<compile_context>
chip_gen: v6e
topology: v6e:2x2x1
jax: 0.10.0
libtpu: 0.0.40
codegen_flags: <defaults>
</compile_context>

<pallas_src>
import functools

import jax
import jax.numpy as jnp
import numpy as np
from jax.experimental import pallas as pl
from jax.experimental.pallas import tpu as pltpu

EPS = 1e-5          # nn.BatchNorm2d default
LANE = 128          # TPU lane width
SUB = 8             # TPU sublane granule


def _round_up(n, m):
    return (n + m - 1) // m * m


def _tap_offsets(wp):
    # 3x3 tap row offsets on the flat padded grid: (ky, kx) -> (ky-1)*Wp + (kx-1)
    return [(ky - 1) * wp + (kx - 1) for ky in range(3) for kx in range(3)]


def conv1_stats_kernel(x_ref, t_ref, wl1_ref, bl1_ref, wl2_ref, bl2_ref,
                       bc1_ref, mask_ref, w1_ref, h_ref, stats_ref,
                       *, wp, front, gp, n_img):
    """Pass 1 (one image per grid step): conv1 + bias + time-emb, BN partials.

    x_ref    : (1, S, Cpi) bf16   flat zero-padded image slab
    h_ref    : (1, S, Cpo) bf16   conv1(+emb) output slab (halo rows zeroed)
    stats_ref: (1, 2, Cpo) f32    [sum, centered sum-of-squares] over valid rows
    """
    cpi = x_ref.shape[2]
    cpo = h_ref.shape[2]
    s_rows = h_ref.shape[1]
    offs = _tap_offsets(wp)

    # ---- time MLP: SiLU(Linear2(SiLU(Linear1(t)))) for this image ----
    e = jax.nn.silu(t_ref[0] * wl1_ref[...] + bl1_ref[...])              # (1, Ep) f32
    emb = jax.nn.silu(
        jnp.dot(e.astype(jnp.bfloat16), wl2_ref[...],
                preferred_element_type=jnp.float32) + bl2_ref[...])      # (1, Cpo)
    eb = emb + bc1_ref[...]        # conv1 bias folded into the same broadcast add

    # ---- conv1: 9 accumulating per-tap matmuls (no im2col concat) ----
    d0 = offs[0]
    h = jnp.dot(x_ref[0, front + d0:front + d0 + gp, :],
                w1_ref[0:cpi, :], preferred_element_type=jnp.float32)
    for k in range(1, 9):
        d = offs[k]
        h = h + jnp.dot(x_ref[0, front + d:front + d + gp, :],
                        w1_ref[k * cpi:(k + 1) * cpi, :],
                        preferred_element_type=jnp.float32)
    h = h + eb                                                            # (Gp, Cpo) f32

    # ---- per-image BatchNorm partials over valid (interior) rows ----
    mg = mask_ref[front:front + gp, :]                                    # (Gp, 1)
    hv = h * mg
    s1 = jnp.sum(hv, axis=0, keepdims=True)                               # (1, Cpo)
    mb = s1 * (1.0 / n_img)                                               # per-image mean
    dc = (h - mb) * mg
    c2 = jnp.sum(dc * dc, axis=0, keepdims=True)                          # centered SSQ
    stats_ref[0, 0:1, :] = s1
    stats_ref[0, 1:2, :] = c2

    # ---- conv1 output slab (bf16): zero tiny halo rows, store computed rows ----
    h_ref[0, 0:front, :] = jnp.zeros((front, cpo), h_ref.dtype)
    h_ref[0, front + gp:s_rows, :] = jnp.zeros((s_rows - front - gp, cpo), h_ref.dtype)
    h_ref[0, front:front + gp, :] = h.astype(h_ref.dtype)


def bn_silu_conv2_kernel(h_ref, scale_ref, shift_ref, mask_ref, w2_ref, bc2_ref,
                         out_ref, hn_scr, *, wp, front, gp):
    """Pass 2 (one image per grid step): BN (folded affine) + SiLU + conv2."""
    cpo = out_ref.shape[2]
    offs = _tap_offsets(wp)

    # BN folded into per-channel scale/shift; the interior mask zeroes ring /
    # halo / slack rows so they double as conv2's "SAME" zero padding.
    hn = jax.nn.silu(h_ref[0].astype(jnp.float32) * scale_ref[...] + shift_ref[...])
    hn_scr[...] = (hn * mask_ref[...]).astype(hn_scr.dtype)               # (S, Cpo) bf16

    # ---- conv2: 9 accumulating per-tap matmuls ----
    d0 = offs[0]
    acc = jnp.dot(hn_scr[front + d0:front + d0 + gp, :],
                  w2_ref[0:cpo, :], preferred_element_type=jnp.float32)
    for k in range(1, 9):
        d = offs[k]
        acc = acc + jnp.dot(hn_scr[front + d:front + d + gp, :],
                            w2_ref[k * cpo:(k + 1) * cpo, :],
                            preferred_element_type=jnp.float32)
    out_ref[0] = (acc + bc2_ref[...]).astype(out_ref.dtype)


@jax.jit
def unet_block_pallas(x_nchw, t, params):
    """x_nchw: (B, Cin, H, W) f32, t: (B,) f32 -> (B, Cout, H, W) f32."""
    B, Cin, H, W = x_nchw.shape
    Cout = params["w_c1"].shape[-1]
    E = params["w_l1"].shape[-1]

    Hp, Wp = H + 2, W + 2
    G = Hp * Wp                               # rows per padded image
    Cpi = _round_up(Cin, LANE)
    Cpo = _round_up(Cout, LANE)
    Ep = _round_up(E, LANE)
    halo = Wp + 1                             # largest |row offset| of a 3x3 tap
    front = _round_up(halo, SUB)              # aligned front halo
    Gp = _round_up(G, SUB)                    # rows computed per image (aligned)
    S = _round_up(front + Gp + halo, SUB)     # slab rows per image

    f32, bf16 = jnp.float32, jnp.bfloat16

    # --- lane-dense per-image slabs; cast to bf16 BEFORE the layout prep ---
    x_nhwc = jnp.transpose(x_nchw.astype(bf16), (0, 2, 3, 1))
    x_pad = jnp.pad(x_nhwc, ((0, 0), (1, 1), (1, 1), (0, Cpi - Cin)))
    x_buf = jnp.pad(x_pad.reshape(B, G, Cpi), ((0, 0), (front, S - front - G), (0, 0)))

    # --- interior-pixel validity mask over one slab (shared by everything) ---
    rr, cc = np.arange(Hp), np.arange(Wp)
    interior = ((rr[:, None] >= 1) & (rr[:, None] <= H) &
                (cc[None, :] >= 1) & (cc[None, :] <= W)).reshape(-1)
    mask_np = np.zeros((S, 1), np.float32)
    mask_np[front:front + G, 0] = interior.astype(np.float32)
    mask = jnp.asarray(mask_np)

    # --- parameters, channel-padded to the lane width ---
    w1 = jnp.pad(params["w_c1"], ((0, 0), (0, Cpi - Cin), (0, Cpo - Cout)))
    w1 = w1.reshape(9 * Cpi, Cpo).astype(bf16)
    w2 = jnp.pad(params["w_c2"], ((0, 0), (0, Cpo - Cout), (0, Cpo - Cout)))
    w2 = w2.reshape(9 * Cpo, Cpo).astype(bf16)
    wl1 = jnp.pad(params["w_l1"], ((0, 0), (0, Ep - E))).astype(f32)
    bl1 = jnp.pad(params["b_l1"], ((0, 0), (0, Ep - E))).astype(f32)
    wl2 = jnp.pad(params["w_l2"], ((0, Ep - E), (0, Cpo - Cout))).astype(bf16)
    bl2 = jnp.pad(params["b_l2"], ((0, 0), (0, Cpo - Cout))).astype(f32)
    bc1 = jnp.pad(params["b_c1"], ((0, 0), (0, Cpo - Cout))).astype(f32)
    bc2 = jnp.pad(params["b_c2"], ((0, 0), (0, Cpo - Cout))).astype(f32)
    gamma = jnp.pad(params["gamma"], ((0, 0), (0, Cpo - Cout))).astype(f32)
    beta = jnp.pad(params["beta"], ((0, 0), (0, Cpo - Cout))).astype(f32)
    t3 = t.reshape(B, 1, 1).astype(f32)

    parallel = pltpu.CompilerParams(dimension_semantics=("parallel",))

    # ---- pass 1: conv1 + bias + time-emb, per-image BN partials ----
    k1 = functools.partial(conv1_stats_kernel, wp=Wp, front=front, gp=Gp,
                           n_img=float(H * W))
    h_buf, stats = pl.pallas_call(
        k1,
        grid=(B,),
        in_specs=[
            pl.BlockSpec((1, S, Cpi), lambda b: (b, 0, 0)),      # x slab
            pl.BlockSpec((1, 1, 1), lambda b: (b, 0, 0)),        # t (this image)
            pl.BlockSpec((1, Ep), lambda b: (0, 0)),             # wl1 (resident)
            pl.BlockSpec((1, Ep), lambda b: (0, 0)),             # bl1
            pl.BlockSpec((Ep, Cpo), lambda b: (0, 0)),           # wl2
            pl.BlockSpec((1, Cpo), lambda b: (0, 0)),            # bl2
            pl.BlockSpec((1, Cpo), lambda b: (0, 0)),            # conv1 bias
            pl.BlockSpec((S, 1), lambda b: (0, 0)),              # interior mask
            pl.BlockSpec((9 * Cpi, Cpo), lambda b: (0, 0)),      # conv1 weights
        ],
        out_specs=(
            pl.BlockSpec((1, S, Cpo), lambda b: (b, 0, 0)),      # conv1 output slab
            pl.BlockSpec((1, 2, Cpo), lambda b: (b, 0, 0)),      # per-image BN partials
        ),
        out_shape=(
            jax.ShapeDtypeStruct((B, S, Cpo), bf16),
            jax.ShapeDtypeStruct((B, 2, Cpo), f32),
        ),
        compiler_params=parallel,
    )(x_buf, t3, wl1, bl1, wl2, bl2, bc1, mask, w1)

    # ---- tiny O(B*C) combine: pooled (biased) variance, fold BN into scale/shift ----
    n_img = H * W
    n_total = B * n_img
    s1 = stats[:, 0, :]                                          # (B, Cpo)
    c2 = stats[:, 1, :]                                          # (B, Cpo)
    mean_b = s1 / n_img
    mean = jnp.sum(s1, axis=0) / n_total
    var = (jnp.sum(c2, axis=0) +
           n_img * jnp.sum(jnp.square(mean_b - mean), axis=0)) / n_total
    inv = jax.lax.rsqrt(var + EPS)
    scale = (gamma[0] * inv).reshape(1, Cpo)
    shift = (beta[0] - mean * gamma[0] * inv).reshape(1, Cpo)

    # ---- pass 2: BN + SiLU + conv2 ----
    k2 = functools.partial(bn_silu_conv2_kernel, wp=Wp, front=front, gp=Gp)
    out2 = pl.pallas_call(
        k2,
        grid=(B,),
        in_specs=[
            pl.BlockSpec((1, S, Cpo), lambda b: (b, 0, 0)),      # conv1 output slab
            pl.BlockSpec((1, Cpo), lambda b: (0, 0)),            # BN scale
            pl.BlockSpec((1, Cpo), lambda b: (0, 0)),            # BN shift
            pl.BlockSpec((S, 1), lambda b: (0, 0)),              # interior mask
            pl.BlockSpec((9 * Cpo, Cpo), lambda b: (0, 0)),      # conv2 weights
            pl.BlockSpec((1, Cpo), lambda b: (0, 0)),            # conv2 bias
        ],
        out_specs=pl.BlockSpec((1, Gp, Cpo), lambda b: (b, 0, 0)),
        out_shape=jax.ShapeDtypeStruct((B, Gp, Cpo), bf16),
        scratch_shapes=[pltpu.VMEM((S, Cpo), bf16)],
        compiler_params=parallel,
    )(h_buf, scale, shift, mask, w2, bc2)

    # flat padded grid -> (B, H, W, Cout) -> NCHW (module returns f32)
    out = out2[:, :G, :].reshape(B, Hp, Wp, Cpo)[:, 1:H + 1, 1:W + 1, :Cout]
    return jnp.transpose(out, (0, 3, 1, 2)).astype(f32)


def unet_block_reference(x_nchw, t, params, conv_dtype=jnp.float32):
    """Pure-JAX reference mirroring the PyTorch forward.

    conv_dtype lets the test apply the same bf16 rounding to the conv / Linear2
    operands that the kernel's MXU path uses (accumulation is f32 either way;
    BatchNorm / SiLU / bias paths stay f32).
    """
    x = jnp.transpose(x_nchw, (0, 2, 3, 1))  # NHWC
    silu = jax.nn.silu

    def conv(v, w_flat, bias):
        i, o = w_flat.shape[1], w_flat.shape[2]
        k = w_flat.reshape(3, 3, i, o)
        y = jax.lax.conv_general_dilated(
            v.astype(conv_dtype), k.astype(conv_dtype),
            window_strides=(1, 1), padding="SAME",
            dimension_numbers=("NHWC", "HWIO", "NHWC"),
            preferred_element_type=jnp.float32)
        return y + bias.reshape(1, 1, 1, -1)

    h = conv(x, params["w_c1"], params["b_c1"])
    e = silu(t.reshape(-1, 1) * params["w_l1"] + params["b_l1"])
    emb = silu(jnp.dot(e.astype(conv_dtype), params["w_l2"].astype(conv_dtype),
                       preferred_element_type=jnp.float32) + params["b_l2"])
    h = h + emb[:, None, None, :]
    mean = jnp.mean(h, axis=(0, 1, 2), keepdims=True)
    var = jnp.mean(jnp.square(h - mean), axis=(0, 1, 2), keepdims=True)  # biased
    h = (h - mean) * jax.lax.rsqrt(var + EPS)
    h = h * params["gamma"].reshape(1, 1, 1, -1) + params["beta"].reshape(1, 1, 1, -1)
    h = silu(h)
    h = conv(h, params["w_c2"], params["b_c2"])
    return jnp.transpose(h, (0, 3, 1, 2))


def make_params(key, in_channels, out_channels, time_emb_dim):
    ks = jax.random.split(key, 8)
    s = 0.1
    return {
        # Linear(1, E): stored transposed as (in, out)
        "w_l1": s * jax.random.normal(ks[0], (1, time_emb_dim), jnp.float32),
        "b_l1": s * jax.random.normal(ks[1], (1, time_emb_dim), jnp.float32),
        # Linear(E, Cout)
        "w_l2": s * jax.random.normal(ks[2], (time_emb_dim, out_channels), jnp.float32),
        "b_l2": s * jax.random.normal(ks[3], (1, out_channels), jnp.float32),
        # Conv2d(Cin, Cout, 3): flattened HWIO -> (9, Cin, Cout), k = ky*3+kx
        "w_c1": s * jax.random.normal(ks[4], (9, in_channels, out_channels), jnp.float32),
        "b_c1": s * jax.random.normal(ks[5], (1, out_channels), jnp.float32),
        # BatchNorm2d default init
        "gamma": jnp.ones((1, out_channels), jnp.float32),
        "beta": jnp.zeros((1, out_channels), jnp.float32),
        # Conv2d(Cout, Cout, 3)
        "w_c2": s * jax.random.normal(ks[6], (9, out_channels, out_channels), jnp.float32),
        "b_c2": s * jax.random.normal(ks[7], (1, out_channels), jnp.float32),
    }


if __name__ == "__main__":
    B, Cin, Cout, H, W, E = 2, 4, 8, 16, 16, 32

    key = jax.random.PRNGKey(0)
    kx, kt, kp = jax.random.split(key, 3)
    x = jax.random.normal(kx, (B, Cin, H, W), jnp.float32)
    t = jax.random.uniform(kt, (B,), jnp.float32)
    params = make_params(kp, Cin, Cout, E)

    out = jax.block_until_ready(unet_block_pallas(x, t, params))

    # Reference applies the same bf16 operand rounding as the kernel's MXU path.
    # Tolerance covers the kernel's additional bf16 storage of the conv1
    # intermediate (pre-BN) and the bf16 output writeback vs the f32 reference.
    ref = unet_block_reference(x, t, params, conv_dtype=jnp.bfloat16)
    np.testing.assert_allclose(np.asarray(out), np.asarray(ref), rtol=1e-2, atol=1e-2)

    print("KERNEL_OK")
</pallas_src>

<mosaic_0001>
module attributes {stable_mosaic.version = 11 : i64} {
  func.func @conv1_stats_kernel(%arg0: i32, %arg1: memref<1x376x128xbf16, #tpu.memory_space<vmem>>, %arg2: memref<1x1x1xf32, #tpu.memory_space<vmem>>, %arg3: memref<1x128xf32, #tpu.memory_space<vmem>>, %arg4: memref<1x128xf32, #tpu.memory_space<vmem>>, %arg5: memref<128x128xbf16, #tpu.memory_space<vmem>>, %arg6: memref<1x128xf32, #tpu.memory_space<vmem>>, %arg7: memref<1x128xf32, #tpu.memory_space<vmem>>, %arg8: memref<376x1xf32, #tpu.memory_space<vmem>>, %arg9: memref<1152x128xbf16, #tpu.memory_space<vmem>>, %arg10: memref<1x376x128xbf16, #tpu.memory_space<vmem>>, %arg11: memref<1x2x128xf32, #tpu.memory_space<vmem>>) attributes {dimension_semantics = [#tpu.dimension_semantics<parallel>], iteration_bounds = array<i64: 2>, scalar_prefetch = 0 : i64, scratch_operands = 0 : i64, tpu.core_type = #tpu.core_type<tc>, window_params = [{transform_indices = @transform_0, window_bounds = array<i64: 1, 376, 128>}, {transform_indices = @transform_1, window_bounds = array<i64: 1, 1, 1>}, {pipeline_mode = #tpu.pipeline_mode<synchronous>, transform_indices = @transform_2, window_bounds = array<i64: 1, 128>}, {pipeline_mode = #tpu.pipeline_mode<synchronous>, transform_indices = @transform_3, window_bounds = array<i64: 1, 128>}, {pipeline_mode = #tpu.pipeline_mode<synchronous>, transform_indices = @transform_4, window_bounds = array<i64: 128, 128>}, {pipeline_mode = #tpu.pipeline_mode<synchronous>, transform_indices = @transform_5, window_bounds = array<i64: 1, 128>}, {pipeline_mode = #tpu.pipeline_mode<synchronous>, transform_indices = @transform_6, window_bounds = array<i64: 1, 128>}, {pipeline_mode = #tpu.pipeline_mode<synchronous>, transform_indices = @transform_7, window_bounds = array<i64: 376, 1>}, {pipeline_mode = #tpu.pipeline_mode<synchronous>, transform_indices = @transform_8, window_bounds = array<i64: 1152, 128>}, {transform_indices = @transform_9, window_bounds = array<i64: 1, 376, 128>}, {transform_indices = @transform_10, window_bounds = array<i64: 1, 2, 128>}]} {
    %c0 = arith.constant 0 : index
    %c0_0 = arith.constant 0 : index
    %c0_1 = arith.constant 0 : index
    %0 = vector.load %arg2[%c0, %c0_0, %c0_1] : memref<1x1x1xf32, #tpu.memory_space<vmem>>, vector<1x1x1xf32>
    %1 = vector.shape_cast %0 : vector<1x1x1xf32> to vector<1x1xf32>
    %c0_2 = arith.constant 0 : index
    %c0_3 = arith.constant 0 : index
    %2 = vector.load %arg3[%c0_2, %c0_3] : memref<1x128xf32, #tpu.memory_space<vmem>>, vector<1x128xf32>
    %3 = vector.broadcast %1 : vector<1x1xf32> to vector<1x128xf32>
    %4 = arith.mulf %3, %2 : vector<1x128xf32>
    %c0_4 = arith.constant 0 : index
    %c0_5 = arith.constant 0 : index
    %5 = vector.load %arg4[%c0_4, %c0_5] : memref<1x128xf32, #tpu.memory_space<vmem>>, vector<1x128xf32>
    %6 = arith.addf %4, %5 : vector<1x128xf32>
    %7 = arith.negf %6 : vector<1x128xf32>
    %8 = math.exp %7 : vector<1x128xf32>
    %cst = arith.constant 1.000000e+00 : f32
    %9 = vector.broadcast %cst : f32 to vector<1x128xf32>
    %10 = arith.addf %9, %8 : vector<1x128xf32>
    %11 = arith.divf %9, %10 : vector<1x128xf32>
    %12 = arith.mulf %6, %11 : vector<1x128xf32>
    %13 = arith.truncf %12 : vector<1x128xf32> to vector<1x128xbf16>
    %c0_6 = arith.constant 0 : index
    %c0_7 = arith.constant 0 : index
    %14 = vector.load %arg5[%c0_6, %c0_7] : memref<128x128xbf16, #tpu.memory_space<vmem>>, vector<128x128xbf16>
    %cst_8 = arith.constant dense<0.000000e+00> : vector<1x128xf32>
    %15 = tpu.matmul %13, %14, %cst_8 {dimension_numbers = #tpu.dot_dimension_numbers<[1], [0], [0], [1], [0, 0, 1, 1], [], []>} : vector<1x128xbf16>, vector<128x128xbf16>, vector<1x128xf32> -> vector<1x128xf32>
    %c0_9 = arith.constant 0 : index
    %c0_10 = arith.constant 0 : index
    %16 = vector.load %arg6[%c0_9, %c0_10] : memref<1x128xf32, #tpu.memory_space<vmem>>, vector<1x128xf32>
    %17 = arith.addf %15, %16 : vector<1x128xf32>
    %18 = arith.negf %17 : vector<1x128xf32>
    %19 = math.exp %18 : vector<1x128xf32>
    %cst_11 = arith.constant 1.000000e+00 : f32
    %20 = vector.broadcast %cst_11 : f32 to vector<1x128xf32>
    %21 = arith.addf %20, %19 : vector<1x128xf32>
    %22 = arith.divf %20, %21 : vector<1x128xf32>
    %23 = arith.mulf %17, %22 : vector<1x128xf32>
    %c0_12 = arith.constant 0 : index
    %c0_13 = arith.constant 0 : index
    %24 = vector.load %arg7[%c0_12, %c0_13] : memref<1x128xf32, #tpu.memory_space<vmem>>, vector<1x128xf32>
    %25 = arith.addf %23, %24 : vector<1x128xf32>
    %c0_14 = arith.constant 0 : index
    %c5 = arith.constant 5 : index
    %c0_15 = arith.constant 0 : index
    %26 = vector.load %arg1[%c0_14, %c5, %c0_15] : memref<1x376x128xbf16, #tpu.memory_space<vmem>>, vector<1x328x128xbf16>
    %27 = vector.shape_cast %26 : vector<1x328x128xbf16> to vector<328x128xbf16>
    %c0_16 = arith.constant 0 : index
    %c0_17 = arith.constant 0 : index
    %28 = vector.load %arg9[%c0_16, %c0_17] : memref<1152x128xbf16, #tpu.memory_space<vmem>>, vector<128x128xbf16>
    %cst_18 = arith.constant dense<0.000000e+00> : vector<328x128xf32>
    %29 = tpu.matmul %27, %28, %cst_18 {dimension_numbers = #tpu.dot_dimension_numbers<[1], [0], [0], [1], [0, 0, 1, 1], [], []>} : vector<328x128xbf16>, vector<128x128xbf16>, vector<328x128xf32> -> vector<328x128xf32>
    %c0_19 = arith.constant 0 : index
    %c6 = arith.constant 6 : index
    %c0_20 = arith.constant 0 : index
    %30 = vector.load %arg1[%c0_19, %c6, %c0_20] : memref<1x376x128xbf16, #tpu.memory_space<vmem>>, vector<1x328x128xbf16>
    %31 = vector.shape_cast %30 : vector<1x328x128xbf16> to vector<328x128xbf16>
    %c128 = arith.constant 128 : index
    %c0_21 = arith.constant 0 : index
    %32 = vector.load %arg9[%c128, %c0_21] : memref<1152x128xbf16, #tpu.memory_space<vmem>>, vector<128x128xbf16>
    %cst_22 = arith.constant dense<0.000000e+00> : vector<328x128xf32>
    %33 = tpu.matmul %31, %32, %cst_22 {dimension_numbers = #tpu.dot_dimension_numbers<[1], [0], [0], [1], [0, 0, 1, 1], [], []>} : vector<328x128xbf16>, vector<128x128xbf16>, vector<328x128xf32> -> vector<328x128xf32>
    %34 = arith.addf %29, %33 : vector<328x128xf32>
    %c0_23 = arith.constant 0 : index
    %c7 = arith.constant 7 : index
    %c0_24 = arith.constant 0 : index
    %35 = vector.load %arg1[%c0_23, %c7, %c0_24] : memref<1x376x128xbf16, #tpu.memory_space<vmem>>, vector<1x328x128xbf16>
    %36 = vector.shape_cast %35 : vector<1x328x128xbf16> to vector<328x128xbf16>
    %c256 = arith.constant 256 : index
    %c0_25 = arith.constant 0 : index
    %37 = vector.load %arg9[%c256, %c0_25] : memref<1152x128xbf16, #tpu.memory_space<vmem>>, vector<128x128xbf16>
    %cst_26 = arith.constant dense<0.000000e+00> : vector<328x128xf32>
    %38 = tpu.matmul %36, %37, %cst_26 {dimension_numbers = #tpu.dot_dimension_numbers<[1], [0], [0], [1], [0, 0, 1, 1], [], []>} : vector<328x128xbf16>, vector<128x128xbf16>, vector<328x128xf32> -> vector<328x128xf32>
    %39 = arith.addf %34, %38 : vector<328x128xf32>
    %c0_27 = arith.constant 0 : index
    %c23 = arith.constant 23 : index
    %c0_28 = arith.constant 0 : index
    %40 = vector.load %arg1[%c0_27, %c23, %c0_28] : memref<1x376x128xbf16, #tpu.memory_space<vmem>>, vector<1x328x128xbf16>
    %41 = vector.shape_cast %40 : vector<1x328x128xbf16> to vector<328x128xbf16>
    %c384 = arith.constant 384 : index
    %c0_29 = arith.constant 0 : index
    %42 = vector.load %arg9[%c384, %c0_29] : memref<1152x128xbf16, #tpu.memory_space<vmem>>, vector<128x128xbf16>
    %cst_30 = arith.constant dense<0.000000e+00> : vector<328x128xf32>
    %43 = tpu.matmul %41, %42, %cst_30 {dimension_numbers = #tpu.dot_dimension_numbers<[1], [0], [0], [1], [0, 0, 1, 1], [], []>} : vector<328x128xbf16>, vector<128x128xbf16>, vector<328x128xf32> -> vector<328x128xf32>
    %44 = arith.addf %39, %43 : vector<328x128xf32>
    %c0_31 = arith.constant 0 : index
    %c24 = arith.constant 24 : index
    %c0_32 = arith.constant 0 : index
    %45 = vector.load %arg1[%c0_31, %c24, %c0_32] : memref<1x376x128xbf16, #tpu.memory_space<vmem>>, vector<1x328x128xbf16>
    %46 = vector.shape_cast %45 : vector<1x328x128xbf16> to vector<328x128xbf16>
    %c512 = arith.constant 512 : index
    %c0_33 = arith.constant 0 : index
    %47 = vector.load %arg9[%c512, %c0_33] : memref<1152x128xbf16, #tpu.memory_space<vmem>>, vector<128x128xbf16>
    %cst_34 = arith.constant dense<0.000000e+00> : vector<328x128xf32>
    %48 = tpu.matmul %46, %47, %cst_34 {dimension_numbers = #tpu.dot_dimension_numbers<[1], [0], [0], [1], [0, 0, 1, 1], [], []>} : vector<328x128xbf16>, vector<128x128xbf16>, vector<328x128xf32> -> vector<328x128xf32>
    %49 = arith.addf %44, %48 : vector<328x128xf32>
    %c0_35 = arith.constant 0 : index
    %c25 = arith.constant 25 : index
    %c0_36 = arith.constant 0 : index
    %50 = vector.load %arg1[%c0_35, %c25, %c0_36] : memref<1x376x128xbf16, #tpu.memory_space<vmem>>, vector<1x328x128xbf16>
    %51 = vector.shape_cast %50 : vector<1x328x128xbf16> to vector<328x128xbf16>
    %c640 = arith.constant 640 : index
    %c0_37 = arith.constant 0 : index
    %52 = vector.load %arg9[%c640, %c0_37] : memref<1152x128xbf16, #tpu.memory_space<vmem>>, vector<128x128xbf16>
    %cst_38 = arith.constant dense<0.000000e+00> : vector<328x128xf32>
    %53 = tpu.matmul %51, %52, %cst_38 {dimension_numbers = #tpu.dot_dimension_numbers<[1], [0], [0], [1], [0, 0, 1, 1], [], []>} : vector<328x128xbf16>, vector<128x128xbf16>, vector<328x128xf32> -> vector<328x128xf32>
    %54 = arith.addf %49, %53 : vector<328x128xf32>
    %c0_39 = arith.constant 0 : index
    %c41 = arith.constant 41 : index
    %c0_40 = arith.constant 0 : index
    %55 = vector.load %arg1[%c0_39, %c41, %c0_40] : memref<1x376x128xbf16, #tpu.memory_space<vmem>>, vector<1x328x128xbf16>
    %56 = vector.shape_cast %55 : vector<1x328x128xbf16> to vector<328x128xbf16>
    %c768 = arith.constant 768 : index
    %c0_41 = arith.constant 0 : index
    %57 = vector.load %arg9[%c768, %c0_41] : memref<1152x128xbf16, #tpu.memory_space<vmem>>, vector<128x128xbf16>
    %cst_42 = arith.constant dense<0.000000e+00> : vector<328x128xf32>
    %58 = tpu.matmul %56, %57, %cst_42 {dimension_numbers = #tpu.dot_dimension_numbers<[1], [0], [0], [1], [0, 0, 1, 1], [], []>} : vector<328x128xbf16>, vector<128x128xbf16>, vector<328x128xf32> -> vector<328x128xf32>
    %59 = arith.addf %54, %58 : vector<328x128xf32>
    %c0_43 = arith.constant 0 : index
    %c42 = arith.constant 42 : index
    %c0_44 = arith.constant 0 : index
    %60 = vector.load %arg1[%c0_43, %c42, %c0_44] : memref<1x376x128xbf16, #tpu.memory_space<vmem>>, vector<1x328x128xbf16>
    %61 = vector.shape_cast %60 : vector<1x328x128xbf16> to vector<328x128xbf16>
    %c896 = arith.constant 896 : index
    %c0_45 = arith.constant 0 : index
    %62 = vector.load %arg9[%c896, %c0_45] : memref<1152x128xbf16, #tpu.memory_space<vmem>>, vector<128x128xbf16>
    %cst_46 = arith.constant dense<0.000000e+00> : vector<328x128xf32>
    %63 = tpu.matmul %61, %62, %cst_46 {dimension_numbers = #tpu.dot_dimension_numbers<[1], [0], [0], [1], [0, 0, 1, 1], [], []>} : vector<328x128xbf16>, vector<128x128xbf16>, vector<328x128xf32> -> vector<328x128xf32>
    %64 = arith.addf %59, %63 : vector<328x128xf32>
    %c0_47 = arith.constant 0 : index
    %c43 = arith.constant 43 : index
    %c0_48 = arith.constant 0 : index
    %65 = vector.load %arg1[%c0_47, %c43, %c0_48] : memref<1x376x128xbf16, #tpu.memory_space<vmem>>, vector<1x328x128xbf16>
    %66 = vector.shape_cast %65 : vector<1x328x128xbf16> to vector<328x128xbf16>
    %c1024 = arith.constant 1024 : index
    %c0_49 = arith.constant 0 : index
    %67 = vector.load %arg9[%c1024, %c0_49] : memref<1152x128xbf16, #tpu.memory_space<vmem>>, vector<128x128xbf16>
    %cst_50 = arith.constant dense<0.000000e+00> : vector<328x128xf32>
    %68 = tpu.matmul %66, %67, %cst_50 {dimension_numbers = #tpu.dot_dimension_numbers<[1], [0], [0], [1], [0, 0, 1, 1], [], []>} : vector<328x128xbf16>, vector<128x128xbf16>, vector<328x128xf32> -> vector<328x128xf32>
    %69 = arith.addf %64, %68 : vector<328x128xf32>
    %70 = vector.broadcast %25 : vector<1x128xf32> to vector<328x128xf32>
    %71 = arith.addf %69, %70 : vector<328x128xf32>
    %c24_51 = arith.constant 24 : index
    %c0_52 = arith.constant 0 : index
    %72 = vector.load %arg8[%c24_51, %c0_52] : memref<376x1xf32, #tpu.memory_space<vmem>>, vector<328x1xf32>
    %73 = vector.broadcast %72 : vector<328x1xf32> to vector<328x128xf32>
    %74 = arith.mulf %71, %73 : vector<328x128xf32>
    %cst_53 = arith.constant dense<0.000000e+00> : vector<128xf32>
    %75 = vector.multi_reduction <add>, %74, %cst_53 [0] : vector<328x128xf32> to vector<128xf32>
    %76 = vector.shape_cast %75 : vector<128xf32> to vector<1x128xf32>
    %cst_54 = arith.constant 3.906250e-03 : f32
    %77 = vector.broadcast %cst_54 : f32 to vector<1x128xf32>
    %78 = arith.mulf %76, %77 : vector<1x128xf32>
    %79 = vector.broadcast %78 : vector<1x128xf32> to vector<328x128xf32>
    %80 = arith.subf %71, %79 : vector<328x128xf32>
    %81 = vector.broadcast %72 : vector<328x1xf32> to vector<328x128xf32>
    %82 = arith.mulf %80, %81 : vector<328x128xf32>
    %83 = arith.mulf %82, %82 : vector<328x128xf32>
    %cst_55 = arith.constant dense<0.000000e+00> : vector<128xf32>
    %84 = vector.multi_reduction <add>, %83, %cst_55 [0] : vector<328x128xf32> to vector<128xf32>
    %85 = vector.shape_cast %84 : vector<128xf32> to vector<1x128xf32>
    %c0_56 = arith.constant 0 : index
    %c0_57 = arith.constant 0 : index
    %c0_58 = arith.constant 0 : index
    %86 = vector.load %arg11[%c0_56, %c0_57, %c0_58] : memref<1x2x128xf32, #tpu.memory_space<vmem>>, vector<1x1x128xf32>
    %87 = vector.shape_cast %86 : vector<1x1x128xf32> to vector<1x128xf32>
    %88 = vector.shape_cast %76 : vector<1x128xf32> to vector<1x1x128xf32>
    tpu.vector_store %arg11[%c0_56, %c0_57, %c0_58], %88 {strides = array<i32>} : memref<1x2x128xf32, #tpu.memory_space<vmem>>, vector<1x1x128xf32>,
    %c0_59 = arith.constant 0 : index
    %c1 = arith.constant 1 : index
    %c0_60 = arith.constant 0 : index
    %89 = vector.load %arg11[%c0_59, %c1, %c0_60] : memref<1x2x128xf32, #tpu.memory_space<vmem>>, vector<1x1x128xf32>
    %90 = vector.shape_cast %89 : vector<1x1x128xf32> to vector<1x128xf32>
    %91 = vector.shape_cast %85 : vector<1x128xf32> to vector<1x1x128xf32>
    tpu.vector_store %arg11[%c0_59, %c1, %c0_60], %91 {strides = array<i32>} : memref<1x2x128xf32, #tpu.memory_space<vmem>>, vector<1x1x128xf32>,
    %cst_61 = arith.constant 0.000000e+00 : bf16
    %92 = vector.broadcast %cst_61 : bf16 to vector<24x128xbf16>
    %c0_62 = arith.constant 0 : index
    %c0_63 = arith.constant 0 : index
    %c0_64 = arith.constant 0 : index
    %93 = vector.load %arg10[%c0_62, %c0_63, %c0_64] : memref<1x376x128xbf16, #tpu.memory_space<vmem>>, vector<1x24x128xbf16>
    %94 = vector.shape_cast %93 : vector<1x24x128xbf16> to vector<24x128xbf16>
    %95 = vector.shape_cast %92 : vector<24x128xbf16> to vector<1x24x128xbf16>
    tpu.vector_store %arg10[%c0_62, %c0_63, %c0_64], %95 {strides = array<i32>} : memref<1x376x128xbf16, #tpu.memory_space<vmem>>, vector<1x24x128xbf16>,
    %cst_65 = arith.constant 0.000000e+00 : bf16
    %96 = vector.broadcast %cst_65 : bf16 to vector<24x128xbf16>
    %c0_66 = arith.constant 0 : index
    %c352 = arith.constant 352 : index
    %c0_67 = arith.constant 0 : index
    %97 = vector.load %arg10[%c0_66, %c352, %c0_67] : memref<1x376x128xbf16, #tpu.memory_space<vmem>>, vector<1x24x128xbf16>
    %98 = vector.shape_cast %97 : vector<1x24x128xbf16> to vector<24x128xbf16>
    %99 = vector.shape_cast %96 : vector<24x128xbf16> to vector<1x24x128xbf16>
    tpu.vector_store %arg10[%c0_66, %c352, %c0_67], %99 {strides = array<i32>} : memref<1x376x128xbf16, #tpu.memory_space<vmem>>, vector<1x24x128xbf16>,
    %100 = arith.truncf %71 : vector<328x128xf32> to vector<328x128xbf16>
    %c0_68 = arith.constant 0 : index
    %c24_69 = arith.constant 24 : index
    %c0_70 = arith.constant 0 : index
    %101 = vector.load %arg10[%c0_68, %c24_69, %c0_70] : memref<1x376x128xbf16, #tpu.memory_space<vmem>>, vector<1x328x128xbf16>
    %102 = vector.shape_cast %101 : vector<1x328x128xbf16> to vector<328x128xbf16>
    %103 = vector.shape_cast %100 : vector<328x128xbf16> to vector<1x328x128xbf16>
    tpu.vector_store %arg10[%c0_68, %c24_69, %c0_70], %103 {strides = array<i32>} : memref<1x376x128xbf16, #tpu.memory_space<vmem>>, vector<1x328x128xbf16>,
    return
  }
  func.func @transform_0(%arg0: i32) -> (i32, i32, i32) {
    %c0_i32 = arith.constant 0 : i32
    %c0_i32_0 = arith.constant 0 : i32
    %c0_i32_1 = arith.constant 0 : i32
    return %arg0, %c0_i32, %c0_i32_0 : i32, i32, i32
  }
  func.func @transform_1(%arg0: i32) -> (i32, i32, i32) {
    %c0_i32 = arith.constant 0 : i32
    %c0_i32_0 = arith.constant 0 : i32
    %c0_i32_1 = arith.constant 0 : i32
    return %arg0, %c0_i32, %c0_i32_0 : i32, i32, i32
  }
  func.func @transform_2(%arg0: i32) -> (i32, i32) {
    %c0_i32 = arith.constant 0 : i32
    %c0_i32_0 = arith.constant 0 : i32
    %c0_i32_1 = arith.constant 0 : i32
    return %c0_i32, %c0_i32_0 : i32, i32
  }
  func.func @transform_3(%arg0: i32) -> (i32, i32) {
    %c0_i32 = arith.constant 0 : i32
    %c0_i32_0 = arith.constant 0 : i32
    %c0_i32_1 = arith.constant 0 : i32
    return %c0_i32, %c0_i32_0 : i32, i32
  }
  func.func @transform_4(%arg0: i32) -> (i32, i32) {
    %c0_i32 = arith.constant 0 : i32
    %c0_i32_0 = arith.constant 0 : i32
    %c0_i32_1 = arith.constant 0 : i32
    return %c0_i32, %c0_i32_0 : i32, i32
  }
  func.func @transform_5(%arg0: i32) -> (i32, i32) {
    %c0_i32 = arith.constant 0 : i32
    %c0_i32_0 = arith.constant 0 : i32
    %c0_i32_1 = arith.constant 0 : i32
    return %c0_i32, %c0_i32_0 : i32, i32
  }
  func.func @transform_6(%arg0: i32) -> (i32, i32) {
    %c0_i32 = arith.constant 0 : i32
    %c0_i32_0 = arith.constant 0 : i32
    %c0_i32_1 = arith.constant 0 : i32
    return %c0_i32, %c0_i32_0 : i32, i32
  }
  func.func @transform_7(%arg0: i32) -> (i32, i32) {
    %c0_i32 = arith.constant 0 : i32
    %c0_i32_0 = arith.constant 0 : i32
    %c0_i32_1 = arith.constant 0 : i32
    return %c0_i32, %c0_i32_0 : i32, i32
  }
  func.func @transform_8(%arg0: i32) -> (i32, i32) {
    %c0_i32 = arith.constant 0 : i32
    %c0_i32_0 = arith.constant 0 : i32
    %c0_i32_1 = arith.constant 0 : i32
    return %c0_i32, %c0_i32_0 : i32, i32
  }
  func.func @transform_9(%arg0: i32) -> (i32, i32, i32) {
    %c0_i32 = arith.constant 0 : i32
    %c0_i32_0 = arith.constant 0 : i32
    %c0_i32_1 = arith.constant 0 : i32
    return %arg0, %c0_i32, %c0_i32_0 : i32, i32, i32
  }
  func.func @transform_10(%arg0: i32) -> (i32, i32, i32) {
    %c0_i32 = arith.constant 0 : i32
    %c0_i32_0 = arith.constant 0 : i32
    %c0_i32_1 = arith.constant 0 : i32
    return %arg0, %c0_i32, %c0_i32_0 : i32, i32, i32
  }
}

module attributes {stable_mosaic.version = 11 : i64} {
  func.func @bn_silu_conv2_kernel(%arg0: i32, %arg1: memref<1x376x128xbf16, #tpu.memory_space<vmem>>, %arg2: memref<1x128xf32, #tpu.memory_space<vmem>>, %arg3: memref<1x128xf32, #tpu.memory_space<vmem>>, %arg4: memref<376x1xf32, #tpu.memory_space<vmem>>, %arg5: memref<1152x128xbf16, #tpu.memory_space<vmem>>, %arg6: memref<1x128xf32, #tpu.memory_space<vmem>>, %arg7: memref<1x328x128xbf16, #tpu.memory_space<vmem>>, %arg8: memref<376x128xbf16, #tpu.memory_space<vmem>>) attributes {dimension_semantics = [#tpu.dimension_semantics<parallel>], iteration_bounds = array<i64: 2>, scalar_prefetch = 0 : i64, scratch_operands = 1 : i64, tpu.core_type = #tpu.core_type<tc>, window_params = [{transform_indices = @transform_0, window_bounds = array<i64: 1, 376, 128>}, {pipeline_mode = #tpu.pipeline_mode<synchronous>, transform_indices = @transform_1, window_bounds = array<i64: 1, 128>}, {pipeline_mode = #tpu.pipeline_mode<synchronous>, transform_indices = @transform_2, window_bounds = array<i64: 1, 128>}, {pipeline_mode = #tpu.pipeline_mode<synchronous>, transform_indices = @transform_3, window_bounds = array<i64: 376, 1>}, {pipeline_mode = #tpu.pipeline_mode<synchronous>, transform_indices = @transform_4, window_bounds = array<i64: 1152, 128>}, {pipeline_mode = #tpu.pipeline_mode<synchronous>, transform_indices = @transform_5, window_bounds = array<i64: 1, 128>}, {transform_indices = @transform_6, window_bounds = array<i64: 1, 328, 128>}]} {
    %c0 = arith.constant 0 : index
    %c0_0 = arith.constant 0 : index
    %c0_1 = arith.constant 0 : index
    %0 = vector.load %arg1[%c0, %c0_0, %c0_1] : memref<1x376x128xbf16, #tpu.memory_space<vmem>>, vector<1x376x128xbf16>
    %1 = vector.shape_cast %0 : vector<1x376x128xbf16> to vector<376x128xbf16>
    %2 = arith.extf %1 : vector<376x128xbf16> to vector<376x128xf32>
    %c0_2 = arith.constant 0 : index
    %c0_3 = arith.constant 0 : index
    %3 = vector.load %arg2[%c0_2, %c0_3] : memref<1x128xf32, #tpu.memory_space<vmem>>, vector<1x128xf32>
    %4 = vector.broadcast %3 : vector<1x128xf32> to vector<376x128xf32>
    %5 = arith.mulf %2, %4 : vector<376x128xf32>
    %c0_4 = arith.constant 0 : index
    %c0_5 = arith.constant 0 : index
    %6 = vector.load %arg3[%c0_4, %c0_5] : memref<1x128xf32, #tpu.memory_space<vmem>>, vector<1x128xf32>
    %7 = vector.broadcast %6 : vector<1x128xf32> to vector<376x128xf32>
    %8 = arith.addf %5, %7 : vector<376x128xf32>
    %9 = arith.negf %8 : vector<376x128xf32>
    %10 = math.exp %9 : vector<376x128xf32>
    %cst = arith.constant 1.000000e+00 : f32
    %11 = vector.broadcast %cst : f32 to vector<376x128xf32>
    %12 = arith.addf %11, %10 : vector<376x128xf32>
    %13 = arith.divf %11, %12 : vector<376x128xf32>
    %14 = arith.mulf %8, %13 : vector<376x128xf32>
    %c0_6 = arith.constant 0 : index
    %c0_7 = arith.constant 0 : index
    %15 = vector.load %arg4[%c0_6, %c0_7] : memref<376x1xf32, #tpu.memory_space<vmem>>, vector<376x1xf32>
    %16 = vector.broadcast %15 : vector<376x1xf32> to vector<376x128xf32>
    %17 = arith.mulf %14, %16 : vector<376x128xf32>
    %18 = arith.truncf %17 : vector<376x128xf32> to vector<376x128xbf16>
    %c0_8 = arith.constant 0 : index
    %c0_9 = arith.constant 0 : index
    %19 = vector.load %arg8[%c0_8, %c0_9] : memref<376x128xbf16, #tpu.memory_space<vmem>>, vector<376x128xbf16>
    tpu.vector_store %arg8[%c0_8, %c0_9], %18 {strides = array<i32>} : memref<376x128xbf16, #tpu.memory_space<vmem>>, vector<376x128xbf16>,
    %c5 = arith.constant 5 : index
    %c0_10 = arith.constant 0 : index
    %20 = vector.load %arg8[%c5, %c0_10] : memref<376x128xbf16, #tpu.memory_space<vmem>>, vector<328x128xbf16>
    %c0_11 = arith.constant 0 : index
    %c0_12 = arith.constant 0 : index
    %21 = vector.load %arg5[%c0_11, %c0_12] : memref<1152x128xbf16, #tpu.memory_space<vmem>>, vector<128x128xbf16>
    %cst_13 = arith.constant dense<0.000000e+00> : vector<328x128xf32>
    %22 = tpu.matmul %20, %21, %cst_13 {dimension_numbers = #tpu.dot_dimension_numbers<[1], [0], [0], [1], [0, 0, 1, 1], [], []>} : vector<328x128xbf16>, vector<128x128xbf16>, vector<328x128xf32> -> vector<328x128xf32>
    %c6 = arith.constant 6 : index
    %c0_14 = arith.constant 0 : index
    %23 = vector.load %arg8[%c6, %c0_14] : memref<376x128xbf16, #tpu.memory_space<vmem>>, vector<328x128xbf16>
    %c128 = arith.constant 128 : index
    %c0_15 = arith.constant 0 : index
    %24 = vector.load %arg5[%c128, %c0_15] : memref<1152x128xbf16, #tpu.memory_space<vmem>>, vector<128x128xbf16>
    %cst_16 = arith.constant dense<0.000000e+00> : vector<328x128xf32>
    %25 = tpu.matmul %23, %24, %cst_16 {dimension_numbers = #tpu.dot_dimension_numbers<[1], [0], [0], [1], [0, 0, 1, 1], [], []>} : vector<328x128xbf16>, vector<128x128xbf16>, vector<328x128xf32> -> vector<328x128xf32>
    %26 = arith.addf %22, %25 : vector<328x128xf32>
    %c7 = arith.constant 7 : index
    %c0_17 = arith.constant 0 : index
    %27 = vector.load %arg8[%c7, %c0_17] : memref<376x128xbf16, #tpu.memory_space<vmem>>, vector<328x128xbf16>
    %c256 = arith.constant 256 : index
    %c0_18 = arith.constant 0 : index
    %28 = vector.load %arg5[%c256, %c0_18] : memref<1152x128xbf16, #tpu.memory_space<vmem>>, vector<128x128xbf16>
    %cst_19 = arith.constant dense<0.000000e+00> : vector<328x128xf32>
    %29 = tpu.matmul %27, %28, %cst_19 {dimension_numbers = #tpu.dot_dimension_numbers<[1], [0], [0], [1], [0, 0, 1, 1], [], []>} : vector<328x128xbf16>, vector<128x128xbf16>, vector<328x128xf32> -> vector<328x128xf32>
    %30 = arith.addf %26, %29 : vector<328x128xf32>
    %c23 = arith.constant 23 : index
    %c0_20 = arith.constant 0 : index
    %31 = vector.load %arg8[%c23, %c0_20] : memref<376x128xbf16, #tpu.memory_space<vmem>>, vector<328x128xbf16>
    %c384 = arith.constant 384 : index
    %c0_21 = arith.constant 0 : index
    %32 = vector.load %arg5[%c384, %c0_21] : memref<1152x128xbf16, #tpu.memory_space<vmem>>, vector<128x128xbf16>
    %cst_22 = arith.constant dense<0.000000e+00> : vector<328x128xf32>
    %33 = tpu.matmul %31, %32, %cst_22 {dimension_numbers = #tpu.dot_dimension_numbers<[1], [0], [0], [1], [0, 0, 1, 1], [], []>} : vector<328x128xbf16>, vector<128x128xbf16>, vector<328x128xf32> -> vector<328x128xf32>
    %34 = arith.addf %30, %33 : vector<328x128xf32>
    %c24 = arith.constant 24 : index
    %c0_23 = arith.constant 0 : index
    %35 = vector.load %arg8[%c24, %c0_23] : memref<376x128xbf16, #tpu.memory_space<vmem>>, vector<328x128xbf16>
    %c512 = arith.constant 512 : index
    %c0_24 = arith.constant 0 : index
    %36 = vector.load %arg5[%c512, %c0_24] : memref<1152x128xbf16, #tpu.memory_space<vmem>>, vector<128x128xbf16>
    %cst_25 = arith.constant dense<0.000000e+00> : vector<328x128xf32>
    %37 = tpu.matmul %35, %36, %cst_25 {dimension_numbers = #tpu.dot_dimension_numbers<[1], [0], [0], [1], [0, 0, 1, 1], [], []>} : vector<328x128xbf16>, vector<128x128xbf16>, vector<328x128xf32> -> vector<328x128xf32>
    %38 = arith.addf %34, %37 : vector<328x128xf32>
    %c25 = arith.constant 25 : index
    %c0_26 = arith.constant 0 : index
    %39 = vector.load %arg8[%c25, %c0_26] : memref<376x128xbf16, #tpu.memory_space<vmem>>, vector<328x128xbf16>
    %c640 = arith.constant 640 : index
    %c0_27 = arith.constant 0 : index
    %40 = vector.load %arg5[%c640, %c0_27] : memref<1152x128xbf16, #tpu.memory_space<vmem>>, vector<128x128xbf16>
    %cst_28 = arith.constant dense<0.000000e+00> : vector<328x128xf32>
    %41 = tpu.matmul %39, %40, %cst_28 {dimension_numbers = #tpu.dot_dimension_numbers<[1], [0], [0], [1], [0, 0, 1, 1], [], []>} : vector<328x128xbf16>, vector<128x128xbf16>, vector<328x128xf32> -> vector<328x128xf32>
    %42 = arith.addf %38, %41 : vector<328x128xf32>
    %c41 = arith.constant 41 : index
    %c0_29 = arith.constant 0 : index
    %43 = vector.load %arg8[%c41, %c0_29] : memref<376x128xbf16, #tpu.memory_space<vmem>>, vector<328x128xbf16>
    %c768 = arith.constant 768 : index
    %c0_30 = arith.constant 0 : index
    %44 = vector.load %arg5[%c768, %c0_30] : memref<1152x128xbf16, #tpu.memory_space<vmem>>, vector<128x128xbf16>
    %cst_31 = arith.constant dense<0.000000e+00> : vector<328x128xf32>
    %45 = tpu.matmul %43, %44, %cst_31 {dimension_numbers = #tpu.dot_dimension_numbers<[1], [0], [0], [1], [0, 0, 1, 1], [], []>} : vector<328x128xbf16>, vector<128x128xbf16>, vector<328x128xf32> -> vector<328x128xf32>
    %46 = arith.addf %42, %45 : vector<328x128xf32>
    %c42 = arith.constant 42 : index
    %c0_32 = arith.constant 0 : index
    %47 = vector.load %arg8[%c42, %c0_32] : memref<376x128xbf16, #tpu.memory_space<vmem>>, vector<328x128xbf16>
    %c896 = arith.constant 896 : index
    %c0_33 = arith.constant 0 : index
    %48 = vector.load %arg5[%c896, %c0_33] : memref<1152x128xbf16, #tpu.memory_space<vmem>>, vector<128x128xbf16>
    %cst_34 = arith.constant dense<0.000000e+00> : vector<328x128xf32>
    %49 = tpu.matmul %47, %48, %cst_34 {dimension_numbers = #tpu.dot_dimension_numbers<[1], [0], [0], [1], [0, 0, 1, 1], [], []>} : vector<328x128xbf16>, vector<128x128xbf16>, vector<328x128xf32> -> vector<328x128xf32>
    %50 = arith.addf %46, %49 : vector<328x128xf32>
    %c43 = arith.constant 43 : index
    %c0_35 = arith.constant 0 : index
    %51 = vector.load %arg8[%c43, %c0_35] : memref<376x128xbf16, #tpu.memory_space<vmem>>, vector<328x128xbf16>
    %c1024 = arith.constant 1024 : index
    %c0_36 = arith.constant 0 : index
    %52 = vector.load %arg5[%c1024, %c0_36] : memref<1152x128xbf16, #tpu.memory_space<vmem>>, vector<128x128xbf16>
    %cst_37 = arith.constant dense<0.000000e+00> : vector<328x128xf32>
    %53 = tpu.matmul %51, %52, %cst_37 {dimension_numbers = #tpu.dot_dimension_numbers<[1], [0], [0], [1], [0, 0, 1, 1], [], []>} : vector<328x128xbf16>, vector<128x128xbf16>, vector<328x128xf32> -> vector<328x128xf32>
    %54 = arith.addf %50, %53 : vector<328x128xf32>
    %c0_38 = arith.constant 0 : index
    %c0_39 = arith.constant 0 : index
    %55 = vector.load %arg6[%c0_38, %c0_39] : memref<1x128xf32, #tpu.memory_space<vmem>>, vector<1x128xf32>
    %56 = vector.broadcast %55 : vector<1x128xf32> to vector<328x128xf32>
    %57 = arith.addf %54, %56 : vector<328x128xf32>
    %58 = arith.truncf %57 : vector<328x128xf32> to vector<328x128xbf16>
    %c0_40 = arith.constant 0 : index
    %c0_41 = arith.constant 0 : index
    %c0_42 = arith.constant 0 : index
    %59 = vector.load %arg7[%c0_40, %c0_41, %c0_42] : memref<1x328x128xbf16, #tpu.memory_space<vmem>>, vector<1x328x128xbf16>
    %60 = vector.shape_cast %59 : vector<1x328x128xbf16> to vector<328x128xbf16>
    %61 = vector.shape_cast %58 : vector<328x128xbf16> to vector<1x328x128xbf16>
    tpu.vector_store %arg7[%c0_40, %c0_41, %c0_42], %61 {strides = array<i32>} : memref<1x328x128xbf16, #tpu.memory_space<vmem>>, vector<1x328x128xbf16>,
    return
  }
  func.func @transform_0(%arg0: i32) -> (i32, i32, i32) {
    %c0_i32 = arith.constant 0 : i32
    %c0_i32_0 = arith.constant 0 : i32
    %c0_i32_1 = arith.constant 0 : i32
    return %arg0, %c0_i32, %c0_i32_0 : i32, i32, i32
  }
  func.func @transform_1(%arg0: i32) -> (i32, i32) {
    %c0_i32 = arith.constant 0 : i32
    %c0_i32_0 = arith.constant 0 : i32
    %c0_i32_1 = arith.constant 0 : i32
    return %c0_i32, %c0_i32_0 : i32, i32
  }
  func.func @transform_2(%arg0: i32) -> (i32, i32) {
    %c0_i32 = arith.constant 0 : i32
    %c0_i32_0 = arith.constant 0 : i32
    %c0_i32_1 = arith.constant 0 : i32
    return %c0_i32, %c0_i32_0 : i32, i32
  }
  func.func @transform_3(%arg0: i32) -> (i32, i32) {
    %c0_i32 = arith.constant 0 : i32
    %c0_i32_0 = arith.constant 0 : i32
    %c0_i32_1 = arith.constant 0 : i32
    return %c0_i32, %c0_i32_0 : i32, i32
  }
  func.func @transform_4(%arg0: i32) -> (i32, i32) {
    %c0_i32 = arith.constant 0 : i32
    %c0_i32_0 = arith.constant 0 : i32
    %c0_i32_1 = arith.constant 0 : i32
    return %c0_i32, %c0_i32_0 : i32, i32
  }
  func.func @transform_5(%arg0: i32) -> (i32, i32) {
    %c0_i32 = arith.constant 0 : i32
    %c0_i32_0 = arith.constant 0 : i32
    %c0_i32_1 = arith.constant 0 : i32
    return %c0_i32, %c0_i32_0 : i32, i32
  }
  func.func @transform_6(%arg0: i32) -> (i32, i32, i32) {
    %c0_i32 = arith.constant 0 : i32
    %c0_i32_0 = arith.constant 0 : i32
    %c0_i32_1 = arith.constant 0 : i32
    return %arg0, %c0_i32, %c0_i32_0 : i32, i32, i32
  }
}

</mosaic_0001>

<llo_original>
// kernel: unet_block_pallas.2
$region0: #{unet_block_pallas.2}
  #allocation0 [shape = 'u32[]', space=smem, size = 0x4, offset = 0x4, fixed_abs, tag = 'smem constant byte address 0x4 - core index']
  #allocation1 [shape = 'u32[144,128]{1,0:T(1,128)}', space=vmem, size = 0x12000, scoped, tag = 'internal scratch']
  %s0 = inlined_call_operand.vmem [shape: bf16[2,376,128], index: 0, kind: input, shape index: {}]
  %s1 = inlined_call_operand.vmem [shape: f32[2,1,1], index: 1, kind: input, shape index: {}]
  %s2 = inlined_call_operand.vmem [shape: f32[1,128], index: 2, kind: input, shape index: {}]
  %s3 = inlined_call_operand.vmem [shape: f32[1,128], index: 3, kind: input, shape index: {}]
  %s4 = inlined_call_operand.vmem [shape: bf16[128,128], index: 4, kind: input, shape index: {}]
  %s5 = inlined_call_operand.vmem [shape: f32[1,128], index: 5, kind: input, shape index: {}]
  %s6 = inlined_call_operand.vmem [shape: f32[1,128], index: 6, kind: input, shape index: {}]
  %s7 = inlined_call_operand.vmem [shape: f32[376,1], index: 7, kind: input, shape index: {}]
  %s8 = inlined_call_operand.vmem [shape: bf16[1152,128], index: 8, kind: input, shape index: {}]
  %s9 = inlined_call_operand.vmem [shape: bf16[2,376,128], index: 9, kind: output, shape index: {0}]
  %s10 = inlined_call_operand.vmem [shape: f32[2,2,128], index: 10, kind: output, shape index: {1}]
  %11 = xla_tuple %s9, %s10
  %s12 = sld [smem:[#allocation0]]
  $region77: #{unet_block_pallas.2} parent=0
    _
  %s14 = ssub.s32 1, %s12
  %s15 = scalar_select 0, %s14, %s12
  loop: start=0, step=1, limit=4
  $region2: #{unet_block_pallas.2} parent=0 // loop_pre_header
    _
  $region3: #{unet_block_pallas.2} parent=0 // loop_header
    %s17 = sphi 0, %s21
    %p18 = scmp.ge.s32.totalorder %s17, 4
    %s27 = sphi 0, %s29
    %s30 = sphi 0, %s27
    %s31 = sphi 0, %s30
    %s47 = sphi 0, %s31
    %s53 = sphi 0, %s55
    %s56 = sphi 0, %s53
    %s57 = sphi 0, %s56
    %s73 = sphi 0, %s57
    %s77 = sphi 0, %s77
    %s79 = sphi 0, %s77
    %s80 = sphi 0, %s79
    %s94 = sphi 0, %s80
    %s98 = sphi 0, %s98
    %s100 = sphi 0, %s98
    %s101 = sphi 0, %s100
    %s115 = sphi 0, %s101
    %s119 = sphi 0, %s119
    %s121 = sphi 0, %s119
    %s122 = sphi 0, %s121
    %s136 = sphi 0, %s122
    %s140 = sphi 0, %s140
    %s142 = sphi 0, %s140
    %s143 = sphi 0, %s142
    %s157 = sphi 0, %s143
    %s161 = sphi 0, %s161
    %s163 = sphi 0, %s161
    %s164 = sphi 0, %s163
    %s178 = sphi 0, %s164
    %s182 = sphi 0, %s182
    %s184 = sphi 0, %s182
    %s185 = sphi 0, %s184
    %s199 = sphi 0, %s185
    %s203 = sphi 0, %s203
    %s205 = sphi 0, %s203
    %s206 = sphi 0, %s205
    %s220 = sphi 0, %s206
    %s226 = sphi 0, %s228
    %s229 = sphi 0, %s226
    %s230 = sphi 0, %s229
    %s246 = sphi 0, %s230
    %s252 = sphi 0, %s254
    %s255 = sphi 0, %s252
    %s256 = sphi 0, %s255
    %s272 = sphi 0, %s256
  $region4: #{unet_block_pallas.2} parent=0 // loop_header_branch
    %20 = sbr.rel (%p18) target = $region8
  $region5: #{unet_block_pallas.2} parent=0 // loop_body
    %s22 = ssub.s32 %s17, 1
    %s23 = ssub.s32 %s17, 2
    %s24 = sadd.s32 %s17, 1
    %s25 = ssub.s32 %s17, %s24
    %p26 = scmp.eq.s32.totalorder %s25, 0
    %s28 = sadd.s32 %s27, 1
    %s29 = scalar_select %p26, %s27, %s28
    %p32 = pneg %p26
    %p33 = scmp.eq.s32.totalorder %s17, 1
    %p34 = por %p32, %p33
    %p35 = scmp.ne.s32.totalorder %s27, %s30
    %p36 = scmp.eq.s32.totalorder %s17, 0
    %p37 = por %p35, %p36
    %p38 = scmp.ne.s32.totalorder %s27, %s30
    %p39 = scmp.eq.s32.totalorder %s22, 1
    %p40 = por %p38, %p39
    %p41 = scmp.ne.s32.totalorder %s30, %s31
    %p42 = scmp.eq.s32.totalorder %s22, 0
    %p43 = por %p41, %p42
    %p44 = scmp.ne.s32.totalorder %s30, %s31
    %p45 = scmp.eq.s32.totalorder %s23, 1
    %p46 = por %p44, %p45
    %p48 = scmp.ne.s32.totalorder %s31, %s47
    %p49 = scmp.eq.s32.totalorder %s23, 0
    %p50 = por %p48, %p49
    %s51 = ssub.s32 %s17, %s24
    %p52 = scmp.eq.s32.totalorder %s51, 0
    %s54 = sadd.s32 %s53, 1
    %s55 = scalar_select %p52, %s53, %s54
    %p58 = pneg %p52
    %p59 = scmp.eq.s32.totalorder %s17, 1
    %p60 = por %p58, %p59
    %p61 = scmp.ne.s32.totalorder %s53, %s56
    %p62 = scmp.eq.s32.totalorder %s17, 0
    %p63 = por %p61, %p62
    %p64 = scmp.ne.s32.totalorder %s53, %s56
    %p65 = scmp.eq.s32.totalorder %s22, 1
    %p66 = por %p64, %p65
    %p67 = scmp.ne.s32.totalorder %s56, %s57
    %p68 = scmp.eq.s32.totalorder %s22, 0
    %p69 = por %p67, %p68
    %p70 = scmp.ne.s32.totalorder %s56, %s57
    %p71 = scmp.eq.s32.totalorder %s23, 1
    %p72 = por %p70, %p71
    %p74 = scmp.ne.s32.totalorder %s57, %s73
    %p75 = scmp.eq.s32.totalorder %s23, 0
    %p76 = por %p74, %p75
    %s78 = sadd.s32 %s77, 1
    %p81 = scmp.eq.s32.totalorder %s17, 1
    %p82 = scmp.ne.s32.totalorder %s77, %s79
    %p83 = scmp.eq.s32.totalorder %s17, 0
    %p84 = por %p82, %p83
    %p85 = scmp.ne.s32.totalorder %s77, %s79
    %p86 = scmp.eq.s32.totalorder %s22, 1
    %p87 = por %p85, %p86
    %p88 = scmp.ne.s32.totalorder %s79, %s80
    %p89 = scmp.eq.s32.totalorder %s22, 0
    %p90 = por %p88, %p89
    %p91 = scmp.ne.s32.totalorder %s79, %s80
    %p92 = scmp.eq.s32.totalorder %s23, 1
    %p93 = por %p91, %p92
    %p95 = scmp.ne.s32.totalorder %s80, %s94
    %p96 = scmp.eq.s32.totalorder %s23, 0
    %p97 = por %p95, %p96
    %s99 = sadd.s32 %s98, 1
    %p102 = scmp.eq.s32.totalorder %s17, 1
    %p103 = scmp.ne.s32.totalorder %s98, %s100
    %p104 = scmp.eq.s32.totalorder %s17, 0
    %p105 = por %p103, %p104
    %p106 = scmp.ne.s32.totalorder %s98, %s100
    %p107 = scmp.eq.s32.totalorder %s22, 1
    %p108 = por %p106, %p107
    %p109 = scmp.ne.s32.totalorder %s100, %s101
    %p110 = scmp.eq.s32.totalorder %s22, 0
    %p111 = por %p109, %p110
    %p112 = scmp.ne.s32.totalorder %s100, %s101
    %p113 = scmp.eq.s32.totalorder %s23, 1
    %p114 = por %p112, %p113
    %p116 = scmp.ne.s32.totalorder %s101, %s115
    %p117 = scmp.eq.s32.totalorder %s23, 0
    %p118 = por %p116, %p117
    %s120 = sadd.s32 %s119, 1
    %p123 = scmp.eq.s32.totalorder %s17, 1
    %p124 = scmp.ne.s32.totalorder %s119, %s121
    %p125 = scmp.eq.s32.totalorder %s17, 0
    %p126 = por %p124, %p125
    %p127 = scmp.ne.s32.totalorder %s119, %s121
    %p128 = scmp.eq.s32.totalorder %s22, 1
    %p129 = por %p127, %p128
    %p130 = scmp.ne.s32.totalorder %s121, %s122
    %p131 = scmp.eq.s32.totalorder %s22, 0
    %p132 = por %p130, %p131
    %p133 = scmp.ne.s32.totalorder %s121, %s122
    %p134 = scmp.eq.s32.totalorder %s23, 1
    %p135 = por %p133, %p134
    %p137 = scmp.ne.s32.totalorder %s122, %s136
    %p138 = scmp.eq.s32.totalorder %s23, 0
    %p139 = por %p137, %p138
    %s141 = sadd.s32 %s140, 1
    %p144 = scmp.eq.s32.totalorder %s17, 1
    %p145 = scmp.ne.s32.totalorder %s140, %s142
    %p146 = scmp.eq.s32.totalorder %s17, 0
    %p147 = por %p145, %p146
    %p148 = scmp.ne.s32.totalorder %s140, %s142
    %p149 = scmp.eq.s32.totalorder %s22, 1
    %p150 = por %p148, %p149
    %p151 = scmp.ne.s32.totalorder %s142, %s143
    %p152 = scmp.eq.s32.totalorder %s22, 0
    %p153 = por %p151, %p152
    %p154 = scmp.ne.s32.totalorder %s142, %s143
    %p155 = scmp.eq.s32.totalorder %s23, 1
    %p156 = por %p154, %p155
    %p158 = scmp.ne.s32.totalorder %s143, %s157
    %p159 = scmp.eq.s32.totalorder %s23, 0
    %p160 = por %p158, %p159
    %s162 = sadd.s32 %s161, 1
    %p165 = scmp.eq.s32.totalorder %s17, 1
    %p166 = scmp.ne.s32.totalorder %s161, %s163
    %p167 = scmp.eq.s32.totalorder %s17, 0
    %p168 = por %p166, %p167
    %p169 = scmp.ne.s32.totalorder %s161, %s163
    %p170 = scmp.eq.s32.totalorder %s22, 1
    %p171 = por %p169, %p170
    %p172 = scmp.ne.s32.totalorder %s163, %s164
    %p173 = scmp.eq.s32.totalorder %s22, 0
    %p174 = por %p172, %p173
    %p175 = scmp.ne.s32.totalorder %s163, %s164
    %p176 = scmp.eq.s32.totalorder %s23, 1
    %p177 = por %p175, %p176
    %p179 = scmp.ne.s32.totalorder %s164, %s178
    %p180 = scmp.eq.s32.totalorder %s23, 0
    %p181 = por %p179, %p180
    %s183 = sadd.s32 %s182, 1
    %p186 = scmp.eq.s32.totalorder %s17, 1
    %p187 = scmp.ne.s32.totalorder %s182, %s184
    %p188 = scmp.eq.s32.totalorder %s17, 0
    %p189 = por %p187, %p188
    %p190 = scmp.ne.s32.totalorder %s182, %s184
    %p191 = scmp.eq.s32.totalorder %s22, 1
    %p192 = por %p190, %p191
    %p193 = scmp.ne.s32.totalorder %s184, %s185
    %p194 = scmp.eq.s32.totalorder %s22, 0
    %p195 = por %p193, %p194
    %p196 = scmp.ne.s32.totalorder %s184, %s185
    %p197 = scmp.eq.s32.totalorder %s23, 1
    %p198 = por %p196, %p197
    %p200 = scmp.ne.s32.totalorder %s185, %s199
    %p201 = scmp.eq.s32.totalorder %s23, 0
    %p202 = por %p200, %p201
    %s204 = sadd.s32 %s203, 1
    %p207 = scmp.eq.s32.totalorder %s17, 1
    %p208 = scmp.ne.s32.totalorder %s203, %s205
    %p209 = scmp.eq.s32.totalorder %s17, 0
    %p210 = por %p208, %p209
    %p211 = scmp.ne.s32.totalorder %s203, %s205
    %p212 = scmp.eq.s32.totalorder %s22, 1
    %p213 = por %p211, %p212
    %p214 = scmp.ne.s32.totalorder %s205, %s206
    %p215 = scmp.eq.s32.totalorder %s22, 0
    %p216 = por %p214, %p215
    %p217 = scmp.ne.s32.totalorder %s205, %s206
    %p218 = scmp.eq.s32.totalorder %s23, 1
    %p219 = por %p217, %p218
    %p221 = scmp.ne.s32.totalorder %s206, %s220
    %p222 = scmp.eq.s32.totalorder %s23, 0
    %p223 = por %p221, %p222
    %s224 = ssub.s32 %s17, %s24
    %p225 = scmp.eq.s32.totalorder %s224, 0
    %s227 = sadd.s32 %s226, 1
    %s228 = scalar_select %p225, %s226, %s227
    %p231 = pneg %p225
    %p232 = scmp.eq.s32.totalorder %s17, 1
    %p233 = por %p231, %p232
    %p234 = scmp.ne.s32.totalorder %s226, %s229
    %p235 = scmp.eq.s32.totalorder %s17, 0
    %p236 = por %p234, %p235
    %p237 = scmp.ne.s32.totalorder %s226, %s229
    %p238 = scmp.eq.s32.totalorder %s22, 1
    %p239 = por %p237, %p238
    %p240 = scmp.ne.s32.totalorder %s229, %s230
    %p241 = scmp.eq.s32.totalorder %s22, 0
    %p242 = por %p240, %p241
    %p243 = scmp.ne.s32.totalorder %s229, %s230
    %p244 = scmp.eq.s32.totalorder %s23, 1
    %p245 = por %p243, %p244
    %p247 = scmp.ne.s32.totalorder %s230, %s246
    %p248 = scmp.eq.s32.totalorder %s23, 0
    %p249 = por %p247, %p248
    %s250 = ssub.s32 %s17, %s24
    %p251 = scmp.eq.s32.totalorder %s250, 0
    %s253 = sadd.s32 %s252, 1
    %s254 = scalar_select %p251, %s252, %s253
    %p257 = pneg %p251
    %p258 = scmp.eq.s32.totalorder %s17, 1
    %p259 = por %p257, %p258
    %p260 = scmp.ne.s32.totalorder %s252, %s255
    %p261 = scmp.eq.s32.totalorder %s17, 0
    %p262 = por %p260, %p261
    %p263 = scmp.ne.s32.totalorder %s252, %s255
    %p264 = scmp.eq.s32.totalorder %s22, 1
    %p265 = por %p263, %p264
    %p266 = scmp.ne.s32.totalorder %s255, %s256
    %p267 = scmp.eq.s32.totalorder %s22, 0
    %p268 = por %p266, %p267
    %p269 = scmp.ne.s32.totalorder %s255, %s256
    %p270 = scmp.eq.s32.totalorder %s23, 1
    %p271 = por %p269, %p270
    %p273 = scmp.ne.s32.totalorder %s256, %s272
    %p274 = scmp.eq.s32.totalorder %s23, 0
    %p275 = por %p273, %p274
    %p276 = scmp.le.s32.totalorder 1, %s17
    %p277 = scmp.lt.s32.totalorder %s17, 3
    %p278 = pnand %p276, %p277
    %p279 = pneg %p278
    // Predicated region
    $region9: #{unet_block_pallas.2} parent=5 // pred_check
      _
    $region10: #{unet_block_pallas.2} parent=5 // pred_check_branch
      %281 = sbr.rel (%p278) target = $region12
    $region11: #{unet_block_pallas.2} parent=5 // pred_region
      %s282 = ssub.s32 %s17, 1
      // Predicated region
      $region13: #{unet_block_pallas.2} parent=11 // pred_check
        %p283 = pneg %p90
      $region14: #{unet_block_pallas.2} parent=11 // pred_check_branch
        %285 = sbr.rel (%p283) target = $region16
      $region15: #{unet_block_pallas.2} parent=11 // pred_region
        _
      $region16: #{unet_block_pallas.2} parent=11 // pred_fallthru
        _
      // Predicated region
      $region17: #{unet_block_pallas.2} parent=11 // pred_check
        %p286 = pneg %p111
      $region18: #{unet_block_pallas.2} parent=11 // pred_check_branch
        %288 = sbr.rel (%p286) target = $region20
      $region19: #{unet_block_pallas.2} parent=11 // pred_region
        _
      $region20: #{unet_block_pallas.2} parent=11 // pred_fallthru
        _
      // Predicated region
      $region21: #{unet_block_pallas.2} parent=11 // pred_check
        %p289 = pneg %p132
      $region22: #{unet_block_pallas.2} parent=11 // pred_check_branch
        %291 = sbr.rel (%p289) target = $region24
      $region23: #{unet_block_pallas.2} parent=11 // pred_region
        _
      $region24: #{unet_block_pallas.2} parent=11 // pred_fallthru
        _
      // Predicated region
      $region25: #{unet_block_pallas.2} parent=11 // pred_check
        %p292 = pneg %p153
      $region26: #{unet_block_pallas.2} parent=11 // pred_check_branch
        %294 = sbr.rel (%p292) target = $region28
      $region27: #{unet_block_pallas.2} parent=11 // pred_region
        _
      $region28: #{unet_block_pallas.2} parent=11 // pred_fallthru
        _
      // Predicated region
      $region29: #{unet_block_pallas.2} parent=11 // pred_check
        %p295 = pneg %p174
      $region30: #{unet_block_pallas.2} parent=11 // pred_check_branch
        %297 = sbr.rel (%p295) target = $region32
      $region31: #{unet_block_pallas.2} parent=11 // pred_region
        _
      $region32: #{unet_block_pallas.2} parent=11 // pred_fallthru
        _
      // Predicated region
      $region33: #{unet_block_pallas.2} parent=11 // pred_check
        %p298 = pneg %p195
      $region34: #{unet_block_pallas.2} parent=11 // pred_check_branch
        %300 = sbr.rel (%p298) target = $region36
      $region35: #{unet_block_pallas.2} parent=11 // pred_region
        _
      $region36: #{unet_block_pallas.2} parent=11 // pred_fallthru
        _
      // Predicated region
      $region37: #{unet_block_pallas.2} parent=11 // pred_check
        %p301 = pneg %p216
      $region38: #{unet_block_pallas.2} parent=11 // pred_check_branch
        %303 = sbr.rel (%p301) target = $region40
      $region39: #{unet_block_pallas.2} parent=11 // pred_region
        _
      $region40: #{unet_block_pallas.2} parent=11 // pred_fallthru
        _
    $region12: #{unet_block_pallas.2} parent=5 // pred_fallthru
      _
    %p304 = scmp.lt.s32.totalorder %s17, 2
    // Predicated region
    $region41: #{unet_block_pallas.2} parent=5 // pred_check
      %p305 = pneg %p304
    $region42: #{unet_block_pallas.2} parent=5 // pred_check_branch
      %307 = sbr.rel (%p305) target = $region44
    $region43: #{unet_block_pallas.2} parent=5 // pred_region
      // Predicated region
      $region45: #{unet_block_pallas.2} parent=43 // pred_check
        %p308 = pneg %p37
      $region46: #{unet_block_pallas.2} parent=43 // pred_check_branch
        %310 = sbr.rel (%p308) target = $region48
      $region47: #{unet_block_pallas.2} parent=43 // pred_region
        %p311 = scmp.lt.s32.totalorder %s17, 1
        %s312 = scalar_select %p311, %s17, 1
        %s313 = smul.addr %s312, 47
        %s314 = smul.addr %s313, 4
        %s315 = scalar_lea.vmem %s0, %s314
      $region48: #{unet_block_pallas.2} parent=43 // pred_fallthru
        _
      // Predicated region
      $region49: #{unet_block_pallas.2} parent=43 // pred_check
        %p316 = pneg %p63
      $region50: #{unet_block_pallas.2} parent=43 // pred_check_branch
        %318 = sbr.rel (%p316) target = $region52
      $region51: #{unet_block_pallas.2} parent=43 // pred_region
        %p319 = scmp.lt.s32.totalorder %s17, 1
        %s320 = scalar_select %p319, %s17, 1
        %s321 = scalar_lea.vmem %s1, %s320
      $region52: #{unet_block_pallas.2} parent=43 // pred_fallthru
        _
    $region44: #{unet_block_pallas.2} parent=5 // pred_fallthru
      _
    %p322 = scmp.le.s32.totalorder 1, %s17
    %p323 = scmp.lt.s32.totalorder %s17, 3
    %p324 = pnand %p322, %p323
    %p325 = pneg %p324
    // Predicated region
    $region53: #{unet_block_pallas.2} parent=5 // pred_check
      _
    $region54: #{unet_block_pallas.2} parent=5 // pred_check_branch
      %327 = sbr.rel (%p324) target = $region56
    $region55: #{unet_block_pallas.2} parent=5 // pred_region
      %s328 = ssub.s32 %s17, 1
      %p329 = scmp.lt.s32.totalorder %s22, 1
      %s330 = scalar_select %p329, %s22, 1
      %s331 = smul.addr %s330, 47
      %s332 = smul.addr %s331, 4
      %s333 = scalar_lea.vmem %s0, %s332
      %p334 = pneg %p43
      %p335 = pneg %p40
      %p336 = scmp.lt.s32.totalorder %s22, 1
      %s337 = scalar_select %p336, %s22, 1
      %s338 = scalar_lea.vmem %s1, %s337
      %p339 = pneg %p69
      %p340 = pneg %p66
      %p341 = pneg %p90
      %p342 = pneg %p87
      %p343 = pneg %p111
      %p344 = pneg %p108
      %p345 = pneg %p132
      %p346 = pneg %p129
      %p347 = pneg %p153
      %p348 = pneg %p150
      %p349 = pneg %p174
      %p350 = pneg %p171
      %p351 = pneg %p195
      %p352 = pneg %p192
      %p353 = pneg %p216
      %p354 = pneg %p213
      %p355 = pneg %p242
      %p356 = pneg %p239
      %p357 = scmp.lt.s32.totalorder %s22, 1
      %s358 = scalar_select %p357, %s22, 1
      %s359 = smul.addr %s358, 47
      %s360 = smul.addr %s359, 4
      %s361 = scalar_lea.vmem %s9, %s360
      %p362 = pneg %p268
      %p363 = pneg %p265
      %p364 = scmp.lt.s32.totalorder %s22, 1
      %s365 = scalar_select %p364, %s22, 1
      %s366 = smul.addr %s365, 2
      %s367 = scalar_lea.vmem %s10, %s366
      %p368 = scmp.lt.s32.totalorder %s22, 1
      %s369 = scalar_select %p368, %s22, 1
      %s370 = smul.addr %s369, 47
      %s371 = smul.addr %s370, 4
      %s372 = scalar_lea.vmem %s0, %s371
      %p373 = scmp.lt.s32.totalorder %s22, 1
      %s374 = scalar_select %p373, %s22, 1
      %s375 = scalar_lea.vmem %s1, %s374
      %p376 = scmp.lt.s32.totalorder %s22, 1
      %s377 = scalar_select %p376, %s22, 1
      %s378 = smul.addr %s377, 47
      %s379 = smul.addr %s378, 4
      %s380 = scalar_lea.vmem %s9, %s379
      %p381 = scmp.lt.s32.totalorder %s22, 1
      %s382 = scalar_select %p381, %s22, 1
      %s383 = smul.addr %s382, 2
      %s384 = scalar_lea.vmem %s10, %s383
      %v386 = vld [vmem:[%s375] sm:$0x1]
      %v387 = vld [vmem:[%s2] sm:$0x1]
      %389 = vset.pattern.permute.xlu0 0
      %390 = vperm.xlu0 %389, %v386
      %v391 = vpop.permute.xlu0 %390
      %v393 = vlaneseq
      %v394 = vshrl.u32 %v393, 7
      %v395 = vsub.s32 0, %v394
      %v396 = vrot.slane %v391, %v395
      %v397 = vmul.f32 %v396, %v387
      %v398 = vld [vmem:[%s3] sm:$0x1]
      %v399 = vadd.f32 %v397, %v398
      %v400 = vxor.u32 %v399, 2147483648
      %v401 = vmul.f32 %v400, 1.442695
      %v402 = vpow.pop %v401
      %v403 = vadd.f32 %v402, 1.0
      %v404 = vrcp.pop %v403
      %v405 = vmul.f32 1.0, %v404
      %v406 = vmul.f32 %v399, %v405
      %v407 = vpack.c.bf16 %v406, %v406
      %v408 = vld [vmem:[%s4] sm:$0xf]
      %v409 = vld [vmem:[%s4 + $0x4] sm:$0xf]
      %v410 = vld [vmem:[%s4 + $0x8] sm:$0xf]
      %v411 = vld [vmem:[%s4 + $0xc] sm:$0xf]
      %v412 = vld [vmem:[%s4 + $0x10] sm:$0xf]
      %v413 = vld [vmem:[%s4 + $0x14] sm:$0xf]
      %v414 = vld [vmem:[%s4 + $0x18] sm:$0xf]
      %v415 = vld [vmem:[%s4 + $0x1c] sm:$0xf]
      %v416 = vld [vmem:[%s4 + $0x20] sm:$0xf]
      %v417 = vld [vmem:[%s4 + $0x24] sm:$0xf]
      %v418 = vld [vmem:[%s4 + $0x28] sm:$0xf]
      %v419 = vld [vmem:[%s4 + $0x2c] sm:$0xf]
      %v420 = vld [vmem:[%s4 + $0x30] sm:$0xf]
      %v421 = vld [vmem:[%s4 + $0x34] sm:$0xf]
      %v422 = vld [vmem:[%s4 + $0x38] sm:$0xf]
      %v423 = vld [vmem:[%s4 + $0x3c] sm:$0xf]
      %v424 = vld [vmem:[%s5] sm:$0x1]
      %v441 = vunpack.c.l.b16 %v408
      %v442 = vunpack.c.l.b16 %v409
      %v443 = vunpack.c.l.b16 %v410
      %v444 = vunpack.c.l.b16 %v411
      %v445 = vunpack.c.l.b16 %v412
      %v446 = vunpack.c.l.b16 %v413
      %v447 = vunpack.c.l.b16 %v414
      %v448 = vunpack.c.l.b16 %v415
      %v449 = vunpack.c.l.b16 %v416
      %v450 = vunpack.c.l.b16 %v417
      %v451 = vunpack.c.l.b16 %v418
      %v452 = vunpack.c.l.b16 %v419
      %v453 = vunpack.c.l.b16 %v420
      %v454 = vunpack.c.l.b16 %v421
      %v455 = vunpack.c.l.b16 %v422
      %v456 = vunpack.c.l.b16 %v423
      %v457 = vpack.c.b16 %v442, %v441
      %v458 = vpack.c.b16 %v444, %v443
      %v459 = vpack.c.b16 %v446, %v445
      %v460 = vpack.c.b16 %v448, %v447
      %v461 = vpack.c.b16 %v450, %v449
      %v462 = vpack.c.b16 %v452, %v451
      %v463 = vpack.c.b16 %v454, %v453
      %v464 = vpack.c.b16 %v456, %v455
      %473 = vmatprep.subr.bf16.mxu0 0
      %474 = vmatpush1.bf16.msra.mxu0 %v464
      %475 = vmatprep.subr.bf16.mxu0 0
      %476 = vmatpush1.bf16.msra.mxu0 %v463
      %477 = vmatprep.subr.bf16.mxu0 0
      %478 = vmatpush1.bf16.msra.mxu0 %v462
      %479 = vmatprep.subr.bf16.mxu0 0
      %480 = vmatpush1.bf16.msra.mxu0 %v461
      %481 = vmatprep.subr.bf16.mxu0 0
      %482 = vmatpush1.bf16.msra.mxu0 %v460
      %483 = vmatprep.subr.bf16.mxu0 0
      %484 = vmatpush1.bf16.msra.mxu0 %v459
      %485 = vmatprep.subr.bf16.mxu0 0
      %486 = vmatpush1.bf16.msra.mxu0 %v458
      %487 = vmatprep.subr.bf16.mxu0 0
      %488 = vmatpush1.bf16.msra.mxu0 %v457
      %489 = vmatprep.subr.bf16.mxu0 0
      %490 = vmatpush2.bf16.msra.mxu0 0
      %491 = vmatprep.subr.bf16.mxu0 0
      %492 = vmatpush2.bf16.msra.mxu0 0
      %493 = vmatprep.subr.bf16.mxu0 0
      %494 = vmatpush2.bf16.msra.mxu0 0
      %495 = vmatprep.subr.bf16.mxu0 0
      %496 = vmatpush2.bf16.msra.mxu0 0
      %497 = vmatprep.subr.bf16.mxu0 0
      %498 = vmatpush2.bf16.msra.mxu0 0
      %499 = vmatprep.subr.bf16.mxu0 0
      %500 = vmatpush2.bf16.msra.mxu0 0
      %501 = vmatprep.subr.bf16.mxu0 0
      %502 = vmatpush2.bf16.msra.mxu0 0
      %503 = vmatprep.subr.bf16.mxu0 0
      %504 = vmatpush2.bf16.msra.mxu0 0
      %505 = vmatprep.mubr.bf16.mxu0 0
      %506 = vmatmul.mubr.bf16.gmra.mxu0 %v407
      %v507 = vpop.f32.mrf.mxu0
      %v508 = vadd.f32 %v424, %v507
      %v509 = vpop.f32.mrf.mxu0
      %v510 = vpop.f32.mrf.mxu0
      %v511 = vpop.f32.mrf.mxu0
      %512 = vdwg.mxu0
      %v513 = vxor.u32 %v508, 2147483648
      %v514 = vmul.f32 %v513, 1.442695
      %v515 = vpow.pop %v514
      %v516 = vadd.f32 %v515, 1.0
      %v517 = vrcp.pop %v516
      %v518 = vmul.f32 1.0, %v517
      %v519 = vmul.f32 %v508, %v518
      %v520 = vld [vmem:[%s6] sm:$0x1]
      %v521 = vadd.f32 %v519, %v520
      %v522 = vld [vmem:[%s372] sm:$0xc]
      %v523 = vld [vmem:[%s372 + $0x4] sm:$0xf]
      %v524 = vld [vmem:[%s372 + $0x8] sm:$0xf]
      %v525 = vld [vmem:[%s372 + $0xc] sm:$0xf]
      %v526 = vld [vmem:[%s372 + $0x10] sm:$0xf]
      %v527 = vld [vmem:[%s372 + $0x14] sm:$0xf]
      %v528 = vld [vmem:[%s372 + $0x18] sm:$0xf]
      %v529 = vld [vmem:[%s372 + $0x1c] sm:$0xf]
      %v530 = vld [vmem:[%s372 + $0x20] sm:$0xf]
      %v531 = vld [vmem:[%s372 + $0x24] sm:$0xf]
      %v532 = vld [vmem:[%s372 + $0x28] sm:$0xf]
      %v533 = vld [vmem:[%s372 + $0x2c] sm:$0xf]
      %v534 = vld [vmem:[%s372 + $0x30] sm:$0xf]
      %v535 = vld [vmem:[%s372 + $0x34] sm:$0xf]
      %v536 = vld [vmem:[%s372 + $0x38] sm:$0xf]
      %v537 = vld [vmem:[%s372 + $0x3c] sm:$0xf]
      %v538 = vld [vmem:[%s372 + $0x40] sm:$0xf]
      %v539 = vld [vmem:[%s372 + $0x44] sm:$0xf]
      %v540 = vld [vmem:[%s372 + $0x48] sm:$0xf]
      %v541 = vld [vmem:[%s372 + $0x4c] sm:$0xf]
      %v542 = vld [vmem:[%s372 + $0x50] sm:$0xf]
      %v543 = vld [vmem:[%s372 + $0x54] sm:$0xf]
      %v544 = vld [vmem:[%s372 + $0x58] sm:$0xf]
      %v545 = vld [vmem:[%s372 + $0x5c] sm:$0xf]
      %v546 = vld [vmem:[%s372 + $0x60] sm:$0xf]
      %v547 = vld [vmem:[%s372 + $0x64] sm:$0xf]
      %v548 = vld [vmem:[%s372 + $0x68] sm:$0xf]
      %v549 = vld [vmem:[%s372 + $0x6c] sm:$0xf]
      %v550 = vld [vmem:[%s372 + $0x70] sm:$0xf]
      %v551 = vld [vmem:[%s372 + $0x74] sm:$0xf]
      %v552 = vld [vmem:[%s372 + $0x78] sm:$0xf]
      %v553 = vld [vmem:[%s372 + $0x7c] sm:$0xf]
      %v554 = vld [vmem:[%s372 + $0x80] sm:$0xf]
      %v555 = vld [vmem:[%s372 + $0x84] sm:$0xf]
      %v556 = vld [vmem:[%s372 + $0x88] sm:$0xf]
      %v557 = vld [vmem:[%s372 + $0x8c] sm:$0xf]
      %v558 = vld [vmem:[%s372 + $0x90] sm:$0xf]
      %v559 = vld [vmem:[%s372 + $0x94] sm:$0xf]
      %v560 = vld [vmem:[%s372 + $0x98] sm:$0xf]
      %v561 = vld [vmem:[%s372 + $0x9c] sm:$0xf]
      %v562 = vld [vmem:[%s372 + $0xa0] sm:$0xf]
      %v563 = vld [vmem:[%s372 + $0xa4] sm:$0x7]
      %v564 = vld [vmem:[%s8] sm:$0xf]
      %v565 = vld [vmem:[%s8 + $0x4] sm:$0xf]
      %v566 = vld [vmem:[%s8 + $0x8] sm:$0xf]
      %v567 = vld [vmem:[%s8 + $0xc] sm:$0xf]
      %v568 = vld [vmem:[%s8 + $0x10] sm:$0xf]
      %v569 = vld [vmem:[%s8 + $0x14] sm:$0xf]
      %v570 = vld [vmem:[%s8 + $0x18] sm:$0xf]
      %v571 = vld [vmem:[%s8 + $0x1c] sm:$0xf]
      %v572 = vld [vmem:[%s8 + $0x20] sm:$0xf]
      %v573 = vld [vmem:[%s8 + $0x24] sm:$0xf]
      %v574 = vld [vmem:[%s8 + $0x28] sm:$0xf]
      %v575 = vld [vmem:[%s8 + $0x2c] sm:$0xf]
      %v576 = vld [vmem:[%s8 + $0x30] sm:$0xf]
      %v577 = vld [vmem:[%s8 + $0x34] sm:$0xf]
      %v578 = vld [vmem:[%s8 + $0x38] sm:$0xf]
      %v579 = vld [vmem:[%s8 + $0x3c] sm:$0xf]
      %v580 = vld [vmem:[%s372] sm:$0x8]
      %v581 = vld [vmem:[%s8 + $0x40] sm:$0xf]
      %v582 = vld [vmem:[%s8 + $0x44] sm:$0xf]
      %v583 = vld [vmem:[%s8 + $0x48] sm:$0xf]
      %v584 = vld [vmem:[%s8 + $0x4c] sm:$0xf]
      %v585 = vld [vmem:[%s8 + $0x50] sm:$0xf]
      %v586 = vld [vmem:[%s8 + $0x54] sm:$0xf]
      %v587 = vld [vmem:[%s8 + $0x58] sm:$0xf]
      %v588 = vld [vmem:[%s8 + $0x5c] sm:$0xf]
      %v589 = vld [vmem:[%s8 + $0x60] sm:$0xf]
      %v590 = vld [vmem:[%s8 + $0x64] sm:$0xf]
      %v591 = vld [vmem:[%s8 + $0x68] sm:$0xf]
      %v592 = vld [vmem:[%s8 + $0x6c] sm:$0xf]
      %v593 = vld [vmem:[%s8 + $0x70] sm:$0xf]
      %v594 = vld [vmem:[%s8 + $0x74] sm:$0xf]
      %v595 = vld [vmem:[%s8 + $0x78] sm:$0xf]
      %v596 = vld [vmem:[%s8 + $0x7c] sm:$0xf]
      %v639 = vunpack.c.l.b16 %v580
      %v640 = vunpack.c.l.b16 %v523
      %v641 = vunpack.c.l.b16 %v524
      %v642 = vunpack.c.l.b16 %v525
      %v643 = vunpack.c.l.b16 %v526
      %v644 = vunpack.c.l.b16 %v527
      %v645 = vunpack.c.l.b16 %v528
      %v646 = vunpack.c.l.b16 %v529
      %v647 = vunpack.c.l.b16 %v530
      %v648 = vunpack.c.l.b16 %v531
      %v649 = vunpack.c.l.b16 %v532
      %v650 = vunpack.c.l.b16 %v533
      %v651 = vunpack.c.l.b16 %v534
      %v652 = vunpack.c.l.b16 %v535
      %v653 = vunpack.c.l.b16 %v536
      %v654 = vunpack.c.l.b16 %v537
      %v655 = vunpack.c.l.b16 %v538
      %v656 = vunpack.c.l.b16 %v539
      %v657 = vunpack.c.l.b16 %v540
      %v658 = vunpack.c.l.b16 %v541
      %v659 = vunpack.c.l.b16 %v542
      %v660 = vunpack.c.l.b16 %v543
      %v661 = vunpack.c.l.b16 %v544
      %v662 = vunpack.c.l.b16 %v545
      %v663 = vunpack.c.l.b16 %v546
      %v664 = vunpack.c.l.b16 %v547
      %v665 = vunpack.c.l.b16 %v548
      %v666 = vunpack.c.l.b16 %v549
      %v667 = vunpack.c.l.b16 %v550
      %v668 = vunpack.c.l.b16 %v551
      %v669 = vunpack.c.l.b16 %v552
      %v670 = vunpack.c.l.b16 %v553
      %v671 = vunpack.c.l.b16 %v554
      %v672 = vunpack.c.l.b16 %v555
      %v673 = vunpack.c.l.b16 %v556
      %v674 = vunpack.c.l.b16 %v557
      %v675 = vunpack.c.l.b16 %v558
      %v676 = vunpack.c.l.b16 %v559
      %v677 = vunpack.c.l.b16 %v560
      %v678 = vunpack.c.l.b16 %v561
      %v679 = vunpack.c.l.b16 %v562
      %v680 = vunpack.c.l.b16 %v563
      %v681 = vpack.c.b16 %v640, %v639
      %v682 = vpack.c.b16 %v642, %v641
      %v683 = vpack.c.b16 %v644, %v643
      %v684 = vpack.c.b16 %v646, %v645
      %v685 = vpack.c.b16 %v648, %v647
      %v686 = vpack.c.b16 %v650, %v649
      %v687 = vpack.c.b16 %v652, %v651
      %v688 = vpack.c.b16 %v654, %v653
      %v689 = vpack.c.b16 %v656, %v655
      %v690 = vpack.c.b16 %v658, %v657
      %v691 = vpack.c.b16 %v660, %v659
      %v692 = vpack.c.b16 %v662, %v661
      %v693 = vpack.c.b16 %v664, %v663
      %v694 = vpack.c.b16 %v666, %v665
      %v695 = vpack.c.b16 %v668, %v667
      %v696 = vpack.c.b16 %v670, %v669
      %v697 = vpack.c.b16 %v672, %v671
      %v698 = vpack.c.b16 %v674, %v673
      %v699 = vpack.c.b16 %v676, %v675
      %v700 = vpack.c.b16 %v678, %v677
      %v701 = vpack.c.b16 %v680, %v679
      %vm702 = vcmask 1044480
      %v703 = vrot.slane %v681, 3
      %v704 = vrot.slane %v682, 3
      %v705 = vsel %vm702, %v703, %v704
      %v706 = vrot.slane %v683, 3
      %v707 = vsel %vm702, %v704, %v706
      %v708 = vrot.slane %v684, 3
      %v709 = vsel %vm702, %v706, %v708
      %v710 = vrot.slane %v685, 3
      %v711 = vsel %vm702, %v708, %v710
      %v712 = vrot.slane %v686, 3
      %v713 = vsel %vm702, %v710, %v712
      %v714 = vrot.slane %v687, 3
      %v715 = vsel %vm702, %v712, %v714
      %v716 = vrot.slane %v688, 3
      %v717 = vsel %vm702, %v714, %v716
      %v718 = vrot.slane %v689, 3
      %v719 = vsel %vm702, %v716, %v718
      %v720 = vrot.slane %v690, 3
      %v721 = vsel %vm702, %v718, %v720
      %v722 = vrot.slane %v691, 3
      %v723 = vsel %vm702, %v720, %v722
      %v724 = vrot.slane %v692, 3
      %v725 = vsel %vm702, %v722, %v724
      %v726 = vrot.slane %v693, 3
      %v727 = vsel %vm702, %v724, %v726
      %v728 = vrot.slane %v694, 3
      %v729 = vsel %vm702, %v726, %v728
      %v730 = vrot.slane %v695, 3
      %v731 = vsel %vm702, %v728, %v730
      %v732 = vrot.slane %v696, 3
      %v733 = vsel %vm702, %v730, %v732
      %v734 = vrot.slane %v697, 3
      %v735 = vsel %vm702, %v732, %v734
      %v736 = vrot.slane %v698, 3
      %v737 = vsel %vm702, %v734, %v736
      %v738 = vrot.slane %v699, 3
      %v739 = vsel %vm702, %v736, %v738
      %v740 = vrot.slane %v700, 3
      %v741 = vsel %vm702, %v738, %v740
      %v742 = vrot.slane %v701, 3
      %v743 = vsel %vm702, %v740, %v742
      %v781 = vunpack.c.l.b16 %v581
      %v782 = vunpack.c.l.b16 %v582
      %v783 = vunpack.c.l.b16 %v583
      %v784 = vunpack.c.l.b16 %v584
      %v785 = vunpack.c.l.b16 %v585
      %v786 = vunpack.c.l.b16 %v586
      %v787 = vunpack.c.l.b16 %v587
      %v788 = vunpack.c.l.b16 %v588
      %v789 = vunpack.c.l.b16 %v589
      %v790 = vunpack.c.l.b16 %v590
      %v791 = vunpack.c.l.b16 %v591
      %v792 = vunpack.c.l.b16 %v592
      %v793 = vunpack.c.l.b16 %v593
      %v794 = vunpack.c.l.b16 %v594
      %v795 = vunpack.c.l.b16 %v595
      %v796 = vunpack.c.l.b16 %v596
      %v797 = vpack.c.b16 %v782, %v781
      %v798 = vpack.c.b16 %v784, %v783
      %v799 = vpack.c.b16 %v786, %v785
      %v800 = vpack.c.b16 %v788, %v787
      %v801 = vpack.c.b16 %v790, %v789
      %v802 = vpack.c.b16 %v792, %v791
      %v803 = vpack.c.b16 %v794, %v793
      %v804 = vpack.c.b16 %v796, %v795
      %813 = vmatprep.subr.bf16.mxu0 0
      %814 = vmatpush1.bf16.msra.mxu0 %v804
      %815 = vmatprep.subr.bf16.mxu0 0
      %816 = vmatpush1.bf16.msra.mxu0 %v803
      %817 = vmatprep.subr.bf16.mxu0 0
      %818 = vmatpush1.bf16.msra.mxu0 %v802
      %819 = vmatprep.subr.bf16.mxu0 0
      %820 = vmatpush1.bf16.msra.mxu0 %v801
      %821 = vmatprep.subr.bf16.mxu0 0
      %822 = vmatpush1.bf16.msra.mxu0 %v800
      %823 = vmatprep.subr.bf16.mxu0 0
      %824 = vmatpush1.bf16.msra.mxu0 %v799
      %825 = vmatprep.subr.bf16.mxu0 0
      %826 = vmatpush1.bf16.msra.mxu0 %v798
      %827 = vmatprep.subr.bf16.mxu0 0
      %828 = vmatpush1.bf16.msra.mxu0 %v797
      %829 = vmatprep.subr.bf16.mxu0 0
      %830 = vmatpush2.bf16.msra.mxu0 0
      %831 = vmatprep.subr.bf16.mxu0 0
      %832 = vmatpush2.bf16.msra.mxu0 0
      %833 = vmatprep.subr.bf16.mxu0 0
      %834 = vmatpush2.bf16.msra.mxu0 0
      %835 = vmatprep.subr.bf16.mxu0 0
      %836 = vmatpush2.bf16.msra.mxu0 0
      %837 = vmatprep.subr.bf16.mxu0 0
      %838 = vmatpush2.bf16.msra.mxu0 0
      %839 = vmatprep.subr.bf16.mxu0 0
      %840 = vmatpush2.bf16.msra.mxu0 0
      %841 = vmatprep.subr.bf16.mxu0 0
      %842 = vmatpush2.bf16.msra.mxu0 0
      %843 = vmatprep.subr.bf16.mxu0 0
      %844 = vmatpush2.bf16.msra.mxu0 0
      %845 = vmatprep.mubr.bf16.mxu0 0
      %846 = vmatmul.mubr.bf16.gmra.mxu0 %v705
      %v847 = vpop.f32.mrf.mxu0
      %v848 = vadd.f32 0.0, %v847
      %v849 = vpop.f32.mrf.mxu0
      %v850 = vpop.f32.mrf.mxu0
      %v851 = vadd.f32 0.0, %v850
      %v852 = vpop.f32.mrf.mxu0
      %853 = vmatprep.mubr.bf16.mxu0 0
      %854 = vmatmul.mubr.bf16.gmra.mxu0 %v707
      %v855 = vpop.f32.mrf.mxu0
      %v856 = vadd.f32 0.0, %v855
      %v857 = vpop.f32.mrf.mxu0
      %v858 = vpop.f32.mrf.mxu0
      %v859 = vadd.f32 0.0, %v858
      %v860 = vpop.f32.mrf.mxu0
      %861 = vmatprep.mubr.bf16.mxu0 0
      %862 = vmatmul.mubr.bf16.gmra.mxu0 %v709
      %v863 = vpop.f32.mrf.mxu0
      %v864 = vadd.f32 0.0, %v863
      %v865 = vpop.f32.mrf.mxu0
      %v866 = vpop.f32.mrf.mxu0
      %v867 = vadd.f32 0.0, %v866
      %v868 = vpop.f32.mrf.mxu0
      %869 = vmatprep.mubr.bf16.mxu0 0
      %870 = vmatmul.mubr.bf16.gmra.mxu0 %v711
      %v871 = vpop.f32.mrf.mxu0
      %v872 = vadd.f32 0.0, %v871
      %v873 = vpop.f32.mrf.mxu0
      %v874 = vpop.f32.mrf.mxu0
      %v875 = vadd.f32 0.0, %v874
      %v876 = vpop.f32.mrf.mxu0
      %877 = vmatprep.mubr.bf16.mxu0 0
      %878 = vmatmul.mubr.bf16.gmra.mxu0 %v713
      %v879 = vpop.f32.mrf.mxu0
      %v880 = vadd.f32 0.0, %v879
      %v881 = vpop.f32.mrf.mxu0
      %v882 = vpop.f32.mrf.mxu0
      %v883 = vadd.f32 0.0, %v882
      %v884 = vpop.f32.mrf.mxu0
      %885 = vmatprep.mubr.bf16.mxu0 0
      %886 = vmatmul.mubr.bf16.gmra.mxu0 %v715
      %v887 = vpop.f32.mrf.mxu0
      %v888 = vadd.f32 0.0, %v887
      %v889 = vpop.f32.mrf.mxu0
      %v890 = vpop.f32.mrf.mxu0
      %v891 = vadd.f32 0.0, %v890
      %v892 = vpop.f32.mrf.mxu0
      %893 = vmatprep.mubr.bf16.mxu0 0
      %894 = vmatmul.mubr.bf16.gmra.mxu0 %v717
      %v895 = vpop.f32.mrf.mxu0
      %v896 = vadd.f32 0.0, %v895
      %v897 = vpop.f32.mrf.mxu0
      %v898 = vpop.f32.mrf.mxu0
      %v899 = vadd.f32 0.0, %v898
      %v900 = vpop.f32.mrf.mxu0
      %901 = vmatprep.mubr.bf16.mxu0 0
      %902 = vmatmul.mubr.bf16.gmra.mxu0 %v719
      %v903 = vpop.f32.mrf.mxu0
      %v904 = vadd.f32 0.0, %v903
      %v905 = vpop.f32.mrf.mxu0
      %v906 = vpop.f32.mrf.mxu0
      %v907 = vadd.f32 0.0, %v906
      %v908 = vpop.f32.mrf.mxu0
      %909 = vmatprep.mubr.bf16.mxu0 0
      %910 = vmatmul.mubr.bf16.gmra.mxu0 %v721
      %v911 = vpop.f32.mrf.mxu0
      %v912 = vadd.f32 0.0, %v911
      %v913 = vpop.f32.mrf.mxu0
      %v914 = vpop.f32.mrf.mxu0
      %v915 = vadd.f32 0.0, %v914
      %v916 = vpop.f32.mrf.mxu0
      %917 = vmatprep.mubr.bf16.mxu0 0
      %918 = vmatmul.mubr.bf16.gmra.mxu0 %v723
      %v919 = vpop.f32.mrf.mxu0
      %v920 = vadd.f32 0.0, %v919
      %v921 = vpop.f32.mrf.mxu0
      %v922 = vpop.f32.mrf.mxu0
      %v923 = vadd.f32 0.0, %v922
      %v924 = vpop.f32.mrf.mxu0
      %925 = vmatprep.mubr.bf16.mxu0 0
      %926 = vmatmul.mubr.bf16.gmra.mxu0 %v725
      %v927 = vpop.f32.mrf.mxu0
      %v928 = vadd.f32 0.0, %v927
      %v929 = vpop.f32.mrf.mxu0
      %v930 = vpop.f32.mrf.mxu0
      %v931 = vadd.f32 0.0, %v930
      %v932 = vpop.f32.mrf.mxu0
      %933 = vmatprep.mubr.bf16.mxu0 0
      %934 = vmatmul.mubr.bf16.gmra.mxu0 %v727
      %v935 = vpop.f32.mrf.mxu0
      %v936 = vadd.f32 0.0, %v935
      %v937 = vpop.f32.mrf.mxu0
      %v938 = vpop.f32.mrf.mxu0
      %v939 = vadd.f32 0.0, %v938
      %v940 = vpop.f32.mrf.mxu0
      %941 = vmatprep.mubr.bf16.mxu0 0
      %942 = vmatmul.mubr.bf16.gmra.mxu0 %v729
      %v943 = vpop.f32.mrf.mxu0
      %v944 = vadd.f32 0.0, %v943
      %v945 = vpop.f32.mrf.mxu0
      %v946 = vpop.f32.mrf.mxu0
      %v947 = vadd.f32 0.0, %v946
      %v948 = vpop.f32.mrf.mxu0
      %949 = vmatprep.mubr.bf16.mxu0 0
      %950 = vmatmul.mubr.bf16.gmra.mxu0 %v731
      %v951 = vpop.f32.mrf.mxu0
      %v952 = vadd.f32 0.0, %v951
      %v953 = vpop.f32.mrf.mxu0
      %v954 = vpop.f32.mrf.mxu0
      %v955 = vadd.f32 0.0, %v954
      %v956 = vpop.f32.mrf.mxu0
      %957 = vmatprep.mubr.bf16.mxu0 0
      %958 = vmatmul.mubr.bf16.gmra.mxu0 %v733
      %v959 = vpop.f32.mrf.mxu0
      %v960 = vadd.f32 0.0, %v959
      %v961 = vpop.f32.mrf.mxu0
      %v962 = vpop.f32.mrf.mxu0
      %v963 = vadd.f32 0.0, %v962
      %v964 = vpop.f32.mrf.mxu0
      %965 = vmatprep.mubr.bf16.mxu0 0
      %966 = vmatmul.mubr.bf16.gmra.mxu0 %v735
      %v967 = vpop.f32.mrf.mxu0
      %v968 = vadd.f32 0.0, %v967
      %v969 = vpop.f32.mrf.mxu0
      %v970 = vpop.f32.mrf.mxu0
      %v971 = vadd.f32 0.0, %v970
      %v972 = vpop.f32.mrf.mxu0
      %973 = vmatprep.mubr.bf16.mxu0 0
      %974 = vmatmul.mubr.bf16.gmra.mxu0 %v737
      %v975 = vpop.f32.mrf.mxu0
      %v976 = vadd.f32 0.0, %v975
      %v977 = vpop.f32.mrf.mxu0
      %v978 = vpop.f32.mrf.mxu0
      %v979 = vadd.f32 0.0, %v978
      %v980 = vpop.f32.mrf.mxu0
      %981 = vmatprep.mubr.bf16.mxu0 0
      %982 = vmatmul.mubr.bf16.gmra.mxu0 %v739
      %v983 = vpop.f32.mrf.mxu0
      %v984 = vadd.f32 0.0, %v983
      %v985 = vpop.f32.mrf.mxu0
      %v986 = vpop.f32.mrf.mxu0
      %v987 = vadd.f32 0.0, %v986
      %v988 = vpop.f32.mrf.mxu0
      %989 = vmatprep.mubr.bf16.mxu0 0
      %990 = vmatmul.mubr.bf16.gmra.mxu0 %v741
      %v991 = vpop.f32.mrf.mxu0
      %v992 = vadd.f32 0.0, %v991
      %v993 = vpop.f32.mrf.mxu0
      %v994 = vpop.f32.mrf.mxu0
      %v995 = vadd.f32 0.0, %v994
      %v996 = vpop.f32.mrf.mxu0
      %997 = vmatprep.mubr.bf16.mxu0 0
      %998 = vmatmul.mubr.bf16.gmra.mxu0 %v743
      %v999 = vpop.f32.mrf.mxu0
      %v1000 = vadd.f32 0.0, %v999
      %v1001 = vpop.f32.mrf.mxu0
      %v1002 = vpop.f32.mrf.mxu0
      %v1003 = vadd.f32 0.0, %v1002
      %v1004 = vpop.f32.mrf.mxu0
      %1005 = vmatprep.mubr.bf16.mxu0 0
      %1006 = vmatmul.mubr.bf16.gmra.mxu0 %v742
      %v1007 = vpop.f32.mrf.mxu0
      %v1008 = vadd.f32 0.0, %v1007
      %v1009 = vpop.f32.mrf.mxu0
      %v1010 = vpop.f32.mrf.mxu0
      %v1011 = vpop.f32.mrf.mxu0
      %1012 = vdwg.mxu0
      %v1014 = vunpack.c.l.b16 %v522
      %v1015 = vpack.c.b16 %v640, %v1014
      %vm1016 = vsmask.f32 5376
      %v1018 = vshrl.u32 %v1015, 16
      %v1020 = vrot.slane %v1018, 2
      %v1021 = vshll.u32 %v1015, 16
      %v1023 = vrot.slane %v1021, 3
      %v1024 = vor.u32 %v1020, %v1023
      %v1026 = vshrl.u32 %v682, 16
      %v1028 = vrot.slane %v1026, 2
      %v1029 = vshll.u32 %v682, 16
      %v1031 = vrot.slane %v1029, 3
      %v1032 = vor.u32 %v1028, %v1031
      %v1033 = vsel %vm1016, %v1024, %v1032
      %v1035 = vshrl.u32 %v683, 16
      %v1037 = vrot.slane %v1035, 2
      %v1038 = vshll.u32 %v683, 16
      %v1040 = vrot.slane %v1038, 3
      %v1041 = vor.u32 %v1037, %v1040
      %v1042 = vsel %vm1016, %v1032, %v1041
      %v1044 = vshrl.u32 %v684, 16
      %v1046 = vrot.slane %v1044, 2
      %v1047 = vshll.u32 %v684, 16
      %v1049 = vrot.slane %v1047, 3
      %v1050 = vor.u32 %v1046, %v1049
      %v1051 = vsel %vm1016, %v1041, %v1050
      %v1053 = vshrl.u32 %v685, 16
      %v1055 = vrot.slane %v1053, 2
      %v1056 = vshll.u32 %v685, 16
      %v1058 = vrot.slane %v1056, 3
      %v1059 = vor.u32 %v1055, %v1058
      %v1060 = vsel %vm1016, %v1050, %v1059
      %v1062 = vshrl.u32 %v686, 16
      %v1064 = vrot.slane %v1062, 2
      %v1065 = vshll.u32 %v686, 16
      %v1067 = vrot.slane %v1065, 3
      %v1068 = vor.u32 %v1064, %v1067
      %v1069 = vsel %vm1016, %v1059, %v1068
      %v1071 = vshrl.u32 %v687, 16
      %v1073 = vrot.slane %v1071, 2
      %v1074 = vshll.u32 %v687, 16
      %v1076 = vrot.slane %v1074, 3
      %v1077 = vor.u32 %v1073, %v1076
      %v1078 = vsel %vm1016, %v1068, %v1077
      %v1080 = vshrl.u32 %v688, 16
      %v1082 = vrot.slane %v1080, 2
      %v1083 = vshll.u32 %v688, 16
      %v1085 = vrot.slane %v1083, 3
      %v1086 = vor.u32 %v1082, %v1085
      %v1087 = vsel %vm1016, %v1077, %v1086
      %v1089 = vshrl.u32 %v689, 16
      %v1091 = vrot.slane %v1089, 2
      %v1092 = vshll.u32 %v689, 16
      %v1094 = vrot.slane %v1092, 3
      %v1095 = vor.u32 %v1091, %v1094
      %v1096 = vsel %vm1016, %v1086, %v1095
      %v1098 = vshrl.u32 %v690, 16
      %v1100 = vrot.slane %v1098, 2
      %v1101 = vshll.u32 %v690, 16
      %v1103 = vrot.slane %v1101, 3
      %v1104 = vor.u32 %v1100, %v1103
      %v1105 = vsel %vm1016, %v1095, %v1104
      %v1107 = vshrl.u32 %v691, 16
      %v1109 = vrot.slane %v1107, 2
      %v1110 = vshll.u32 %v691, 16
      %v1112 = vrot.slane %v1110, 3
      %v1113 = vor.u32 %v1109, %v1112
      %v1114 = vsel %vm1016, %v1104, %v1113
      %v1116 = vshrl.u32 %v692, 16
      %v1118 = vrot.slane %v1116, 2
      %v1119 = vshll.u32 %v692, 16
      %v1121 = vrot.slane %v1119, 3
      %v1122 = vor.u32 %v1118, %v1121
      %v1123 = vsel %vm1016, %v1113, %v1122
      %v1125 = vshrl.u32 %v693, 16
      %v1127 = vrot.slane %v1125, 2
      %v1128 = vshll.u32 %v693, 16
      %v1130 = vrot.slane %v1128, 3
      %v1131 = vor.u32 %v1127, %v1130
      %v1132 = vsel %vm1016, %v1122, %v1131
      %v1134 = vshrl.u32 %v694, 16
      %v1136 = vrot.slane %v1134, 2
      %v1137 = vshll.u32 %v694, 16
      %v1139 = vrot.slane %v1137, 3
      %v1140 = vor.u32 %v1136, %v1139
      %v1141 = vsel %vm1016, %v1131, %v1140
      %v1143 = vshrl.u32 %v695, 16
      %v1145 = vrot.slane %v1143, 2
      %v1146 = vshll.u32 %v695, 16
      %v1148 = vrot.slane %v1146, 3
      %v1149 = vor.u32 %v1145, %v1148
      %v1150 = vsel %vm1016, %v1140, %v1149
      %v1152 = vshrl.u32 %v696, 16
      %v1154 = vrot.slane %v1152, 2
      %v1155 = vshll.u32 %v696, 16
      %v1157 = vrot.slane %v1155, 3
      %v1158 = vor.u32 %v1154, %v1157
      %v1159 = vsel %vm1016, %v1149, %v1158
      %v1161 = vshrl.u32 %v697, 16
      %v1163 = vrot.slane %v1161, 2
      %v1164 = vshll.u32 %v697, 16
      %v1166 = vrot.slane %v1164, 3
      %v1167 = vor.u32 %v1163, %v1166
      %v1168 = vsel %vm1016, %v1158, %v1167
      %v1170 = vshrl.u32 %v698, 16
      %v1172 = vrot.slane %v1170, 2
      %v1173 = vshll.u32 %v698, 16
      %v1175 = vrot.slane %v1173, 3
      %v1176 = vor.u32 %v1172, %v1175
      %v1177 = vsel %vm1016, %v1167, %v1176
      %v1179 = vshrl.u32 %v699, 16
      %v1181 = vrot.slane %v1179, 2
      %v1182 = vshll.u32 %v699, 16
      %v1184 = vrot.slane %v1182, 3
      %v1185 = vor.u32 %v1181, %v1184
      %v1186 = vsel %vm1016, %v1176, %v1185
      %v1188 = vshrl.u32 %v700, 16
      %v1190 = vrot.slane %v1188, 2
      %v1191 = vshll.u32 %v700, 16
      %v1193 = vrot.slane %v1191, 3
      %v1194 = vor.u32 %v1190, %v1193
      %v1195 = vsel %vm1016, %v1185, %v1194
      %v1197 = vshrl.u32 %v701, 16
      %v1199 = vrot.slane %v1197, 2
      %v1200 = vshll.u32 %v701, 16
      %v1202 = vrot.slane %v1200, 3
      %v1203 = vor.u32 %v1199, %v1202
      %v1204 = vsel %vm1016, %v1194, %v1203
      %v1242 = vunpack.c.l.b16 %v564
      %v1243 = vunpack.c.l.b16 %v565
      %v1244 = vunpack.c.l.b16 %v566
      %v1245 = vunpack.c.l.b16 %v567
      %v1246 = vunpack.c.l.b16 %v568
      %v1247 = vunpack.c.l.b16 %v569
      %v1248 = vunpack.c.l.b16 %v570
      %v1249 = vunpack.c.l.b16 %v571
      %v1250 = vunpack.c.l.b16 %v572
      %v1251 = vunpack.c.l.b16 %v573
      %v1252 = vunpack.c.l.b16 %v574
      %v1253 = vunpack.c.l.b16 %v575
      %v1254 = vunpack.c.l.b16 %v576
      %v1255 = vunpack.c.l.b16 %v577
      %v1256 = vunpack.c.l.b16 %v578
      %v1257 = vunpack.c.l.b16 %v579
      %v1258 = vpack.c.b16 %v1243, %v1242
      %v1259 = vpack.c.b16 %v1245, %v1244
      %v1260 = vpack.c.b16 %v1247, %v1246
      %v1261 = vpack.c.b16 %v1249, %v1248
      %v1262 = vpack.c.b16 %v1251, %v1250
      %v1263 = vpack.c.b16 %v1253, %v1252
      %v1264 = vpack.c.b16 %v1255, %v1254
      %v1265 = vpack.c.b16 %v1257, %v1256
      %1274 = vmatprep.subr.bf16.mxu0 0
      %1275 = vmatpush1.bf16.msra.mxu0 %v1265
      %1276 = vmatprep.subr.bf16.mxu0 0
      %1277 = vmatpush1.bf16.msra.mxu0 %v1264
      %1278 = vmatprep.subr.bf16.mxu0 0
      %1279 = vmatpush1.bf16.msra.mxu0 %v1263
      %1280 = vmatprep.subr.bf16.mxu0 0
      %1281 = vmatpush1.bf16.msra.mxu0 %v1262
      %1282 = vmatprep.subr.bf16.mxu0 0
      %1283 = vmatpush1.bf16.msra.mxu0 %v1261
      %1284 = vmatprep.subr.bf16.mxu0 0
      %1285 = vmatpush1.bf16.msra.mxu0 %v1260
      %1286 = vmatprep.subr.bf16.mxu0 0
      %1287 = vmatpush1.bf16.msra.mxu0 %v1259
      %1288 = vmatprep.subr.bf16.mxu0 0
      %1289 = vmatpush1.bf16.msra.mxu0 %v1258
      %1290 = vmatprep.subr.bf16.mxu0 0
      %1291 = vmatpush2.bf16.msra.mxu0 0
      %1292 = vmatprep.subr.bf16.mxu0 0
      %1293 = vmatpush2.bf16.msra.mxu0 0
      %1294 = vmatprep.subr.bf16.mxu0 0
      %1295 = vmatpush2.bf16.msra.mxu0 0
      %1296 = vmatprep.subr.bf16.mxu0 0
      %1297 = vmatpush2.bf16.msra.mxu0 0
      %1298 = vmatprep.subr.bf16.mxu0 0
      %1299 = vmatpush2.bf16.msra.mxu0 0
      %1300 = vmatprep.subr.bf16.mxu0 0
      %1301 = vmatpush2.bf16.msra.mxu0 0
      %1302 = vmatprep.subr.bf16.mxu0 0
      %1303 = vmatpush2.bf16.msra.mxu0 0
      %1304 = vmatprep.subr.bf16.mxu0 0
      %1305 = vmatpush2.bf16.msra.mxu0 0
      %1306 = vmatprep.mubr.bf16.mxu0 0
      %1307 = vmatmul.mubr.bf16.gmra.mxu0 %v1033
      %v1308 = vpop.f32.mrf.mxu0
      %v1309 = vadd.f32 %v848, %v1308
      %v1310 = vpop.f32.mrf.mxu0
      %v1311 = vpop.f32.mrf.mxu0
      %v1312 = vadd.f32 %v851, %v1311
      %v1313 = vpop.f32.mrf.mxu0
      %1314 = vmatprep.mubr.bf16.mxu0 0
      %1315 = vmatmul.mubr.bf16.gmra.mxu0 %v1042
      %v1316 = vpop.f32.mrf.mxu0
      %v1317 = vadd.f32 %v856, %v1316
      %v1318 = vpop.f32.mrf.mxu0
      %v1319 = vpop.f32.mrf.mxu0
      %v1320 = vadd.f32 %v859, %v1319
      %v1321 = vpop.f32.mrf.mxu0
      %1322 = vmatprep.mubr.bf16.mxu0 0
      %1323 = vmatmul.mubr.bf16.gmra.mxu0 %v1051
      %v1324 = vpop.f32.mrf.mxu0
      %v1325 = vadd.f32 %v864, %v1324
      %v1326 = vpop.f32.mrf.mxu0
      %v1327 = vpop.f32.mrf.mxu0
      %v1328 = vadd.f32 %v867, %v1327
      %v1329 = vpop.f32.mrf.mxu0
      %1330 = vmatprep.mubr.bf16.mxu0 0
      %1331 = vmatmul.mubr.bf16.gmra.mxu0 %v1060
      %v1332 = vpop.f32.mrf.mxu0
      %v1333 = vadd.f32 %v872, %v1332
      %v1334 = vpop.f32.mrf.mxu0
      %v1335 = vpop.f32.mrf.mxu0
      %v1336 = vadd.f32 %v875, %v1335
      %v1337 = vpop.f32.mrf.mxu0
      %1338 = vmatprep.mubr.bf16.mxu0 0
      %1339 = vmatmul.mubr.bf16.gmra.mxu0 %v1069
      %v1340 = vpop.f32.mrf.mxu0
      %v1341 = vadd.f32 %v880, %v1340
      %v1342 = vpop.f32.mrf.mxu0
      %v1343 = vpop.f32.mrf.mxu0
      %v1344 = vadd.f32 %v883, %v1343
      %v1345 = vpop.f32.mrf.mxu0
      %1346 = vmatprep.mubr.bf16.mxu0 0
      %1347 = vmatmul.mubr.bf16.gmra.mxu0 %v1078
      %v1348 = vpop.f32.mrf.mxu0
      %v1349 = vadd.f32 %v888, %v1348
      %v1350 = vpop.f32.mrf.mxu0
      %v1351 = vpop.f32.mrf.mxu0
      %v1352 = vadd.f32 %v891, %v1351
      %v1353 = vpop.f32.mrf.mxu0
      %1354 = vmatprep.mubr.bf16.mxu0 0
      %1355 = vmatmul.mubr.bf16.gmra.mxu0 %v1087
      %v1356 = vpop.f32.mrf.mxu0
      %v1357 = vadd.f32 %v896, %v1356
      %v1358 = vpop.f32.mrf.mxu0
      %v1359 = vpop.f32.mrf.mxu0
      %v1360 = vadd.f32 %v899, %v1359
      %v1361 = vpop.f32.mrf.mxu0
      %1362 = vmatprep.mubr.bf16.mxu0 0
      %1363 = vmatmul.mubr.bf16.gmra.mxu0 %v1096
      %v1364 = vpop.f32.mrf.mxu0
      %v1365 = vadd.f32 %v904, %v1364
      %v1366 = vpop.f32.mrf.mxu0
      %v1367 = vpop.f32.mrf.mxu0
      %v1368 = vadd.f32 %v907, %v1367
      %v1369 = vpop.f32.mrf.mxu0
      %1370 = vmatprep.mubr.bf16.mxu0 0
      %1371 = vmatmul.mubr.bf16.gmra.mxu0 %v1105
      %v1372 = vpop.f32.mrf.mxu0
      %v1373 = vadd.f32 %v912, %v1372
      %v1374 = vpop.f32.mrf.mxu0
      %v1375 = vpop.f32.mrf.mxu0
      %v1376 = vadd.f32 %v915, %v1375
      %v1377 = vpop.f32.mrf.mxu0
      %1378 = vmatprep.mubr.bf16.mxu0 0
      %1379 = vmatmul.mubr.bf16.gmra.mxu0 %v1114
      %v1380 = vpop.f32.mrf.mxu0
      %v1381 = vadd.f32 %v920, %v1380
      %v1382 = vpop.f32.mrf.mxu0
      %v1383 = vpop.f32.mrf.mxu0
      %v1384 = vadd.f32 %v923, %v1383
      %v1385 = vpop.f32.mrf.mxu0
      %1386 = vmatprep.mubr.bf16.mxu0 0
      %1387 = vmatmul.mubr.bf16.gmra.mxu0 %v1123
      %v1388 = vpop.f32.mrf.mxu0
      %v1389 = vadd.f32 %v928, %v1388
      %v1390 = vpop.f32.mrf.mxu0
      %v1391 = vpop.f32.mrf.mxu0
      %v1392 = vadd.f32 %v931, %v1391
      %v1393 = vpop.f32.mrf.mxu0
      %1394 = vmatprep.mubr.bf16.mxu0 0
      %1395 = vmatmul.mubr.bf16.gmra.mxu0 %v1132
      %v1396 = vpop.f32.mrf.mxu0
      %v1397 = vadd.f32 %v936, %v1396
      %v1398 = vpop.f32.mrf.mxu0
      %v1399 = vpop.f32.mrf.mxu0
      %v1400 = vadd.f32 %v939, %v1399
      %v1401 = vpop.f32.mrf.mxu0
      %1402 = vmatprep.mubr.bf16.mxu0 0
      %1403 = vmatmul.mubr.bf16.gmra.mxu0 %v1141
      %v1404 = vpop.f32.mrf.mxu0
      %v1405 = vadd.f32 %v944, %v1404
      %v1406 = vpop.f32.mrf.mxu0
      %v1407 = vpop.f32.mrf.mxu0
      %v1408 = vadd.f32 %v947, %v1407
      %v1409 = vpop.f32.mrf.mxu0
      %1410 = vmatprep.mubr.bf16.mxu0 0
      %1411 = vmatmul.mubr.bf16.gmra.mxu0 %v1150
      %v1412 = vpop.f32.mrf.mxu0
      %v1413 = vadd.f32 %v952, %v1412
      %v1414 = vpop.f32.mrf.mxu0
      %v1415 = vpop.f32.mrf.mxu0
      %v1416 = vadd.f32 %v955, %v1415
      %v1417 = vpop.f32.mrf.mxu0
      %1418 = vmatprep.mubr.bf16.mxu0 0
      %1419 = vmatmul.mubr.bf16.gmra.mxu0 %v1159
      %v1420 = vpop.f32.mrf.mxu0
      %v1421 = vadd.f32 %v960, %v1420
      %v1422 = vpop.f32.mrf.mxu0
      %v1423 = vpop.f32.mrf.mxu0
      %v1424 = vadd.f32 %v963, %v1423
      %v1425 = vpop.f32.mrf.mxu0
      %1426 = vmatprep.mubr.bf16.mxu0 0
      %1427 = vmatmul.mubr.bf16.gmra.mxu0 %v1168
      %v1428 = vpop.f32.mrf.mxu0
      %v1429 = vadd.f32 %v968, %v1428
      %v1430 = vpop.f32.mrf.mxu0
      %v1431 = vpop.f32.mrf.mxu0
      %v1432 = vadd.f32 %v971, %v1431
      %v1433 = vpop.f32.mrf.mxu0
      %1434 = vmatprep.mubr.bf16.mxu0 0
      %1435 = vmatmul.mubr.bf16.gmra.mxu0 %v1177
      %v1436 = vpop.f32.mrf.mxu0
      %v1437 = vadd.f32 %v976, %v1436
      %v1438 = vpop.f32.mrf.mxu0
      %v1439 = vpop.f32.mrf.mxu0
      %v1440 = vadd.f32 %v979, %v1439
      %v1441 = vpop.f32.mrf.mxu0
      %1442 = vmatprep.mubr.bf16.mxu0 0
      %1443 = vmatmul.mubr.bf16.gmra.mxu0 %v1186
      %v1444 = vpop.f32.mrf.mxu0
      %v1445 = vadd.f32 %v984, %v1444
      %v1446 = vpop.f32.mrf.mxu0
      %v1447 = vpop.f32.mrf.mxu0
      %v1448 = vadd.f32 %v987, %v1447
      %v1449 = vpop.f32.mrf.mxu0
      %1450 = vmatprep.mubr.bf16.mxu0 0
      %1451 = vmatmul.mubr.bf16.gmra.mxu0 %v1195
      %v1452 = vpop.f32.mrf.mxu0
      %v1453 = vadd.f32 %v992, %v1452
      %v1454 = vpop.f32.mrf.mxu0
      %v1455 = vpop.f32.mrf.mxu0
      %v1456 = vadd.f32 %v995, %v1455
      %v1457 = vpop.f32.mrf.mxu0
      %1458 = vmatprep.mubr.bf16.mxu0 0
      %1459 = vmatmul.mubr.bf16.gmra.mxu0 %v1204
      %v1460 = vpop.f32.mrf.mxu0
      %v1461 = vadd.f32 %v1000, %v1460
      %v1462 = vpop.f32.mrf.mxu0
      %v1463 = vpop.f32.mrf.mxu0
      %v1464 = vadd.f32 %v1003, %v1463
      %v1465 = vpop.f32.mrf.mxu0
      %1466 = vmatprep.mubr.bf16.mxu0 0
      %1467 = vmatmul.mubr.bf16.gmra.mxu0 %v1203
      %v1468 = vpop.f32.mrf.mxu0
      %v1469 = vadd.f32 %v1008, %v1468
      %v1470 = vpop.f32.mrf.mxu0
      %v1471 = vpop.f32.mrf.mxu0
      %v1472 = vpop.f32.mrf.mxu0
      %1473 = vdwg.mxu0
      %v1474 = vld [vmem:[%s372 + $0xa4] sm:$0xf]
      %v1475 = vld [vmem:[%s8 + $0x80] sm:$0xf]
      %v1476 = vld [vmem:[%s8 + $0x84] sm:$0xf]
      %v1477 = vld [vmem:[%s8 + $0x88] sm:$0xf]
      %v1478 = vld [vmem:[%s8 + $0x8c] sm:$0xf]
      %v1479 = vld [vmem:[%s8 + $0x90] sm:$0xf]
      %v1480 = vld [vmem:[%s8 + $0x94] sm:$0xf]
      %v1481 = vld [vmem:[%s8 + $0x98] sm:$0xf]
      %v1482 = vld [vmem:[%s8 + $0x9c] sm:$0xf]
      %v1483 = vld [vmem:[%s8 + $0xa0] sm:$0xf]
      %v1484 = vld [vmem:[%s8 + $0xa4] sm:$0xf]
      %v1485 = vld [vmem:[%s8 + $0xa8] sm:$0xf]
      %v1486 = vld [vmem:[%s8 + $0xac] sm:$0xf]
      %v1487 = vld [vmem:[%s8 + $0xb0] sm:$0xf]
      %v1488 = vld [vmem:[%s8 + $0xb4] sm:$0xf]
      %v1489 = vld [vmem:[%s8 + $0xb8] sm:$0xf]
      %v1490 = vld [vmem:[%s8 + $0xbc] sm:$0xf]
      %v1492 = vunpack.c.l.b16 %v1474
      %v1493 = vpack.c.b16 %v1492, %v679
      %vm1494 = vsmask.f32 4352
      %v1496 = vshrl.u32 %v681, 16
      %v1498 = vrot.slane %v1496, 3
      %v1499 = vshll.u32 %v681, 16
      %v1501 = vrot.slane %v1499, 4
      %v1502 = vor.u32 %v1498, %v1501
      %v1503 = vrot.slane %v1026, 3
      %v1504 = vrot.slane %v1029, 4
      %v1505 = vor.u32 %v1503, %v1504
      %v1506 = vsel %vm1494, %v1502, %v1505
      %v1507 = vrot.slane %v1035, 3
      %v1508 = vrot.slane %v1038, 4
      %v1509 = vor.u32 %v1507, %v1508
      %v1510 = vsel %vm1494, %v1505, %v1509
      %v1511 = vrot.slane %v1044, 3
      %v1512 = vrot.slane %v1047, 4
      %v1513 = vor.u32 %v1511, %v1512
      %v1514 = vsel %vm1494, %v1509, %v1513
      %v1515 = vrot.slane %v1053, 3
      %v1516 = vrot.slane %v1056, 4
      %v1517 = vor.u32 %v1515, %v1516
      %v1518 = vsel %vm1494, %v1513, %v1517
      %v1519 = vrot.slane %v1062, 3
      %v1520 = vrot.slane %v1065, 4
      %v1521 = vor.u32 %v1519, %v1520
      %v1522 = vsel %vm1494, %v1517, %v1521
      %v1523 = vrot.slane %v1071, 3
      %v1524 = vrot.slane %v1074, 4
      %v1525 = vor.u32 %v1523, %v1524
      %v1526 = vsel %vm1494, %v1521, %v1525
      %v1527 = vrot.slane %v1080, 3
      %v1528 = vrot.slane %v1083, 4
      %v1529 = vor.u32 %v1527, %v1528
      %v1530 = vsel %vm1494, %v1525, %v1529
      %v1531 = vrot.slane %v1089, 3
      %v1532 = vrot.slane %v1092, 4
      %v1533 = vor.u32 %v1531, %v1532
      %v1534 = vsel %vm1494, %v1529, %v1533
      %v1535 = vrot.slane %v1098, 3
      %v1536 = vrot.slane %v1101, 4
      %v1537 = vor.u32 %v1535, %v1536
      %v1538 = vsel %vm1494, %v1533, %v1537
      %v1539 = vrot.slane %v1107, 3
      %v1540 = vrot.slane %v1110, 4
      %v1541 = vor.u32 %v1539, %v1540
      %v1542 = vsel %vm1494, %v1537, %v1541
      %v1543 = vrot.slane %v1116, 3
      %v1544 = vrot.slane %v1119, 4
      %v1545 = vor.u32 %v1543, %v1544
      %v1546 = vsel %vm1494, %v1541, %v1545
      %v1547 = vrot.slane %v1125, 3
      %v1548 = vrot.slane %v1128, 4
      %v1549 = vor.u32 %v1547, %v1548
      %v1550 = vsel %vm1494, %v1545, %v1549
      %v1551 = vrot.slane %v1134, 3
      %v1552 = vrot.slane %v1137, 4
      %v1553 = vor.u32 %v1551, %v1552
      %v1554 = vsel %vm1494, %v1549, %v1553
      %v1555 = vrot.slane %v1143, 3
      %v1556 = vrot.slane %v1146, 4
      %v1557 = vor.u32 %v1555, %v1556
      %v1558 = vsel %vm1494, %v1553, %v1557
      %v1559 = vrot.slane %v1152, 3
      %v1560 = vrot.slane %v1155, 4
      %v1561 = vor.u32 %v1559, %v1560
      %v1562 = vsel %vm1494, %v1557, %v1561
      %v1563 = vrot.slane %v1161, 3
      %v1564 = vrot.slane %v1164, 4
      %v1565 = vor.u32 %v1563, %v1564
      %v1566 = vsel %vm1494, %v1561, %v1565
      %v1567 = vrot.slane %v1170, 3
      %v1568 = vrot.slane %v1173, 4
      %v1569 = vor.u32 %v1567, %v1568
      %v1570 = vsel %vm1494, %v1565, %v1569
      %v1571 = vrot.slane %v1179, 3
      %v1572 = vrot.slane %v1182, 4
      %v1573 = vor.u32 %v1571, %v1572
      %v1574 = vsel %vm1494, %v1569, %v1573
      %v1575 = vrot.slane %v1188, 3
      %v1576 = vrot.slane %v1191, 4
      %v1577 = vor.u32 %v1575, %v1576
      %v1578 = vsel %vm1494, %v1573, %v1577
      %v1580 = vshrl.u32 %v1493, 16
      %v1582 = vrot.slane %v1580, 3
      %v1583 = vshll.u32 %v1493, 16
      %v1585 = vrot.slane %v1583, 4
      %v1586 = vor.u32 %v1582, %v1585
      %v1587 = vsel %vm1494, %v1577, %v1586
      %v1625 = vunpack.c.l.b16 %v1475
      %v1626 = vunpack.c.l.b16 %v1476
      %v1627 = vunpack.c.l.b16 %v1477
      %v1628 = vunpack.c.l.b16 %v1478
      %v1629 = vunpack.c.l.b16 %v1479
      %v1630 = vunpack.c.l.b16 %v1480
      %v1631 = vunpack.c.l.b16 %v1481
      %v1632 = vunpack.c.l.b16 %v1482
      %v1633 = vunpack.c.l.b16 %v1483
      %v1634 = vunpack.c.l.b16 %v1484
      %v1635 = vunpack.c.l.b16 %v1485
      %v1636 = vunpack.c.l.b16 %v1486
      %v1637 = vunpack.c.l.b16 %v1487
      %v1638 = vunpack.c.l.b16 %v1488
      %v1639 = vunpack.c.l.b16 %v1489
      %v1640 = vunpack.c.l.b16 %v1490
      %v1641 = vpack.c.b16 %v1626, %v1625
      %v1642 = vpack.c.b16 %v1628, %v1627
      %v1643 = vpack.c.b16 %v1630, %v1629
      %v1644 = vpack.c.b16 %v1632, %v1631
      %v1645 = vpack.c.b16 %v1634, %v1633
      %v1646 = vpack.c.b16 %v1636, %v1635
      %v1647 = vpack.c.b16 %v1638, %v1637
      %v1648 = vpack.c.b16 %v1640, %v1639
      %1657 = vmatprep.subr.bf16.mxu0 0
      %1658 = vmatpush1.bf16.msra.mxu0 %v1648
      %1659 = vmatprep.subr.bf16.mxu0 0
      %1660 = vmatpush1.bf16.msra.mxu0 %v1647
      %1661 = vmatprep.subr.bf16.mxu0 0
      %1662 = vmatpush1.bf16.msra.mxu0 %v1646
      %1663 = vmatprep.subr.bf16.mxu0 0
      %1664 = vmatpush1.bf16.msra.mxu0 %v1645
      %1665 = vmatprep.subr.bf16.mxu0 0
      %1666 = vmatpush1.bf16.msra.mxu0 %v1644
      %1667 = vmatprep.subr.bf16.mxu0 0
      %1668 = vmatpush1.bf16.msra.mxu0 %v1643
      %1669 = vmatprep.subr.bf16.mxu0 0
      %1670 = vmatpush1.bf16.msra.mxu0 %v1642
      %1671 = vmatprep.subr.bf16.mxu0 0
      %1672 = vmatpush1.bf16.msra.mxu0 %v1641
      %1673 = vmatprep.subr.bf16.mxu0 0
      %1674 = vmatpush2.bf16.msra.mxu0 0
      %1675 = vmatprep.subr.bf16.mxu0 0
      %1676 = vmatpush2.bf16.msra.mxu0 0
      %1677 = vmatprep.subr.bf16.mxu0 0
      %1678 = vmatpush2.bf16.msra.mxu0 0
      %1679 = vmatprep.subr.bf16.mxu0 0
      %1680 = vmatpush2.bf16.msra.mxu0 0
      %1681 = vmatprep.subr.bf16.mxu0 0
      %1682 = vmatpush2.bf16.msra.mxu0 0
      %1683 = vmatprep.subr.bf16.mxu0 0
      %1684 = vmatpush2.bf16.msra.mxu0 0
      %1685 = vmatprep.subr.bf16.mxu0 0
      %1686 = vmatpush2.bf16.msra.mxu0 0
      %1687 = vmatprep.subr.bf16.mxu0 0
      %1688 = vmatpush2.bf16.msra.mxu0 0
      %1689 = vmatprep.mubr.bf16.mxu0 0
      %1690 = vmatmul.mubr.bf16.gmra.mxu0 %v1506
      %v1691 = vpop.f32.mrf.mxu0
      %v1692 = vadd.f32 0.0, %v1691
      %v1693 = vpop.f32.mrf.mxu0
      %v1694 = vpop.f32.mrf.mxu0
      %v1695 = vadd.f32 0.0, %v1694
      %v1696 = vpop.f32.mrf.mxu0
      %1697 = vmatprep.mubr.bf16.mxu0 0
      %1698 = vmatmul.mubr.bf16.gmra.mxu0 %v1510
      %v1699 = vpop.f32.mrf.mxu0
      %v1700 = vadd.f32 0.0, %v1699
      %v1701 = vpop.f32.mrf.mxu0
      %v1702 = vpop.f32.mrf.mxu0
      %v1703 = vadd.f32 0.0, %v1702
      %v1704 = vpop.f32.mrf.mxu0
      %1705 = vmatprep.mubr.bf16.mxu0 0
      %1706 = vmatmul.mubr.bf16.gmra.mxu0 %v1514
      %v1707 = vpop.f32.mrf.mxu0
      %v1708 = vadd.f32 0.0, %v1707
      %v1709 = vpop.f32.mrf.mxu0
      %v1710 = vpop.f32.mrf.mxu0
      %v1711 = vadd.f32 0.0, %v1710
      %v1712 = vpop.f32.mrf.mxu0
      %1713 = vmatprep.mubr.bf16.mxu0 0
      %1714 = vmatmul.mubr.bf16.gmra.mxu0 %v1518
      %v1715 = vpop.f32.mrf.mxu0
      %v1716 = vadd.f32 0.0, %v1715
      %v1717 = vpop.f32.mrf.mxu0
      %v1718 = vpop.f32.mrf.mxu0
      %v1719 = vadd.f32 0.0, %v1718
      %v1720 = vpop.f32.mrf.mxu0
      %1721 = vmatprep.mubr.bf16.mxu0 0
      %1722 = vmatmul.mubr.bf16.gmra.mxu0 %v1522
      %v1723 = vpop.f32.mrf.mxu0
      %v1724 = vadd.f32 0.0, %v1723
      %v1725 = vpop.f32.mrf.mxu0
      %v1726 = vpop.f32.mrf.mxu0
      %v1727 = vadd.f32 0.0, %v1726
      %v1728 = vpop.f32.mrf.mxu0
      %1729 = vmatprep.mubr.bf16.mxu0 0
      %1730 = vmatmul.mubr.bf16.gmra.mxu0 %v1526
      %v1731 = vpop.f32.mrf.mxu0
      %v1732 = vadd.f32 0.0, %v1731
      %v1733 = vpop.f32.mrf.mxu0
      %v1734 = vpop.f32.mrf.mxu0
      %v1735 = vadd.f32 0.0, %v1734
      %v1736 = vpop.f32.mrf.mxu0
      %1737 = vmatprep.mubr.bf16.mxu0 0
      %1738 = vmatmul.mubr.bf16.gmra.mxu0 %v1530
      %v1739 = vpop.f32.mrf.mxu0
      %v1740 = vadd.f32 0.0, %v1739
      %v1741 = vpop.f32.mrf.mxu0
      %v1742 = vpop.f32.mrf.mxu0
      %v1743 = vadd.f32 0.0, %v1742
      %v1744 = vpop.f32.mrf.mxu0
      %1745 = vmatprep.mubr.bf16.mxu0 0
      %1746 = vmatmul.mubr.bf16.gmra.mxu0 %v1534
      %v1747 = vpop.f32.mrf.mxu0
      %v1748 = vadd.f32 0.0, %v1747
      %v1749 = vpop.f32.mrf.mxu0
      %v1750 = vpop.f32.mrf.mxu0
      %v1751 = vadd.f32 0.0, %v1750
      %v1752 = vpop.f32.mrf.mxu0
      %1753 = vmatprep.mubr.bf16.mxu0 0
      %1754 = vmatmul.mubr.bf16.gmra.mxu0 %v1538
      %v1755 = vpop.f32.mrf.mxu0
      %v1756 = vadd.f32 0.0, %v1755
      %v1757 = vpop.f32.mrf.mxu0
      %v1758 = vpop.f32.mrf.mxu0
      %v1759 = vadd.f32 0.0, %v1758
      %v1760 = vpop.f32.mrf.mxu0
      %1761 = vmatprep.mubr.bf16.mxu0 0
      %1762 = vmatmul.mubr.bf16.gmra.mxu0 %v1542
      %v1763 = vpop.f32.mrf.mxu0
      %v1764 = vadd.f32 0.0, %v1763
      %v1765 = vpop.f32.mrf.mxu0
      %v1766 = vpop.f32.mrf.mxu0
      %v1767 = vadd.f32 0.0, %v1766
      %v1768 = vpop.f32.mrf.mxu0
      %1769 = vmatprep.mubr.bf16.mxu0 0
      %1770 = vmatmul.mubr.bf16.gmra.mxu0 %v1546
      %v1771 = vpop.f32.mrf.mxu0
      %v1772 = vadd.f32 0.0, %v1771
      %v1773 = vpop.f32.mrf.mxu0
      %v1774 = vpop.f32.mrf.mxu0
      %v1775 = vadd.f32 0.0, %v1774
      %v1776 = vpop.f32.mrf.mxu0
      %1777 = vmatprep.mubr.bf16.mxu0 0
      %1778 = vmatmul.mubr.bf16.gmra.mxu0 %v1550
      %v1779 = vpop.f32.mrf.mxu0
      %v1780 = vadd.f32 0.0, %v1779
      %v1781 = vpop.f32.mrf.mxu0
      %v1782 = vpop.f32.mrf.mxu0
      %v1783 = vadd.f32 0.0, %v1782
      %v1784 = vpop.f32.mrf.mxu0
      %1785 = vmatprep.mubr.bf16.mxu0 0
      %1786 = vmatmul.mubr.bf16.gmra.mxu0 %v1554
      %v1787 = vpop.f32.mrf.mxu0
      %v1788 = vadd.f32 0.0, %v1787
      %v1789 = vpop.f32.mrf.mxu0
      %v1790 = vpop.f32.mrf.mxu0
      %v1791 = vadd.f32 0.0, %v1790
      %v1792 = vpop.f32.mrf.mxu0
      %1793 = vmatprep.mubr.bf16.mxu0 0
      %1794 = vmatmul.mubr.bf16.gmra.mxu0 %v1558
      %v1795 = vpop.f32.mrf.mxu0
      %v1796 = vadd.f32 0.0, %v1795
      %v1797 = vpop.f32.mrf.mxu0
      %v1798 = vpop.f32.mrf.mxu0
      %v1799 = vadd.f32 0.0, %v1798
      %v1800 = vpop.f32.mrf.mxu0
      %1801 = vmatprep.mubr.bf16.mxu0 0
      %1802 = vmatmul.mubr.bf16.gmra.mxu0 %v1562
      %v1803 = vpop.f32.mrf.mxu0
      %v1804 = vadd.f32 0.0, %v1803
      %v1805 = vpop.f32.mrf.mxu0
      %v1806 = vpop.f32.mrf.mxu0
      %v1807 = vadd.f32 0.0, %v1806
      %v1808 = vpop.f32.mrf.mxu0
      %1809 = vmatprep.mubr.bf16.mxu0 0
      %1810 = vmatmul.mubr.bf16.gmra.mxu0 %v1566
      %v1811 = vpop.f32.mrf.mxu0
      %v1812 = vadd.f32 0.0, %v1811
      %v1813 = vpop.f32.mrf.mxu0
      %v1814 = vpop.f32.mrf.mxu0
      %v1815 = vadd.f32 0.0, %v1814
      %v1816 = vpop.f32.mrf.mxu0
      %1817 = vmatprep.mubr.bf16.mxu0 0
      %1818 = vmatmul.mubr.bf16.gmra.mxu0 %v1570
      %v1819 = vpop.f32.mrf.mxu0
      %v1820 = vadd.f32 0.0, %v1819
      %v1821 = vpop.f32.mrf.mxu0
      %v1822 = vpop.f32.mrf.mxu0
      %v1823 = vadd.f32 0.0, %v1822
      %v1824 = vpop.f32.mrf.mxu0
      %1825 = vmatprep.mubr.bf16.mxu0 0
      %1826 = vmatmul.mubr.bf16.gmra.mxu0 %v1574
      %v1827 = vpop.f32.mrf.mxu0
      %v1828 = vadd.f32 0.0, %v1827
      %v1829 = vpop.f32.mrf.mxu0
      %v1830 = vpop.f32.mrf.mxu0
      %v1831 = vadd.f32 0.0, %v1830
      %v1832 = vpop.f32.mrf.mxu0
      %1833 = vmatprep.mubr.bf16.mxu0 0
      %1834 = vmatmul.mubr.bf16.gmra.mxu0 %v1578
      %v1835 = vpop.f32.mrf.mxu0
      %v1836 = vadd.f32 0.0, %v1835
      %v1837 = vpop.f32.mrf.mxu0
      %v1838 = vpop.f32.mrf.mxu0
      %v1839 = vadd.f32 0.0, %v1838
      %v1840 = vpop.f32.mrf.mxu0
      %1841 = vmatprep.mubr.bf16.mxu0 0
      %1842 = vmatmul.mubr.bf16.gmra.mxu0 %v1587
      %v1843 = vpop.f32.mrf.mxu0
      %v1844 = vadd.f32 0.0, %v1843
      %v1845 = vpop.f32.mrf.mxu0
      %v1846 = vpop.f32.mrf.mxu0
      %v1847 = vadd.f32 0.0, %v1846
      %v1848 = vpop.f32.mrf.mxu0
      %1849 = vmatprep.mubr.bf16.mxu0 0
      %1850 = vmatmul.mubr.bf16.gmra.mxu0 %v1586
      %v1851 = vpop.f32.mrf.mxu0
      %v1852 = vadd.f32 0.0, %v1851
      %v1853 = vpop.f32.mrf.mxu0
      %v1854 = vpop.f32.mrf.mxu0
      %v1855 = vpop.f32.mrf.mxu0
      %1856 = vdwg.mxu0
      %v1857 = vadd.f32 %v1309, %v1692
      %v1858 = vadd.f32 %v1312, %v1695
      %v1859 = vadd.f32 %v1317, %v1700
      %v1860 = vadd.f32 %v1320, %v1703
      %v1861 = vadd.f32 %v1325, %v1708
      %v1862 = vadd.f32 %v1328, %v1711
      %v1863 = vadd.f32 %v1333, %v1716
      %v1864 = vadd.f32 %v1336, %v1719
      %v1865 = vadd.f32 %v1341, %v1724
      %v1866 = vadd.f32 %v1344, %v1727
      %v1867 = vadd.f32 %v1349, %v1732
      %v1868 = vadd.f32 %v1352, %v1735
      %v1869 = vadd.f32 %v1357, %v1740
      %v1870 = vadd.f32 %v1360, %v1743
      %v1871 = vadd.f32 %v1365, %v1748
      %v1872 = vadd.f32 %v1368, %v1751
      %v1873 = vadd.f32 %v1373, %v1756
      %v1874 = vadd.f32 %v1376, %v1759
      %v1875 = vadd.f32 %v1381, %v1764
      %v1876 = vadd.f32 %v1384, %v1767
      %v1877 = vadd.f32 %v1389, %v1772
      %v1878 = vadd.f32 %v1392, %v1775
      %v1879 = vadd.f32 %v1397, %v1780
      %v1880 = vadd.f32 %v1400, %v1783
      %v1881 = vadd.f32 %v1405, %v1788
      %v1882 = vadd.f32 %v1408, %v1791
      %v1883 = vadd.f32 %v1413, %v1796
      %v1884 = vadd.f32 %v1416, %v1799
      %v1885 = vadd.f32 %v1421, %v1804
      %v1886 = vadd.f32 %v1424, %v1807
      %v1887 = vadd.f32 %v1429, %v1812
      %v1888 = vadd.f32 %v1432, %v1815
      %v1889 = vadd.f32 %v1437, %v1820
      %v1890 = vadd.f32 %v1440, %v1823
      %v1891 = vadd.f32 %v1445, %v1828
      %v1892 = vadd.f32 %v1448, %v1831
      %v1893 = vadd.f32 %v1453, %v1836
      %v1894 = vadd.f32 %v1456, %v1839
      %v1895 = vadd.f32 %v1461, %v1844
      %v1896 = vadd.f32 %v1464, %v1847
      %v1897 = vadd.f32 %v1469, %v1852
      %v1898 = vld [vmem:[%s372 + $0x8] sm:$0x8]
      %v1899 = vld [vmem:[%s372 + $0xc] sm:$0xf]
      %v1900 = vld [vmem:[%s372 + $0x10] sm:$0xf]
      %v1901 = vld [vmem:[%s372 + $0x14] sm:$0xf]
      %v1902 = vld [vmem:[%s372 + $0x18] sm:$0xf]
      %v1903 = vld [vmem:[%s372 + $0x1c] sm:$0xf]
      %v1904 = vld [vmem:[%s372 + $0x20] sm:$0xf]
      %v1905 = vld [vmem:[%s372 + $0x24] sm:$0xf]
      %v1906 = vld [vmem:[%s372 + $0x28] sm:$0xf]
      %v1907 = vld [vmem:[%s372 + $0x2c] sm:$0xf]
      %v1908 = vld [vmem:[%s372 + $0x30] sm:$0xf]
      %v1909 = vld [vmem:[%s372 + $0x34] sm:$0xf]
      %v1910 = vld [vmem:[%s372 + $0x38] sm:$0xf]
      %v1911 = vld [vmem:[%s372 + $0x3c] sm:$0xf]
      %v1912 = vld [vmem:[%s372 + $0x40] sm:$0xf]
      %v1913 = vld [vmem:[%s372 + $0x44] sm:$0xf]
      %v1914 = vld [vmem:[%s372 + $0x48] sm:$0xf]
      %v1915 = vld [vmem:[%s372 + $0x4c] sm:$0xf]
      %v1916 = vld [vmem:[%s372 + $0x50] sm:$0xf]
      %v1917 = vld [vmem:[%s372 + $0x54] sm:$0xf]
      %v1918 = vld [vmem:[%s372 + $0x58] sm:$0xf]
      %v1919 = vld [vmem:[%s372 + $0x5c] sm:$0xf]
      %v1920 = vld [vmem:[%s372 + $0x60] sm:$0xf]
      %v1921 = vld [vmem:[%s372 + $0x64] sm:$0xf]
      %v1922 = vld [vmem:[%s372 + $0x68] sm:$0xf]
      %v1923 = vld [vmem:[%s372 + $0x6c] sm:$0xf]
      %v1924 = vld [vmem:[%s372 + $0x70] sm:$0xf]
      %v1925 = vld [vmem:[%s372 + $0x74] sm:$0xf]
      %v1926 = vld [vmem:[%s372 + $0x78] sm:$0xf]
      %v1927 = vld [vmem:[%s372 + $0x7c] sm:$0xf]
      %v1928 = vld [vmem:[%s372 + $0x80] sm:$0xf]
      %v1929 = vld [vmem:[%s372 + $0x84] sm:$0xf]
      %v1930 = vld [vmem:[%s372 + $0x88] sm:$0xf]
      %v1931 = vld [vmem:[%s372 + $0x8c] sm:$0xf]
      %v1932 = vld [vmem:[%s372 + $0x90] sm:$0xf]
      %v1933 = vld [vmem:[%s372 + $0x94] sm:$0xf]
      %v1934 = vld [vmem:[%s372 + $0x98] sm:$0xf]
      %v1935 = vld [vmem:[%s372 + $0x9c] sm:$0xf]
      %v1936 = vld [vmem:[%s372 + $0xa0] sm:$0xf]
      %v1937 = vld [vmem:[%s372 + $0xa4] sm:$0xf]
      %v1938 = vld [vmem:[%s372 + $0xa8] sm:$0xf]
      %v1939 = vld [vmem:[%s372 + $0xac] sm:$0xf]
      %v1940 = vld [vmem:[%s8 + $0xc0] sm:$0xf]
      %v1941 = vld [vmem:[%s8 + $0xc4] sm:$0xf]
      %v1942 = vld [vmem:[%s8 + $0xc8] sm:$0xf]
      %v1943 = vld [vmem:[%s8 + $0xcc] sm:$0xf]
      %v1944 = vld [vmem:[%s8 + $0xd0] sm:$0xf]
      %v1945 = vld [vmem:[%s8 + $0xd4] sm:$0xf]
      %v1946 = vld [vmem:[%s8 + $0xd8] sm:$0xf]
      %v1947 = vld [vmem:[%s8 + $0xdc] sm:$0xf]
      %v1948 = vld [vmem:[%s8 + $0xe0] sm:$0xf]
      %v1949 = vld [vmem:[%s8 + $0xe4] sm:$0xf]
      %v1950 = vld [vmem:[%s8 + $0xe8] sm:$0xf]
      %v1951 = vld [vmem:[%s8 + $0xec] sm:$0xf]
      %v1952 = vld [vmem:[%s8 + $0xf0] sm:$0xf]
      %v1953 = vld [vmem:[%s8 + $0xf4] sm:$0xf]
      %v1954 = vld [vmem:[%s8 + $0xf8] sm:$0xf]
      %v1955 = vld [vmem:[%s8 + $0xfc] sm:$0xf]
      %v1998 = vunpack.c.l.b16 %v1898
      %v1999 = vunpack.c.l.b16 %v1899
      %v2000 = vunpack.c.l.b16 %v1900
      %v2001 = vunpack.c.l.b16 %v1901
      %v2002 = vunpack.c.l.b16 %v1902
      %v2003 = vunpack.c.l.b16 %v1903
      %v2004 = vunpack.c.l.b16 %v1904
      %v2005 = vunpack.c.l.b16 %v1905
      %v2006 = vunpack.c.l.b16 %v1906
      %v2007 = vunpack.c.l.b16 %v1907
      %v2008 = vunpack.c.l.b16 %v1908
      %v2009 = vunpack.c.l.b16 %v1909
      %v2010 = vunpack.c.l.b16 %v1910
      %v2011 = vunpack.c.l.b16 %v1911
      %v2012 = vunpack.c.l.b16 %v1912
      %v2013 = vunpack.c.l.b16 %v1913
      %v2014 = vunpack.c.l.b16 %v1914
      %v2015 = vunpack.c.l.b16 %v1915
      %v2016 = vunpack.c.l.b16 %v1916
      %v2017 = vunpack.c.l.b16 %v1917
      %v2018 = vunpack.c.l.b16 %v1918
      %v2019 = vunpack.c.l.b16 %v1919
      %v2020 = vunpack.c.l.b16 %v1920
      %v2021 = vunpack.c.l.b16 %v1921
      %v2022 = vunpack.c.l.b16 %v1922
      %v2023 = vunpack.c.l.b16 %v1923
      %v2024 = vunpack.c.l.b16 %v1924
      %v2025 = vunpack.c.l.b16 %v1925
      %v2026 = vunpack.c.l.b16 %v1926
      %v2027 = vunpack.c.l.b16 %v1927
      %v2028 = vunpack.c.l.b16 %v1928
      %v2029 = vunpack.c.l.b16 %v1929
      %v2030 = vunpack.c.l.b16 %v1930
      %v2031 = vunpack.c.l.b16 %v1931
      %v2032 = vunpack.c.l.b16 %v1932
      %v2033 = vunpack.c.l.b16 %v1933
      %v2034 = vunpack.c.l.b16 %v1934
      %v2035 = vunpack.c.l.b16 %v1935
      %v2036 = vunpack.c.l.b16 %v1936
      %v2037 = vunpack.c.l.b16 %v1937
      %v2038 = vunpack.c.l.b16 %v1938
      %v2039 = vunpack.c.l.b16 %v1939
      %v2040 = vpack.c.b16 %v1999, %v1998
      %v2041 = vpack.c.b16 %v2001, %v2000
      %v2042 = vpack.c.b16 %v2003, %v2002
      %v2043 = vpack.c.b16 %v2005, %v2004
      %v2044 = vpack.c.b16 %v2007, %v2006
      %v2045 = vpack.c.b16 %v2009, %v2008
      %v2046 = vpack.c.b16 %v2011, %v2010
      %v2047 = vpack.c.b16 %v2013, %v2012
      %v2048 = vpack.c.b16 %v2015, %v2014
      %v2049 = vpack.c.b16 %v2017, %v2016
      %v2050 = vpack.c.b16 %v2019, %v2018
      %v2051 = vpack.c.b16 %v2021, %v2020
      %v2052 = vpack.c.b16 %v2023, %v2022
      %v2053 = vpack.c.b16 %v2025, %v2024
      %v2054 = vpack.c.b16 %v2027, %v2026
      %v2055 = vpack.c.b16 %v2029, %v2028
      %v2056 = vpack.c.b16 %v2031, %v2030
      %v2057 = vpack.c.b16 %v2033, %v2032
      %v2058 = vpack.c.b16 %v2035, %v2034
      %v2059 = vpack.c.b16 %v2037, %v2036
      %v2060 = vpack.c.b16 %v2039, %v2038
      %v2062 = vshrl.u32 %v2040, 16
      %v2064 = vrot.slane %v2062, 3
      %v2065 = vshll.u32 %v2040, 16
      %v2067 = vrot.slane %v2065, 4
      %v2068 = vor.u32 %v2064, %v2067
      %v2070 = vshrl.u32 %v2041, 16
      %v2072 = vrot.slane %v2070, 3
      %v2073 = vshll.u32 %v2041, 16
      %v2075 = vrot.slane %v2073, 4
      %v2076 = vor.u32 %v2072, %v2075
      %v2077 = vsel %vm1494, %v2068, %v2076
      %v2079 = vshrl.u32 %v2042, 16
      %v2081 = vrot.slane %v2079, 3
      %v2082 = vshll.u32 %v2042, 16
      %v2084 = vrot.slane %v2082, 4
      %v2085 = vor.u32 %v2081, %v2084
      %v2086 = vsel %vm1494, %v2076, %v2085
      %v2088 = vshrl.u32 %v2043, 16
      %v2090 = vrot.slane %v2088, 3
      %v2091 = vshll.u32 %v2043, 16
      %v2093 = vrot.slane %v2091, 4
      %v2094 = vor.u32 %v2090, %v2093
      %v2095 = vsel %vm1494, %v2085, %v2094
      %v2097 = vshrl.u32 %v2044, 16
      %v2099 = vrot.slane %v2097, 3
      %v2100 = vshll.u32 %v2044, 16
      %v2102 = vrot.slane %v2100, 4
      %v2103 = vor.u32 %v2099, %v2102
      %v2104 = vsel %vm1494, %v2094, %v2103
      %v2106 = vshrl.u32 %v2045, 16
      %v2108 = vrot.slane %v2106, 3
      %v2109 = vshll.u32 %v2045, 16
      %v2111 = vrot.slane %v2109, 4
      %v2112 = vor.u32 %v2108, %v2111
      %v2113 = vsel %vm1494, %v2103, %v2112
      %v2115 = vshrl.u32 %v2046, 16
      %v2117 = vrot.slane %v2115, 3
      %v2118 = vshll.u32 %v2046, 16
      %v2120 = vrot.slane %v2118, 4
      %v2121 = vor.u32 %v2117, %v2120
      %v2122 = vsel %vm1494, %v2112, %v2121
      %v2124 = vshrl.u32 %v2047, 16
      %v2126 = vrot.slane %v2124, 3
      %v2127 = vshll.u32 %v2047, 16
      %v2129 = vrot.slane %v2127, 4
      %v2130 = vor.u32 %v2126, %v2129
      %v2131 = vsel %vm1494, %v2121, %v2130
      %v2133 = vshrl.u32 %v2048, 16
      %v2135 = vrot.slane %v2133, 3
      %v2136 = vshll.u32 %v2048, 16
      %v2138 = vrot.slane %v2136, 4
      %v2139 = vor.u32 %v2135, %v2138
      %v2140 = vsel %vm1494, %v2130, %v2139
      %v2142 = vshrl.u32 %v2049, 16
      %v2144 = vrot.slane %v2142, 3
      %v2145 = vshll.u32 %v2049, 16
      %v2147 = vrot.slane %v2145, 4
      %v2148 = vor.u32 %v2144, %v2147
      %v2149 = vsel %vm1494, %v2139, %v2148
      %v2151 = vshrl.u32 %v2050, 16
      %v2153 = vrot.slane %v2151, 3
      %v2154 = vshll.u32 %v2050, 16
      %v2156 = vrot.slane %v2154, 4
      %v2157 = vor.u32 %v2153, %v2156
      %v2158 = vsel %vm1494, %v2148, %v2157
      %v2160 = vshrl.u32 %v2051, 16
      %v2162 = vrot.slane %v2160, 3
      %v2163 = vshll.u32 %v2051, 16
      %v2165 = vrot.slane %v2163, 4
      %v2166 = vor.u32 %v2162, %v2165
      %v2167 = vsel %vm1494, %v2157, %v2166
      %v2169 = vshrl.u32 %v2052, 16
      %v2171 = vrot.slane %v2169, 3
      %v2172 = vshll.u32 %v2052, 16
      %v2174 = vrot.slane %v2172, 4
      %v2175 = vor.u32 %v2171, %v2174
      %v2176 = vsel %vm1494, %v2166, %v2175
      %v2178 = vshrl.u32 %v2053, 16
      %v2180 = vrot.slane %v2178, 3
      %v2181 = vshll.u32 %v2053, 16
      %v2183 = vrot.slane %v2181, 4
      %v2184 = vor.u32 %v2180, %v2183
      %v2185 = vsel %vm1494, %v2175, %v2184
      %v2187 = vshrl.u32 %v2054, 16
      %v2189 = vrot.slane %v2187, 3
      %v2190 = vshll.u32 %v2054, 16
      %v2192 = vrot.slane %v2190, 4
      %v2193 = vor.u32 %v2189, %v2192
      %v2194 = vsel %vm1494, %v2184, %v2193
      %v2196 = vshrl.u32 %v2055, 16
      %v2198 = vrot.slane %v2196, 3
      %v2199 = vshll.u32 %v2055, 16
      %v2201 = vrot.slane %v2199, 4
      %v2202 = vor.u32 %v2198, %v2201
      %v2203 = vsel %vm1494, %v2193, %v2202
      %v2205 = vshrl.u32 %v2056, 16
      %v2207 = vrot.slane %v2205, 3
      %v2208 = vshll.u32 %v2056, 16
      %v2210 = vrot.slane %v2208, 4
      %v2211 = vor.u32 %v2207, %v2210
      %v2212 = vsel %vm1494, %v2202, %v2211
      %v2214 = vshrl.u32 %v2057, 16
      %v2216 = vrot.slane %v2214, 3
      %v2217 = vshll.u32 %v2057, 16
      %v2219 = vrot.slane %v2217, 4
      %v2220 = vor.u32 %v2216, %v2219
      %v2221 = vsel %vm1494, %v2211, %v2220
      %v2223 = vshrl.u32 %v2058, 16
      %v2225 = vrot.slane %v2223, 3
      %v2226 = vshll.u32 %v2058, 16
      %v2228 = vrot.slane %v2226, 4
      %v2229 = vor.u32 %v2225, %v2228
      %v2230 = vsel %vm1494, %v2220, %v2229
      %v2232 = vshrl.u32 %v2059, 16
      %v2234 = vrot.slane %v2232, 3
      %v2235 = vshll.u32 %v2059, 16
      %v2237 = vrot.slane %v2235, 4
      %v2238 = vor.u32 %v2234, %v2237
      %v2239 = vsel %vm1494, %v2229, %v2238
      %v2241 = vshrl.u32 %v2060, 16
      %v2243 = vrot.slane %v2241, 3
      %v2244 = vshll.u32 %v2060, 16
      %v2246 = vrot.slane %v2244, 4
      %v2247 = vor.u32 %v2243, %v2246
      %v2248 = vsel %vm1494, %v2238, %v2247
      %v2286 = vunpack.c.l.b16 %v1940
      %v2287 = vunpack.c.l.b16 %v1941
      %v2288 = vunpack.c.l.b16 %v1942
      %v2289 = vunpack.c.l.b16 %v1943
      %v2290 = vunpack.c.l.b16 %v1944
      %v2291 = vunpack.c.l.b16 %v1945
      %v2292 = vunpack.c.l.b16 %v1946
      %v2293 = vunpack.c.l.b16 %v1947
      %v2294 = vunpack.c.l.b16 %v1948
      %v2295 = vunpack.c.l.b16 %v1949
      %v2296 = vunpack.c.l.b16 %v1950
      %v2297 = vunpack.c.l.b16 %v1951
      %v2298 = vunpack.c.l.b16 %v1952
      %v2299 = vunpack.c.l.b16 %v1953
      %v2300 = vunpack.c.l.b16 %v1954
      %v2301 = vunpack.c.l.b16 %v1955
      %v2302 = vpack.c.b16 %v2287, %v2286
      %v2303 = vpack.c.b16 %v2289, %v2288
      %v2304 = vpack.c.b16 %v2291, %v2290
      %v2305 = vpack.c.b16 %v2293, %v2292
      %v2306 = vpack.c.b16 %v2295, %v2294
      %v2307 = vpack.c.b16 %v2297, %v2296
      %v2308 = vpack.c.b16 %v2299, %v2298
      %v2309 = vpack.c.b16 %v2301, %v2300
      %2318 = vmatprep.subr.bf16.mxu0 0
      %2319 = vmatpush1.bf16.msra.mxu0 %v2309
      %2320 = vmatprep.subr.bf16.mxu0 0
      %2321 = vmatpush1.bf16.msra.mxu0 %v2308
      %2322 = vmatprep.subr.bf16.mxu0 0
      %2323 = vmatpush1.bf16.msra.mxu0 %v2307
      %2324 = vmatprep.subr.bf16.mxu0 0
      %2325 = vmatpush1.bf16.msra.mxu0 %v2306
      %2326 = vmatprep.subr.bf16.mxu0 0
      %2327 = vmatpush1.bf16.msra.mxu0 %v2305
      %2328 = vmatprep.subr.bf16.mxu0 0
      %2329 = vmatpush1.bf16.msra.mxu0 %v2304
      %2330 = vmatprep.subr.bf16.mxu0 0
      %2331 = vmatpush1.bf16.msra.mxu0 %v2303
      %2332 = vmatprep.subr.bf16.mxu0 0
      %2333 = vmatpush1.bf16.msra.mxu0 %v2302
      %2334 = vmatprep.subr.bf16.mxu0 0
      %2335 = vmatpush2.bf16.msra.mxu0 0
      %2336 = vmatprep.subr.bf16.mxu0 0
      %2337 = vmatpush2.bf16.msra.mxu0 0
      %2338 = vmatprep.subr.bf16.mxu0 0
      %2339 = vmatpush2.bf16.msra.mxu0 0
      %2340 = vmatprep.subr.bf16.mxu0 0
      %2341 = vmatpush2.bf16.msra.mxu0 0
      %2342 = vmatprep.subr.bf16.mxu0 0
      %2343 = vmatpush2.bf16.msra.mxu0 0
      %2344 = vmatprep.subr.bf16.mxu0 0
      %2345 = vmatpush2.bf16.msra.mxu0 0
      %2346 = vmatprep.subr.bf16.mxu0 0
      %2347 = vmatpush2.bf16.msra.mxu0 0
      %2348 = vmatprep.subr.bf16.mxu0 0
      %2349 = vmatpush2.bf16.msra.mxu0 0
      %2350 = vmatprep.mubr.bf16.mxu0 0
      %2351 = vmatmul.mubr.bf16.gmra.mxu0 %v2077
      %v2352 = vpop.f32.mrf.mxu0
      %v2353 = vadd.f32 0.0, %v2352
      %v2354 = vpop.f32.mrf.mxu0
      %v2355 = vpop.f32.mrf.mxu0
      %v2356 = vadd.f32 0.0, %v2355
      %v2357 = vpop.f32.mrf.mxu0
      %2358 = vmatprep.mubr.bf16.mxu0 0
      %2359 = vmatmul.mubr.bf16.gmra.mxu0 %v2086
      %v2360 = vpop.f32.mrf.mxu0
      %v2361 = vadd.f32 0.0, %v2360
      %v2362 = vpop.f32.mrf.mxu0
      %v2363 = vpop.f32.mrf.mxu0
      %v2364 = vadd.f32 0.0, %v2363
      %v2365 = vpop.f32.mrf.mxu0
      %2366 = vmatprep.mubr.bf16.mxu0 0
      %2367 = vmatmul.mubr.bf16.gmra.mxu0 %v2095
      %v2368 = vpop.f32.mrf.mxu0
      %v2369 = vadd.f32 0.0, %v2368
      %v2370 = vpop.f32.mrf.mxu0
      %v2371 = vpop.f32.mrf.mxu0
      %v2372 = vadd.f32 0.0, %v2371
      %v2373 = vpop.f32.mrf.mxu0
      %2374 = vmatprep.mubr.bf16.mxu0 0
      %2375 = vmatmul.mubr.bf16.gmra.mxu0 %v2104
      %v2376 = vpop.f32.mrf.mxu0
      %v2377 = vadd.f32 0.0, %v2376
      %v2378 = vpop.f32.mrf.mxu0
      %v2379 = vpop.f32.mrf.mxu0
      %v2380 = vadd.f32 0.0, %v2379
      %v2381 = vpop.f32.mrf.mxu0
      %2382 = vmatprep.mubr.bf16.mxu0 0
      %2383 = vmatmul.mubr.bf16.gmra.mxu0 %v2113
      %v2384 = vpop.f32.mrf.mxu0
      %v2385 = vadd.f32 0.0, %v2384
      %v2386 = vpop.f32.mrf.mxu0
      %v2387 = vpop.f32.mrf.mxu0
      %v2388 = vadd.f32 0.0, %v2387
      %v2389 = vpop.f32.mrf.mxu0
      %2390 = vmatprep.mubr.bf16.mxu0 0
      %2391 = vmatmul.mubr.bf16.gmra.mxu0 %v2122
      %v2392 = vpop.f32.mrf.mxu0
      %v2393 = vadd.f32 0.0, %v2392
      %v2394 = vpop.f32.mrf.mxu0
      %v2395 = vpop.f32.mrf.mxu0
      %v2396 = vadd.f32 0.0, %v2395
      %v2397 = vpop.f32.mrf.mxu0
      %2398 = vmatprep.mubr.bf16.mxu0 0
      %2399 = vmatmul.mubr.bf16.gmra.mxu0 %v2131
      %v2400 = vpop.f32.mrf.mxu0
      %v2401 = vadd.f32 0.0, %v2400
      %v2402 = vpop.f32.mrf.mxu0
      %v2403 = vpop.f32.mrf.mxu0
      %v2404 = vadd.f32 0.0, %v2403
      %v2405 = vpop.f32.mrf.mxu0
      %2406 = vmatprep.mubr.bf16.mxu0 0
      %2407 = vmatmul.mubr.bf16.gmra.mxu0 %v2140
      %v2408 = vpop.f32.mrf.mxu0
      %v2409 = vadd.f32 0.0, %v2408
      %v2410 = vpop.f32.mrf.mxu0
      %v2411 = vpop.f32.mrf.mxu0
      %v2412 = vadd.f32 0.0, %v2411
      %v2413 = vpop.f32.mrf.mxu0
      %2414 = vmatprep.mubr.bf16.mxu0 0
      %2415 = vmatmul.mubr.bf16.gmra.mxu0 %v2149
      %v2416 = vpop.f32.mrf.mxu0
      %v2417 = vadd.f32 0.0, %v2416
      %v2418 = vpop.f32.mrf.mxu0
      %v2419 = vpop.f32.mrf.mxu0
      %v2420 = vadd.f32 0.0, %v2419
      %v2421 = vpop.f32.mrf.mxu0
      %2422 = vmatprep.mubr.bf16.mxu0 0
      %2423 = vmatmul.mubr.bf16.gmra.mxu0 %v2158
      %v2424 = vpop.f32.mrf.mxu0
      %v2425 = vadd.f32 0.0, %v2424
      %v2426 = vpop.f32.mrf.mxu0
      %v2427 = vpop.f32.mrf.mxu0
      %v2428 = vadd.f32 0.0, %v2427
      %v2429 = vpop.f32.mrf.mxu0
      %2430 = vmatprep.mubr.bf16.mxu0 0
      %2431 = vmatmul.mubr.bf16.gmra.mxu0 %v2167
      %v2432 = vpop.f32.mrf.mxu0
      %v2433 = vadd.f32 0.0, %v2432
      %v2434 = vpop.f32.mrf.mxu0
      %v2435 = vpop.f32.mrf.mxu0
      %v2436 = vadd.f32 0.0, %v2435
      %v2437 = vpop.f32.mrf.mxu0
      %2438 = vmatprep.mubr.bf16.mxu0 0
      %2439 = vmatmul.mubr.bf16.gmra.mxu0 %v2176
      %v2440 = vpop.f32.mrf.mxu0
      %v2441 = vadd.f32 0.0, %v2440
      %v2442 = vpop.f32.mrf.mxu0
      %v2443 = vpop.f32.mrf.mxu0
      %v2444 = vadd.f32 0.0, %v2443
      %v2445 = vpop.f32.mrf.mxu0
      %2446 = vmatprep.mubr.bf16.mxu0 0
      %2447 = vmatmul.mubr.bf16.gmra.mxu0 %v2185
      %v2448 = vpop.f32.mrf.mxu0
      %v2449 = vadd.f32 0.0, %v2448
      %v2450 = vpop.f32.mrf.mxu0
      %v2451 = vpop.f32.mrf.mxu0
      %v2452 = vadd.f32 0.0, %v2451
      %v2453 = vpop.f32.mrf.mxu0
      %2454 = vmatprep.mubr.bf16.mxu0 0
      %2455 = vmatmul.mubr.bf16.gmra.mxu0 %v2194
      %v2456 = vpop.f32.mrf.mxu0
      %v2457 = vadd.f32 0.0, %v2456
      %v2458 = vpop.f32.mrf.mxu0
      %v2459 = vpop.f32.mrf.mxu0
      %v2460 = vadd.f32 0.0, %v2459
      %v2461 = vpop.f32.mrf.mxu0
      %2462 = vmatprep.mubr.bf16.mxu0 0
      %2463 = vmatmul.mubr.bf16.gmra.mxu0 %v2203
      %v2464 = vpop.f32.mrf.mxu0
      %v2465 = vadd.f32 0.0, %v2464
      %v2466 = vpop.f32.mrf.mxu0
      %v2467 = vpop.f32.mrf.mxu0
      %v2468 = vadd.f32 0.0, %v2467
      %v2469 = vpop.f32.mrf.mxu0
      %2470 = vmatprep.mubr.bf16.mxu0 0
      %2471 = vmatmul.mubr.bf16.gmra.mxu0 %v2212
      %v2472 = vpop.f32.mrf.mxu0
      %v2473 = vadd.f32 0.0, %v2472
      %v2474 = vpop.f32.mrf.mxu0
      %v2475 = vpop.f32.mrf.mxu0
      %v2476 = vadd.f32 0.0, %v2475
      %v2477 = vpop.f32.mrf.mxu0
      %2478 = vmatprep.mubr.bf16.mxu0 0
      %2479 = vmatmul.mubr.bf16.gmra.mxu0 %v2221
      %v2480 = vpop.f32.mrf.mxu0
      %v2481 = vadd.f32 0.0, %v2480
      %v2482 = vpop.f32.mrf.mxu0
      %v2483 = vpop.f32.mrf.mxu0
      %v2484 = vadd.f32 0.0, %v2483
      %v2485 = vpop.f32.mrf.mxu0
      %2486 = vmatprep.mubr.bf16.mxu0 0
      %2487 = vmatmul.mubr.bf16.gmra.mxu0 %v2230
      %v2488 = vpop.f32.mrf.mxu0
      %v2489 = vadd.f32 0.0, %v2488
      %v2490 = vpop.f32.mrf.mxu0
      %v2491 = vpop.f32.mrf.mxu0
      %v2492 = vadd.f32 0.0, %v2491
      %v2493 = vpop.f32.mrf.mxu0
      %2494 = vmatprep.mubr.bf16.mxu0 0
      %2495 = vmatmul.mubr.bf16.gmra.mxu0 %v2239
      %v2496 = vpop.f32.mrf.mxu0
      %v2497 = vadd.f32 0.0, %v2496
      %v2498 = vpop.f32.mrf.mxu0
      %v2499 = vpop.f32.mrf.mxu0
      %v2500 = vadd.f32 0.0, %v2499
      %v2501 = vpop.f32.mrf.mxu0
      %2502 = vmatprep.mubr.bf16.mxu0 0
      %2503 = vmatmul.mubr.bf16.gmra.mxu0 %v2248
      %v2504 = vpop.f32.mrf.mxu0
      %v2505 = vadd.f32 0.0, %v2504
      %v2506 = vpop.f32.mrf.mxu0
      %v2507 = vpop.f32.mrf.mxu0
      %v2508 = vadd.f32 0.0, %v2507
      %v2509 = vpop.f32.mrf.mxu0
      %2510 = vmatprep.mubr.bf16.mxu0 0
      %2511 = vmatmul.mubr.bf16.gmra.mxu0 %v2247
      %v2512 = vpop.f32.mrf.mxu0
      %v2513 = vadd.f32 0.0, %v2512
      %v2514 = vpop.f32.mrf.mxu0
      %v2515 = vpop.f32.mrf.mxu0
      %v2516 = vpop.f32.mrf.mxu0
      %2517 = vdwg.mxu0
      %v2518 = vadd.f32 %v1857, %v2353
      %v2519 = vadd.f32 %v1858, %v2356
      %v2520 = vadd.f32 %v1859, %v2361
      %v2521 = vadd.f32 %v1860, %v2364
      %v2522 = vadd.f32 %v1861, %v2369
      %v2523 = vadd.f32 %v1862, %v2372
      %v2524 = vadd.f32 %v1863, %v2377
      %v2525 = vadd.f32 %v1864, %v2380
      %v2526 = vadd.f32 %v1865, %v2385
      %v2527 = vadd.f32 %v1866, %v2388
      %v2528 = vadd.f32 %v1867, %v2393
      %v2529 = vadd.f32 %v1868, %v2396
      %v2530 = vadd.f32 %v1869, %v2401
      %v2531 = vadd.f32 %v1870, %v2404
      %v2532 = vadd.f32 %v1871, %v2409
      %v2533 = vadd.f32 %v1872, %v2412
      %v2534 = vadd.f32 %v1873, %v2417
      %v2535 = vadd.f32 %v1874, %v2420
      %v2536 = vadd.f32 %v1875, %v2425
      %v2537 = vadd.f32 %v1876, %v2428
      %v2538 = vadd.f32 %v1877, %v2433
      %v2539 = vadd.f32 %v1878, %v2436
      %v2540 = vadd.f32 %v1879, %v2441
      %v2541 = vadd.f32 %v1880, %v2444
      %v2542 = vadd.f32 %v1881, %v2449
      %v2543 = vadd.f32 %v1882, %v2452
      %v2544 = vadd.f32 %v1883, %v2457
      %v2545 = vadd.f32 %v1884, %v2460
      %v2546 = vadd.f32 %v1885, %v2465
      %v2547 = vadd.f32 %v1886, %v2468
      %v2548 = vadd.f32 %v1887, %v2473
      %v2549 = vadd.f32 %v1888, %v2476
      %v2550 = vadd.f32 %v1889, %v2481
      %v2551 = vadd.f32 %v1890, %v2484
      %v2552 = vadd.f32 %v1891, %v2489
      %v2553 = vadd.f32 %v1892, %v2492
      %v2554 = vadd.f32 %v1893, %v2497
      %v2555 = vadd.f32 %v1894, %v2500
      %v2556 = vadd.f32 %v1895, %v2505
      %v2557 = vadd.f32 %v1896, %v2508
      %v2558 = vadd.f32 %v1897, %v2513
      %v2559 = vld [vmem:[%s8 + $0x100] sm:$0xf]
      %v2560 = vld [vmem:[%s8 + $0x104] sm:$0xf]
      %v2561 = vld [vmem:[%s8 + $0x108] sm:$0xf]
      %v2562 = vld [vmem:[%s8 + $0x10c] sm:$0xf]
      %v2563 = vld [vmem:[%s8 + $0x110] sm:$0xf]
      %v2564 = vld [vmem:[%s8 + $0x114] sm:$0xf]
      %v2565 = vld [vmem:[%s8 + $0x118] sm:$0xf]
      %v2566 = vld [vmem:[%s8 + $0x11c] sm:$0xf]
      %v2567 = vld [vmem:[%s8 + $0x120] sm:$0xf]
      %v2568 = vld [vmem:[%s8 + $0x124] sm:$0xf]
      %v2569 = vld [vmem:[%s8 + $0x128] sm:$0xf]
      %v2570 = vld [vmem:[%s8 + $0x12c] sm:$0xf]
      %v2571 = vld [vmem:[%s8 + $0x130] sm:$0xf]
      %v2572 = vld [vmem:[%s8 + $0x134] sm:$0xf]
      %v2573 = vld [vmem:[%s8 + $0x138] sm:$0xf]
      %v2574 = vld [vmem:[%s8 + $0x13c] sm:$0xf]
      %v2575 = vpack.c.b16 %v2000, %v1999
      %v2576 = vpack.c.b16 %v2002, %v2001
      %v2577 = vpack.c.b16 %v2004, %v2003
      %v2578 = vpack.c.b16 %v2006, %v2005
      %v2579 = vpack.c.b16 %v2008, %v2007
      %v2580 = vpack.c.b16 %v2010, %v2009
      %v2581 = vpack.c.b16 %v2012, %v2011
      %v2582 = vpack.c.b16 %v2014, %v2013
      %v2583 = vpack.c.b16 %v2016, %v2015
      %v2584 = vpack.c.b16 %v2018, %v2017
      %v2585 = vpack.c.b16 %v2020, %v2019
      %v2586 = vpack.c.b16 %v2022, %v2021
      %v2587 = vpack.c.b16 %v2024, %v2023
      %v2588 = vpack.c.b16 %v2026, %v2025
      %v2589 = vpack.c.b16 %v2028, %v2027
      %v2590 = vpack.c.b16 %v2030, %v2029
      %v2591 = vpack.c.b16 %v2032, %v2031
      %v2592 = vpack.c.b16 %v2034, %v2033
      %v2593 = vpack.c.b16 %v2036, %v2035
      %v2594 = vpack.c.b16 %v2038, %v2037
      %v2595 = vpack.c.b16 %v2039, %v2039
      %v2633 = vunpack.c.l.b16 %v2559
      %v2634 = vunpack.c.l.b16 %v2560
      %v2635 = vunpack.c.l.b16 %v2561
      %v2636 = vunpack.c.l.b16 %v2562
      %v2637 = vunpack.c.l.b16 %v2563
      %v2638 = vunpack.c.l.b16 %v2564
      %v2639 = vunpack.c.l.b16 %v2565
      %v2640 = vunpack.c.l.b16 %v2566
      %v2641 = vunpack.c.l.b16 %v2567
      %v2642 = vunpack.c.l.b16 %v2568
      %v2643 = vunpack.c.l.b16 %v2569
      %v2644 = vunpack.c.l.b16 %v2570
      %v2645 = vunpack.c.l.b16 %v2571
      %v2646 = vunpack.c.l.b16 %v2572
      %v2647 = vunpack.c.l.b16 %v2573
      %v2648 = vunpack.c.l.b16 %v2574
      %v2649 = vpack.c.b16 %v2634, %v2633
      %v2650 = vpack.c.b16 %v2636, %v2635
      %v2651 = vpack.c.b16 %v2638, %v2637
      %v2652 = vpack.c.b16 %v2640, %v2639
      %v2653 = vpack.c.b16 %v2642, %v2641
      %v2654 = vpack.c.b16 %v2644, %v2643
      %v2655 = vpack.c.b16 %v2646, %v2645
      %v2656 = vpack.c.b16 %v2648, %v2647
      %2665 = vmatprep.subr.bf16.mxu0 0
      %2666 = vmatpush1.bf16.msra.mxu0 %v2656
      %2667 = vmatprep.subr.bf16.mxu0 0
      %2668 = vmatpush1.bf16.msra.mxu0 %v2655
      %2669 = vmatprep.subr.bf16.mxu0 0
      %2670 = vmatpush1.bf16.msra.mxu0 %v2654
      %2671 = vmatprep.subr.bf16.mxu0 0
      %2672 = vmatpush1.bf16.msra.mxu0 %v2653
      %2673 = vmatprep.subr.bf16.mxu0 0
      %2674 = vmatpush1.bf16.msra.mxu0 %v2652
      %2675 = vmatprep.subr.bf16.mxu0 0
      %2676 = vmatpush1.bf16.msra.mxu0 %v2651
      %2677 = vmatprep.subr.bf16.mxu0 0
      %2678 = vmatpush1.bf16.msra.mxu0 %v2650
      %2679 = vmatprep.subr.bf16.mxu0 0
      %2680 = vmatpush1.bf16.msra.mxu0 %v2649
      %2681 = vmatprep.subr.bf16.mxu0 0
      %2682 = vmatpush2.bf16.msra.mxu0 0
      %2683 = vmatprep.subr.bf16.mxu0 0
      %2684 = vmatpush2.bf16.msra.mxu0 0
      %2685 = vmatprep.subr.bf16.mxu0 0
      %2686 = vmatpush2.bf16.msra.mxu0 0
      %2687 = vmatprep.subr.bf16.mxu0 0
      %2688 = vmatpush2.bf16.msra.mxu0 0
      %2689 = vmatprep.subr.bf16.mxu0 0
      %2690 = vmatpush2.bf16.msra.mxu0 0
      %2691 = vmatprep.subr.bf16.mxu0 0
      %2692 = vmatpush2.bf16.msra.mxu0 0
      %2693 = vmatprep.subr.bf16.mxu0 0
      %2694 = vmatpush2.bf16.msra.mxu0 0
      %2695 = vmatprep.subr.bf16.mxu0 0
      %2696 = vmatpush2.bf16.msra.mxu0 0
      %2697 = vmatprep.mubr.bf16.mxu0 0
      %2698 = vmatmul.mubr.bf16.gmra.mxu0 %v2575
      %v2699 = vpop.f32.mrf.mxu0
      %v2700 = vadd.f32 0.0, %v2699
      %v2701 = vpop.f32.mrf.mxu0
      %v2702 = vpop.f32.mrf.mxu0
      %v2703 = vadd.f32 0.0, %v2702
      %v2704 = vpop.f32.mrf.mxu0
      %2705 = vmatprep.mubr.bf16.mxu0 0
      %2706 = vmatmul.mubr.bf16.gmra.mxu0 %v2576
      %v2707 = vpop.f32.mrf.mxu0
      %v2708 = vadd.f32 0.0, %v2707
      %v2709 = vpop.f32.mrf.mxu0
      %v2710 = vpop.f32.mrf.mxu0
      %v2711 = vadd.f32 0.0, %v2710
      %v2712 = vpop.f32.mrf.mxu0
      %2713 = vmatprep.mubr.bf16.mxu0 0
      %2714 = vmatmul.mubr.bf16.gmra.mxu0 %v2577
      %v2715 = vpop.f32.mrf.mxu0
      %v2716 = vadd.f32 0.0, %v2715
      %v2717 = vpop.f32.mrf.mxu0
      %v2718 = vpop.f32.mrf.mxu0
      %v2719 = vadd.f32 0.0, %v2718
      %v2720 = vpop.f32.mrf.mxu0
      %2721 = vmatprep.mubr.bf16.mxu0 0
      %2722 = vmatmul.mubr.bf16.gmra.mxu0 %v2578
      %v2723 = vpop.f32.mrf.mxu0
      %v2724 = vadd.f32 0.0, %v2723
      %v2725 = vpop.f32.mrf.mxu0
      %v2726 = vpop.f32.mrf.mxu0
      %v2727 = vadd.f32 0.0, %v2726
      %v2728 = vpop.f32.mrf.mxu0
      %2729 = vmatprep.mubr.bf16.mxu0 0
      %2730 = vmatmul.mubr.bf16.gmra.mxu0 %v2579
      %v2731 = vpop.f32.mrf.mxu0
      %v2732 = vadd.f32 0.0, %v2731
      %v2733 = vpop.f32.mrf.mxu0
      %v2734 = vpop.f32.mrf.mxu0
      %v2735 = vadd.f32 0.0, %v2734
      %v2736 = vpop.f32.mrf.mxu0
      %2737 = vmatprep.mubr.bf16.mxu0 0
      %2738 = vmatmul.mubr.bf16.gmra.mxu0 %v2580
      %v2739 = vpop.f32.mrf.mxu0
      %v2740 = vadd.f32 0.0, %v2739
      %v2741 = vpop.f32.mrf.mxu0
      %v2742 = vpop.f32.mrf.mxu0
      %v2743 = vadd.f32 0.0, %v2742
      %v2744 = vpop.f32.mrf.mxu0
      %2745 = vmatprep.mubr.bf16.mxu0 0
      %2746 = vmatmul.mubr.bf16.gmra.mxu0 %v2581
      %v2747 = vpop.f32.mrf.mxu0
      %v2748 = vadd.f32 0.0, %v2747
      %v2749 = vpop.f32.mrf.mxu0
      %v2750 = vpop.f32.mrf.mxu0
      %v2751 = vadd.f32 0.0, %v2750
      %v2752 = vpop.f32.mrf.mxu0
      %2753 = vmatprep.mubr.bf16.mxu0 0
      %2754 = vmatmul.mubr.bf16.gmra.mxu0 %v2582
      %v2755 = vpop.f32.mrf.mxu0
      %v2756 = vadd.f32 0.0, %v2755
      %v2757 = vpop.f32.mrf.mxu0
      %v2758 = vpop.f32.mrf.mxu0
      %v2759 = vadd.f32 0.0, %v2758
      %v2760 = vpop.f32.mrf.mxu0
      %2761 = vmatprep.mubr.bf16.mxu0 0
      %2762 = vmatmul.mubr.bf16.gmra.mxu0 %v2583
      %v2763 = vpop.f32.mrf.mxu0
      %v2764 = vadd.f32 0.0, %v2763
      %v2765 = vpop.f32.mrf.mxu0
      %v2766 = vpop.f32.mrf.mxu0
      %v2767 = vadd.f32 0.0, %v2766
      %v2768 = vpop.f32.mrf.mxu0
      %2769 = vmatprep.mubr.bf16.mxu0 0
      %2770 = vmatmul.mubr.bf16.gmra.mxu0 %v2584
      %v2771 = vpop.f32.mrf.mxu0
      %v2772 = vadd.f32 0.0, %v2771
      %v2773 = vpop.f32.mrf.mxu0
      %v2774 = vpop.f32.mrf.mxu0
      %v2775 = vadd.f32 0.0, %v2774
      %v2776 = vpop.f32.mrf.mxu0
      %2777 = vmatprep.mubr.bf16.mxu0 0
      %2778 = vmatmul.mubr.bf16.gmra.mxu0 %v2585
      %v2779 = vpop.f32.mrf.mxu0
      %v2780 = vadd.f32 0.0, %v2779
      %v2781 = vpop.f32.mrf.mxu0
      %v2782 = vpop.f32.mrf.mxu0
      %v2783 = vadd.f32 0.0, %v2782
      %v2784 = vpop.f32.mrf.mxu0
      %2785 = vmatprep.mubr.bf16.mxu0 0
      %2786 = vmatmul.mubr.bf16.gmra.mxu0 %v2586
      %v2787 = vpop.f32.mrf.mxu0
      %v2788 = vadd.f32 0.0, %v2787
      %v2789 = vpop.f32.mrf.mxu0
      %v2790 = vpop.f32.mrf.mxu0
      %v2791 = vadd.f32 0.0, %v2790
      %v2792 = vpop.f32.mrf.mxu0
      %2793 = vmatprep.mubr.bf16.mxu0 0
      %2794 = vmatmul.mubr.bf16.gmra.mxu0 %v2587
      %v2795 = vpop.f32.mrf.mxu0
      %v2796 = vadd.f32 0.0, %v2795
      %v2797 = vpop.f32.mrf.mxu0
      %v2798 = vpop.f32.mrf.mxu0
      %v2799 = vadd.f32 0.0, %v2798
      %v2800 = vpop.f32.mrf.mxu0
      %2801 = vmatprep.mubr.bf16.mxu0 0
      %2802 = vmatmul.mubr.bf16.gmra.mxu0 %v2588
      %v2803 = vpop.f32.mrf.mxu0
      %v2804 = vadd.f32 0.0, %v2803
      %v2805 = vpop.f32.mrf.mxu0
      %v2806 = vpop.f32.mrf.mxu0
      %v2807 = vadd.f32 0.0, %v2806
      %v2808 = vpop.f32.mrf.mxu0
      %2809 = vmatprep.mubr.bf16.mxu0 0
      %2810 = vmatmul.mubr.bf16.gmra.mxu0 %v2589
      %v2811 = vpop.f32.mrf.mxu0
      %v2812 = vadd.f32 0.0, %v2811
      %v2813 = vpop.f32.mrf.mxu0
      %v2814 = vpop.f32.mrf.mxu0
      %v2815 = vadd.f32 0.0, %v2814
      %v2816 = vpop.f32.mrf.mxu0
      %2817 = vmatprep.mubr.bf16.mxu0 0
      %2818 = vmatmul.mubr.bf16.gmra.mxu0 %v2590
      %v2819 = vpop.f32.mrf.mxu0
      %v2820 = vadd.f32 0.0, %v2819
      %v2821 = vpop.f32.mrf.mxu0
      %v2822 = vpop.f32.mrf.mxu0
      %v2823 = vadd.f32 0.0, %v2822
      %v2824 = vpop.f32.mrf.mxu0
      %2825 = vmatprep.mubr.bf16.mxu0 0
      %2826 = vmatmul.mubr.bf16.gmra.mxu0 %v2591
      %v2827 = vpop.f32.mrf.mxu0
      %v2828 = vadd.f32 0.0, %v2827
      %v2829 = vpop.f32.mrf.mxu0
      %v2830 = vpop.f32.mrf.mxu0
      %v2831 = vadd.f32 0.0, %v2830
      %v2832 = vpop.f32.mrf.mxu0
      %2833 = vmatprep.mubr.bf16.mxu0 0
      %2834 = vmatmul.mubr.bf16.gmra.mxu0 %v2592
      %v2835 = vpop.f32.mrf.mxu0
      %v2836 = vadd.f32 0.0, %v2835
      %v2837 = vpop.f32.mrf.mxu0
      %v2838 = vpop.f32.mrf.mxu0
      %v2839 = vadd.f32 0.0, %v2838
      %v2840 = vpop.f32.mrf.mxu0
      %2841 = vmatprep.mubr.bf16.mxu0 0
      %2842 = vmatmul.mubr.bf16.gmra.mxu0 %v2593
      %v2843 = vpop.f32.mrf.mxu0
      %v2844 = vadd.f32 0.0, %v2843
      %v2845 = vpop.f32.mrf.mxu0
      %v2846 = vpop.f32.mrf.mxu0
      %v2847 = vadd.f32 0.0, %v2846
      %v2848 = vpop.f32.mrf.mxu0
      %2849 = vmatprep.mubr.bf16.mxu0 0
      %2850 = vmatmul.mubr.bf16.gmra.mxu0 %v2594
      %v2851 = vpop.f32.mrf.mxu0
      %v2852 = vadd.f32 0.0, %v2851
      %v2853 = vpop.f32.mrf.mxu0
      %v2854 = vpop.f32.mrf.mxu0
      %v2855 = vadd.f32 0.0, %v2854
      %v2856 = vpop.f32.mrf.mxu0
      %2857 = vmatprep.mubr.bf16.mxu0 0
      %2858 = vmatmul.mubr.bf16.gmra.mxu0 %v2595
      %v2859 = vpop.f32.mrf.mxu0
      %v2860 = vadd.f32 0.0, %v2859
      %v2861 = vpop.f32.mrf.mxu0
      %v2862 = vpop.f32.mrf.mxu0
      %v2863 = vpop.f32.mrf.mxu0
      %2864 = vdwg.mxu0
      %v2865 = vadd.f32 %v2518, %v2700
      %v2866 = vadd.f32 %v2519, %v2703
      %v2867 = vadd.f32 %v2520, %v2708
      %v2868 = vadd.f32 %v2521, %v2711
      %v2869 = vadd.f32 %v2522, %v2716
      %v2870 = vadd.f32 %v2523, %v2719
      %v2871 = vadd.f32 %v2524, %v2724
      %v2872 = vadd.f32 %v2525, %v2727
      %v2873 = vadd.f32 %v2526, %v2732
      %v2874 = vadd.f32 %v2527, %v2735
      %v2875 = vadd.f32 %v2528, %v2740
      %v2876 = vadd.f32 %v2529, %v2743
      %v2877 = vadd.f32 %v2530, %v2748
      %v2878 = vadd.f32 %v2531, %v2751
      %v2879 = vadd.f32 %v2532, %v2756
      %v2880 = vadd.f32 %v2533, %v2759
      %v2881 = vadd.f32 %v2534, %v2764
      %v2882 = vadd.f32 %v2535, %v2767
      %v2883 = vadd.f32 %v2536, %v2772
      %v2884 = vadd.f32 %v2537, %v2775
      %v2885 = vadd.f32 %v2538, %v2780
      %v2886 = vadd.f32 %v2539, %v2783
      %v2887 = vadd.f32 %v2540, %v2788
      %v2888 = vadd.f32 %v2541, %v2791
      %v2889 = vadd.f32 %v2542, %v2796
      %v2890 = vadd.f32 %v2543, %v2799
      %v2891 = vadd.f32 %v2544, %v2804
      %v2892 = vadd.f32 %v2545, %v2807
      %v2893 = vadd.f32 %v2546, %v2812
      %v2894 = vadd.f32 %v2547, %v2815
      %v2895 = vadd.f32 %v2548, %v2820
      %v2896 = vadd.f32 %v2549, %v2823
      %v2897 = vadd.f32 %v2550, %v2828
      %v2898 = vadd.f32 %v2551, %v2831
      %v2899 = vadd.f32 %v2552, %v2836
      %v2900 = vadd.f32 %v2553, %v2839
      %v2901 = vadd.f32 %v2554, %v2844
      %v2902 = vadd.f32 %v2555, %v2847
      %v2903 = vadd.f32 %v2556, %v2852
      %v2904 = vadd.f32 %v2557, %v2855
      %v2905 = vadd.f32 %v2558, %v2860
      %v2906 = vld [vmem:[%s372 + $0xc] sm:$0xf]
      %v2907 = vld [vmem:[%s372 + $0x10] sm:$0xf]
      %v2908 = vld [vmem:[%s372 + $0x14] sm:$0xf]
      %v2909 = vld [vmem:[%s372 + $0x18] sm:$0xf]
      %v2910 = vld [vmem:[%s372 + $0x1c] sm:$0xf]
      %v2911 = vld [vmem:[%s372 + $0x20] sm:$0xf]
      %v2912 = vld [vmem:[%s372 + $0x24] sm:$0xf]
      %v2913 = vld [vmem:[%s372 + $0x28] sm:$0xf]
      %v2914 = vld [vmem:[%s372 + $0x2c] sm:$0xf]
      %v2915 = vld [vmem:[%s372 + $0x30] sm:$0xf]
      %v2916 = vld [vmem:[%s372 + $0x34] sm:$0xf]
      %v2917 = vld [vmem:[%s372 + $0x38] sm:$0xf]
      %v2918 = vld [vmem:[%s372 + $0x3c] sm:$0xf]
      %v2919 = vld [vmem:[%s372 + $0x40] sm:$0xf]
      %v2920 = vld [vmem:[%s372 + $0x44] sm:$0xf]
      %v2921 = vld [vmem:[%s372 + $0x48] sm:$0xf]
      %v2922 = vld [vmem:[%s372 + $0x4c] sm:$0xf]
      %v2923 = vld [vmem:[%s372 + $0x50] sm:$0xf]
      %v2924 = vld [vmem:[%s372 + $0x54] sm:$0xf]
      %v2925 = vld [vmem:[%s372 + $0x58] sm:$0xf]
      %v2926 = vld [vmem:[%s372 + $0x5c] sm:$0xf]
      %v2927 = vld [vmem:[%s372 + $0x60] sm:$0xf]
      %v2928 = vld [vmem:[%s372 + $0x64] sm:$0xf]
      %v2929 = vld [vmem:[%s372 + $0x68] sm:$0xf]
      %v2930 = vld [vmem:[%s372 + $0x6c] sm:$0xf]
      %v2931 = vld [vmem:[%s372 + $0x70] sm:$0xf]
      %v2932 = vld [vmem:[%s372 + $0x74] sm:$0xf]
      %v2933 = vld [vmem:[%s372 + $0x78] sm:$0xf]
      %v2934 = vld [vmem:[%s372 + $0x7c] sm:$0xf]
      %v2935 = vld [vmem:[%s372 + $0x80] sm:$0xf]
      %v2936 = vld [vmem:[%s372 + $0x84] sm:$0xf]
      %v2937 = vld [vmem:[%s372 + $0x88] sm:$0xf]
      %v2938 = vld [vmem:[%s372 + $0x8c] sm:$0xf]
      %v2939 = vld [vmem:[%s372 + $0x90] sm:$0xf]
      %v2940 = vld [vmem:[%s372 + $0x94] sm:$0xf]
      %v2941 = vld [vmem:[%s372 + $0x98] sm:$0xf]
      %v2942 = vld [vmem:[%s372 + $0x9c] sm:$0xf]
      %v2943 = vld [vmem:[%s372 + $0xa0] sm:$0xf]
      %v2944 = vld [vmem:[%s372 + $0xa4] sm:$0xf]
      %v2945 = vld [vmem:[%s372 + $0xa8] sm:$0xf]
      %v2946 = vld [vmem:[%s372 + $0xac] sm:$0xf]
      %v2947 = vld [vmem:[%s372 + $0xb0] sm:$0x1]
      %v2948 = vld [vmem:[%s8 + $0x140] sm:$0xf]
      %v2949 = vld [vmem:[%s8 + $0x144] sm:$0xf]
      %v2950 = vld [vmem:[%s8 + $0x148] sm:$0xf]
      %v2951 = vld [vmem:[%s8 + $0x14c] sm:$0xf]
      %v2952 = vld [vmem:[%s8 + $0x150] sm:$0xf]
      %v2953 = vld [vmem:[%s8 + $0x154] sm:$0xf]
      %v2954 = vld [vmem:[%s8 + $0x158] sm:$0xf]
      %v2955 = vld [vmem:[%s8 + $0x15c] sm:$0xf]
      %v2956 = vld [vmem:[%s8 + $0x160] sm:$0xf]
      %v2957 = vld [vmem:[%s8 + $0x164] sm:$0xf]
      %v2958 = vld [vmem:[%s8 + $0x168] sm:$0xf]
      %v2959 = vld [vmem:[%s8 + $0x16c] sm:$0xf]
      %v2960 = vld [vmem:[%s8 + $0x170] sm:$0xf]
      %v2961 = vld [vmem:[%s8 + $0x174] sm:$0xf]
      %v2962 = vld [vmem:[%s8 + $0x178] sm:$0xf]
      %v2963 = vld [vmem:[%s8 + $0x17c] sm:$0xf]
      %v3006 = vunpack.c.l.b16 %v2906
      %v3007 = vunpack.c.l.b16 %v2907
      %v3008 = vunpack.c.l.b16 %v2908
      %v3009 = vunpack.c.l.b16 %v2909
      %v3010 = vunpack.c.l.b16 %v2910
      %v3011 = vunpack.c.l.b16 %v2911
      %v3012 = vunpack.c.l.b16 %v2912
      %v3013 = vunpack.c.l.b16 %v2913
      %v3014 = vunpack.c.l.b16 %v2914
      %v3015 = vunpack.c.l.b16 %v2915
      %v3016 = vunpack.c.l.b16 %v2916
      %v3017 = vunpack.c.l.b16 %v2917
      %v3018 = vunpack.c.l.b16 %v2918
      %v3019 = vunpack.c.l.b16 %v2919
      %v3020 = vunpack.c.l.b16 %v2920
      %v3021 = vunpack.c.l.b16 %v2921
      %v3022 = vunpack.c.l.b16 %v2922
      %v3023 = vunpack.c.l.b16 %v2923
      %v3024 = vunpack.c.l.b16 %v2924
      %v3025 = vunpack.c.l.b16 %v2925
      %v3026 = vunpack.c.l.b16 %v2926
      %v3027 = vunpack.c.l.b16 %v2927
      %v3028 = vunpack.c.l.b16 %v2928
      %v3029 = vunpack.c.l.b16 %v2929
      %v3030 = vunpack.c.l.b16 %v2930
      %v3031 = vunpack.c.l.b16 %v2931
      %v3032 = vunpack.c.l.b16 %v2932
      %v3033 = vunpack.c.l.b16 %v2933
      %v3034 = vunpack.c.l.b16 %v2934
      %v3035 = vunpack.c.l.b16 %v2935
      %v3036 = vunpack.c.l.b16 %v2936
      %v3037 = vunpack.c.l.b16 %v2937
      %v3038 = vunpack.c.l.b16 %v2938
      %v3039 = vunpack.c.l.b16 %v2939
      %v3040 = vunpack.c.l.b16 %v2940
      %v3041 = vunpack.c.l.b16 %v2941
      %v3042 = vunpack.c.l.b16 %v2942
      %v3043 = vunpack.c.l.b16 %v2943
      %v3044 = vunpack.c.l.b16 %v2944
      %v3045 = vunpack.c.l.b16 %v2945
      %v3046 = vunpack.c.l.b16 %v2946
      %v3047 = vunpack.c.l.b16 %v2947
      %v3048 = vpack.c.b16 %v3007, %v3006
      %v3049 = vpack.c.b16 %v3009, %v3008
      %v3050 = vpack.c.b16 %v3011, %v3010
      %v3051 = vpack.c.b16 %v3013, %v3012
      %v3052 = vpack.c.b16 %v3015, %v3014
      %v3053 = vpack.c.b16 %v3017, %v3016
      %v3054 = vpack.c.b16 %v3019, %v3018
      %v3055 = vpack.c.b16 %v3021, %v3020
      %v3056 = vpack.c.b16 %v3023, %v3022
      %v3057 = vpack.c.b16 %v3025, %v3024
      %v3058 = vpack.c.b16 %v3027, %v3026
      %v3059 = vpack.c.b16 %v3029, %v3028
      %v3060 = vpack.c.b16 %v3031, %v3030
      %v3061 = vpack.c.b16 %v3033, %v3032
      %v3062 = vpack.c.b16 %v3035, %v3034
      %v3063 = vpack.c.b16 %v3037, %v3036
      %v3064 = vpack.c.b16 %v3039, %v3038
      %v3065 = vpack.c.b16 %v3041, %v3040
      %v3066 = vpack.c.b16 %v3043, %v3042
      %v3067 = vpack.c.b16 %v3045, %v3044
      %v3068 = vpack.c.b16 %v3047, %v3046
      %vm3069 = vsmask.f32 7424
      %v3071 = vshrl.u32 %v3048, 16
      %v3073 = vshll.u32 %v3048, 16
      %v3075 = vrot.slane %v3073, 1
      %v3076 = vor.u32 %v3071, %v3075
      %v3078 = vshll.u32 %v3049, 16
      %v3080 = vrot.slane %v3078, 1
      %v3081 = vsel %vm3069, %v3076, %v3080
      %v3082 = vshrl.u32 %v3049, 16
      %v3084 = vor.u32 %v3082, %v3080
      %v3086 = vshll.u32 %v3050, 16
      %v3088 = vrot.slane %v3086, 1
      %v3089 = vsel %vm3069, %v3084, %v3088
      %v3090 = vshrl.u32 %v3050, 16
      %v3092 = vor.u32 %v3090, %v3088
      %v3094 = vshll.u32 %v3051, 16
      %v3096 = vrot.slane %v3094, 1
      %v3097 = vsel %vm3069, %v3092, %v3096
      %v3098 = vshrl.u32 %v3051, 16
      %v3100 = vor.u32 %v3098, %v3096
      %v3102 = vshll.u32 %v3052, 16
      %v3104 = vrot.slane %v3102, 1
      %v3105 = vsel %vm3069, %v3100, %v3104
      %v3106 = vshrl.u32 %v3052, 16
      %v3108 = vor.u32 %v3106, %v3104
      %v3110 = vshll.u32 %v3053, 16
      %v3112 = vrot.slane %v3110, 1
      %v3113 = vsel %vm3069, %v3108, %v3112
      %v3114 = vshrl.u32 %v3053, 16
      %v3116 = vor.u32 %v3114, %v3112
      %v3118 = vshll.u32 %v3054, 16
      %v3120 = vrot.slane %v3118, 1
      %v3121 = vsel %vm3069, %v3116, %v3120
      %v3122 = vshrl.u32 %v3054, 16
      %v3124 = vor.u32 %v3122, %v3120
      %v3126 = vshll.u32 %v3055, 16
      %v3128 = vrot.slane %v3126, 1
      %v3129 = vsel %vm3069, %v3124, %v3128
      %v3130 = vshrl.u32 %v3055, 16
      %v3132 = vor.u32 %v3130, %v3128
      %v3134 = vshll.u32 %v3056, 16
      %v3136 = vrot.slane %v3134, 1
      %v3137 = vsel %vm3069, %v3132, %v3136
      %v3138 = vshrl.u32 %v3056, 16
      %v3140 = vor.u32 %v3138, %v3136
      %v3142 = vshll.u32 %v3057, 16
      %v3144 = vrot.slane %v3142, 1
      %v3145 = vsel %vm3069, %v3140, %v3144
      %v3146 = vshrl.u32 %v3057, 16
      %v3148 = vor.u32 %v3146, %v3144
      %v3150 = vshll.u32 %v3058, 16
      %v3152 = vrot.slane %v3150, 1
      %v3153 = vsel %vm3069, %v3148, %v3152
      %v3154 = vshrl.u32 %v3058, 16
      %v3156 = vor.u32 %v3154, %v3152
      %v3158 = vshll.u32 %v3059, 16
      %v3160 = vrot.slane %v3158, 1
      %v3161 = vsel %vm3069, %v3156, %v3160
      %v3162 = vshrl.u32 %v3059, 16
      %v3164 = vor.u32 %v3162, %v3160
      %v3166 = vshll.u32 %v3060, 16
      %v3168 = vrot.slane %v3166, 1
      %v3169 = vsel %vm3069, %v3164, %v3168
      %v3170 = vshrl.u32 %v3060, 16
      %v3172 = vor.u32 %v3170, %v3168
      %v3174 = vshll.u32 %v3061, 16
      %v3176 = vrot.slane %v3174, 1
      %v3177 = vsel %vm3069, %v3172, %v3176
      %v3178 = vshrl.u32 %v3061, 16
      %v3180 = vor.u32 %v3178, %v3176
      %v3182 = vshll.u32 %v3062, 16
      %v3184 = vrot.slane %v3182, 1
      %v3185 = vsel %vm3069, %v3180, %v3184
      %v3186 = vshrl.u32 %v3062, 16
      %v3188 = vor.u32 %v3186, %v3184
      %v3190 = vshll.u32 %v3063, 16
      %v3192 = vrot.slane %v3190, 1
      %v3193 = vsel %vm3069, %v3188, %v3192
      %v3194 = vshrl.u32 %v3063, 16
      %v3196 = vor.u32 %v3194, %v3192
      %v3198 = vshll.u32 %v3064, 16
      %v3200 = vrot.slane %v3198, 1
      %v3201 = vsel %vm3069, %v3196, %v3200
      %v3202 = vshrl.u32 %v3064, 16
      %v3204 = vor.u32 %v3202, %v3200
      %v3206 = vshll.u32 %v3065, 16
      %v3208 = vrot.slane %v3206, 1
      %v3209 = vsel %vm3069, %v3204, %v3208
      %v3210 = vshrl.u32 %v3065, 16
      %v3212 = vor.u32 %v3210, %v3208
      %v3214 = vshll.u32 %v3066, 16
      %v3216 = vrot.slane %v3214, 1
      %v3217 = vsel %vm3069, %v3212, %v3216
      %v3218 = vshrl.u32 %v3066, 16
      %v3220 = vor.u32 %v3218, %v3216
      %v3222 = vshll.u32 %v3067, 16
      %v3224 = vrot.slane %v3222, 1
      %v3225 = vsel %vm3069, %v3220, %v3224
      %v3226 = vshrl.u32 %v3067, 16
      %v3228 = vor.u32 %v3226, %v3224
      %v3230 = vshll.u32 %v3068, 16
      %v3232 = vrot.slane %v3230, 1
      %v3233 = vsel %vm3069, %v3228, %v3232
      %v3234 = vshrl.u32 %v3068, 16
      %v3236 = vor.u32 %v3234, %v3232
      %v3274 = vunpack.c.l.b16 %v2948
      %v3275 = vunpack.c.l.b16 %v2949
      %v3276 = vunpack.c.l.b16 %v2950
      %v3277 = vunpack.c.l.b16 %v2951
      %v3278 = vunpack.c.l.b16 %v2952
      %v3279 = vunpack.c.l.b16 %v2953
      %v3280 = vunpack.c.l.b16 %v2954
      %v3281 = vunpack.c.l.b16 %v2955
      %v3282 = vunpack.c.l.b16 %v2956
      %v3283 = vunpack.c.l.b16 %v2957
      %v3284 = vunpack.c.l.b16 %v2958
      %v3285 = vunpack.c.l.b16 %v2959
      %v3286 = vunpack.c.l.b16 %v2960
      %v3287 = vunpack.c.l.b16 %v2961
      %v3288 = vunpack.c.l.b16 %v2962
      %v3289 = vunpack.c.l.b16 %v2963
      %v3290 = vpack.c.b16 %v3275, %v3274
      %v3291 = vpack.c.b16 %v3277, %v3276
      %v3292 = vpack.c.b16 %v3279, %v3278
      %v3293 = vpack.c.b16 %v3281, %v3280
      %v3294 = vpack.c.b16 %v3283, %v3282
      %v3295 = vpack.c.b16 %v3285, %v3284
      %v3296 = vpack.c.b16 %v3287, %v3286
      %v3297 = vpack.c.b16 %v3289, %v3288
      %3306 = vmatprep.subr.bf16.mxu0 0
      %3307 = vmatpush1.bf16.msra.mxu0 %v3297
      %3308 = vmatprep.subr.bf16.mxu0 0
      %3309 = vmatpush1.bf16.msra.mxu0 %v3296
      %3310 = vmatprep.subr.bf16.mxu0 0
      %3311 = vmatpush1.bf16.msra.mxu0 %v3295
      %3312 = vmatprep.subr.bf16.mxu0 0
      %3313 = vmatpush1.bf16.msra.mxu0 %v3294
      %3314 = vmatprep.subr.bf16.mxu0 0
      %3315 = vmatpush1.bf16.msra.mxu0 %v3293
      %3316 = vmatprep.subr.bf16.mxu0 0
      %3317 = vmatpush1.bf16.msra.mxu0 %v3292
      %3318 = vmatprep.subr.bf16.mxu0 0
      %3319 = vmatpush1.bf16.msra.mxu0 %v3291
      %3320 = vmatprep.subr.bf16.mxu0 0
      %3321 = vmatpush1.bf16.msra.mxu0 %v3290
      %3322 = vmatprep.subr.bf16.mxu0 0
      %3323 = vmatpush2.bf16.msra.mxu0 0
      %3324 = vmatprep.subr.bf16.mxu0 0
      %3325 = vmatpush2.bf16.msra.mxu0 0
      %3326 = vmatprep.subr.bf16.mxu0 0
      %3327 = vmatpush2.bf16.msra.mxu0 0
      %3328 = vmatprep.subr.bf16.mxu0 0
      %3329 = vmatpush2.bf16.msra.mxu0 0
      %3330 = vmatprep.subr.bf16.mxu0 0
      %3331 = vmatpush2.bf16.msra.mxu0 0
      %3332 = vmatprep.subr.bf16.mxu0 0
      %3333 = vmatpush2.bf16.msra.mxu0 0
      %3334 = vmatprep.subr.bf16.mxu0 0
      %3335 = vmatpush2.bf16.msra.mxu0 0
      %3336 = vmatprep.subr.bf16.mxu0 0
      %3337 = vmatpush2.bf16.msra.mxu0 0
      %3338 = vmatprep.mubr.bf16.mxu0 0
      %3339 = vmatmul.mubr.bf16.gmra.mxu0 %v3081
      %v3340 = vpop.f32.mrf.mxu0
      %v3341 = vadd.f32 0.0, %v3340
      %v3342 = vpop.f32.mrf.mxu0
      %v3343 = vpop.f32.mrf.mxu0
      %v3344 = vadd.f32 0.0, %v3343
      %v3345 = vpop.f32.mrf.mxu0
      %3346 = vmatprep.mubr.bf16.mxu0 0
      %3347 = vmatmul.mubr.bf16.gmra.mxu0 %v3089
      %v3348 = vpop.f32.mrf.mxu0
      %v3349 = vadd.f32 0.0, %v3348
      %v3350 = vpop.f32.mrf.mxu0
      %v3351 = vpop.f32.mrf.mxu0
      %v3352 = vadd.f32 0.0, %v3351
      %v3353 = vpop.f32.mrf.mxu0
      %3354 = vmatprep.mubr.bf16.mxu0 0
      %3355 = vmatmul.mubr.bf16.gmra.mxu0 %v3097
      %v3356 = vpop.f32.mrf.mxu0
      %v3357 = vadd.f32 0.0, %v3356
      %v3358 = vpop.f32.mrf.mxu0
      %v3359 = vpop.f32.mrf.mxu0
      %v3360 = vadd.f32 0.0, %v3359
      %v3361 = vpop.f32.mrf.mxu0
      %3362 = vmatprep.mubr.bf16.mxu0 0
      %3363 = vmatmul.mubr.bf16.gmra.mxu0 %v3105
      %v3364 = vpop.f32.mrf.mxu0
      %v3365 = vadd.f32 0.0, %v3364
      %v3366 = vpop.f32.mrf.mxu0
      %v3367 = vpop.f32.mrf.mxu0
      %v3368 = vadd.f32 0.0, %v3367
      %v3369 = vpop.f32.mrf.mxu0
      %3370 = vmatprep.mubr.bf16.mxu0 0
      %3371 = vmatmul.mubr.bf16.gmra.mxu0 %v3113
      %v3372 = vpop.f32.mrf.mxu0
      %v3373 = vadd.f32 0.0, %v3372
      %v3374 = vpop.f32.mrf.mxu0
      %v3375 = vpop.f32.mrf.mxu0
      %v3376 = vadd.f32 0.0, %v3375
      %v3377 = vpop.f32.mrf.mxu0
      %3378 = vmatprep.mubr.bf16.mxu0 0
      %3379 = vmatmul.mubr.bf16.gmra.mxu0 %v3121
      %v3380 = vpop.f32.mrf.mxu0
      %v3381 = vadd.f32 0.0, %v3380
      %v3382 = vpop.f32.mrf.mxu0
      %v3383 = vpop.f32.mrf.mxu0
      %v3384 = vadd.f32 0.0, %v3383
      %v3385 = vpop.f32.mrf.mxu0
      %3386 = vmatprep.mubr.bf16.mxu0 0
      %3387 = vmatmul.mubr.bf16.gmra.mxu0 %v3129
      %v3388 = vpop.f32.mrf.mxu0
      %v3389 = vadd.f32 0.0, %v3388
      %v3390 = vpop.f32.mrf.mxu0
      %v3391 = vpop.f32.mrf.mxu0
      %v3392 = vadd.f32 0.0, %v3391
      %v3393 = vpop.f32.mrf.mxu0
      %3394 = vmatprep.mubr.bf16.mxu0 0
      %3395 = vmatmul.mubr.bf16.gmra.mxu0 %v3137
      %v3396 = vpop.f32.mrf.mxu0
      %v3397 = vadd.f32 0.0, %v3396
      %v3398 = vpop.f32.mrf.mxu0
      %v3399 = vpop.f32.mrf.mxu0
      %v3400 = vadd.f32 0.0, %v3399
      %v3401 = vpop.f32.mrf.mxu0
      %3402 = vmatprep.mubr.bf16.mxu0 0
      %3403 = vmatmul.mubr.bf16.gmra.mxu0 %v3145
      %v3404 = vpop.f32.mrf.mxu0
      %v3405 = vadd.f32 0.0, %v3404
      %v3406 = vpop.f32.mrf.mxu0
      %v3407 = vpop.f32.mrf.mxu0
      %v3408 = vadd.f32 0.0, %v3407
      %v3409 = vpop.f32.mrf.mxu0
      %3410 = vmatprep.mubr.bf16.mxu0 0
      %3411 = vmatmul.mubr.bf16.gmra.mxu0 %v3153
      %v3412 = vpop.f32.mrf.mxu0
      %v3413 = vadd.f32 0.0, %v3412
      %v3414 = vpop.f32.mrf.mxu0
      %v3415 = vpop.f32.mrf.mxu0
      %v3416 = vadd.f32 0.0, %v3415
      %v3417 = vpop.f32.mrf.mxu0
      %3418 = vmatprep.mubr.bf16.mxu0 0
      %3419 = vmatmul.mubr.bf16.gmra.mxu0 %v3161
      %v3420 = vpop.f32.mrf.mxu0
      %v3421 = vadd.f32 0.0, %v3420
      %v3422 = vpop.f32.mrf.mxu0
      %v3423 = vpop.f32.mrf.mxu0
      %v3424 = vadd.f32 0.0, %v3423
      %v3425 = vpop.f32.mrf.mxu0
      %3426 = vmatprep.mubr.bf16.mxu0 0
      %3427 = vmatmul.mubr.bf16.gmra.mxu0 %v3169
      %v3428 = vpop.f32.mrf.mxu0
      %v3429 = vadd.f32 0.0, %v3428
      %v3430 = vpop.f32.mrf.mxu0
      %v3431 = vpop.f32.mrf.mxu0
      %v3432 = vadd.f32 0.0, %v3431
      %v3433 = vpop.f32.mrf.mxu0
      %3434 = vmatprep.mubr.bf16.mxu0 0
      %3435 = vmatmul.mubr.bf16.gmra.mxu0 %v3177
      %v3436 = vpop.f32.mrf.mxu0
      %v3437 = vadd.f32 0.0, %v3436
      %v3438 = vpop.f32.mrf.mxu0
      %v3439 = vpop.f32.mrf.mxu0
      %v3440 = vadd.f32 0.0, %v3439
      %v3441 = vpop.f32.mrf.mxu0
      %3442 = vmatprep.mubr.bf16.mxu0 0
      %3443 = vmatmul.mubr.bf16.gmra.mxu0 %v3185
      %v3444 = vpop.f32.mrf.mxu0
      %v3445 = vadd.f32 0.0, %v3444
      %v3446 = vpop.f32.mrf.mxu0
      %v3447 = vpop.f32.mrf.mxu0
      %v3448 = vadd.f32 0.0, %v3447
      %v3449 = vpop.f32.mrf.mxu0
      %3450 = vmatprep.mubr.bf16.mxu0 0
      %3451 = vmatmul.mubr.bf16.gmra.mxu0 %v3193
      %v3452 = vpop.f32.mrf.mxu0
      %v3453 = vadd.f32 0.0, %v3452
      %v3454 = vpop.f32.mrf.mxu0
      %v3455 = vpop.f32.mrf.mxu0
      %v3456 = vadd.f32 0.0, %v3455
      %v3457 = vpop.f32.mrf.mxu0
      %3458 = vmatprep.mubr.bf16.mxu0 0
      %3459 = vmatmul.mubr.bf16.gmra.mxu0 %v3201
      %v3460 = vpop.f32.mrf.mxu0
      %v3461 = vadd.f32 0.0, %v3460
      %v3462 = vpop.f32.mrf.mxu0
      %v3463 = vpop.f32.mrf.mxu0
      %v3464 = vadd.f32 0.0, %v3463
      %v3465 = vpop.f32.mrf.mxu0
      %3466 = vmatprep.mubr.bf16.mxu0 0
      %3467 = vmatmul.mubr.bf16.gmra.mxu0 %v3209
      %v3468 = vpop.f32.mrf.mxu0
      %v3469 = vadd.f32 0.0, %v3468
      %v3470 = vpop.f32.mrf.mxu0
      %v3471 = vpop.f32.mrf.mxu0
      %v3472 = vadd.f32 0.0, %v3471
      %v3473 = vpop.f32.mrf.mxu0
      %3474 = vmatprep.mubr.bf16.mxu0 0
      %3475 = vmatmul.mubr.bf16.gmra.mxu0 %v3217
      %v3476 = vpop.f32.mrf.mxu0
      %v3477 = vadd.f32 0.0, %v3476
      %v3478 = vpop.f32.mrf.mxu0
      %v3479 = vpop.f32.mrf.mxu0
      %v3480 = vadd.f32 0.0, %v3479
      %v3481 = vpop.f32.mrf.mxu0
      %3482 = vmatprep.mubr.bf16.mxu0 0
      %3483 = vmatmul.mubr.bf16.gmra.mxu0 %v3225
      %v3484 = vpop.f32.mrf.mxu0
      %v3485 = vadd.f32 0.0, %v3484
      %v3486 = vpop.f32.mrf.mxu0
      %v3487 = vpop.f32.mrf.mxu0
      %v3488 = vadd.f32 0.0, %v3487
      %v3489 = vpop.f32.mrf.mxu0
      %3490 = vmatprep.mubr.bf16.mxu0 0
      %3491 = vmatmul.mubr.bf16.gmra.mxu0 %v3233
      %v3492 = vpop.f32.mrf.mxu0
      %v3493 = vadd.f32 0.0, %v3492
      %v3494 = vpop.f32.mrf.mxu0
      %v3495 = vpop.f32.mrf.mxu0
      %v3496 = vadd.f32 0.0, %v3495
      %v3497 = vpop.f32.mrf.mxu0
      %3498 = vmatprep.mubr.bf16.mxu0 0
      %3499 = vmatmul.mubr.bf16.gmra.mxu0 %v3236
      %v3500 = vpop.f32.mrf.mxu0
      %v3501 = vadd.f32 0.0, %v3500
      %v3502 = vpop.f32.mrf.mxu0
      %v3503 = vpop.f32.mrf.mxu0
      %v3504 = vpop.f32.mrf.mxu0
      %3505 = vdwg.mxu0
      %v3506 = vadd.f32 %v2865, %v3341
      %v3507 = vadd.f32 %v2866, %v3344
      %v3508 = vadd.f32 %v2867, %v3349
      %v3509 = vadd.f32 %v2868, %v3352
      %v3510 = vadd.f32 %v2869, %v3357
      %v3511 = vadd.f32 %v2870, %v3360
      %v3512 = vadd.f32 %v2871, %v3365
      %v3513 = vadd.f32 %v2872, %v3368
      %v3514 = vadd.f32 %v2873, %v3373
      %v3515 = vadd.f32 %v2874, %v3376
      %v3516 = vadd.f32 %v2875, %v3381
      %v3517 = vadd.f32 %v2876, %v3384
      %v3518 = vadd.f32 %v2877, %v3389
      %v3519 = vadd.f32 %v2878, %v3392
      %v3520 = vadd.f32 %v2879, %v3397
      %v3521 = vadd.f32 %v2880, %v3400
      %v3522 = vadd.f32 %v2881, %v3405
      %v3523 = vadd.f32 %v2882, %v3408
      %v3524 = vadd.f32 %v2883, %v3413
      %v3525 = vadd.f32 %v2884, %v3416
      %v3526 = vadd.f32 %v2885, %v3421
      %v3527 = vadd.f32 %v2886, %v3424
      %v3528 = vadd.f32 %v2887, %v3429
      %v3529 = vadd.f32 %v2888, %v3432
      %v3530 = vadd.f32 %v2889, %v3437
      %v3531 = vadd.f32 %v2890, %v3440
      %v3532 = vadd.f32 %v2891, %v3445
      %v3533 = vadd.f32 %v2892, %v3448
      %v3534 = vadd.f32 %v2893, %v3453
      %v3535 = vadd.f32 %v2894, %v3456
      %v3536 = vadd.f32 %v2895, %v3461
      %v3537 = vadd.f32 %v2896, %v3464
      %v3538 = vadd.f32 %v2897, %v3469
      %v3539 = vadd.f32 %v2898, %v3472
      %v3540 = vadd.f32 %v2899, %v3477
      %v3541 = vadd.f32 %v2900, %v3480
      %v3542 = vadd.f32 %v2901, %v3485
      %v3543 = vadd.f32 %v2902, %v3488
      %v3544 = vadd.f32 %v2903, %v3493
      %v3545 = vadd.f32 %v2904, %v3496
      %v3546 = vadd.f32 %v2905, %v3501
      %v3547 = vld [vmem:[%s372 + $0x14] sm:$0xf]
      %v3548 = vld [vmem:[%s372 + $0x18] sm:$0xf]
      %v3549 = vld [vmem:[%s372 + $0x1c] sm:$0xf]
      %v3550 = vld [vmem:[%s372 + $0x20] sm:$0xf]
      %v3551 = vld [vmem:[%s372 + $0x24] sm:$0xf]
      %v3552 = vld [vmem:[%s372 + $0x28] sm:$0xf]
      %v3553 = vld [vmem:[%s372 + $0x2c] sm:$0xf]
      %v3554 = vld [vmem:[%s372 + $0x30] sm:$0xf]
      %v3555 = vld [vmem:[%s372 + $0x34] sm:$0xf]
      %v3556 = vld [vmem:[%s372 + $0x38] sm:$0xf]
      %v3557 = vld [vmem:[%s372 + $0x3c] sm:$0xf]
      %v3558 = vld [vmem:[%s372 + $0x40] sm:$0xf]
      %v3559 = vld [vmem:[%s372 + $0x44] sm:$0xf]
      %v3560 = vld [vmem:[%s372 + $0x48] sm:$0xf]
      %v3561 = vld [vmem:[%s372 + $0x4c] sm:$0xf]
      %v3562 = vld [vmem:[%s372 + $0x50] sm:$0xf]
      %v3563 = vld [vmem:[%s372 + $0x54] sm:$0xf]
      %v3564 = vld [vmem:[%s372 + $0x58] sm:$0xf]
      %v3565 = vld [vmem:[%s372 + $0x5c] sm:$0xf]
      %v3566 = vld [vmem:[%s372 + $0x60] sm:$0xf]
      %v3567 = vld [vmem:[%s372 + $0x64] sm:$0xf]
      %v3568 = vld [vmem:[%s372 + $0x68] sm:$0xf]
      %v3569 = vld [vmem:[%s372 + $0x6c] sm:$0xf]
      %v3570 = vld [vmem:[%s372 + $0x70] sm:$0xf]
      %v3571 = vld [vmem:[%s372 + $0x74] sm:$0xf]
      %v3572 = vld [vmem:[%s372 + $0x78] sm:$0xf]
      %v3573 = vld [vmem:[%s372 + $0x7c] sm:$0xf]
      %v3574 = vld [vmem:[%s372 + $0x80] sm:$0xf]
      %v3575 = vld [vmem:[%s372 + $0x84] sm:$0xf]
      %v3576 = vld [vmem:[%s372 + $0x88] sm:$0xf]
      %v3577 = vld [vmem:[%s372 + $0x8c] sm:$0xf]
      %v3578 = vld [vmem:[%s372 + $0x90] sm:$0xf]
      %v3579 = vld [vmem:[%s372 + $0x94] sm:$0xf]
      %v3580 = vld [vmem:[%s372 + $0x98] sm:$0xf]
      %v3581 = vld [vmem:[%s372 + $0x9c] sm:$0xf]
      %v3582 = vld [vmem:[%s372 + $0xa0] sm:$0xf]
      %v3583 = vld [vmem:[%s372 + $0xa4] sm:$0xf]
      %v3584 = vld [vmem:[%s372 + $0xa8] sm:$0xf]
      %v3585 = vld [vmem:[%s372 + $0xac] sm:$0xf]
      %v3586 = vld [vmem:[%s372 + $0xb0] sm:$0xf]
      %v3587 = vld [vmem:[%s372 + $0xb4] sm:$0xf]
      %v3588 = vld [vmem:[%s372 + $0xb8] sm:$0x1]
      %v3589 = vld [vmem:[%s8 + $0x180] sm:$0xf]
      %v3590 = vld [vmem:[%s8 + $0x184] sm:$0xf]
      %v3591 = vld [vmem:[%s8 + $0x188] sm:$0xf]
      %v3592 = vld [vmem:[%s8 + $0x18c] sm:$0xf]
      %v3593 = vld [vmem:[%s8 + $0x190] sm:$0xf]
      %v3594 = vld [vmem:[%s8 + $0x194] sm:$0xf]
      %v3595 = vld [vmem:[%s8 + $0x198] sm:$0xf]
      %v3596 = vld [vmem:[%s8 + $0x19c] sm:$0xf]
      %v3597 = vld [vmem:[%s8 + $0x1a0] sm:$0xf]
      %v3598 = vld [vmem:[%s8 + $0x1a4] sm:$0xf]
      %v3599 = vld [vmem:[%s8 + $0x1a8] sm:$0xf]
      %v3600 = vld [vmem:[%s8 + $0x1ac] sm:$0xf]
      %v3601 = vld [vmem:[%s8 + $0x1b0] sm:$0xf]
      %v3602 = vld [vmem:[%s8 + $0x1b4] sm:$0xf]
      %v3603 = vld [vmem:[%s8 + $0x1b8] sm:$0xf]
      %v3604 = vld [vmem:[%s8 + $0x1bc] sm:$0xf]
      %v3647 = vunpack.c.l.b16 %v3547
      %v3648 = vunpack.c.l.b16 %v3548
      %v3649 = vunpack.c.l.b16 %v3549
      %v3650 = vunpack.c.l.b16 %v3550
      %v3651 = vunpack.c.l.b16 %v3551
      %v3652 = vunpack.c.l.b16 %v3552
      %v3653 = vunpack.c.l.b16 %v3553
      %v3654 = vunpack.c.l.b16 %v3554
      %v3655 = vunpack.c.l.b16 %v3555
      %v3656 = vunpack.c.l.b16 %v3556
      %v3657 = vunpack.c.l.b16 %v3557
      %v3658 = vunpack.c.l.b16 %v3558
      %v3659 = vunpack.c.l.b16 %v3559
      %v3660 = vunpack.c.l.b16 %v3560
      %v3661 = vunpack.c.l.b16 %v3561
      %v3662 = vunpack.c.l.b16 %v3562
      %v3663 = vunpack.c.l.b16 %v3563
      %v3664 = vunpack.c.l.b16 %v3564
      %v3665 = vunpack.c.l.b16 %v3565
      %v3666 = vunpack.c.l.b16 %v3566
      %v3667 = vunpack.c.l.b16 %v3567
      %v3668 = vunpack.c.l.b16 %v3568
      %v3669 = vunpack.c.l.b16 %v3569
      %v3670 = vunpack.c.l.b16 %v3570
      %v3671 = vunpack.c.l.b16 %v3571
      %v3672 = vunpack.c.l.b16 %v3572
      %v3673 = vunpack.c.l.b16 %v3573
      %v3674 = vunpack.c.l.b16 %v3574
      %v3675 = vunpack.c.l.b16 %v3575
      %v3676 = vunpack.c.l.b16 %v3576
      %v3677 = vunpack.c.l.b16 %v3577
      %v3678 = vunpack.c.l.b16 %v3578
      %v3679 = vunpack.c.l.b16 %v3579
      %v3680 = vunpack.c.l.b16 %v3580
      %v3681 = vunpack.c.l.b16 %v3581
      %v3682 = vunpack.c.l.b16 %v3582
      %v3683 = vunpack.c.l.b16 %v3583
      %v3684 = vunpack.c.l.b16 %v3584
      %v3685 = vunpack.c.l.b16 %v3585
      %v3686 = vunpack.c.l.b16 %v3586
      %v3687 = vunpack.c.l.b16 %v3587
      %v3688 = vunpack.c.l.b16 %v3588
      %v3689 = vpack.c.b16 %v3648, %v3647
      %v3690 = vpack.c.b16 %v3650, %v3649
      %v3691 = vpack.c.b16 %v3652, %v3651
      %v3692 = vpack.c.b16 %v3654, %v3653
      %v3693 = vpack.c.b16 %v3656, %v3655
      %v3694 = vpack.c.b16 %v3658, %v3657
      %v3695 = vpack.c.b16 %v3660, %v3659
      %v3696 = vpack.c.b16 %v3662, %v3661
      %v3697 = vpack.c.b16 %v3664, %v3663
      %v3698 = vpack.c.b16 %v3666, %v3665
      %v3699 = vpack.c.b16 %v3668, %v3667
      %v3700 = vpack.c.b16 %v3670, %v3669
      %v3701 = vpack.c.b16 %v3672, %v3671
      %v3702 = vpack.c.b16 %v3674, %v3673
      %v3703 = vpack.c.b16 %v3676, %v3675
      %v3704 = vpack.c.b16 %v3678, %v3677
      %v3705 = vpack.c.b16 %v3680, %v3679
      %v3706 = vpack.c.b16 %v3682, %v3681
      %v3707 = vpack.c.b16 %v3684, %v3683
      %v3708 = vpack.c.b16 %v3686, %v3685
      %v3709 = vpack.c.b16 %v3688, %v3687
      %v3711 = vshrl.u32 %v3689, 16
      %v3713 = vshll.u32 %v3689, 16
      %v3715 = vrot.slane %v3713, 1
      %v3716 = vor.u32 %v3711, %v3715
      %v3718 = vshll.u32 %v3690, 16
      %v3720 = vrot.slane %v3718, 1
      %v3721 = vsel %vm3069, %v3716, %v3720
      %v3722 = vshrl.u32 %v3690, 16
      %v3724 = vor.u32 %v3722, %v3720
      %v3726 = vshll.u32 %v3691, 16
      %v3728 = vrot.slane %v3726, 1
      %v3729 = vsel %vm3069, %v3724, %v3728
      %v3730 = vshrl.u32 %v3691, 16
      %v3732 = vor.u32 %v3730, %v3728
      %v3734 = vshll.u32 %v3692, 16
      %v3736 = vrot.slane %v3734, 1
      %v3737 = vsel %vm3069, %v3732, %v3736
      %v3738 = vshrl.u32 %v3692, 16
      %v3740 = vor.u32 %v3738, %v3736
      %v3742 = vshll.u32 %v3693, 16
      %v3744 = vrot.slane %v3742, 1
      %v3745 = vsel %vm3069, %v3740, %v3744
      %v3746 = vshrl.u32 %v3693, 16
      %v3748 = vor.u32 %v3746, %v3744
      %v3750 = vshll.u32 %v3694, 16
      %v3752 = vrot.slane %v3750, 1
      %v3753 = vsel %vm3069, %v3748, %v3752
      %v3754 = vshrl.u32 %v3694, 16
      %v3756 = vor.u32 %v3754, %v3752
      %v3758 = vshll.u32 %v3695, 16
      %v3760 = vrot.slane %v3758, 1
      %v3761 = vsel %vm3069, %v3756, %v3760
      %v3762 = vshrl.u32 %v3695, 16
      %v3764 = vor.u32 %v3762, %v3760
      %v3766 = vshll.u32 %v3696, 16
      %v3768 = vrot.slane %v3766, 1
      %v3769 = vsel %vm3069, %v3764, %v3768
      %v3770 = vshrl.u32 %v3696, 16
      %v3772 = vor.u32 %v3770, %v3768
      %v3774 = vshll.u32 %v3697, 16
      %v3776 = vrot.slane %v3774, 1
      %v3777 = vsel %vm3069, %v3772, %v3776
      %v3778 = vshrl.u32 %v3697, 16
      %v3780 = vor.u32 %v3778, %v3776
      %v3782 = vshll.u32 %v3698, 16
      %v3784 = vrot.slane %v3782, 1
      %v3785 = vsel %vm3069, %v3780, %v3784
      %v3786 = vshrl.u32 %v3698, 16
      %v3788 = vor.u32 %v3786, %v3784
      %v3790 = vshll.u32 %v3699, 16
      %v3792 = vrot.slane %v3790, 1
      %v3793 = vsel %vm3069, %v3788, %v3792
      %v3794 = vshrl.u32 %v3699, 16
      %v3796 = vor.u32 %v3794, %v3792
      %v3798 = vshll.u32 %v3700, 16
      %v3800 = vrot.slane %v3798, 1
      %v3801 = vsel %vm3069, %v3796, %v3800
      %v3802 = vshrl.u32 %v3700, 16
      %v3804 = vor.u32 %v3802, %v3800
      %v3806 = vshll.u32 %v3701, 16
      %v3808 = vrot.slane %v3806, 1
      %v3809 = vsel %vm3069, %v3804, %v3808
      %v3810 = vshrl.u32 %v3701, 16
      %v3812 = vor.u32 %v3810, %v3808
      %v3814 = vshll.u32 %v3702, 16
      %v3816 = vrot.slane %v3814, 1
      %v3817 = vsel %vm3069, %v3812, %v3816
      %v3818 = vshrl.u32 %v3702, 16
      %v3820 = vor.u32 %v3818, %v3816
      %v3822 = vshll.u32 %v3703, 16
      %v3824 = vrot.slane %v3822, 1
      %v3825 = vsel %vm3069, %v3820, %v3824
      %v3826 = vshrl.u32 %v3703, 16
      %v3828 = vor.u32 %v3826, %v3824
      %v3830 = vshll.u32 %v3704, 16
      %v3832 = vrot.slane %v3830, 1
      %v3833 = vsel %vm3069, %v3828, %v3832
      %v3834 = vshrl.u32 %v3704, 16
      %v3836 = vor.u32 %v3834, %v3832
      %v3838 = vshll.u32 %v3705, 16
      %v3840 = vrot.slane %v3838, 1
      %v3841 = vsel %vm3069, %v3836, %v3840
      %v3842 = vshrl.u32 %v3705, 16
      %v3844 = vor.u32 %v3842, %v3840
      %v3846 = vshll.u32 %v3706, 16
      %v3848 = vrot.slane %v3846, 1
      %v3849 = vsel %vm3069, %v3844, %v3848
      %v3850 = vshrl.u32 %v3706, 16
      %v3852 = vor.u32 %v3850, %v3848
      %v3854 = vshll.u32 %v3707, 16
      %v3856 = vrot.slane %v3854, 1
      %v3857 = vsel %vm3069, %v3852, %v3856
      %v3858 = vshrl.u32 %v3707, 16
      %v3860 = vor.u32 %v3858, %v3856
      %v3862 = vshll.u32 %v3708, 16
      %v3864 = vrot.slane %v3862, 1
      %v3865 = vsel %vm3069, %v3860, %v3864
      %v3866 = vshrl.u32 %v3708, 16
      %v3868 = vor.u32 %v3866, %v3864
      %v3870 = vshll.u32 %v3709, 16
      %v3872 = vrot.slane %v3870, 1
      %v3873 = vsel %vm3069, %v3868, %v3872
      %v3874 = vshrl.u32 %v3709, 16
      %v3876 = vor.u32 %v3874, %v3872
      %v3914 = vunpack.c.l.b16 %v3589
      %v3915 = vunpack.c.l.b16 %v3590
      %v3916 = vunpack.c.l.b16 %v3591
      %v3917 = vunpack.c.l.b16 %v3592
      %v3918 = vunpack.c.l.b16 %v3593
      %v3919 = vunpack.c.l.b16 %v3594
      %v3920 = vunpack.c.l.b16 %v3595
      %v3921 = vunpack.c.l.b16 %v3596
      %v3922 = vunpack.c.l.b16 %v3597
      %v3923 = vunpack.c.l.b16 %v3598
      %v3924 = vunpack.c.l.b16 %v3599
      %v3925 = vunpack.c.l.b16 %v3600
      %v3926 = vunpack.c.l.b16 %v3601
      %v3927 = vunpack.c.l.b16 %v3602
      %v3928 = vunpack.c.l.b16 %v3603
      %v3929 = vunpack.c.l.b16 %v3604
      %v3930 = vpack.c.b16 %v3915, %v3914
      %v3931 = vpack.c.b16 %v3917, %v3916
      %v3932 = vpack.c.b16 %v3919, %v3918
      %v3933 = vpack.c.b16 %v3921, %v3920
      %v3934 = vpack.c.b16 %v3923, %v3922
      %v3935 = vpack.c.b16 %v3925, %v3924
      %v3936 = vpack.c.b16 %v3927, %v3926
      %v3937 = vpack.c.b16 %v3929, %v3928
      %3946 = vmatprep.subr.bf16.mxu0 0
      %3947 = vmatpush1.bf16.msra.mxu0 %v3937
      %3948 = vmatprep.subr.bf16.mxu0 0
      %3949 = vmatpush1.bf16.msra.mxu0 %v3936
      %3950 = vmatprep.subr.bf16.mxu0 0
      %3951 = vmatpush1.bf16.msra.mxu0 %v3935
      %3952 = vmatprep.subr.bf16.mxu0 0
      %3953 = vmatpush1.bf16.msra.mxu0 %v3934
      %3954 = vmatprep.subr.bf16.mxu0 0
      %3955 = vmatpush1.bf16.msra.mxu0 %v3933
      %3956 = vmatprep.subr.bf16.mxu0 0
      %3957 = vmatpush1.bf16.msra.mxu0 %v3932
      %3958 = vmatprep.subr.bf16.mxu0 0
      %3959 = vmatpush1.bf16.msra.mxu0 %v3931
      %3960 = vmatprep.subr.bf16.mxu0 0
      %3961 = vmatpush1.bf16.msra.mxu0 %v3930
      %3962 = vmatprep.subr.bf16.mxu0 0
      %3963 = vmatpush2.bf16.msra.mxu0 0
      %3964 = vmatprep.subr.bf16.mxu0 0
      %3965 = vmatpush2.bf16.msra.mxu0 0
      %3966 = vmatprep.subr.bf16.mxu0 0
      %3967 = vmatpush2.bf16.msra.mxu0 0
      %3968 = vmatprep.subr.bf16.mxu0 0
      %3969 = vmatpush2.bf16.msra.mxu0 0
      %3970 = vmatprep.subr.bf16.mxu0 0
      %3971 = vmatpush2.bf16.msra.mxu0 0
      %3972 = vmatprep.subr.bf16.mxu0 0
      %3973 = vmatpush2.bf16.msra.mxu0 0
      %3974 = vmatprep.subr.bf16.mxu0 0
      %3975 = vmatpush2.bf16.msra.mxu0 0
      %3976 = vmatprep.subr.bf16.mxu0 0
      %3977 = vmatpush2.bf16.msra.mxu0 0
      %3978 = vmatprep.mubr.bf16.mxu0 0
      %3979 = vmatmul.mubr.bf16.gmra.mxu0 %v3721
      %v3980 = vpop.f32.mrf.mxu0
      %v3981 = vadd.f32 0.0, %v3980
      %v3982 = vpop.f32.mrf.mxu0
      %v3983 = vpop.f32.mrf.mxu0
      %v3984 = vadd.f32 0.0, %v3983
      %v3985 = vpop.f32.mrf.mxu0
      %3986 = vmatprep.mubr.bf16.mxu0 0
      %3987 = vmatmul.mubr.bf16.gmra.mxu0 %v3729
      %v3988 = vpop.f32.mrf.mxu0
      %v3989 = vadd.f32 0.0, %v3988
      %v3990 = vpop.f32.mrf.mxu0
      %v3991 = vpop.f32.mrf.mxu0
      %v3992 = vadd.f32 0.0, %v3991
      %v3993 = vpop.f32.mrf.mxu0
      %3994 = vmatprep.mubr.bf16.mxu0 0
      %3995 = vmatmul.mubr.bf16.gmra.mxu0 %v3737
      %v3996 = vpop.f32.mrf.mxu0
      %v3997 = vadd.f32 0.0, %v3996
      %v3998 = vpop.f32.mrf.mxu0
      %v3999 = vpop.f32.mrf.mxu0
      %v4000 = vadd.f32 0.0, %v3999
      %v4001 = vpop.f32.mrf.mxu0
      %4002 = vmatprep.mubr.bf16.mxu0 0
      %4003 = vmatmul.mubr.bf16.gmra.mxu0 %v3745
      %v4004 = vpop.f32.mrf.mxu0
      %v4005 = vadd.f32 0.0, %v4004
      %v4006 = vpop.f32.mrf.mxu0
      %v4007 = vpop.f32.mrf.mxu0
      %v4008 = vadd.f32 0.0, %v4007
      %v4009 = vpop.f32.mrf.mxu0
      %4010 = vmatprep.mubr.bf16.mxu0 0
      %4011 = vmatmul.mubr.bf16.gmra.mxu0 %v3753
      %v4012 = vpop.f32.mrf.mxu0
      %v4013 = vadd.f32 0.0, %v4012
      %v4014 = vpop.f32.mrf.mxu0
      %v4015 = vpop.f32.mrf.mxu0
      %v4016 = vadd.f32 0.0, %v4015
      %v4017 = vpop.f32.mrf.mxu0
      %4018 = vmatprep.mubr.bf16.mxu0 0
      %4019 = vmatmul.mubr.bf16.gmra.mxu0 %v3761
      %v4020 = vpop.f32.mrf.mxu0
      %v4021 = vadd.f32 0.0, %v4020
      %v4022 = vpop.f32.mrf.mxu0
      %v4023 = vpop.f32.mrf.mxu0
      %v4024 = vadd.f32 0.0, %v4023
      %v4025 = vpop.f32.mrf.mxu0
      %4026 = vmatprep.mubr.bf16.mxu0 0
      %4027 = vmatmul.mubr.bf16.gmra.mxu0 %v3769
      %v4028 = vpop.f32.mrf.mxu0
      %v4029 = vadd.f32 0.0, %v4028
      %v4030 = vpop.f32.mrf.mxu0
      %v4031 = vpop.f32.mrf.mxu0
      %v4032 = vadd.f32 0.0, %v4031
      %v4033 = vpop.f32.mrf.mxu0
      %4034 = vmatprep.mubr.bf16.mxu0 0
      %4035 = vmatmul.mubr.bf16.gmra.mxu0 %v3777
      %v4036 = vpop.f32.mrf.mxu0
      %v4037 = vadd.f32 0.0, %v4036
      %v4038 = vpop.f32.mrf.mxu0
      %v4039 = vpop.f32.mrf.mxu0
      %v4040 = vadd.f32 0.0, %v4039
      %v4041 = vpop.f32.mrf.mxu0
      %4042 = vmatprep.mubr.bf16.mxu0 0
      %4043 = vmatmul.mubr.bf16.gmra.mxu0 %v3785
      %v4044 = vpop.f32.mrf.mxu0
      %v4045 = vadd.f32 0.0, %v4044
      %v4046 = vpop.f32.mrf.mxu0
      %v4047 = vpop.f32.mrf.mxu0
      %v4048 = vadd.f32 0.0, %v4047
      %v4049 = vpop.f32.mrf.mxu0
      %4050 = vmatprep.mubr.bf16.mxu0 0
      %4051 = vmatmul.mubr.bf16.gmra.mxu0 %v3793
      %v4052 = vpop.f32.mrf.mxu0
      %v4053 = vadd.f32 0.0, %v4052
      %v4054 = vpop.f32.mrf.mxu0
      %v4055 = vpop.f32.mrf.mxu0
      %v4056 = vadd.f32 0.0, %v4055
      %v4057 = vpop.f32.mrf.mxu0
      %4058 = vmatprep.mubr.bf16.mxu0 0
      %4059 = vmatmul.mubr.bf16.gmra.mxu0 %v3801
      %v4060 = vpop.f32.mrf.mxu0
      %v4061 = vadd.f32 0.0, %v4060
      %v4062 = vpop.f32.mrf.mxu0
      %v4063 = vpop.f32.mrf.mxu0
      %v4064 = vadd.f32 0.0, %v4063
      %v4065 = vpop.f32.mrf.mxu0
      %4066 = vmatprep.mubr.bf16.mxu0 0
      %4067 = vmatmul.mubr.bf16.gmra.mxu0 %v3809
      %v4068 = vpop.f32.mrf.mxu0
      %v4069 = vadd.f32 0.0, %v4068
      %v4070 = vpop.f32.mrf.mxu0
      %v4071 = vpop.f32.mrf.mxu0
      %v4072 = vadd.f32 0.0, %v4071
      %v4073 = vpop.f32.mrf.mxu0
      %4074 = vmatprep.mubr.bf16.mxu0 0
      %4075 = vmatmul.mubr.bf16.gmra.mxu0 %v3817
      %v4076 = vpop.f32.mrf.mxu0
      %v4077 = vadd.f32 0.0, %v4076
      %v4078 = vpop.f32.mrf.mxu0
      %v4079 = vpop.f32.mrf.mxu0
      %v4080 = vadd.f32 0.0, %v4079
      %v4081 = vpop.f32.mrf.mxu0
      %4082 = vmatprep.mubr.bf16.mxu0 0
      %4083 = vmatmul.mubr.bf16.gmra.mxu0 %v3825
      %v4084 = vpop.f32.mrf.mxu0
      %v4085 = vadd.f32 0.0, %v4084
      %v4086 = vpop.f32.mrf.mxu0
      %v4087 = vpop.f32.mrf.mxu0
      %v4088 = vadd.f32 0.0, %v4087
      %v4089 = vpop.f32.mrf.mxu0
      %4090 = vmatprep.mubr.bf16.mxu0 0
      %4091 = vmatmul.mubr.bf16.gmra.mxu0 %v3833
      %v4092 = vpop.f32.mrf.mxu0
      %v4093 = vadd.f32 0.0, %v4092
      %v4094 = vpop.f32.mrf.mxu0
      %v4095 = vpop.f32.mrf.mxu0
      %v4096 = vadd.f32 0.0, %v4095
      %v4097 = vpop.f32.mrf.mxu0
      %4098 = vmatprep.mubr.bf16.mxu0 0
      %4099 = vmatmul.mubr.bf16.gmra.mxu0 %v3841
      %v4100 = vpop.f32.mrf.mxu0
      %v4101 = vadd.f32 0.0, %v4100
      %v4102 = vpop.f32.mrf.mxu0
      %v4103 = vpop.f32.mrf.mxu0
      %v4104 = vadd.f32 0.0, %v4103
      %v4105 = vpop.f32.mrf.mxu0
      %4106 = vmatprep.mubr.bf16.mxu0 0
      %4107 = vmatmul.mubr.bf16.gmra.mxu0 %v3849
      %v4108 = vpop.f32.mrf.mxu0
      %v4109 = vadd.f32 0.0, %v4108
      %v4110 = vpop.f32.mrf.mxu0
      %v4111 = vpop.f32.mrf.mxu0
      %v4112 = vadd.f32 0.0, %v4111
      %v4113 = vpop.f32.mrf.mxu0
      %4114 = vmatprep.mubr.bf16.mxu0 0
      %4115 = vmatmul.mubr.bf16.gmra.mxu0 %v3857
      %v4116 = vpop.f32.mrf.mxu0
      %v4117 = vadd.f32 0.0, %v4116
      %v4118 = vpop.f32.mrf.mxu0
      %v4119 = vpop.f32.mrf.mxu0
      %v4120 = vadd.f32 0.0, %v4119
      %v4121 = vpop.f32.mrf.mxu0
      %4122 = vmatprep.mubr.bf16.mxu0 0
      %4123 = vmatmul.mubr.bf16.gmra.mxu0 %v3865
      %v4124 = vpop.f32.mrf.mxu0
      %v4125 = vadd.f32 0.0, %v4124
      %v4126 = vpop.f32.mrf.mxu0
      %v4127 = vpop.f32.mrf.mxu0
      %v4128 = vadd.f32 0.0, %v4127
      %v4129 = vpop.f32.mrf.mxu0
      %4130 = vmatprep.mubr.bf16.mxu0 0
      %4131 = vmatmul.mubr.bf16.gmra.mxu0 %v3873
      %v4132 = vpop.f32.mrf.mxu0
      %v4133 = vadd.f32 0.0, %v4132
      %v4134 = vpop.f32.mrf.mxu0
      %v4135 = vpop.f32.mrf.mxu0
      %v4136 = vadd.f32 0.0, %v4135
      %v4137 = vpop.f32.mrf.mxu0
      %4138 = vmatprep.mubr.bf16.mxu0 0
      %4139 = vmatmul.mubr.bf16.gmra.mxu0 %v3876
      %v4140 = vpop.f32.mrf.mxu0
      %v4141 = vadd.f32 0.0, %v4140
      %v4142 = vpop.f32.mrf.mxu0
      %v4143 = vpop.f32.mrf.mxu0
      %v4144 = vpop.f32.mrf.mxu0
      %4145 = vdwg.mxu0
      %v4146 = vadd.f32 %v3506, %v3981
      %v4147 = vadd.f32 %v3507, %v3984
      %v4148 = vadd.f32 %v3508, %v3989
      %v4149 = vadd.f32 %v3509, %v3992
      %v4150 = vadd.f32 %v3510, %v3997
      %v4151 = vadd.f32 %v3511, %v4000
      %v4152 = vadd.f32 %v3512, %v4005
      %v4153 = vadd.f32 %v3513, %v4008
      %v4154 = vadd.f32 %v3514, %v4013
      %v4155 = vadd.f32 %v3515, %v4016
      %v4156 = vadd.f32 %v3516, %v4021
      %v4157 = vadd.f32 %v3517, %v4024
      %v4158 = vadd.f32 %v3518, %v4029
      %v4159 = vadd.f32 %v3519, %v4032
      %v4160 = vadd.f32 %v3520, %v4037
      %v4161 = vadd.f32 %v3521, %v4040
      %v4162 = vadd.f32 %v3522, %v4045
      %v4163 = vadd.f32 %v3523, %v4048
      %v4164 = vadd.f32 %v3524, %v4053
      %v4165 = vadd.f32 %v3525, %v4056
      %v4166 = vadd.f32 %v3526, %v4061
      %v4167 = vadd.f32 %v3527, %v4064
      %v4168 = vadd.f32 %v3528, %v4069
      %v4169 = vadd.f32 %v3529, %v4072
      %v4170 = vadd.f32 %v3530, %v4077
      %v4171 = vadd.f32 %v3531, %v4080
      %v4172 = vadd.f32 %v3532, %v4085
      %v4173 = vadd.f32 %v3533, %v4088
      %v4174 = vadd.f32 %v3534, %v4093
      %v4175 = vadd.f32 %v3535, %v4096
      %v4176 = vadd.f32 %v3536, %v4101
      %v4177 = vadd.f32 %v3537, %v4104
      %v4178 = vadd.f32 %v3538, %v4109
      %v4179 = vadd.f32 %v3539, %v4112
      %v4180 = vadd.f32 %v3540, %v4117
      %v4181 = vadd.f32 %v3541, %v4120
      %v4182 = vadd.f32 %v3542, %v4125
      %v4183 = vadd.f32 %v3543, %v4128
      %v4184 = vadd.f32 %v3544, %v4133
      %v4185 = vadd.f32 %v3545, %v4136
      %v4186 = vadd.f32 %v3546, %v4141
      %v4187 = vld [vmem:[%s372 + $0x14] sm:$0xe]
      %v4188 = vld [vmem:[%s8 + $0x1c0] sm:$0xf]
      %v4189 = vld [vmem:[%s8 + $0x1c4] sm:$0xf]
      %v4190 = vld [vmem:[%s8 + $0x1c8] sm:$0xf]
      %v4191 = vld [vmem:[%s8 + $0x1cc] sm:$0xf]
      %v4192 = vld [vmem:[%s8 + $0x1d0] sm:$0xf]
      %v4193 = vld [vmem:[%s8 + $0x1d4] sm:$0xf]
      %v4194 = vld [vmem:[%s8 + $0x1d8] sm:$0xf]
      %v4195 = vld [vmem:[%s8 + $0x1dc] sm:$0xf]
      %v4196 = vld [vmem:[%s8 + $0x1e0] sm:$0xf]
      %v4197 = vld [vmem:[%s8 + $0x1e4] sm:$0xf]
      %v4198 = vld [vmem:[%s8 + $0x1e8] sm:$0xf]
      %v4199 = vld [vmem:[%s8 + $0x1ec] sm:$0xf]
      %v4200 = vld [vmem:[%s8 + $0x1f0] sm:$0xf]
      %v4201 = vld [vmem:[%s8 + $0x1f4] sm:$0xf]
      %v4202 = vld [vmem:[%s8 + $0x1f8] sm:$0xf]
      %v4203 = vld [vmem:[%s8 + $0x1fc] sm:$0xf]
      %v4205 = vunpack.c.l.b16 %v4187
      %v4206 = vpack.c.b16 %v3648, %v4205
      %vm4207 = vcmask 1046528
      %v4208 = vrot.slane %v4206, 1
      %v4209 = vrot.slane %v3690, 1
      %v4210 = vsel %vm4207, %v4208, %v4209
      %v4211 = vrot.slane %v3691, 1
      %v4212 = vsel %vm4207, %v4209, %v4211
      %v4213 = vrot.slane %v3692, 1
      %v4214 = vsel %vm4207, %v4211, %v4213
      %v4215 = vrot.slane %v3693, 1
      %v4216 = vsel %vm4207, %v4213, %v4215
      %v4217 = vrot.slane %v3694, 1
      %v4218 = vsel %vm4207, %v4215, %v4217
      %v4219 = vrot.slane %v3695, 1
      %v4220 = vsel %vm4207, %v4217, %v4219
      %v4221 = vrot.slane %v3696, 1
      %v4222 = vsel %vm4207, %v4219, %v4221
      %v4223 = vrot.slane %v3697, 1
      %v4224 = vsel %vm4207, %v4221, %v4223
      %v4225 = vrot.slane %v3698, 1
      %v4226 = vsel %vm4207, %v4223, %v4225
      %v4227 = vrot.slane %v3699, 1
      %v4228 = vsel %vm4207, %v4225, %v4227
      %v4229 = vrot.slane %v3700, 1
      %v4230 = vsel %vm4207, %v4227, %v4229
      %v4231 = vrot.slane %v3701, 1
      %v4232 = vsel %vm4207, %v4229, %v4231
      %v4233 = vrot.slane %v3702, 1
      %v4234 = vsel %vm4207, %v4231, %v4233
      %v4235 = vrot.slane %v3703, 1
      %v4236 = vsel %vm4207, %v4233, %v4235
      %v4237 = vrot.slane %v3704, 1
      %v4238 = vsel %vm4207, %v4235, %v4237
      %v4239 = vrot.slane %v3705, 1
      %v4240 = vsel %vm4207, %v4237, %v4239
      %v4241 = vrot.slane %v3706, 1
      %v4242 = vsel %vm4207, %v4239, %v4241
      %v4243 = vrot.slane %v3707, 1
      %v4244 = vsel %vm4207, %v4241, %v4243
      %v4245 = vrot.slane %v3708, 1
      %v4246 = vsel %vm4207, %v4243, %v4245
      %v4247 = vrot.slane %v3709, 1
      %v4248 = vsel %vm4207, %v4245, %v4247
      %v4286 = vunpack.c.l.b16 %v4188
      %v4287 = vunpack.c.l.b16 %v4189
      %v4288 = vunpack.c.l.b16 %v4190
      %v4289 = vunpack.c.l.b16 %v4191
      %v4290 = vunpack.c.l.b16 %v4192
      %v4291 = vunpack.c.l.b16 %v4193
      %v4292 = vunpack.c.l.b16 %v4194
      %v4293 = vunpack.c.l.b16 %v4195
      %v4294 = vunpack.c.l.b16 %v4196
      %v4295 = vunpack.c.l.b16 %v4197
      %v4296 = vunpack.c.l.b16 %v4198
      %v4297 = vunpack.c.l.b16 %v4199
      %v4298 = vunpack.c.l.b16 %v4200
      %v4299 = vunpack.c.l.b16 %v4201
      %v4300 = vunpack.c.l.b16 %v4202
      %v4301 = vunpack.c.l.b16 %v4203
      %v4302 = vpack.c.b16 %v4287, %v4286
      %v4303 = vpack.c.b16 %v4289, %v4288
      %v4304 = vpack.c.b16 %v4291, %v4290
      %v4305 = vpack.c.b16 %v4293, %v4292
      %v4306 = vpack.c.b16 %v4295, %v4294
      %v4307 = vpack.c.b16 %v4297, %v4296
      %v4308 = vpack.c.b16 %v4299, %v4298
      %v4309 = vpack.c.b16 %v4301, %v4300
      %4318 = vmatprep.subr.bf16.mxu0 0
      %4319 = vmatpush1.bf16.msra.mxu0 %v4309
      %4320 = vmatprep.subr.bf16.mxu0 0
      %4321 = vmatpush1.bf16.msra.mxu0 %v4308
      %4322 = vmatprep.subr.bf16.mxu0 0
      %4323 = vmatpush1.bf16.msra.mxu0 %v4307
      %4324 = vmatprep.subr.bf16.mxu0 0
      %4325 = vmatpush1.bf16.msra.mxu0 %v4306
      %4326 = vmatprep.subr.bf16.mxu0 0
      %4327 = vmatpush1.bf16.msra.mxu0 %v4305
      %4328 = vmatprep.subr.bf16.mxu0 0
      %4329 = vmatpush1.bf16.msra.mxu0 %v4304
      %4330 = vmatprep.subr.bf16.mxu0 0
      %4331 = vmatpush1.bf16.msra.mxu0 %v4303
      %4332 = vmatprep.subr.bf16.mxu0 0
      %4333 = vmatpush1.bf16.msra.mxu0 %v4302
      %4334 = vmatprep.subr.bf16.mxu0 0
      %4335 = vmatpush2.bf16.msra.mxu0 0
      %4336 = vmatprep.subr.bf16.mxu0 0
      %4337 = vmatpush2.bf16.msra.mxu0 0
      %4338 = vmatprep.subr.bf16.mxu0 0
      %4339 = vmatpush2.bf16.msra.mxu0 0
      %4340 = vmatprep.subr.bf16.mxu0 0
      %4341 = vmatpush2.bf16.msra.mxu0 0
      %4342 = vmatprep.subr.bf16.mxu0 0
      %4343 = vmatpush2.bf16.msra.mxu0 0
      %4344 = vmatprep.subr.bf16.mxu0 0
      %4345 = vmatpush2.bf16.msra.mxu0 0
      %4346 = vmatprep.subr.bf16.mxu0 0
      %4347 = vmatpush2.bf16.msra.mxu0 0
      %4348 = vmatprep.subr.bf16.mxu0 0
      %4349 = vmatpush2.bf16.msra.mxu0 0
      %4350 = vmatprep.mubr.bf16.mxu0 0
      %4351 = vmatmul.mubr.bf16.gmra.mxu0 %v4210
      %v4352 = vpop.f32.mrf.mxu0
      %v4353 = vadd.f32 0.0, %v4352
      %v4354 = vpop.f32.mrf.mxu0
      %v4355 = vpop.f32.mrf.mxu0
      %v4356 = vadd.f32 0.0, %v4355
      %v4357 = vpop.f32.mrf.mxu0
      %4358 = vmatprep.mubr.bf16.mxu0 0
      %4359 = vmatmul.mubr.bf16.gmra.mxu0 %v4212
      %v4360 = vpop.f32.mrf.mxu0
      %v4361 = vadd.f32 0.0, %v4360
      %v4362 = vpop.f32.mrf.mxu0
      %v4363 = vpop.f32.mrf.mxu0
      %v4364 = vadd.f32 0.0, %v4363
      %v4365 = vpop.f32.mrf.mxu0
      %4366 = vmatprep.mubr.bf16.mxu0 0
      %4367 = vmatmul.mubr.bf16.gmra.mxu0 %v4214
      %v4368 = vpop.f32.mrf.mxu0
      %v4369 = vadd.f32 0.0, %v4368
      %v4370 = vpop.f32.mrf.mxu0
      %v4371 = vpop.f32.mrf.mxu0
      %v4372 = vadd.f32 0.0, %v4371
      %v4373 = vpop.f32.mrf.mxu0
      %4374 = vmatprep.mubr.bf16.mxu0 0
      %4375 = vmatmul.mubr.bf16.gmra.mxu0 %v4216
      %v4376 = vpop.f32.mrf.mxu0
      %v4377 = vadd.f32 0.0, %v4376
      %v4378 = vpop.f32.mrf.mxu0
      %v4379 = vpop.f32.mrf.mxu0
      %v4380 = vadd.f32 0.0, %v4379
      %v4381 = vpop.f32.mrf.mxu0
      %4382 = vmatprep.mubr.bf16.mxu0 0
      %4383 = vmatmul.mubr.bf16.gmra.mxu0 %v4218
      %v4384 = vpop.f32.mrf.mxu0
      %v4385 = vadd.f32 0.0, %v4384
      %v4386 = vpop.f32.mrf.mxu0
      %v4387 = vpop.f32.mrf.mxu0
      %v4388 = vadd.f32 0.0, %v4387
      %v4389 = vpop.f32.mrf.mxu0
      %4390 = vmatprep.mubr.bf16.mxu0 0
      %4391 = vmatmul.mubr.bf16.gmra.mxu0 %v4220
      %v4392 = vpop.f32.mrf.mxu0
      %v4393 = vadd.f32 0.0, %v4392
      %v4394 = vpop.f32.mrf.mxu0
      %v4395 = vpop.f32.mrf.mxu0
      %v4396 = vadd.f32 0.0, %v4395
      %v4397 = vpop.f32.mrf.mxu0
      %4398 = vmatprep.mubr.bf16.mxu0 0
      %4399 = vmatmul.mubr.bf16.gmra.mxu0 %v4222
      %v4400 = vpop.f32.mrf.mxu0
      %v4401 = vadd.f32 0.0, %v4400
      %v4402 = vpop.f32.mrf.mxu0
      %v4403 = vpop.f32.mrf.mxu0
      %v4404 = vadd.f32 0.0, %v4403
      %v4405 = vpop.f32.mrf.mxu0
      %4406 = vmatprep.mubr.bf16.mxu0 0
      %4407 = vmatmul.mubr.bf16.gmra.mxu0 %v4224
      %v4408 = vpop.f32.mrf.mxu0
      %v4409 = vadd.f32 0.0, %v4408
      %v4410 = vpop.f32.mrf.mxu0
      %v4411 = vpop.f32.mrf.mxu0
      %v4412 = vadd.f32 0.0, %v4411
      %v4413 = vpop.f32.mrf.mxu0
      %4414 = vmatprep.mubr.bf16.mxu0 0
      %4415 = vmatmul.mubr.bf16.gmra.mxu0 %v4226
      %v4416 = vpop.f32.mrf.mxu0
      %v4417 = vadd.f32 0.0, %v4416
      %v4418 = vpop.f32.mrf.mxu0
      %v4419 = vpop.f32.mrf.mxu0
      %v4420 = vadd.f32 0.0, %v4419
      %v4421 = vpop.f32.mrf.mxu0
      %4422 = vmatprep.mubr.bf16.mxu0 0
      %4423 = vmatmul.mubr.bf16.gmra.mxu0 %v4228
      %v4424 = vpop.f32.mrf.mxu0
      %v4425 = vadd.f32 0.0, %v4424
      %v4426 = vpop.f32.mrf.mxu0
      %v4427 = vpop.f32.mrf.mxu0
      %v4428 = vadd.f32 0.0, %v4427
      %v4429 = vpop.f32.mrf.mxu0
      %4430 = vmatprep.mubr.bf16.mxu0 0
      %4431 = vmatmul.mubr.bf16.gmra.mxu0 %v4230
      %v4432 = vpop.f32.mrf.mxu0
      %v4433 = vadd.f32 0.0, %v4432
      %v4434 = vpop.f32.mrf.mxu0
      %v4435 = vpop.f32.mrf.mxu0
      %v4436 = vadd.f32 0.0, %v4435
      %v4437 = vpop.f32.mrf.mxu0
      %4438 = vmatprep.mubr.bf16.mxu0 0
      %4439 = vmatmul.mubr.bf16.gmra.mxu0 %v4232
      %v4440 = vpop.f32.mrf.mxu0
      %v4441 = vadd.f32 0.0, %v4440
      %v4442 = vpop.f32.mrf.mxu0
      %v4443 = vpop.f32.mrf.mxu0
      %v4444 = vadd.f32 0.0, %v4443
      %v4445 = vpop.f32.mrf.mxu0
      %4446 = vmatprep.mubr.bf16.mxu0 0
      %4447 = vmatmul.mubr.bf16.gmra.mxu0 %v4234
      %v4448 = vpop.f32.mrf.mxu0
      %v4449 = vadd.f32 0.0, %v4448
      %v4450 = vpop.f32.mrf.mxu0
      %v4451 = vpop.f32.mrf.mxu0
      %v4452 = vadd.f32 0.0, %v4451
      %v4453 = vpop.f32.mrf.mxu0
      %4454 = vmatprep.mubr.bf16.mxu0 0
      %4455 = vmatmul.mubr.bf16.gmra.mxu0 %v4236
      %v4456 = vpop.f32.mrf.mxu0
      %v4457 = vadd.f32 0.0, %v4456
      %v4458 = vpop.f32.mrf.mxu0
      %v4459 = vpop.f32.mrf.mxu0
      %v4460 = vadd.f32 0.0, %v4459
      %v4461 = vpop.f32.mrf.mxu0
      %4462 = vmatprep.mubr.bf16.mxu0 0
      %4463 = vmatmul.mubr.bf16.gmra.mxu0 %v4238
      %v4464 = vpop.f32.mrf.mxu0
      %v4465 = vadd.f32 0.0, %v4464
      %v4466 = vpop.f32.mrf.mxu0
      %v4467 = vpop.f32.mrf.mxu0
      %v4468 = vadd.f32 0.0, %v4467
      %v4469 = vpop.f32.mrf.mxu0
      %4470 = vmatprep.mubr.bf16.mxu0 0
      %4471 = vmatmul.mubr.bf16.gmra.mxu0 %v4240
      %v4472 = vpop.f32.mrf.mxu0
      %v4473 = vadd.f32 0.0, %v4472
      %v4474 = vpop.f32.mrf.mxu0
      %v4475 = vpop.f32.mrf.mxu0
      %v4476 = vadd.f32 0.0, %v4475
      %v4477 = vpop.f32.mrf.mxu0
      %4478 = vmatprep.mubr.bf16.mxu0 0
      %4479 = vmatmul.mubr.bf16.gmra.mxu0 %v4242
      %v4480 = vpop.f32.mrf.mxu0
      %v4481 = vadd.f32 0.0, %v4480
      %v4482 = vpop.f32.mrf.mxu0
      %v4483 = vpop.f32.mrf.mxu0
      %v4484 = vadd.f32 0.0, %v4483
      %v4485 = vpop.f32.mrf.mxu0
      %4486 = vmatprep.mubr.bf16.mxu0 0
      %4487 = vmatmul.mubr.bf16.gmra.mxu0 %v4244
      %v4488 = vpop.f32.mrf.mxu0
      %v4489 = vadd.f32 0.0, %v4488
      %v4490 = vpop.f32.mrf.mxu0
      %v4491 = vpop.f32.mrf.mxu0
      %v4492 = vadd.f32 0.0, %v4491
      %v4493 = vpop.f32.mrf.mxu0
      %4494 = vmatprep.mubr.bf16.mxu0 0
      %4495 = vmatmul.mubr.bf16.gmra.mxu0 %v4246
      %v4496 = vpop.f32.mrf.mxu0
      %v4497 = vadd.f32 0.0, %v4496
      %v4498 = vpop.f32.mrf.mxu0
      %v4499 = vpop.f32.mrf.mxu0
      %v4500 = vadd.f32 0.0, %v4499
      %v4501 = vpop.f32.mrf.mxu0
      %4502 = vmatprep.mubr.bf16.mxu0 0
      %4503 = vmatmul.mubr.bf16.gmra.mxu0 %v4248
      %v4504 = vpop.f32.mrf.mxu0
      %v4505 = vadd.f32 0.0, %v4504
      %v4506 = vpop.f32.mrf.mxu0
      %v4507 = vpop.f32.mrf.mxu0
      %v4508 = vadd.f32 0.0, %v4507
      %v4509 = vpop.f32.mrf.mxu0
      %4510 = vmatprep.mubr.bf16.mxu0 0
      %4511 = vmatmul.mubr.bf16.gmra.mxu0 %v4247
      %v4512 = vpop.f32.mrf.mxu0
      %v4513 = vadd.f32 0.0, %v4512
      %v4514 = vpop.f32.mrf.mxu0
      %v4515 = vpop.f32.mrf.mxu0
      %v4516 = vpop.f32.mrf.mxu0
      %4517 = vdwg.mxu0
      %v4518 = vadd.f32 %v4146, %v4353
      %v4519 = vadd.f32 %v4147, %v4356
      %v4520 = vadd.f32 %v4148, %v4361
      %v4521 = vadd.f32 %v4149, %v4364
      %v4522 = vadd.f32 %v4150, %v4369
      %v4523 = vadd.f32 %v4151, %v4372
      %v4524 = vadd.f32 %v4152, %v4377
      %v4525 = vadd.f32 %v4153, %v4380
      %v4526 = vadd.f32 %v4154, %v4385
      %v4527 = vadd.f32 %v4155, %v4388
      %v4528 = vadd.f32 %v4156, %v4393
      %v4529 = vadd.f32 %v4157, %v4396
      %v4530 = vadd.f32 %v4158, %v4401
      %v4531 = vadd.f32 %v4159, %v4404
      %v4532 = vadd.f32 %v4160, %v4409
      %v4533 = vadd.f32 %v4161, %v4412
      %v4534 = vadd.f32 %v4162, %v4417
      %v4535 = vadd.f32 %v4163, %v4420
      %v4536 = vadd.f32 %v4164, %v4425
      %v4537 = vadd.f32 %v4165, %v4428
      %v4538 = vadd.f32 %v4166, %v4433
      %v4539 = vadd.f32 %v4167, %v4436
      %v4540 = vadd.f32 %v4168, %v4441
      %v4541 = vadd.f32 %v4169, %v4444
      %v4542 = vadd.f32 %v4170, %v4449
      %v4543 = vadd.f32 %v4171, %v4452
      %v4544 = vadd.f32 %v4172, %v4457
      %v4545 = vadd.f32 %v4173, %v4460
      %v4546 = vadd.f32 %v4174, %v4465
      %v4547 = vadd.f32 %v4175, %v4468
      %v4548 = vadd.f32 %v4176, %v4473
      %v4549 = vadd.f32 %v4177, %v4476
      %v4550 = vadd.f32 %v4178, %v4481
      %v4551 = vadd.f32 %v4179, %v4484
      %v4552 = vadd.f32 %v4180, %v4489
      %v4553 = vadd.f32 %v4181, %v4492
      %v4554 = vadd.f32 %v4182, %v4497
      %v4555 = vadd.f32 %v4183, %v4500
      %v4556 = vadd.f32 %v4184, %v4505
      %v4557 = vadd.f32 %v4185, %v4508
      %v4558 = vadd.f32 %v4186, %v4513
      %v4559 = vld [vmem:[%s372 + $0xb8] sm:$0x3]
      %v4560 = vld [vmem:[%s8 + $0x200] sm:$0xf]
      %v4561 = vld [vmem:[%s8 + $0x204] sm:$0xf]
      %v4562 = vld [vmem:[%s8 + $0x208] sm:$0xf]
      %v4563 = vld [vmem:[%s8 + $0x20c] sm:$0xf]
      %v4564 = vld [vmem:[%s8 + $0x210] sm:$0xf]
      %v4565 = vld [vmem:[%s8 + $0x214] sm:$0xf]
      %v4566 = vld [vmem:[%s8 + $0x218] sm:$0xf]
      %v4567 = vld [vmem:[%s8 + $0x21c] sm:$0xf]
      %v4568 = vld [vmem:[%s8 + $0x220] sm:$0xf]
      %v4569 = vld [vmem:[%s8 + $0x224] sm:$0xf]
      %v4570 = vld [vmem:[%s8 + $0x228] sm:$0xf]
      %v4571 = vld [vmem:[%s8 + $0x22c] sm:$0xf]
      %v4572 = vld [vmem:[%s8 + $0x230] sm:$0xf]
      %v4573 = vld [vmem:[%s8 + $0x234] sm:$0xf]
      %v4574 = vld [vmem:[%s8 + $0x238] sm:$0xf]
      %v4575 = vld [vmem:[%s8 + $0x23c] sm:$0xf]
      %v4577 = vunpack.c.l.b16 %v4559
      %v4578 = vpack.c.b16 %v4577, %v3687
      %vm4579 = vsmask.f32 6400
      %v4581 = vshrl.u32 %v4206, 16
      %v4583 = vrot.slane %v4581, 1
      %v4584 = vshll.u32 %v4206, 16
      %v4586 = vrot.slane %v4584, 2
      %v4587 = vor.u32 %v4583, %v4586
      %v4588 = vrot.slane %v3722, 1
      %v4589 = vrot.slane %v3718, 2
      %v4590 = vor.u32 %v4588, %v4589
      %v4591 = vsel %vm4579, %v4587, %v4590
      %v4592 = vrot.slane %v3730, 1
      %v4593 = vrot.slane %v3726, 2
      %v4594 = vor.u32 %v4592, %v4593
      %v4595 = vsel %vm4579, %v4590, %v4594
      %v4596 = vrot.slane %v3738, 1
      %v4597 = vrot.slane %v3734, 2
      %v4598 = vor.u32 %v4596, %v4597
      %v4599 = vsel %vm4579, %v4594, %v4598
      %v4600 = vrot.slane %v3746, 1
      %v4601 = vrot.slane %v3742, 2
      %v4602 = vor.u32 %v4600, %v4601
      %v4603 = vsel %vm4579, %v4598, %v4602
      %v4604 = vrot.slane %v3754, 1
      %v4605 = vrot.slane %v3750, 2
      %v4606 = vor.u32 %v4604, %v4605
      %v4607 = vsel %vm4579, %v4602, %v4606
      %v4608 = vrot.slane %v3762, 1
      %v4609 = vrot.slane %v3758, 2
      %v4610 = vor.u32 %v4608, %v4609
      %v4611 = vsel %vm4579, %v4606, %v4610
      %v4612 = vrot.slane %v3770, 1
      %v4613 = vrot.slane %v3766, 2
      %v4614 = vor.u32 %v4612, %v4613
      %v4615 = vsel %vm4579, %v4610, %v4614
      %v4616 = vrot.slane %v3778, 1
      %v4617 = vrot.slane %v3774, 2
      %v4618 = vor.u32 %v4616, %v4617
      %v4619 = vsel %vm4579, %v4614, %v4618
      %v4620 = vrot.slane %v3786, 1
      %v4621 = vrot.slane %v3782, 2
      %v4622 = vor.u32 %v4620, %v4621
      %v4623 = vsel %vm4579, %v4618, %v4622
      %v4624 = vrot.slane %v3794, 1
      %v4625 = vrot.slane %v3790, 2
      %v4626 = vor.u32 %v4624, %v4625
      %v4627 = vsel %vm4579, %v4622, %v4626
      %v4628 = vrot.slane %v3802, 1
      %v4629 = vrot.slane %v3798, 2
      %v4630 = vor.u32 %v4628, %v4629
      %v4631 = vsel %vm4579, %v4626, %v4630
      %v4632 = vrot.slane %v3810, 1
      %v4633 = vrot.slane %v3806, 2
      %v4634 = vor.u32 %v4632, %v4633
      %v4635 = vsel %vm4579, %v4630, %v4634
      %v4636 = vrot.slane %v3818, 1
      %v4637 = vrot.slane %v3814, 2
      %v4638 = vor.u32 %v4636, %v4637
      %v4639 = vsel %vm4579, %v4634, %v4638
      %v4640 = vrot.slane %v3826, 1
      %v4641 = vrot.slane %v3822, 2
      %v4642 = vor.u32 %v4640, %v4641
      %v4643 = vsel %vm4579, %v4638, %v4642
      %v4644 = vrot.slane %v3834, 1
      %v4645 = vrot.slane %v3830, 2
      %v4646 = vor.u32 %v4644, %v4645
      %v4647 = vsel %vm4579, %v4642, %v4646
      %v4648 = vrot.slane %v3842, 1
      %v4649 = vrot.slane %v3838, 2
      %v4650 = vor.u32 %v4648, %v4649
      %v4651 = vsel %vm4579, %v4646, %v4650
      %v4652 = vrot.slane %v3850, 1
      %v4653 = vrot.slane %v3846, 2
      %v4654 = vor.u32 %v4652, %v4653
      %v4655 = vsel %vm4579, %v4650, %v4654
      %v4656 = vrot.slane %v3858, 1
      %v4657 = vrot.slane %v3854, 2
      %v4658 = vor.u32 %v4656, %v4657
      %v4659 = vsel %vm4579, %v4654, %v4658
      %v4660 = vrot.slane %v3866, 1
      %v4661 = vrot.slane %v3862, 2
      %v4662 = vor.u32 %v4660, %v4661
      %v4663 = vsel %vm4579, %v4658, %v4662
      %v4665 = vshrl.u32 %v4578, 16
      %v4667 = vrot.slane %v4665, 1
      %v4668 = vshll.u32 %v4578, 16
      %v4670 = vrot.slane %v4668, 2
      %v4671 = vor.u32 %v4667, %v4670
      %v4672 = vsel %vm4579, %v4662, %v4671
      %v4710 = vunpack.c.l.b16 %v4560
      %v4711 = vunpack.c.l.b16 %v4561
      %v4712 = vunpack.c.l.b16 %v4562
      %v4713 = vunpack.c.l.b16 %v4563
      %v4714 = vunpack.c.l.b16 %v4564
      %v4715 = vunpack.c.l.b16 %v4565
      %v4716 = vunpack.c.l.b16 %v4566
      %v4717 = vunpack.c.l.b16 %v4567
      %v4718 = vunpack.c.l.b16 %v4568
      %v4719 = vunpack.c.l.b16 %v4569
      %v4720 = vunpack.c.l.b16 %v4570
      %v4721 = vunpack.c.l.b16 %v4571
      %v4722 = vunpack.c.l.b16 %v4572
      %v4723 = vunpack.c.l.b16 %v4573
      %v4724 = vunpack.c.l.b16 %v4574
      %v4725 = vunpack.c.l.b16 %v4575
      %v4726 = vpack.c.b16 %v4711, %v4710
      %v4727 = vpack.c.b16 %v4713, %v4712
      %v4728 = vpack.c.b16 %v4715, %v4714
      %v4729 = vpack.c.b16 %v4717, %v4716
      %v4730 = vpack.c.b16 %v4719, %v4718
      %v4731 = vpack.c.b16 %v4721, %v4720
      %v4732 = vpack.c.b16 %v4723, %v4722
      %v4733 = vpack.c.b16 %v4725, %v4724
      %4742 = vmatprep.subr.bf16.mxu0 0
      %4743 = vmatpush1.bf16.msra.mxu0 %v4733
      %4744 = vmatprep.subr.bf16.mxu0 0
      %4745 = vmatpush1.bf16.msra.mxu0 %v4732
      %4746 = vmatprep.subr.bf16.mxu0 0
      %4747 = vmatpush1.bf16.msra.mxu0 %v4731
      %4748 = vmatprep.subr.bf16.mxu0 0
      %4749 = vmatpush1.bf16.msra.mxu0 %v4730
      %4750 = vmatprep.subr.bf16.mxu0 0
      %4751 = vmatpush1.bf16.msra.mxu0 %v4729
      %4752 = vmatprep.subr.bf16.mxu0 0
      %4753 = vmatpush1.bf16.msra.mxu0 %v4728
      %4754 = vmatprep.subr.bf16.mxu0 0
      %4755 = vmatpush1.bf16.msra.mxu0 %v4727
      %4756 = vmatprep.subr.bf16.mxu0 0
      %4757 = vmatpush1.bf16.msra.mxu0 %v4726
      %4758 = vmatprep.subr.bf16.mxu0 0
      %4759 = vmatpush2.bf16.msra.mxu0 0
      %4760 = vmatprep.subr.bf16.mxu0 0
      %4761 = vmatpush2.bf16.msra.mxu0 0
      %4762 = vmatprep.subr.bf16.mxu0 0
      %4763 = vmatpush2.bf16.msra.mxu0 0
      %4764 = vmatprep.subr.bf16.mxu0 0
      %4765 = vmatpush2.bf16.msra.mxu0 0
      %4766 = vmatprep.subr.bf16.mxu0 0
      %4767 = vmatpush2.bf16.msra.mxu0 0
      %4768 = vmatprep.subr.bf16.mxu0 0
      %4769 = vmatpush2.bf16.msra.mxu0 0
      %4770 = vmatprep.subr.bf16.mxu0 0
      %4771 = vmatpush2.bf16.msra.mxu0 0
      %4772 = vmatprep.subr.bf16.mxu0 0
      %4773 = vmatpush2.bf16.msra.mxu0 0
      %4774 = vmatprep.mubr.bf16.mxu0 0
      %4775 = vmatmul.mubr.bf16.gmra.mxu0 %v4591
      %v4776 = vpop.f32.mrf.mxu0
      %v4777 = vadd.f32 0.0, %v4776
      %v4778 = vpop.f32.mrf.mxu0
      %v4779 = vpop.f32.mrf.mxu0
      %v4780 = vadd.f32 0.0, %v4779
      %v4781 = vpop.f32.mrf.mxu0
      %4782 = vmatprep.mubr.bf16.mxu0 0
      %4783 = vmatmul.mubr.bf16.gmra.mxu0 %v4595
      %v4784 = vpop.f32.mrf.mxu0
      %v4785 = vadd.f32 0.0, %v4784
      %v4786 = vpop.f32.mrf.mxu0
      %v4787 = vpop.f32.mrf.mxu0
      %v4788 = vadd.f32 0.0, %v4787
      %v4789 = vpop.f32.mrf.mxu0
      %4790 = vmatprep.mubr.bf16.mxu0 0
      %4791 = vmatmul.mubr.bf16.gmra.mxu0 %v4599
      %v4792 = vpop.f32.mrf.mxu0
      %v4793 = vadd.f32 0.0, %v4792
      %v4794 = vpop.f32.mrf.mxu0
      %v4795 = vpop.f32.mrf.mxu0
      %v4796 = vadd.f32 0.0, %v4795
      %v4797 = vpop.f32.mrf.mxu0
      %4798 = vmatprep.mubr.bf16.mxu0 0
      %4799 = vmatmul.mubr.bf16.gmra.mxu0 %v4603
      %v4800 = vpop.f32.mrf.mxu0
      %v4801 = vadd.f32 0.0, %v4800
      %v4802 = vpop.f32.mrf.mxu0
      %v4803 = vpop.f32.mrf.mxu0
      %v4804 = vadd.f32 0.0, %v4803
      %v4805 = vpop.f32.mrf.mxu0
      %4806 = vmatprep.mubr.bf16.mxu0 0
      %4807 = vmatmul.mubr.bf16.gmra.mxu0 %v4607
      %v4808 = vpop.f32.mrf.mxu0
      %v4809 = vadd.f32 0.0, %v4808
      %v4810 = vpop.f32.mrf.mxu0
      %v4811 = vpop.f32.mrf.mxu0
      %v4812 = vadd.f32 0.0, %v4811
      %v4813 = vpop.f32.mrf.mxu0
      %4814 = vmatprep.mubr.bf16.mxu0 0
      %4815 = vmatmul.mubr.bf16.gmra.mxu0 %v4611
      %v4816 = vpop.f32.mrf.mxu0
      %v4817 = vadd.f32 0.0, %v4816
      %v4818 = vpop.f32.mrf.mxu0
      %v4819 = vpop.f32.mrf.mxu0
      %v4820 = vadd.f32 0.0, %v4819
      %v4821 = vpop.f32.mrf.mxu0
      %4822 = vmatprep.mubr.bf16.mxu0 0
      %4823 = vmatmul.mubr.bf16.gmra.mxu0 %v4615
      %v4824 = vpop.f32.mrf.mxu0
      %v4825 = vadd.f32 0.0, %v4824
      %v4826 = vpop.f32.mrf.mxu0
      %v4827 = vpop.f32.mrf.mxu0
      %v4828 = vadd.f32 0.0, %v4827
      %v4829 = vpop.f32.mrf.mxu0
      %4830 = vmatprep.mubr.bf16.mxu0 0
      %4831 = vmatmul.mubr.bf16.gmra.mxu0 %v4619
      %v4832 = vpop.f32.mrf.mxu0
      %v4833 = vadd.f32 0.0, %v4832
      %v4834 = vpop.f32.mrf.mxu0
      %v4835 = vpop.f32.mrf.mxu0
      %v4836 = vadd.f32 0.0, %v4835
      %v4837 = vpop.f32.mrf.mxu0
      %4838 = vmatprep.mubr.bf16.mxu0 0
      %4839 = vmatmul.mubr.bf16.gmra.mxu0 %v4623
      %v4840 = vpop.f32.mrf.mxu0
      %v4841 = vadd.f32 0.0, %v4840
      %v4842 = vpop.f32.mrf.mxu0
      %v4843 = vpop.f32.mrf.mxu0
      %v4844 = vadd.f32 0.0, %v4843
      %v4845 = vpop.f32.mrf.mxu0
      %4846 = vmatprep.mubr.bf16.mxu0 0
      %4847 = vmatmul.mubr.bf16.gmra.mxu0 %v4627
      %v4848 = vpop.f32.mrf.mxu0
      %v4849 = vadd.f32 0.0, %v4848
      %v4850 = vpop.f32.mrf.mxu0
      %v4851 = vpop.f32.mrf.mxu0
      %v4852 = vadd.f32 0.0, %v4851
      %v4853 = vpop.f32.mrf.mxu0
      %4854 = vmatprep.mubr.bf16.mxu0 0
      %4855 = vmatmul.mubr.bf16.gmra.mxu0 %v4631
      %v4856 = vpop.f32.mrf.mxu0
      %v4857 = vadd.f32 0.0, %v4856
      %v4858 = vpop.f32.mrf.mxu0
      %v4859 = vpop.f32.mrf.mxu0
      %v4860 = vadd.f32 0.0, %v4859
      %v4861 = vpop.f32.mrf.mxu0
      %4862 = vmatprep.mubr.bf16.mxu0 0
      %4863 = vmatmul.mubr.bf16.gmra.mxu0 %v4635
      %v4864 = vpop.f32.mrf.mxu0
      %v4865 = vadd.f32 0.0, %v4864
      %v4866 = vpop.f32.mrf.mxu0
      %v4867 = vpop.f32.mrf.mxu0
      %v4868 = vadd.f32 0.0, %v4867
      %v4869 = vpop.f32.mrf.mxu0
      %4870 = vmatprep.mubr.bf16.mxu0 0
      %4871 = vmatmul.mubr.bf16.gmra.mxu0 %v4639
      %v4872 = vpop.f32.mrf.mxu0
      %v4873 = vadd.f32 0.0, %v4872
      %v4874 = vpop.f32.mrf.mxu0
      %v4875 = vpop.f32.mrf.mxu0
      %v4876 = vadd.f32 0.0, %v4875
      %v4877 = vpop.f32.mrf.mxu0
      %4878 = vmatprep.mubr.bf16.mxu0 0
      %4879 = vmatmul.mubr.bf16.gmra.mxu0 %v4643
      %v4880 = vpop.f32.mrf.mxu0
      %v4881 = vadd.f32 0.0, %v4880
      %v4882 = vpop.f32.mrf.mxu0
      %v4883 = vpop.f32.mrf.mxu0
      %v4884 = vadd.f32 0.0, %v4883
      %v4885 = vpop.f32.mrf.mxu0
      %4886 = vmatprep.mubr.bf16.mxu0 0
      %4887 = vmatmul.mubr.bf16.gmra.mxu0 %v4647
      %v4888 = vpop.f32.mrf.mxu0
      %v4889 = vadd.f32 0.0, %v4888
      %v4890 = vpop.f32.mrf.mxu0
      %v4891 = vpop.f32.mrf.mxu0
      %v4892 = vadd.f32 0.0, %v4891
      %v4893 = vpop.f32.mrf.mxu0
      %4894 = vmatprep.mubr.bf16.mxu0 0
      %4895 = vmatmul.mubr.bf16.gmra.mxu0 %v4651
      %v4896 = vpop.f32.mrf.mxu0
      %v4897 = vadd.f32 0.0, %v4896
      %v4898 = vpop.f32.mrf.mxu0
      %v4899 = vpop.f32.mrf.mxu0
      %v4900 = vadd.f32 0.0, %v4899
      %v4901 = vpop.f32.mrf.mxu0
      %4902 = vmatprep.mubr.bf16.mxu0 0
      %4903 = vmatmul.mubr.bf16.gmra.mxu0 %v4655
      %v4904 = vpop.f32.mrf.mxu0
      %v4905 = vadd.f32 0.0, %v4904
      %v4906 = vpop.f32.mrf.mxu0
      %v4907 = vpop.f32.mrf.mxu0
      %v4908 = vadd.f32 0.0, %v4907
      %v4909 = vpop.f32.mrf.mxu0
      %4910 = vmatprep.mubr.bf16.mxu0 0
      %4911 = vmatmul.mubr.bf16.gmra.mxu0 %v4659
      %v4912 = vpop.f32.mrf.mxu0
      %v4913 = vadd.f32 0.0, %v4912
      %v4914 = vpop.f32.mrf.mxu0
      %v4915 = vpop.f32.mrf.mxu0
      %v4916 = vadd.f32 0.0, %v4915
      %v4917 = vpop.f32.mrf.mxu0
      %4918 = vmatprep.mubr.bf16.mxu0 0
      %4919 = vmatmul.mubr.bf16.gmra.mxu0 %v4663
      %v4920 = vpop.f32.mrf.mxu0
      %v4921 = vadd.f32 0.0, %v4920
      %v4922 = vpop.f32.mrf.mxu0
      %v4923 = vpop.f32.mrf.mxu0
      %v4924 = vadd.f32 0.0, %v4923
      %v4925 = vpop.f32.mrf.mxu0
      %4926 = vmatprep.mubr.bf16.mxu0 0
      %4927 = vmatmul.mubr.bf16.gmra.mxu0 %v4672
      %v4928 = vpop.f32.mrf.mxu0
      %v4929 = vadd.f32 0.0, %v4928
      %v4930 = vpop.f32.mrf.mxu0
      %v4931 = vpop.f32.mrf.mxu0
      %v4932 = vadd.f32 0.0, %v4931
      %v4933 = vpop.f32.mrf.mxu0
      %4934 = vmatprep.mubr.bf16.mxu0 0
      %4935 = vmatmul.mubr.bf16.gmra.mxu0 %v4671
      %v4936 = vpop.f32.mrf.mxu0
      %v4937 = vadd.f32 0.0, %v4936
      %v4938 = vpop.f32.mrf.mxu0
      %v4939 = vpop.f32.mrf.mxu0
      %v4940 = vpop.f32.mrf.mxu0
      %4941 = vdwg.mxu0
      %v4942 = vadd.f32 %v4518, %v4777
      %v4943 = vadd.f32 %v4519, %v4780
      %v4944 = vadd.f32 %v4520, %v4785
      %v4945 = vadd.f32 %v4521, %v4788
      %v4946 = vadd.f32 %v4522, %v4793
      %v4947 = vadd.f32 %v4523, %v4796
      %v4948 = vadd.f32 %v4524, %v4801
      %v4949 = vadd.f32 %v4525, %v4804
      %v4950 = vadd.f32 %v4526, %v4809
      %v4951 = vadd.f32 %v4527, %v4812
      %v4952 = vadd.f32 %v4528, %v4817
      %v4953 = vadd.f32 %v4529, %v4820
      %v4954 = vadd.f32 %v4530, %v4825
      %v4955 = vadd.f32 %v4531, %v4828
      %v4956 = vadd.f32 %v4532, %v4833
      %v4957 = vadd.f32 %v4533, %v4836
      %v4958 = vadd.f32 %v4534, %v4841
      %v4959 = vadd.f32 %v4535, %v4844
      %v4960 = vadd.f32 %v4536, %v4849
      %v4961 = vadd.f32 %v4537, %v4852
      %v4962 = vadd.f32 %v4538, %v4857
      %v4963 = vadd.f32 %v4539, %v4860
      %v4964 = vadd.f32 %v4540, %v4865
      %v4965 = vadd.f32 %v4541, %v4868
      %v4966 = vadd.f32 %v4542, %v4873
      %v4967 = vadd.f32 %v4543, %v4876
      %v4968 = vadd.f32 %v4544, %v4881
      %v4969 = vadd.f32 %v4545, %v4884
      %v4970 = vadd.f32 %v4546, %v4889
      %v4971 = vadd.f32 %v4547, %v4892
      %v4972 = vadd.f32 %v4548, %v4897
      %v4973 = vadd.f32 %v4549, %v4900
      %v4974 = vadd.f32 %v4550, %v4905
      %v4975 = vadd.f32 %v4551, %v4908
      %v4976 = vadd.f32 %v4552, %v4913
      %v4977 = vadd.f32 %v4553, %v4916
      %v4978 = vadd.f32 %v4554, %v4921
      %v4979 = vadd.f32 %v4555, %v4924
      %v4980 = vadd.f32 %v4556, %v4929
      %v4981 = vadd.f32 %v4557, %v4932
      %v4982 = vadd.f32 %v4558, %v4937
      %v4983 = vlaneseq
      %v4984 = vshrl.u32 %v4983, 7
      %v4985 = vsub.s32 0, %v4984
      %v4986 = vrot.slane %v521, %v4985
      %v4987 = vadd.f32 %v4942, %v4986
      %v4988 = vadd.f32 %v4943, %v4986
      %v4989 = vadd.f32 %v4944, %v4986
      %v4990 = vadd.f32 %v4945, %v4986
      %v4991 = vadd.f32 %v4946, %v4986
      %v4992 = vadd.f32 %v4947, %v4986
      %v4993 = vadd.f32 %v4948, %v4986
      %v4994 = vadd.f32 %v4949, %v4986
      %v4995 = vadd.f32 %v4950, %v4986
      %v4996 = vadd.f32 %v4951, %v4986
      %v4997 = vadd.f32 %v4952, %v4986
      %v4998 = vadd.f32 %v4953, %v4986
      %v4999 = vadd.f32 %v4954, %v4986
      %v5000 = vadd.f32 %v4955, %v4986
      %v5001 = vadd.f32 %v4956, %v4986
      %v5002 = vadd.f32 %v4957, %v4986
      %v5003 = vadd.f32 %v4958, %v4986
      %v5004 = vadd.f32 %v4959, %v4986
      %v5005 = vadd.f32 %v4960, %v4986
      %v5006 = vadd.f32 %v4961, %v4986
      %v5007 = vadd.f32 %v4962, %v4986
      %v5008 = vadd.f32 %v4963, %v4986
      %v5009 = vadd.f32 %v4964, %v4986
      %v5010 = vadd.f32 %v4965, %v4986
      %v5011 = vadd.f32 %v4966, %v4986
      %v5012 = vadd.f32 %v4967, %v4986
      %v5013 = vadd.f32 %v4968, %v4986
      %v5014 = vadd.f32 %v4969, %v4986
      %v5015 = vadd.f32 %v4970, %v4986
      %v5016 = vadd.f32 %v4971, %v4986
      %v5017 = vadd.f32 %v4972, %v4986
      %v5018 = vadd.f32 %v4973, %v4986
      %v5019 = vadd.f32 %v4974, %v4986
      %v5020 = vadd.f32 %v4975, %v4986
      %v5021 = vadd.f32 %v4976, %v4986
      %v5022 = vadd.f32 %v4977, %v4986
      %v5023 = vadd.f32 %v4978, %v4986
      %v5024 = vadd.f32 %v4979, %v4986
      %v5025 = vadd.f32 %v4980, %v4986
      %v5026 = vadd.f32 %v4981, %v4986
      %v5027 = vadd.f32 %v4982, %v4986
      %v5028 = vld [vmem:[%s7 + $0x18] sm:$0xff]
      %v5029 = vld [vmem:[%s7 + $0x20] sm:$0xff]
      %v5030 = vld [vmem:[%s7 + $0x28] sm:$0xff]
      %v5031 = vld [vmem:[%s7 + $0x30] sm:$0xff]
      %v5032 = vld [vmem:[%s7 + $0x38] sm:$0xff]
      %v5033 = vld [vmem:[%s7 + $0x40] sm:$0xff]
      %v5034 = vld [vmem:[%s7 + $0x48] sm:$0xff]
      %v5035 = vld [vmem:[%s7 + $0x50] sm:$0xff]
      %v5036 = vld [vmem:[%s7 + $0x58] sm:$0xff]
      %v5037 = vld [vmem:[%s7 + $0x60] sm:$0xff]
      %v5038 = vld [vmem:[%s7 + $0x68] sm:$0xff]
      %v5039 = vld [vmem:[%s7 + $0x70] sm:$0xff]
      %v5040 = vld [vmem:[%s7 + $0x78] sm:$0xff]
      %v5041 = vld [vmem:[%s7 + $0x80] sm:$0xff]
      %v5042 = vld [vmem:[%s7 + $0x88] sm:$0xff]
      %v5043 = vld [vmem:[%s7 + $0x90] sm:$0xff]
      %v5044 = vld [vmem:[%s7 + $0x98] sm:$0xff]
      %v5045 = vld [vmem:[%s7 + $0xa0] sm:$0xff]
      %v5046 = vld [vmem:[%s7 + $0xa8] sm:$0xff]
      %v5047 = vld [vmem:[%s7 + $0xb0] sm:$0xff]
      %v5048 = vld [vmem:[%s7 + $0xb8] sm:$0xff]
      %v5049 = vld [vmem:[%s7 + $0xc0] sm:$0xff]
      %v5050 = vld [vmem:[%s7 + $0xc8] sm:$0xff]
      %v5051 = vld [vmem:[%s7 + $0xd0] sm:$0xff]
      %v5052 = vld [vmem:[%s7 + $0xd8] sm:$0xff]
      %v5053 = vld [vmem:[%s7 + $0xe0] sm:$0xff]
      %v5054 = vld [vmem:[%s7 + $0xe8] sm:$0xff]
      %v5055 = vld [vmem:[%s7 + $0xf0] sm:$0xff]
      %v5056 = vld [vmem:[%s7 + $0xf8] sm:$0xff]
      %v5057 = vld [vmem:[%s7 + $0x100] sm:$0xff]
      %v5058 = vld [vmem:[%s7 + $0x108] sm:$0xff]
      %v5059 = vld [vmem:[%s7 + $0x110] sm:$0xff]
      %v5060 = vld [vmem:[%s7 + $0x118] sm:$0xff]
      %v5061 = vld [vmem:[%s7 + $0x120] sm:$0xff]
      %v5062 = vld [vmem:[%s7 + $0x128] sm:$0xff]
      %v5063 = vld [vmem:[%s7 + $0x130] sm:$0xff]
      %v5064 = vld [vmem:[%s7 + $0x138] sm:$0xff]
      %v5065 = vld [vmem:[%s7 + $0x140] sm:$0xff]
      %v5066 = vld [vmem:[%s7 + $0x148] sm:$0xff]
      %v5067 = vld [vmem:[%s7 + $0x150] sm:$0xff]
      %v5068 = vld [vmem:[%s7 + $0x158] sm:$0xff]
      %5070 = vset.pattern.permute.xlu0 0
      %5071 = vperm.xlu0 %5070, %v5028
      %v5072 = vpop.permute.xlu0 %5071
      %5075 = vset.pattern.permute.xlu0 0
      %5076 = vperm.xlu0 %5075, %v5029
      %v5077 = vpop.permute.xlu0 %5076
      %5080 = vset.pattern.permute.xlu0 0
      %5081 = vperm.xlu0 %5080, %v5030
      %v5082 = vpop.permute.xlu0 %5081
      %5085 = vset.pattern.permute.xlu0 0
      %5086 = vperm.xlu0 %5085, %v5031
      %v5087 = vpop.permute.xlu0 %5086
      %5090 = vset.pattern.permute.xlu0 0
      %5091 = vperm.xlu0 %5090, %v5032
      %v5092 = vpop.permute.xlu0 %5091
      %5095 = vset.pattern.permute.xlu0 0
      %5096 = vperm.xlu0 %5095, %v5033
      %v5097 = vpop.permute.xlu0 %5096
      %5100 = vset.pattern.permute.xlu0 0
      %5101 = vperm.xlu0 %5100, %v5034
      %v5102 = vpop.permute.xlu0 %5101
      %5105 = vset.pattern.permute.xlu0 0
      %5106 = vperm.xlu0 %5105, %v5035
      %v5107 = vpop.permute.xlu0 %5106
      %5110 = vset.pattern.permute.xlu0 0
      %5111 = vperm.xlu0 %5110, %v5036
      %v5112 = vpop.permute.xlu0 %5111
      %5115 = vset.pattern.permute.xlu0 0
      %5116 = vperm.xlu0 %5115, %v5037
      %v5117 = vpop.permute.xlu0 %5116
      %5120 = vset.pattern.permute.xlu0 0
      %5121 = vperm.xlu0 %5120, %v5038
      %v5122 = vpop.permute.xlu0 %5121
      %5125 = vset.pattern.permute.xlu0 0
      %5126 = vperm.xlu0 %5125, %v5039
      %v5127 = vpop.permute.xlu0 %5126
      %5130 = vset.pattern.permute.xlu0 0
      %5131 = vperm.xlu0 %5130, %v5040
      %v5132 = vpop.permute.xlu0 %5131
      %5135 = vset.pattern.permute.xlu0 0
      %5136 = vperm.xlu0 %5135, %v5041
      %v5137 = vpop.permute.xlu0 %5136
      %5140 = vset.pattern.permute.xlu0 0
      %5141 = vperm.xlu0 %5140, %v5042
      %v5142 = vpop.permute.xlu0 %5141
      %5145 = vset.pattern.permute.xlu0 0
      %5146 = vperm.xlu0 %5145, %v5043
      %v5147 = vpop.permute.xlu0 %5146
      %5150 = vset.pattern.permute.xlu0 0
      %5151 = vperm.xlu0 %5150, %v5044
      %v5152 = vpop.permute.xlu0 %5151
      %5155 = vset.pattern.permute.xlu0 0
      %5156 = vperm.xlu0 %5155, %v5045
      %v5157 = vpop.permute.xlu0 %5156
      %5160 = vset.pattern.permute.xlu0 0
      %5161 = vperm.xlu0 %5160, %v5046
      %v5162 = vpop.permute.xlu0 %5161
      %5165 = vset.pattern.permute.xlu0 0
      %5166 = vperm.xlu0 %5165, %v5047
      %v5167 = vpop.permute.xlu0 %5166
      %5170 = vset.pattern.permute.xlu0 0
      %5171 = vperm.xlu0 %5170, %v5048
      %v5172 = vpop.permute.xlu0 %5171
      %5175 = vset.pattern.permute.xlu0 0
      %5176 = vperm.xlu0 %5175, %v5049
      %v5177 = vpop.permute.xlu0 %5176
      %5180 = vset.pattern.permute.xlu0 0
      %5181 = vperm.xlu0 %5180, %v5050
      %v5182 = vpop.permute.xlu0 %5181
      %5185 = vset.pattern.permute.xlu0 0
      %5186 = vperm.xlu0 %5185, %v5051
      %v5187 = vpop.permute.xlu0 %5186
      %5190 = vset.pattern.permute.xlu0 0
      %5191 = vperm.xlu0 %5190, %v5052
      %v5192 = vpop.permute.xlu0 %5191
      %5195 = vset.pattern.permute.xlu0 0
      %5196 = vperm.xlu0 %5195, %v5053
      %v5197 = vpop.permute.xlu0 %5196
      %5200 = vset.pattern.permute.xlu0 0
      %5201 = vperm.xlu0 %5200, %v5054
      %v5202 = vpop.permute.xlu0 %5201
      %5205 = vset.pattern.permute.xlu0 0
      %5206 = vperm.xlu0 %5205, %v5055
      %v5207 = vpop.permute.xlu0 %5206
      %5210 = vset.pattern.permute.xlu0 0
      %5211 = vperm.xlu0 %5210, %v5056
      %v5212 = vpop.permute.xlu0 %5211
      %5215 = vset.pattern.permute.xlu0 0
      %5216 = vperm.xlu0 %5215, %v5057
      %v5217 = vpop.permute.xlu0 %5216
      %5220 = vset.pattern.permute.xlu0 0
      %5221 = vperm.xlu0 %5220, %v5058
      %v5222 = vpop.permute.xlu0 %5221
      %5225 = vset.pattern.permute.xlu0 0
      %5226 = vperm.xlu0 %5225, %v5059
      %v5227 = vpop.permute.xlu0 %5226
      %5230 = vset.pattern.permute.xlu0 0
      %5231 = vperm.xlu0 %5230, %v5060
      %v5232 = vpop.permute.xlu0 %5231
      %5235 = vset.pattern.permute.xlu0 0
      %5236 = vperm.xlu0 %5235, %v5061
      %v5237 = vpop.permute.xlu0 %5236
      %5240 = vset.pattern.permute.xlu0 0
      %5241 = vperm.xlu0 %5240, %v5062
      %v5242 = vpop.permute.xlu0 %5241
      %5245 = vset.pattern.permute.xlu0 0
      %5246 = vperm.xlu0 %5245, %v5063
      %v5247 = vpop.permute.xlu0 %5246
      %5250 = vset.pattern.permute.xlu0 0
      %5251 = vperm.xlu0 %5250, %v5064
      %v5252 = vpop.permute.xlu0 %5251
      %5255 = vset.pattern.permute.xlu0 0
      %5256 = vperm.xlu0 %5255, %v5065
      %v5257 = vpop.permute.xlu0 %5256
      %5260 = vset.pattern.permute.xlu0 0
      %5261 = vperm.xlu0 %5260, %v5066
      %v5262 = vpop.permute.xlu0 %5261
      %5265 = vset.pattern.permute.xlu0 0
      %5266 = vperm.xlu0 %5265, %v5067
      %v5267 = vpop.permute.xlu0 %5266
      %5270 = vset.pattern.permute.xlu0 0
      %5271 = vperm.xlu0 %5270, %v5068
      %v5272 = vpop.permute.xlu0 %5271
      %v5274 = vmul.f32 %v4987, %v5072
      %v5275 = vmul.f32 %v4988, %v5077
      %v5276 = vmul.f32 %v4989, %v5082
      %v5277 = vmul.f32 %v4990, %v5087
      %v5278 = vmul.f32 %v4991, %v5092
      %v5279 = vmul.f32 %v4992, %v5097
      %v5280 = vmul.f32 %v4993, %v5102
      %v5281 = vmul.f32 %v4994, %v5107
      %v5282 = vmul.f32 %v4995, %v5112
      %v5283 = vmul.f32 %v4996, %v5117
      %v5284 = vmul.f32 %v4997, %v5122
      %v5285 = vmul.f32 %v4998, %v5127
      %v5286 = vmul.f32 %v4999, %v5132
      %v5287 = vmul.f32 %v5000, %v5137
      %v5288 = vmul.f32 %v5001, %v5142
      %v5289 = vmul.f32 %v5002, %v5147
      %v5290 = vmul.f32 %v5003, %v5152
      %v5291 = vmul.f32 %v5004, %v5157
      %v5292 = vmul.f32 %v5005, %v5162
      %v5293 = vmul.f32 %v5006, %v5167
      %v5294 = vmul.f32 %v5007, %v5172
      %v5295 = vmul.f32 %v5008, %v5177
      %v5296 = vmul.f32 %v5009, %v5182
      %v5297 = vmul.f32 %v5010, %v5187
      %v5298 = vmul.f32 %v5011, %v5192
      %v5299 = vmul.f32 %v5012, %v5197
      %v5300 = vmul.f32 %v5013, %v5202
      %v5301 = vmul.f32 %v5014, %v5207
      %v5302 = vmul.f32 %v5015, %v5212
      %v5303 = vmul.f32 %v5016, %v5217
      %v5304 = vmul.f32 %v5017, %v5222
      %v5305 = vmul.f32 %v5018, %v5227
      %v5306 = vmul.f32 %v5019, %v5232
      %v5307 = vmul.f32 %v5020, %v5237
      %v5308 = vmul.f32 %v5021, %v5242
      %v5309 = vmul.f32 %v5022, %v5247
      %v5310 = vmul.f32 %v5023, %v5252
      %v5311 = vmul.f32 %v5024, %v5257
      %v5312 = vmul.f32 %v5025, %v5262
      %v5313 = vmul.f32 %v5026, %v5267
      %v5314 = vmul.f32 %v5027, %v5272
      %v5315 = vadd.f32 %v5274, %v5275
      %v5316 = vadd.f32 %v5315, %v5276
      %v5317 = vadd.f32 %v5316, %v5277
      %v5318 = vadd.f32 %v5317, %v5278
      %v5319 = vadd.f32 %v5318, %v5279
      %v5320 = vadd.f32 %v5319, %v5280
      %v5321 = vadd.f32 %v5320, %v5281
      %v5322 = vadd.f32 %v5321, %v5282
      %v5323 = vadd.f32 %v5322, %v5283
      %v5324 = vadd.f32 %v5323, %v5284
      %v5325 = vadd.f32 %v5324, %v5285
      %v5326 = vadd.f32 %v5325, %v5286
      %v5327 = vadd.f32 %v5326, %v5287
      %v5328 = vadd.f32 %v5327, %v5288
      %v5329 = vadd.f32 %v5328, %v5289
      %v5330 = vadd.f32 %v5329, %v5290
      %v5331 = vadd.f32 %v5330, %v5291
      %v5332 = vadd.f32 %v5331, %v5292
      %v5333 = vadd.f32 %v5332, %v5293
      %v5334 = vadd.f32 %v5333, %v5294
      %v5335 = vadd.f32 %v5334, %v5295
      %v5336 = vadd.f32 %v5335, %v5296
      %v5337 = vadd.f32 %v5336, %v5297
      %v5338 = vadd.f32 %v5337, %v5298
      %v5339 = vadd.f32 %v5338, %v5299
      %v5340 = vadd.f32 %v5339, %v5300
      %v5341 = vadd.f32 %v5340, %v5301
      %v5342 = vadd.f32 %v5341, %v5302
      %v5343 = vadd.f32 %v5342, %v5303
      %v5344 = vadd.f32 %v5343, %v5304
      %v5345 = vadd.f32 %v5344, %v5305
      %v5346 = vadd.f32 %v5345, %v5306
      %v5347 = vadd.f32 %v5346, %v5307
      %v5348 = vadd.f32 %v5347, %v5308
      %v5349 = vadd.f32 %v5348, %v5309
      %v5350 = vadd.f32 %v5349, %v5310
      %v5351 = vadd.f32 %v5350, %v5311
      %v5352 = vadd.f32 %v5351, %v5312
      %v5353 = vadd.f32 %v5352, %v5313
      %v5354 = vadd.f32 %v5353, %v5314
      %v5355 = vrot.slane %v5354, 4
      %v5356 = vadd.f32 %v5354, %v5355
      %v5357 = vrot.slane %v5356, 2
      %v5358 = vadd.f32 %v5356, %v5357
      %v5359 = vrot.slane %v5358, 1
      %v5360 = vadd.f32 %v5358, %v5359
      %v5361 = vmul.f32 %v5360, 0.00390625
      %v5362 = vsub.f32 %v4987, %v5361
      %v5363 = vsub.f32 %v4988, %v5361
      %v5364 = vsub.f32 %v4989, %v5361
      %v5365 = vsub.f32 %v4990, %v5361
      %v5366 = vsub.f32 %v4991, %v5361
      %v5367 = vsub.f32 %v4992, %v5361
      %v5368 = vsub.f32 %v4993, %v5361
      %v5369 = vsub.f32 %v4994, %v5361
      %v5370 = vsub.f32 %v4995, %v5361
      %v5371 = vsub.f32 %v4996, %v5361
      %v5372 = vsub.f32 %v4997, %v5361
      %v5373 = vsub.f32 %v4998, %v5361
      %v5374 = vsub.f32 %v4999, %v5361
      %v5375 = vsub.f32 %v5000, %v5361
      %v5376 = vsub.f32 %v5001, %v5361
      %v5377 = vsub.f32 %v5002, %v5361
      %v5378 = vsub.f32 %v5003, %v5361
      %v5379 = vsub.f32 %v5004, %v5361
      %v5380 = vsub.f32 %v5005, %v5361
      %v5381 = vsub.f32 %v5006, %v5361
      %v5382 = vsub.f32 %v5007, %v5361
      %v5383 = vsub.f32 %v5008, %v5361
      %v5384 = vsub.f32 %v5009, %v5361
      %v5385 = vsub.f32 %v5010, %v5361
      %v5386 = vsub.f32 %v5011, %v5361
      %v5387 = vsub.f32 %v5012, %v5361
      %v5388 = vsub.f32 %v5013, %v5361
      %v5389 = vsub.f32 %v5014, %v5361
      %v5390 = vsub.f32 %v5015, %v5361
      %v5391 = vsub.f32 %v5016, %v5361
      %v5392 = vsub.f32 %v5017, %v5361
      %v5393 = vsub.f32 %v5018, %v5361
      %v5394 = vsub.f32 %v5019, %v5361
      %v5395 = vsub.f32 %v5020, %v5361
      %v5396 = vsub.f32 %v5021, %v5361
      %v5397 = vsub.f32 %v5022, %v5361
      %v5398 = vsub.f32 %v5023, %v5361
      %v5399 = vsub.f32 %v5024, %v5361
      %v5400 = vsub.f32 %v5025, %v5361
      %v5401 = vsub.f32 %v5026, %v5361
      %v5402 = vsub.f32 %v5027, %v5361
      %v5403 = vmul.f32 %v5362, %v5072
      %v5404 = vmul.f32 %v5363, %v5077
      %v5405 = vmul.f32 %v5364, %v5082
      %v5406 = vmul.f32 %v5365, %v5087
      %v5407 = vmul.f32 %v5366, %v5092
      %v5408 = vmul.f32 %v5367, %v5097
      %v5409 = vmul.f32 %v5368, %v5102
      %v5410 = vmul.f32 %v5369, %v5107
      %v5411 = vmul.f32 %v5370, %v5112
      %v5412 = vmul.f32 %v5371, %v5117
      %v5413 = vmul.f32 %v5372, %v5122
      %v5414 = vmul.f32 %v5373, %v5127
      %v5415 = vmul.f32 %v5374, %v5132
      %v5416 = vmul.f32 %v5375, %v5137
      %v5417 = vmul.f32 %v5376, %v5142
      %v5418 = vmul.f32 %v5377, %v5147
      %v5419 = vmul.f32 %v5378, %v5152
      %v5420 = vmul.f32 %v5379, %v5157
      %v5421 = vmul.f32 %v5380, %v5162
      %v5422 = vmul.f32 %v5381, %v5167
      %v5423 = vmul.f32 %v5382, %v5172
      %v5424 = vmul.f32 %v5383, %v5177
      %v5425 = vmul.f32 %v5384, %v5182
      %v5426 = vmul.f32 %v5385, %v5187
      %v5427 = vmul.f32 %v5386, %v5192
      %v5428 = vmul.f32 %v5387, %v5197
      %v5429 = vmul.f32 %v5388, %v5202
      %v5430 = vmul.f32 %v5389, %v5207
      %v5431 = vmul.f32 %v5390, %v5212
      %v5432 = vmul.f32 %v5391, %v5217
      %v5433 = vmul.f32 %v5392, %v5222
      %v5434 = vmul.f32 %v5393, %v5227
      %v5435 = vmul.f32 %v5394, %v5232
      %v5436 = vmul.f32 %v5395, %v5237
      %v5437 = vmul.f32 %v5396, %v5242
      %v5438 = vmul.f32 %v5397, %v5247
      %v5439 = vmul.f32 %v5398, %v5252
      %v5440 = vmul.f32 %v5399, %v5257
      %v5441 = vmul.f32 %v5400, %v5262
      %v5442 = vmul.f32 %v5401, %v5267
      %v5443 = vmul.f32 %v5402, %v5272
      %v5444 = vmul.f32 %v5403, %v5403
      %v5445 = vmul.f32 %v5404, %v5404
      %v5446 = vmul.f32 %v5405, %v5405
      %v5447 = vmul.f32 %v5406, %v5406
      %v5448 = vmul.f32 %v5407, %v5407
      %v5449 = vmul.f32 %v5408, %v5408
      %v5450 = vmul.f32 %v5409, %v5409
      %v5451 = vmul.f32 %v5410, %v5410
      %v5452 = vmul.f32 %v5411, %v5411
      %v5453 = vmul.f32 %v5412, %v5412
      %v5454 = vmul.f32 %v5413, %v5413
      %v5455 = vmul.f32 %v5414, %v5414
      %v5456 = vmul.f32 %v5415, %v5415
      %v5457 = vmul.f32 %v5416, %v5416
      %v5458 = vmul.f32 %v5417, %v5417
      %v5459 = vmul.f32 %v5418, %v5418
      %v5460 = vmul.f32 %v5419, %v5419
      %v5461 = vmul.f32 %v5420, %v5420
      %v5462 = vmul.f32 %v5421, %v5421
      %v5463 = vmul.f32 %v5422, %v5422
      %v5464 = vmul.f32 %v5423, %v5423
      %v5465 = vmul.f32 %v5424, %v5424
      %v5466 = vmul.f32 %v5425, %v5425
      %v5467 = vmul.f32 %v5426, %v5426
      %v5468 = vmul.f32 %v5427, %v5427
      %v5469 = vmul.f32 %v5428, %v5428
      %v5470 = vmul.f32 %v5429, %v5429
      %v5471 = vmul.f32 %v5430, %v5430
      %v5472 = vmul.f32 %v5431, %v5431
      %v5473 = vmul.f32 %v5432, %v5432
      %v5474 = vmul.f32 %v5433, %v5433
      %v5475 = vmul.f32 %v5434, %v5434
      %v5476 = vmul.f32 %v5435, %v5435
      %v5477 = vmul.f32 %v5436, %v5436
      %v5478 = vmul.f32 %v5437, %v5437
      %v5479 = vmul.f32 %v5438, %v5438
      %v5480 = vmul.f32 %v5439, %v5439
      %v5481 = vmul.f32 %v5440, %v5440
      %v5482 = vmul.f32 %v5441, %v5441
      %v5483 = vmul.f32 %v5442, %v5442
      %v5484 = vmul.f32 %v5443, %v5443
      %v5485 = vadd.f32 %v5444, %v5445
      %v5486 = vadd.f32 %v5485, %v5446
      %v5487 = vadd.f32 %v5486, %v5447
      %v5488 = vadd.f32 %v5487, %v5448
      %v5489 = vadd.f32 %v5488, %v5449
      %v5490 = vadd.f32 %v5489, %v5450
      %v5491 = vadd.f32 %v5490, %v5451
      %v5492 = vadd.f32 %v5491, %v5452
      %v5493 = vadd.f32 %v5492, %v5453
      %v5494 = vadd.f32 %v5493, %v5454
      %v5495 = vadd.f32 %v5494, %v5455
      %v5496 = vadd.f32 %v5495, %v5456
      %v5497 = vadd.f32 %v5496, %v5457
      %v5498 = vadd.f32 %v5497, %v5458
      %v5499 = vadd.f32 %v5498, %v5459
      %v5500 = vadd.f32 %v5499, %v5460
      %v5501 = vadd.f32 %v5500, %v5461
      %v5502 = vadd.f32 %v5501, %v5462
      %v5503 = vadd.f32 %v5502, %v5463
      %v5504 = vadd.f32 %v5503, %v5464
      %v5505 = vadd.f32 %v5504, %v5465
      %v5506 = vadd.f32 %v5505, %v5466
      %v5507 = vadd.f32 %v5506, %v5467
      %v5508 = vadd.f32 %v5507, %v5468
      %v5509 = vadd.f32 %v5508, %v5469
      %v5510 = vadd.f32 %v5509, %v5470
      %v5511 = vadd.f32 %v5510, %v5471
      %v5512 = vadd.f32 %v5511, %v5472
      %v5513 = vadd.f32 %v5512, %v5473
      %v5514 = vadd.f32 %v5513, %v5474
      %v5515 = vadd.f32 %v5514, %v5475
      %v5516 = vadd.f32 %v5515, %v5476
      %v5517 = vadd.f32 %v5516, %v5477
      %v5518 = vadd.f32 %v5517, %v5478
      %v5519 = vadd.f32 %v5518, %v5479
      %v5520 = vadd.f32 %v5519, %v5480
      %v5521 = vadd.f32 %v5520, %v5481
      %v5522 = vadd.f32 %v5521, %v5482
      %v5523 = vadd.f32 %v5522, %v5483
      %v5524 = vadd.f32 %v5523, %v5484
      %v5525 = vrot.slane %v5524, 4
      %v5526 = vadd.f32 %v5524, %v5525
      %v5527 = vrot.slane %v5526, 2
      %v5528 = vadd.f32 %v5526, %v5527
      %v5529 = vrot.slane %v5528, 1
      %v5530 = vadd.f32 %v5528, %v5529
      %5531 = vst [vmem:[%s384] sm:$0x1] %v5360
      %5532 = vst [vmem:[%s384 + $0x1] sm:$0x1] %v5530
      %5533 = vst [vmem:[%s380] sm:$0xf] 0
      %5534 = vst [vmem:[%s380 + $0x4] sm:$0xf] 0
      %5535 = vst [vmem:[%s380 + $0x8] sm:$0xf] 0
      %5536 = vst [vmem:[%s380 + $0xb0] sm:$0xf] 0
      %5537 = vst [vmem:[%s380 + $0xb4] sm:$0xf] 0
      %5538 = vst [vmem:[%s380 + $0xb8] sm:$0xf] 0
      %v5539 = vpack.c.bf16 %v4988, %v4987
      %v5540 = vpack.c.bf16 %v4990, %v4989
      %v5541 = vpack.c.bf16 %v4992, %v4991
      %v5542 = vpack.c.bf16 %v4994, %v4993
      %v5543 = vpack.c.bf16 %v4996, %v4995
      %v5544 = vpack.c.bf16 %v4998, %v4997
      %v5545 = vpack.c.bf16 %v5000, %v4999
      %v5546 = vpack.c.bf16 %v5002, %v5001
      %v5547 = vpack.c.bf16 %v5004, %v5003
      %v5548 = vpack.c.bf16 %v5006, %v5005
      %v5549 = vpack.c.bf16 %v5008, %v5007
      %v5550 = vpack.c.bf16 %v5010, %v5009
      %v5551 = vpack.c.bf16 %v5012, %v5011
      %v5552 = vpack.c.bf16 %v5014, %v5013
      %v5553 = vpack.c.bf16 %v5016, %v5015
      %v5554 = vpack.c.bf16 %v5018, %v5017
      %v5555 = vpack.c.bf16 %v5020, %v5019
      %v5556 = vpack.c.bf16 %v5022, %v5021
      %v5557 = vpack.c.bf16 %v5024, %v5023
      %v5558 = vpack.c.bf16 %v5026, %v5025
      %v5559 = vpack.c.bf16 %v5027, %v5027
      %v5581 = vunpack.c.l.b16 %v5539
      %v5582 = vunpack.c.h.b16 %v5539
      %v5583 = vunpack.c.l.b16 %v5540
      %v5584 = vunpack.c.h.b16 %v5540
      %v5585 = vunpack.c.l.b16 %v5541
      %v5586 = vunpack.c.h.b16 %v5541
      %v5587 = vunpack.c.l.b16 %v5542
      %v5588 = vunpack.c.h.b16 %v5542
      %v5589 = vunpack.c.l.b16 %v5543
      %v5590 = vunpack.c.h.b16 %v5543
      %v5591 = vunpack.c.l.b16 %v5544
      %v5592 = vunpack.c.h.b16 %v5544
      %v5593 = vunpack.c.l.b16 %v5545
      %v5594 = vunpack.c.h.b16 %v5545
      %v5595 = vunpack.c.l.b16 %v5546
      %v5596 = vunpack.c.h.b16 %v5546
      %v5597 = vunpack.c.l.b16 %v5547
      %v5598 = vunpack.c.h.b16 %v5547
      %v5599 = vunpack.c.l.b16 %v5548
      %v5600 = vunpack.c.h.b16 %v5548
      %v5601 = vunpack.c.l.b16 %v5549
      %v5602 = vunpack.c.h.b16 %v5549
      %v5603 = vunpack.c.l.b16 %v5550
      %v5604 = vunpack.c.h.b16 %v5550
      %v5605 = vunpack.c.l.b16 %v5551
      %v5606 = vunpack.c.h.b16 %v5551
      %v5607 = vunpack.c.l.b16 %v5552
      %v5608 = vunpack.c.h.b16 %v5552
      %v5609 = vunpack.c.l.b16 %v5553
      %v5610 = vunpack.c.h.b16 %v5553
      %v5611 = vunpack.c.l.b16 %v5554
      %v5612 = vunpack.c.h.b16 %v5554
      %v5613 = vunpack.c.l.b16 %v5555
      %v5614 = vunpack.c.h.b16 %v5555
      %v5615 = vunpack.c.l.b16 %v5556
      %v5616 = vunpack.c.h.b16 %v5556
      %v5617 = vunpack.c.l.b16 %v5557
      %v5618 = vunpack.c.h.b16 %v5557
      %v5619 = vunpack.c.l.b16 %v5558
      %v5620 = vunpack.c.h.b16 %v5558
      %v5621 = vunpack.c.l.b16 %v5559
      %v5622 = vpack.c.b16 %v5581, %v5581
      %v5623 = vpack.c.b16 %v5582, %v5582
      %v5624 = vpack.c.b16 %v5583, %v5583
      %v5625 = vpack.c.b16 %v5584, %v5584
      %v5626 = vpack.c.b16 %v5585, %v5585
      %v5627 = vpack.c.b16 %v5586, %v5586
      %v5628 = vpack.c.b16 %v5587, %v5587
      %v5629 = vpack.c.b16 %v5588, %v5588
      %v5630 = vpack.c.b16 %v5589, %v5589
      %v5631 = vpack.c.b16 %v5590, %v5590
      %v5632 = vpack.c.b16 %v5591, %v5591
      %v5633 = vpack.c.b16 %v5592, %v5592
      %v5634 = vpack.c.b16 %v5593, %v5593
      %v5635 = vpack.c.b16 %v5594, %v5594
      %v5636 = vpack.c.b16 %v5595, %v5595
      %v5637 = vpack.c.b16 %v5596, %v5596
      %v5638 = vpack.c.b16 %v5597, %v5597
      %v5639 = vpack.c.b16 %v5598, %v5598
      %v5640 = vpack.c.b16 %v5599, %v5599
      %v5641 = vpack.c.b16 %v5600, %v5600
      %v5642 = vpack.c.b16 %v5601, %v5601
      %v5643 = vpack.c.b16 %v5602, %v5602
      %v5644 = vpack.c.b16 %v5603, %v5603
      %v5645 = vpack.c.b16 %v5604, %v5604
      %v5646 = vpack.c.b16 %v5605, %v5605
      %v5647 = vpack.c.b16 %v5606, %v5606
      %v5648 = vpack.c.b16 %v5607, %v5607
      %v5649 = vpack.c.b16 %v5608, %v5608
      %v5650 = vpack.c.b16 %v5609, %v5609
      %v5651 = vpack.c.b16 %v5610, %v5610
      %v5652 = vpack.c.b16 %v5611, %v5611
      %v5653 = vpack.c.b16 %v5612, %v5612
      %v5654 = vpack.c.b16 %v5613, %v5613
      %v5655 = vpack.c.b16 %v5614, %v5614
      %v5656 = vpack.c.b16 %v5615, %v5615
      %v5657 = vpack.c.b16 %v5616, %v5616
      %v5658 = vpack.c.b16 %v5617, %v5617
      %v5659 = vpack.c.b16 %v5618, %v5618
      %v5660 = vpack.c.b16 %v5619, %v5619
      %v5661 = vpack.c.b16 %v5620, %v5620
      %v5662 = vpack.c.b16 %v5621, %v5621
      %5704 = vst [vmem:[%s380 + $0xc] sm:$0xf] %v5622
      %5705 = vst [vmem:[%s380 + $0x10] sm:$0xf] %v5623
      %5706 = vst [vmem:[%s380 + $0x14] sm:$0xf] %v5624
      %5707 = vst [vmem:[%s380 + $0x18] sm:$0xf] %v5625
      %5708 = vst [vmem:[%s380 + $0x1c] sm:$0xf] %v5626
      %5709 = vst [vmem:[%s380 + $0x20] sm:$0xf] %v5627
      %5710 = vst [vmem:[%s380 + $0x24] sm:$0xf] %v5628
      %5711 = vst [vmem:[%s380 + $0x28] sm:$0xf] %v5629
      %5712 = vst [vmem:[%s380 + $0x2c] sm:$0xf] %v5630
      %5713 = vst [vmem:[%s380 + $0x30] sm:$0xf] %v5631
      %5714 = vst [vmem:[%s380 + $0x34] sm:$0xf] %v5632
      %5715 = vst [vmem:[%s380 + $0x38] sm:$0xf] %v5633
      %5716 = vst [vmem:[%s380 + $0x3c] sm:$0xf] %v5634
      %5717 = vst [vmem:[%s380 + $0x40] sm:$0xf] %v5635
      %5718 = vst [vmem:[%s380 + $0x44] sm:$0xf] %v5636
      %5719 = vst [vmem:[%s380 + $0x48] sm:$0xf] %v5637
      %5720 = vst [vmem:[%s380 + $0x4c] sm:$0xf] %v5638
      %5721 = vst [vmem:[%s380 + $0x50] sm:$0xf] %v5639
      %5722 = vst [vmem:[%s380 + $0x54] sm:$0xf] %v5640
      %5723 = vst [vmem:[%s380 + $0x58] sm:$0xf] %v5641
      %5724 = vst [vmem:[%s380 + $0x5c] sm:$0xf] %v5642
      %5725 = vst [vmem:[%s380 + $0x60] sm:$0xf] %v5643
      %5726 = vst [vmem:[%s380 + $0x64] sm:$0xf] %v5644
      %5727 = vst [vmem:[%s380 + $0x68] sm:$0xf] %v5645
      %5728 = vst [vmem:[%s380 + $0x6c] sm:$0xf] %v5646
      %5729 = vst [vmem:[%s380 + $0x70] sm:$0xf] %v5647
      %5730 = vst [vmem:[%s380 + $0x74] sm:$0xf] %v5648
      %5731 = vst [vmem:[%s380 + $0x78] sm:$0xf] %v5649
      %5732 = vst [vmem:[%s380 + $0x7c] sm:$0xf] %v5650
      %5733 = vst [vmem:[%s380 + $0x80] sm:$0xf] %v5651
      %5734 = vst [vmem:[%s380 + $0x84] sm:$0xf] %v5652
      %5735 = vst [vmem:[%s380 + $0x88] sm:$0xf] %v5653
      %5736 = vst [vmem:[%s380 + $0x8c] sm:$0xf] %v5654
      %5737 = vst [vmem:[%s380 + $0x90] sm:$0xf] %v5655
      %5738 = vst [vmem:[%s380 + $0x94] sm:$0xf] %v5656
      %5739 = vst [vmem:[%s380 + $0x98] sm:$0xf] %v5657
      %5740 = vst [vmem:[%s380 + $0x9c] sm:$0xf] %v5658
      %5741 = vst [vmem:[%s380 + $0xa0] sm:$0xf] %v5659
      %5742 = vst [vmem:[%s380 + $0xa4] sm:$0xf] %v5660
      %5743 = vst [vmem:[%s380 + $0xa8] sm:$0xf] %v5661
      %5744 = vst [vmem:[%s380 + $0xac] sm:$0xf] %v5662
      %p5745 = scmp.lt.s32.totalorder %s22, 1
      %s5746 = scalar_select %p5745, %s22, 1
      %s5747 = smul.addr %s5746, 47
      %s5748 = smul.addr %s5747, 4
      %s5749 = scalar_lea.vmem %s9, %s5748
      %p5750 = scmp.lt.s32.totalorder %s22, 1
      %s5751 = scalar_select %p5750, %s22, 1
      %s5752 = smul.addr %s5751, 2
      %s5753 = scalar_lea.vmem %s10, %s5752
      // Predicated region
      $region57: #{unet_block_pallas.2} parent=55 // pred_check
        %p5754 = pneg %p239
      $region58: #{unet_block_pallas.2} parent=55 // pred_check_branch
        %5756 = sbr.rel (%p5754) target = $region60
      $region59: #{unet_block_pallas.2} parent=55 // pred_region
        _
      $region60: #{unet_block_pallas.2} parent=55 // pred_fallthru
        _
      // Predicated region
      $region61: #{unet_block_pallas.2} parent=55 // pred_check
        %p5757 = pneg %p265
      $region62: #{unet_block_pallas.2} parent=55 // pred_check_branch
        %5759 = sbr.rel (%p5757) target = $region64
      $region63: #{unet_block_pallas.2} parent=55 // pred_region
        _
      $region64: #{unet_block_pallas.2} parent=55 // pred_fallthru
        _
    $region56: #{unet_block_pallas.2} parent=5 // pred_fallthru
      _
    %p5760 = scmp.le.s32.totalorder 2, %s17
    // Predicated region
    $region65: #{unet_block_pallas.2} parent=5 // pred_check
      %p5761 = pneg %p5760
    $region66: #{unet_block_pallas.2} parent=5 // pred_check_branch
      %5763 = sbr.rel (%p5761) target = $region68
    $region67: #{unet_block_pallas.2} parent=5 // pred_region
      %s5764 = ssub.s32 %s17, 2
      // Predicated region
      $region69: #{unet_block_pallas.2} parent=67 // pred_check
        %p5765 = pneg %p245
      $region70: #{unet_block_pallas.2} parent=67 // pred_check_branch
        %5767 = sbr.rel (%p5765) target = $region72
      $region71: #{unet_block_pallas.2} parent=67 // pred_region
        %p5768 = scmp.lt.s32.totalorder %s23, 1
        %s5769 = scalar_select %p5768, %s23, 1
        %s5770 = smul.addr %s5769, 47
        %s5771 = smul.addr %s5770, 4
        %s5772 = scalar_lea.vmem %s9, %s5771
      $region72: #{unet_block_pallas.2} parent=67 // pred_fallthru
        _
      // Predicated region
      $region73: #{unet_block_pallas.2} parent=67 // pred_check
        %p5773 = pneg %p271
      $region74: #{unet_block_pallas.2} parent=67 // pred_check_branch
        %5775 = sbr.rel (%p5773) target = $region76
      $region75: #{unet_block_pallas.2} parent=67 // pred_region
        %p5776 = scmp.lt.s32.totalorder %s23, 1
        %s5777 = scalar_select %p5776, %s23, 1
        %s5778 = smul.addr %s5777, 2
        %s5779 = scalar_lea.vmem %s10, %s5778
      $region76: #{unet_block_pallas.2} parent=67 // pred_fallthru
        _
    $region68: #{unet_block_pallas.2} parent=5 // pred_fallthru
      _
  $region6: #{unet_block_pallas.2} parent=0 // loop_footer
    %s21 = sadd.s32 1, %s17
  $region7: #{unet_block_pallas.2} parent=0 // loop_footer_branch
    %16 = sbr.rel target = $region3
  $region8: #{unet_block_pallas.2} parent=0 // loop_exit
    _

// kernel: unet_block_pallas.3
$region0: #{unet_block_pallas.3}
  #allocation0 [shape = 'u32[]', space=smem, size = 0x4, offset = 0x4, fixed_abs, tag = 'smem constant byte address 0x4 - core index']
  #allocation1 [shape = 'u32[144,128]{1,0:T(1,128)}', space=vmem, size = 0x12000, scoped, tag = 'internal scratch']
  #allocation2 [shape = 'bf16[376,128]{1,0:T(8,128)(2,1)}', space=vmem, size = 0x17800, scoped, tag = 'scratch operand']
  %s0 = inlined_call_operand.vmem [shape: bf16[2,376,128], index: 0, kind: input, shape index: {}]
  %s1 = inlined_call_operand.vmem [shape: f32[1,128], index: 1, kind: input, shape index: {}]
  %s2 = inlined_call_operand.vmem [shape: f32[1,128], index: 2, kind: input, shape index: {}]
  %s3 = inlined_call_operand.vmem [shape: f32[376,1], index: 3, kind: input, shape index: {}]
  %s4 = inlined_call_operand.vmem [shape: bf16[1152,128], index: 4, kind: input, shape index: {}]
  %s5 = inlined_call_operand.vmem [shape: f32[1,128], index: 5, kind: input, shape index: {}]
  %s6 = inlined_call_operand.vmem [shape: bf16[2,328,128], index: 6, kind: output, shape index: {}]
  %s7 = sld [smem:[#allocation0]]
  $region57: #{unet_block_pallas.3} parent=0
    _
  %s9 = ssub.s32 1, %s7
  %s10 = scalar_select 0, %s9, %s7
  loop: start=0, step=1, limit=4
  $region2: #{unet_block_pallas.3} parent=0 // loop_pre_header
    _
  $region3: #{unet_block_pallas.3} parent=0 // loop_header
    %s12 = sphi 0, %s16
    %p13 = scmp.ge.s32.totalorder %s12, 4
    %s22 = sphi 0, %s24
    %s25 = sphi 0, %s22
    %s26 = sphi 0, %s25
    %s42 = sphi 0, %s26
    %s46 = sphi 0, %s46
    %s48 = sphi 0, %s46
    %s49 = sphi 0, %s48
    %s63 = sphi 0, %s49
    %s67 = sphi 0, %s67
    %s69 = sphi 0, %s67
    %s70 = sphi 0, %s69
    %s84 = sphi 0, %s70
    %s88 = sphi 0, %s88
    %s90 = sphi 0, %s88
    %s91 = sphi 0, %s90
    %s105 = sphi 0, %s91
    %s109 = sphi 0, %s109
    %s111 = sphi 0, %s109
    %s112 = sphi 0, %s111
    %s126 = sphi 0, %s112
    %s130 = sphi 0, %s130
    %s132 = sphi 0, %s130
    %s133 = sphi 0, %s132
    %s147 = sphi 0, %s133
    %s153 = sphi 0, %s155
    %s156 = sphi 0, %s153
    %s157 = sphi 0, %s156
    %s173 = sphi 0, %s157
  $region4: #{unet_block_pallas.3} parent=0 // loop_header_branch
    %15 = sbr.rel (%p13) target = $region8
  $region5: #{unet_block_pallas.3} parent=0 // loop_body
    %s17 = ssub.s32 %s12, 1
    %s18 = ssub.s32 %s12, 2
    %s19 = sadd.s32 %s12, 1
    %s20 = ssub.s32 %s12, %s19
    %p21 = scmp.eq.s32.totalorder %s20, 0
    %s23 = sadd.s32 %s22, 1
    %s24 = scalar_select %p21, %s22, %s23
    %p27 = pneg %p21
    %p28 = scmp.eq.s32.totalorder %s12, 1
    %p29 = por %p27, %p28
    %p30 = scmp.ne.s32.totalorder %s22, %s25
    %p31 = scmp.eq.s32.totalorder %s12, 0
    %p32 = por %p30, %p31
    %p33 = scmp.ne.s32.totalorder %s22, %s25
    %p34 = scmp.eq.s32.totalorder %s17, 1
    %p35 = por %p33, %p34
    %p36 = scmp.ne.s32.totalorder %s25, %s26
    %p37 = scmp.eq.s32.totalorder %s17, 0
    %p38 = por %p36, %p37
    %p39 = scmp.ne.s32.totalorder %s25, %s26
    %p40 = scmp.eq.s32.totalorder %s18, 1
    %p41 = por %p39, %p40
    %p43 = scmp.ne.s32.totalorder %s26, %s42
    %p44 = scmp.eq.s32.totalorder %s18, 0
    %p45 = por %p43, %p44
    %s47 = sadd.s32 %s46, 1
    %p50 = scmp.eq.s32.totalorder %s12, 1
    %p51 = scmp.ne.s32.totalorder %s46, %s48
    %p52 = scmp.eq.s32.totalorder %s12, 0
    %p53 = por %p51, %p52
    %p54 = scmp.ne.s32.totalorder %s46, %s48
    %p55 = scmp.eq.s32.totalorder %s17, 1
    %p56 = por %p54, %p55
    %p57 = scmp.ne.s32.totalorder %s48, %s49
    %p58 = scmp.eq.s32.totalorder %s17, 0
    %p59 = por %p57, %p58
    %p60 = scmp.ne.s32.totalorder %s48, %s49
    %p61 = scmp.eq.s32.totalorder %s18, 1
    %p62 = por %p60, %p61
    %p64 = scmp.ne.s32.totalorder %s49, %s63
    %p65 = scmp.eq.s32.totalorder %s18, 0
    %p66 = por %p64, %p65
    %s68 = sadd.s32 %s67, 1
    %p71 = scmp.eq.s32.totalorder %s12, 1
    %p72 = scmp.ne.s32.totalorder %s67, %s69
    %p73 = scmp.eq.s32.totalorder %s12, 0
    %p74 = por %p72, %p73
    %p75 = scmp.ne.s32.totalorder %s67, %s69
    %p76 = scmp.eq.s32.totalorder %s17, 1
    %p77 = por %p75, %p76
    %p78 = scmp.ne.s32.totalorder %s69, %s70
    %p79 = scmp.eq.s32.totalorder %s17, 0
    %p80 = por %p78, %p79
    %p81 = scmp.ne.s32.totalorder %s69, %s70
    %p82 = scmp.eq.s32.totalorder %s18, 1
    %p83 = por %p81, %p82
    %p85 = scmp.ne.s32.totalorder %s70, %s84
    %p86 = scmp.eq.s32.totalorder %s18, 0
    %p87 = por %p85, %p86
    %s89 = sadd.s32 %s88, 1
    %p92 = scmp.eq.s32.totalorder %s12, 1
    %p93 = scmp.ne.s32.totalorder %s88, %s90
    %p94 = scmp.eq.s32.totalorder %s12, 0
    %p95 = por %p93, %p94
    %p96 = scmp.ne.s32.totalorder %s88, %s90
    %p97 = scmp.eq.s32.totalorder %s17, 1
    %p98 = por %p96, %p97
    %p99 = scmp.ne.s32.totalorder %s90, %s91
    %p100 = scmp.eq.s32.totalorder %s17, 0
    %p101 = por %p99, %p100
    %p102 = scmp.ne.s32.totalorder %s90, %s91
    %p103 = scmp.eq.s32.totalorder %s18, 1
    %p104 = por %p102, %p103
    %p106 = scmp.ne.s32.totalorder %s91, %s105
    %p107 = scmp.eq.s32.totalorder %s18, 0
    %p108 = por %p106, %p107
    %s110 = sadd.s32 %s109, 1
    %p113 = scmp.eq.s32.totalorder %s12, 1
    %p114 = scmp.ne.s32.totalorder %s109, %s111
    %p115 = scmp.eq.s32.totalorder %s12, 0
    %p116 = por %p114, %p115
    %p117 = scmp.ne.s32.totalorder %s109, %s111
    %p118 = scmp.eq.s32.totalorder %s17, 1
    %p119 = por %p117, %p118
    %p120 = scmp.ne.s32.totalorder %s111, %s112
    %p121 = scmp.eq.s32.totalorder %s17, 0
    %p122 = por %p120, %p121
    %p123 = scmp.ne.s32.totalorder %s111, %s112
    %p124 = scmp.eq.s32.totalorder %s18, 1
    %p125 = por %p123, %p124
    %p127 = scmp.ne.s32.totalorder %s112, %s126
    %p128 = scmp.eq.s32.totalorder %s18, 0
    %p129 = por %p127, %p128
    %s131 = sadd.s32 %s130, 1
    %p134 = scmp.eq.s32.totalorder %s12, 1
    %p135 = scmp.ne.s32.totalorder %s130, %s132
    %p136 = scmp.eq.s32.totalorder %s12, 0
    %p137 = por %p135, %p136
    %p138 = scmp.ne.s32.totalorder %s130, %s132
    %p139 = scmp.eq.s32.totalorder %s17, 1
    %p140 = por %p138, %p139
    %p141 = scmp.ne.s32.totalorder %s132, %s133
    %p142 = scmp.eq.s32.totalorder %s17, 0
    %p143 = por %p141, %p142
    %p144 = scmp.ne.s32.totalorder %s132, %s133
    %p145 = scmp.eq.s32.totalorder %s18, 1
    %p146 = por %p144, %p145
    %p148 = scmp.ne.s32.totalorder %s133, %s147
    %p149 = scmp.eq.s32.totalorder %s18, 0
    %p150 = por %p148, %p149
    %s151 = ssub.s32 %s12, %s19
    %p152 = scmp.eq.s32.totalorder %s151, 0
    %s154 = sadd.s32 %s153, 1
    %s155 = scalar_select %p152, %s153, %s154
    %p158 = pneg %p152
    %p159 = scmp.eq.s32.totalorder %s12, 1
    %p160 = por %p158, %p159
    %p161 = scmp.ne.s32.totalorder %s153, %s156
    %p162 = scmp.eq.s32.totalorder %s12, 0
    %p163 = por %p161, %p162
    %p164 = scmp.ne.s32.totalorder %s153, %s156
    %p165 = scmp.eq.s32.totalorder %s17, 1
    %p166 = por %p164, %p165
    %p167 = scmp.ne.s32.totalorder %s156, %s157
    %p168 = scmp.eq.s32.totalorder %s17, 0
    %p169 = por %p167, %p168
    %p170 = scmp.ne.s32.totalorder %s156, %s157
    %p171 = scmp.eq.s32.totalorder %s18, 1
    %p172 = por %p170, %p171
    %p174 = scmp.ne.s32.totalorder %s157, %s173
    %p175 = scmp.eq.s32.totalorder %s18, 0
    %p176 = por %p174, %p175
    %p177 = scmp.le.s32.totalorder 1, %s12
    %p178 = scmp.lt.s32.totalorder %s12, 3
    %p179 = pnand %p177, %p178
    %p180 = pneg %p179
    // Predicated region
    $region9: #{unet_block_pallas.3} parent=5 // pred_check
      _
    $region10: #{unet_block_pallas.3} parent=5 // pred_check_branch
      %182 = sbr.rel (%p179) target = $region12
    $region11: #{unet_block_pallas.3} parent=5 // pred_region
      %s183 = ssub.s32 %s12, 1
      // Predicated region
      $region13: #{unet_block_pallas.3} parent=11 // pred_check
        %p184 = pneg %p59
      $region14: #{unet_block_pallas.3} parent=11 // pred_check_branch
        %186 = sbr.rel (%p184) target = $region16
      $region15: #{unet_block_pallas.3} parent=11 // pred_region
        _
      $region16: #{unet_block_pallas.3} parent=11 // pred_fallthru
        _
      // Predicated region
      $region17: #{unet_block_pallas.3} parent=11 // pred_check
        %p187 = pneg %p80
      $region18: #{unet_block_pallas.3} parent=11 // pred_check_branch
        %189 = sbr.rel (%p187) target = $region20
      $region19: #{unet_block_pallas.3} parent=11 // pred_region
        _
      $region20: #{unet_block_pallas.3} parent=11 // pred_fallthru
        _
      // Predicated region
      $region21: #{unet_block_pallas.3} parent=11 // pred_check
        %p190 = pneg %p101
      $region22: #{unet_block_pallas.3} parent=11 // pred_check_branch
        %192 = sbr.rel (%p190) target = $region24
      $region23: #{unet_block_pallas.3} parent=11 // pred_region
        _
      $region24: #{unet_block_pallas.3} parent=11 // pred_fallthru
        _
      // Predicated region
      $region25: #{unet_block_pallas.3} parent=11 // pred_check
        %p193 = pneg %p122
      $region26: #{unet_block_pallas.3} parent=11 // pred_check_branch
        %195 = sbr.rel (%p193) target = $region28
      $region27: #{unet_block_pallas.3} parent=11 // pred_region
        _
      $region28: #{unet_block_pallas.3} parent=11 // pred_fallthru
        _
      // Predicated region
      $region29: #{unet_block_pallas.3} parent=11 // pred_check
        %p196 = pneg %p143
      $region30: #{unet_block_pallas.3} parent=11 // pred_check_branch
        %198 = sbr.rel (%p196) target = $region32
      $region31: #{unet_block_pallas.3} parent=11 // pred_region
        _
      $region32: #{unet_block_pallas.3} parent=11 // pred_fallthru
        _
    $region12: #{unet_block_pallas.3} parent=5 // pred_fallthru
      _
    %p199 = scmp.lt.s32.totalorder %s12, 2
    // Predicated region
    $region33: #{unet_block_pallas.3} parent=5 // pred_check
      %p200 = pneg %p199
    $region34: #{unet_block_pallas.3} parent=5 // pred_check_branch
      %202 = sbr.rel (%p200) target = $region36
    $region35: #{unet_block_pallas.3} parent=5 // pred_region
      // Predicated region
      $region37: #{unet_block_pallas.3} parent=35 // pred_check
        %p203 = pneg %p32
      $region38: #{unet_block_pallas.3} parent=35 // pred_check_branch
        %205 = sbr.rel (%p203) target = $region40
      $region39: #{unet_block_pallas.3} parent=35 // pred_region
        %p206 = scmp.lt.s32.totalorder %s12, 1
        %s207 = scalar_select %p206, %s12, 1
        %s208 = smul.addr %s207, 47
        %s209 = smul.addr %s208, 4
        %s210 = scalar_lea.vmem %s0, %s209
      $region40: #{unet_block_pallas.3} parent=35 // pred_fallthru
        _
    $region36: #{unet_block_pallas.3} parent=5 // pred_fallthru
      _
    %p211 = scmp.le.s32.totalorder 1, %s12
    %p212 = scmp.lt.s32.totalorder %s12, 3
    %p213 = pnand %p211, %p212
    %p214 = pneg %p213
    // Predicated region
    $region41: #{unet_block_pallas.3} parent=5 // pred_check
      _
    $region42: #{unet_block_pallas.3} parent=5 // pred_check_branch
      %216 = sbr.rel (%p213) target = $region44
    $region43: #{unet_block_pallas.3} parent=5 // pred_region
      %s217 = ssub.s32 %s12, 1
      %p218 = scmp.lt.s32.totalorder %s17, 1
      %s219 = scalar_select %p218, %s17, 1
      %s220 = smul.addr %s219, 47
      %s221 = smul.addr %s220, 4
      %s222 = scalar_lea.vmem %s0, %s221
      %p223 = pneg %p38
      %p224 = pneg %p35
      %p225 = pneg %p59
      %p226 = pneg %p56
      %p227 = pneg %p80
      %p228 = pneg %p77
      %p229 = pneg %p101
      %p230 = pneg %p98
      %p231 = pneg %p122
      %p232 = pneg %p119
      %p233 = pneg %p143
      %p234 = pneg %p140
      %p235 = pneg %p169
      %p236 = pneg %p166
      %p237 = scmp.lt.s32.totalorder %s17, 1
      %s238 = scalar_select %p237, %s17, 1
      %s239 = smul.addr %s238, 41
      %s240 = smul.addr %s239, 4
      %s241 = scalar_lea.vmem %s6, %s240
      %p242 = scmp.lt.s32.totalorder %s17, 1
      %s243 = scalar_select %p242, %s17, 1
      %s244 = smul.addr %s243, 47
      %s245 = smul.addr %s244, 4
      %s246 = scalar_lea.vmem %s0, %s245
      %p247 = scmp.lt.s32.totalorder %s17, 1
      %s248 = scalar_select %p247, %s17, 1
      %s249 = smul.addr %s248, 41
      %s250 = smul.addr %s249, 4
      %s251 = scalar_lea.vmem %s6, %s250
      %v253 = vld [vmem:[%s246] sm:$0xf]
      %v254 = vld [vmem:[%s246 + $0x4] sm:$0xf]
      %v255 = vld [vmem:[%s246 + $0x8] sm:$0xf]
      %v256 = vld [vmem:[%s246 + $0xc] sm:$0xf]
      %v257 = vld [vmem:[%s246 + $0x10] sm:$0xf]
      %v258 = vld [vmem:[%s246 + $0x14] sm:$0xf]
      %v259 = vld [vmem:[%s246 + $0x18] sm:$0xf]
      %v260 = vld [vmem:[%s246 + $0x1c] sm:$0xf]
      %v261 = vld [vmem:[%s246 + $0x20] sm:$0xf]
      %v262 = vld [vmem:[%s246 + $0x24] sm:$0xf]
      %v263 = vld [vmem:[%s246 + $0x28] sm:$0xf]
      %v264 = vld [vmem:[%s246 + $0x2c] sm:$0xf]
      %v265 = vld [vmem:[%s246 + $0x30] sm:$0xf]
      %v266 = vld [vmem:[%s246 + $0x34] sm:$0xf]
      %v267 = vld [vmem:[%s246 + $0x38] sm:$0xf]
      %v268 = vld [vmem:[%s246 + $0x3c] sm:$0xf]
      %v269 = vld [vmem:[%s246 + $0x40] sm:$0xf]
      %v270 = vld [vmem:[%s246 + $0x44] sm:$0xf]
      %v271 = vld [vmem:[%s246 + $0x48] sm:$0xf]
      %v272 = vld [vmem:[%s246 + $0x4c] sm:$0xf]
      %v273 = vld [vmem:[%s246 + $0x50] sm:$0xf]
      %v274 = vld [vmem:[%s246 + $0x54] sm:$0xf]
      %v275 = vld [vmem:[%s246 + $0x58] sm:$0xf]
      %v276 = vld [vmem:[%s246 + $0x5c] sm:$0xf]
      %v277 = vld [vmem:[%s246 + $0x60] sm:$0xf]
      %v278 = vld [vmem:[%s246 + $0x64] sm:$0xf]
      %v279 = vld [vmem:[%s246 + $0x68] sm:$0xf]
      %v280 = vld [vmem:[%s246 + $0x6c] sm:$0xf]
      %v281 = vld [vmem:[%s246 + $0x70] sm:$0xf]
      %v282 = vld [vmem:[%s246 + $0x74] sm:$0xf]
      %v283 = vld [vmem:[%s246 + $0x78] sm:$0xf]
      %v284 = vld [vmem:[%s246 + $0x7c] sm:$0xf]
      %v285 = vld [vmem:[%s246 + $0x80] sm:$0xf]
      %v286 = vld [vmem:[%s246 + $0x84] sm:$0xf]
      %v287 = vld [vmem:[%s246 + $0x88] sm:$0xf]
      %v288 = vld [vmem:[%s246 + $0x8c] sm:$0xf]
      %v289 = vld [vmem:[%s246 + $0x90] sm:$0xf]
      %v290 = vld [vmem:[%s246 + $0x94] sm:$0xf]
      %v291 = vld [vmem:[%s246 + $0x98] sm:$0xf]
      %v292 = vld [vmem:[%s246 + $0x9c] sm:$0xf]
      %v293 = vld [vmem:[%s246 + $0xa0] sm:$0xf]
      %v294 = vld [vmem:[%s246 + $0xa4] sm:$0xf]
      %v295 = vld [vmem:[%s246 + $0xa8] sm:$0xf]
      %v296 = vld [vmem:[%s246 + $0xac] sm:$0xf]
      %v297 = vld [vmem:[%s246 + $0xb0] sm:$0xf]
      %v298 = vld [vmem:[%s246 + $0xb4] sm:$0xf]
      %v299 = vld [vmem:[%s246 + $0xb8] sm:$0xf]
      %v300 = vunpack.c.l.bf16 %v253
      %v301 = vunpack.c.l.bf16 %v254
      %v302 = vunpack.c.l.bf16 %v255
      %v303 = vunpack.c.l.bf16 %v256
      %v304 = vunpack.c.l.bf16 %v257
      %v305 = vunpack.c.l.bf16 %v258
      %v306 = vunpack.c.l.bf16 %v259
      %v307 = vunpack.c.l.bf16 %v260
      %v308 = vunpack.c.l.bf16 %v261
      %v309 = vunpack.c.l.bf16 %v262
      %v310 = vunpack.c.l.bf16 %v263
      %v311 = vunpack.c.l.bf16 %v264
      %v312 = vunpack.c.l.bf16 %v265
      %v313 = vunpack.c.l.bf16 %v266
      %v314 = vunpack.c.l.bf16 %v267
      %v315 = vunpack.c.l.bf16 %v268
      %v316 = vunpack.c.l.bf16 %v269
      %v317 = vunpack.c.l.bf16 %v270
      %v318 = vunpack.c.l.bf16 %v271
      %v319 = vunpack.c.l.bf16 %v272
      %v320 = vunpack.c.l.bf16 %v273
      %v321 = vunpack.c.l.bf16 %v274
      %v322 = vunpack.c.l.bf16 %v275
      %v323 = vunpack.c.l.bf16 %v276
      %v324 = vunpack.c.l.bf16 %v277
      %v325 = vunpack.c.l.bf16 %v278
      %v326 = vunpack.c.l.bf16 %v279
      %v327 = vunpack.c.l.bf16 %v280
      %v328 = vunpack.c.l.bf16 %v281
      %v329 = vunpack.c.l.bf16 %v282
      %v330 = vunpack.c.l.bf16 %v283
      %v331 = vunpack.c.l.bf16 %v284
      %v332 = vunpack.c.l.bf16 %v285
      %v333 = vunpack.c.l.bf16 %v286
      %v334 = vunpack.c.l.bf16 %v287
      %v335 = vunpack.c.l.bf16 %v288
      %v336 = vunpack.c.l.bf16 %v289
      %v337 = vunpack.c.l.bf16 %v290
      %v338 = vunpack.c.l.bf16 %v291
      %v339 = vunpack.c.l.bf16 %v292
      %v340 = vunpack.c.l.bf16 %v293
      %v341 = vunpack.c.l.bf16 %v294
      %v342 = vunpack.c.l.bf16 %v295
      %v343 = vunpack.c.l.bf16 %v296
      %v344 = vunpack.c.l.bf16 %v297
      %v345 = vunpack.c.l.bf16 %v298
      %v346 = vunpack.c.l.bf16 %v299
      %v347 = vld [vmem:[%s1] sm:$0x1]
      %v349 = vlaneseq
      %v350 = vshrl.u32 %v349, 7
      %v351 = vsub.s32 0, %v350
      %v352 = vrot.slane %v347, %v351
      %v354 = vmul.f32 %v300, %v352
      %v355 = vmul.f32 %v301, %v352
      %v356 = vmul.f32 %v302, %v352
      %v357 = vmul.f32 %v303, %v352
      %v358 = vmul.f32 %v304, %v352
      %v359 = vmul.f32 %v305, %v352
      %v360 = vmul.f32 %v306, %v352
      %v361 = vmul.f32 %v307, %v352
      %v362 = vmul.f32 %v308, %v352
      %v363 = vmul.f32 %v309, %v352
      %v364 = vmul.f32 %v310, %v352
      %v365 = vmul.f32 %v311, %v352
      %v366 = vmul.f32 %v312, %v352
      %v367 = vmul.f32 %v313, %v352
      %v368 = vmul.f32 %v314, %v352
      %v369 = vmul.f32 %v315, %v352
      %v370 = vmul.f32 %v316, %v352
      %v371 = vmul.f32 %v317, %v352
      %v372 = vmul.f32 %v318, %v352
      %v373 = vmul.f32 %v319, %v352
      %v374 = vmul.f32 %v320, %v352
      %v375 = vmul.f32 %v321, %v352
      %v376 = vmul.f32 %v322, %v352
      %v377 = vmul.f32 %v323, %v352
      %v378 = vmul.f32 %v324, %v352
      %v379 = vmul.f32 %v325, %v352
      %v380 = vmul.f32 %v326, %v352
      %v381 = vmul.f32 %v327, %v352
      %v382 = vmul.f32 %v328, %v352
      %v383 = vmul.f32 %v329, %v352
      %v384 = vmul.f32 %v330, %v352
      %v385 = vmul.f32 %v331, %v352
      %v386 = vmul.f32 %v332, %v352
      %v387 = vmul.f32 %v333, %v352
      %v388 = vmul.f32 %v334, %v352
      %v389 = vmul.f32 %v335, %v352
      %v390 = vmul.f32 %v336, %v352
      %v391 = vmul.f32 %v337, %v352
      %v392 = vmul.f32 %v338, %v352
      %v393 = vmul.f32 %v339, %v352
      %v394 = vmul.f32 %v340, %v352
      %v395 = vmul.f32 %v341, %v352
      %v396 = vmul.f32 %v342, %v352
      %v397 = vmul.f32 %v343, %v352
      %v398 = vmul.f32 %v344, %v352
      %v399 = vmul.f32 %v345, %v352
      %v400 = vmul.f32 %v346, %v352
      %v401 = vld [vmem:[%s2] sm:$0x1]
      %v403 = vlaneseq
      %v404 = vshrl.u32 %v403, 7
      %v405 = vsub.s32 0, %v404
      %v406 = vrot.slane %v401, %v405
      %v408 = vadd.f32 %v354, %v406
      %v409 = vadd.f32 %v355, %v406
      %v410 = vadd.f32 %v356, %v406
      %v411 = vadd.f32 %v357, %v406
      %v412 = vadd.f32 %v358, %v406
      %v413 = vadd.f32 %v359, %v406
      %v414 = vadd.f32 %v360, %v406
      %v415 = vadd.f32 %v361, %v406
      %v416 = vadd.f32 %v362, %v406
      %v417 = vadd.f32 %v363, %v406
      %v418 = vadd.f32 %v364, %v406
      %v419 = vadd.f32 %v365, %v406
      %v420 = vadd.f32 %v366, %v406
      %v421 = vadd.f32 %v367, %v406
      %v422 = vadd.f32 %v368, %v406
      %v423 = vadd.f32 %v369, %v406
      %v424 = vadd.f32 %v370, %v406
      %v425 = vadd.f32 %v371, %v406
      %v426 = vadd.f32 %v372, %v406
      %v427 = vadd.f32 %v373, %v406
      %v428 = vadd.f32 %v374, %v406
      %v429 = vadd.f32 %v375, %v406
      %v430 = vadd.f32 %v376, %v406
      %v431 = vadd.f32 %v377, %v406
      %v432 = vadd.f32 %v378, %v406
      %v433 = vadd.f32 %v379, %v406
      %v434 = vadd.f32 %v380, %v406
      %v435 = vadd.f32 %v381, %v406
      %v436 = vadd.f32 %v382, %v406
      %v437 = vadd.f32 %v383, %v406
      %v438 = vadd.f32 %v384, %v406
      %v439 = vadd.f32 %v385, %v406
      %v440 = vadd.f32 %v386, %v406
      %v441 = vadd.f32 %v387, %v406
      %v442 = vadd.f32 %v388, %v406
      %v443 = vadd.f32 %v389, %v406
      %v444 = vadd.f32 %v390, %v406
      %v445 = vadd.f32 %v391, %v406
      %v446 = vadd.f32 %v392, %v406
      %v447 = vadd.f32 %v393, %v406
      %v448 = vadd.f32 %v394, %v406
      %v449 = vadd.f32 %v395, %v406
      %v450 = vadd.f32 %v396, %v406
      %v451 = vadd.f32 %v397, %v406
      %v452 = vadd.f32 %v398, %v406
      %v453 = vadd.f32 %v399, %v406
      %v454 = vadd.f32 %v400, %v406
      %v455 = vxor.u32 %v408, 2147483648
      %v456 = vxor.u32 %v409, 2147483648
      %v457 = vxor.u32 %v410, 2147483648
      %v458 = vxor.u32 %v411, 2147483648
      %v459 = vxor.u32 %v412, 2147483648
      %v460 = vxor.u32 %v413, 2147483648
      %v461 = vxor.u32 %v414, 2147483648
      %v462 = vxor.u32 %v415, 2147483648
      %v463 = vxor.u32 %v416, 2147483648
      %v464 = vxor.u32 %v417, 2147483648
      %v465 = vxor.u32 %v418, 2147483648
      %v466 = vxor.u32 %v419, 2147483648
      %v467 = vxor.u32 %v420, 2147483648
      %v468 = vxor.u32 %v421, 2147483648
      %v469 = vxor.u32 %v422, 2147483648
      %v470 = vxor.u32 %v423, 2147483648
      %v471 = vxor.u32 %v424, 2147483648
      %v472 = vxor.u32 %v425, 2147483648
      %v473 = vxor.u32 %v426, 2147483648
      %v474 = vxor.u32 %v427, 2147483648
      %v475 = vxor.u32 %v428, 2147483648
      %v476 = vxor.u32 %v429, 2147483648
      %v477 = vxor.u32 %v430, 2147483648
      %v478 = vxor.u32 %v431, 2147483648
      %v479 = vxor.u32 %v432, 2147483648
      %v480 = vxor.u32 %v433, 2147483648
      %v481 = vxor.u32 %v434, 2147483648
      %v482 = vxor.u32 %v435, 2147483648
      %v483 = vxor.u32 %v436, 2147483648
      %v484 = vxor.u32 %v437, 2147483648
      %v485 = vxor.u32 %v438, 2147483648
      %v486 = vxor.u32 %v439, 2147483648
      %v487 = vxor.u32 %v440, 2147483648
      %v488 = vxor.u32 %v441, 2147483648
      %v489 = vxor.u32 %v442, 2147483648
      %v490 = vxor.u32 %v443, 2147483648
      %v491 = vxor.u32 %v444, 2147483648
      %v492 = vxor.u32 %v445, 2147483648
      %v493 = vxor.u32 %v446, 2147483648
      %v494 = vxor.u32 %v447, 2147483648
      %v495 = vxor.u32 %v448, 2147483648
      %v496 = vxor.u32 %v449, 2147483648
      %v497 = vxor.u32 %v450, 2147483648
      %v498 = vxor.u32 %v451, 2147483648
      %v499 = vxor.u32 %v452, 2147483648
      %v500 = vxor.u32 %v453, 2147483648
      %v501 = vxor.u32 %v454, 2147483648
      %v502 = vmul.f32 %v455, 1.442695
      %v503 = vpow.pop %v502
      %v504 = vmul.f32 %v456, 1.442695
      %v505 = vpow.pop %v504
      %v506 = vmul.f32 %v457, 1.442695
      %v507 = vpow.pop %v506
      %v508 = vmul.f32 %v458, 1.442695
      %v509 = vpow.pop %v508
      %v510 = vmul.f32 %v459, 1.442695
      %v511 = vpow.pop %v510
      %v512 = vmul.f32 %v460, 1.442695
      %v513 = vpow.pop %v512
      %v514 = vmul.f32 %v461, 1.442695
      %v515 = vpow.pop %v514
      %v516 = vmul.f32 %v462, 1.442695
      %v517 = vpow.pop %v516
      %v518 = vmul.f32 %v463, 1.442695
      %v519 = vpow.pop %v518
      %v520 = vmul.f32 %v464, 1.442695
      %v521 = vpow.pop %v520
      %v522 = vmul.f32 %v465, 1.442695
      %v523 = vpow.pop %v522
      %v524 = vmul.f32 %v466, 1.442695
      %v525 = vpow.pop %v524
      %v526 = vmul.f32 %v467, 1.442695
      %v527 = vpow.pop %v526
      %v528 = vmul.f32 %v468, 1.442695
      %v529 = vpow.pop %v528
      %v530 = vmul.f32 %v469, 1.442695
      %v531 = vpow.pop %v530
      %v532 = vmul.f32 %v470, 1.442695
      %v533 = vpow.pop %v532
      %v534 = vmul.f32 %v471, 1.442695
      %v535 = vpow.pop %v534
      %v536 = vmul.f32 %v472, 1.442695
      %v537 = vpow.pop %v536
      %v538 = vmul.f32 %v473, 1.442695
      %v539 = vpow.pop %v538
      %v540 = vmul.f32 %v474, 1.442695
      %v541 = vpow.pop %v540
      %v542 = vmul.f32 %v475, 1.442695
      %v543 = vpow.pop %v542
      %v544 = vmul.f32 %v476, 1.442695
      %v545 = vpow.pop %v544
      %v546 = vmul.f32 %v477, 1.442695
      %v547 = vpow.pop %v546
      %v548 = vmul.f32 %v478, 1.442695
      %v549 = vpow.pop %v548
      %v550 = vmul.f32 %v479, 1.442695
      %v551 = vpow.pop %v550
      %v552 = vmul.f32 %v480, 1.442695
      %v553 = vpow.pop %v552
      %v554 = vmul.f32 %v481, 1.442695
      %v555 = vpow.pop %v554
      %v556 = vmul.f32 %v482, 1.442695
      %v557 = vpow.pop %v556
      %v558 = vmul.f32 %v483, 1.442695
      %v559 = vpow.pop %v558
      %v560 = vmul.f32 %v484, 1.442695
      %v561 = vpow.pop %v560
      %v562 = vmul.f32 %v485, 1.442695
      %v563 = vpow.pop %v562
      %v564 = vmul.f32 %v486, 1.442695
      %v565 = vpow.pop %v564
      %v566 = vmul.f32 %v487, 1.442695
      %v567 = vpow.pop %v566
      %v568 = vmul.f32 %v488, 1.442695
      %v569 = vpow.pop %v568
      %v570 = vmul.f32 %v489, 1.442695
      %v571 = vpow.pop %v570
      %v572 = vmul.f32 %v490, 1.442695
      %v573 = vpow.pop %v572
      %v574 = vmul.f32 %v491, 1.442695
      %v575 = vpow.pop %v574
      %v576 = vmul.f32 %v492, 1.442695
      %v577 = vpow.pop %v576
      %v578 = vmul.f32 %v493, 1.442695
      %v579 = vpow.pop %v578
      %v580 = vmul.f32 %v494, 1.442695
      %v581 = vpow.pop %v580
      %v582 = vmul.f32 %v495, 1.442695
      %v583 = vpow.pop %v582
      %v584 = vmul.f32 %v496, 1.442695
      %v585 = vpow.pop %v584
      %v586 = vmul.f32 %v497, 1.442695
      %v587 = vpow.pop %v586
      %v588 = vmul.f32 %v498, 1.442695
      %v589 = vpow.pop %v588
      %v590 = vmul.f32 %v499, 1.442695
      %v591 = vpow.pop %v590
      %v592 = vmul.f32 %v500, 1.442695
      %v593 = vpow.pop %v592
      %v594 = vmul.f32 %v501, 1.442695
      %v595 = vpow.pop %v594
      %v596 = vadd.f32 %v503, 1.0
      %v597 = vadd.f32 %v505, 1.0
      %v598 = vadd.f32 %v507, 1.0
      %v599 = vadd.f32 %v509, 1.0
      %v600 = vadd.f32 %v511, 1.0
      %v601 = vadd.f32 %v513, 1.0
      %v602 = vadd.f32 %v515, 1.0
      %v603 = vadd.f32 %v517, 1.0
      %v604 = vadd.f32 %v519, 1.0
      %v605 = vadd.f32 %v521, 1.0
      %v606 = vadd.f32 %v523, 1.0
      %v607 = vadd.f32 %v525, 1.0
      %v608 = vadd.f32 %v527, 1.0
      %v609 = vadd.f32 %v529, 1.0
      %v610 = vadd.f32 %v531, 1.0
      %v611 = vadd.f32 %v533, 1.0
      %v612 = vadd.f32 %v535, 1.0
      %v613 = vadd.f32 %v537, 1.0
      %v614 = vadd.f32 %v539, 1.0
      %v615 = vadd.f32 %v541, 1.0
      %v616 = vadd.f32 %v543, 1.0
      %v617 = vadd.f32 %v545, 1.0
      %v618 = vadd.f32 %v547, 1.0
      %v619 = vadd.f32 %v549, 1.0
      %v620 = vadd.f32 %v551, 1.0
      %v621 = vadd.f32 %v553, 1.0
      %v622 = vadd.f32 %v555, 1.0
      %v623 = vadd.f32 %v557, 1.0
      %v624 = vadd.f32 %v559, 1.0
      %v625 = vadd.f32 %v561, 1.0
      %v626 = vadd.f32 %v563, 1.0
      %v627 = vadd.f32 %v565, 1.0
      %v628 = vadd.f32 %v567, 1.0
      %v629 = vadd.f32 %v569, 1.0
      %v630 = vadd.f32 %v571, 1.0
      %v631 = vadd.f32 %v573, 1.0
      %v632 = vadd.f32 %v575, 1.0
      %v633 = vadd.f32 %v577, 1.0
      %v634 = vadd.f32 %v579, 1.0
      %v635 = vadd.f32 %v581, 1.0
      %v636 = vadd.f32 %v583, 1.0
      %v637 = vadd.f32 %v585, 1.0
      %v638 = vadd.f32 %v587, 1.0
      %v639 = vadd.f32 %v589, 1.0
      %v640 = vadd.f32 %v591, 1.0
      %v641 = vadd.f32 %v593, 1.0
      %v642 = vadd.f32 %v595, 1.0
      %v643 = vrcp.pop %v596
      %v644 = vmul.f32 1.0, %v643
      %v645 = vrcp.pop %v597
      %v646 = vmul.f32 1.0, %v645
      %v647 = vrcp.pop %v598
      %v648 = vmul.f32 1.0, %v647
      %v649 = vrcp.pop %v599
      %v650 = vmul.f32 1.0, %v649
      %v651 = vrcp.pop %v600
      %v652 = vmul.f32 1.0, %v651
      %v653 = vrcp.pop %v601
      %v654 = vmul.f32 1.0, %v653
      %v655 = vrcp.pop %v602
      %v656 = vmul.f32 1.0, %v655
      %v657 = vrcp.pop %v603
      %v658 = vmul.f32 1.0, %v657
      %v659 = vrcp.pop %v604
      %v660 = vmul.f32 1.0, %v659
      %v661 = vrcp.pop %v605
      %v662 = vmul.f32 1.0, %v661
      %v663 = vrcp.pop %v606
      %v664 = vmul.f32 1.0, %v663
      %v665 = vrcp.pop %v607
      %v666 = vmul.f32 1.0, %v665
      %v667 = vrcp.pop %v608
      %v668 = vmul.f32 1.0, %v667
      %v669 = vrcp.pop %v609
      %v670 = vmul.f32 1.0, %v669
      %v671 = vrcp.pop %v610
      %v672 = vmul.f32 1.0, %v671
      %v673 = vrcp.pop %v611
      %v674 = vmul.f32 1.0, %v673
      %v675 = vrcp.pop %v612
      %v676 = vmul.f32 1.0, %v675
      %v677 = vrcp.pop %v613
      %v678 = vmul.f32 1.0, %v677
      %v679 = vrcp.pop %v614
      %v680 = vmul.f32 1.0, %v679
      %v681 = vrcp.pop %v615
      %v682 = vmul.f32 1.0, %v681
      %v683 = vrcp.pop %v616
      %v684 = vmul.f32 1.0, %v683
      %v685 = vrcp.pop %v617
      %v686 = vmul.f32 1.0, %v685
      %v687 = vrcp.pop %v618
      %v688 = vmul.f32 1.0, %v687
      %v689 = vrcp.pop %v619
      %v690 = vmul.f32 1.0, %v689
      %v691 = vrcp.pop %v620
      %v692 = vmul.f32 1.0, %v691
      %v693 = vrcp.pop %v621
      %v694 = vmul.f32 1.0, %v693
      %v695 = vrcp.pop %v622
      %v696 = vmul.f32 1.0, %v695
      %v697 = vrcp.pop %v623
      %v698 = vmul.f32 1.0, %v697
      %v699 = vrcp.pop %v624
      %v700 = vmul.f32 1.0, %v699
      %v701 = vrcp.pop %v625
      %v702 = vmul.f32 1.0, %v701
      %v703 = vrcp.pop %v626
      %v704 = vmul.f32 1.0, %v703
      %v705 = vrcp.pop %v627
      %v706 = vmul.f32 1.0, %v705
      %v707 = vrcp.pop %v628
      %v708 = vmul.f32 1.0, %v707
      %v709 = vrcp.pop %v629
      %v710 = vmul.f32 1.0, %v709
      %v711 = vrcp.pop %v630
      %v712 = vmul.f32 1.0, %v711
      %v713 = vrcp.pop %v631
      %v714 = vmul.f32 1.0, %v713
      %v715 = vrcp.pop %v632
      %v716 = vmul.f32 1.0, %v715
      %v717 = vrcp.pop %v633
      %v718 = vmul.f32 1.0, %v717
      %v719 = vrcp.pop %v634
      %v720 = vmul.f32 1.0, %v719
      %v721 = vrcp.pop %v635
      %v722 = vmul.f32 1.0, %v721
      %v723 = vrcp.pop %v636
      %v724 = vmul.f32 1.0, %v723
      %v725 = vrcp.pop %v637
      %v726 = vmul.f32 1.0, %v725
      %v727 = vrcp.pop %v638
      %v728 = vmul.f32 1.0, %v727
      %v729 = vrcp.pop %v639
      %v730 = vmul.f32 1.0, %v729
      %v731 = vrcp.pop %v640
      %v732 = vmul.f32 1.0, %v731
      %v733 = vrcp.pop %v641
      %v734 = vmul.f32 1.0, %v733
      %v735 = vrcp.pop %v642
      %v736 = vmul.f32 1.0, %v735
      %v737 = vmul.f32 %v408, %v644
      %v738 = vmul.f32 %v409, %v646
      %v739 = vmul.f32 %v410, %v648
      %v740 = vmul.f32 %v411, %v650
      %v741 = vmul.f32 %v412, %v652
      %v742 = vmul.f32 %v413, %v654
      %v743 = vmul.f32 %v414, %v656
      %v744 = vmul.f32 %v415, %v658
      %v745 = vmul.f32 %v416, %v660
      %v746 = vmul.f32 %v417, %v662
      %v747 = vmul.f32 %v418, %v664
      %v748 = vmul.f32 %v419, %v666
      %v749 = vmul.f32 %v420, %v668
      %v750 = vmul.f32 %v421, %v670
      %v751 = vmul.f32 %v422, %v672
      %v752 = vmul.f32 %v423, %v674
      %v753 = vmul.f32 %v424, %v676
      %v754 = vmul.f32 %v425, %v678
      %v755 = vmul.f32 %v426, %v680
      %v756 = vmul.f32 %v427, %v682
      %v757 = vmul.f32 %v428, %v684
      %v758 = vmul.f32 %v429, %v686
      %v759 = vmul.f32 %v430, %v688
      %v760 = vmul.f32 %v431, %v690
      %v761 = vmul.f32 %v432, %v692
      %v762 = vmul.f32 %v433, %v694
      %v763 = vmul.f32 %v434, %v696
      %v764 = vmul.f32 %v435, %v698
      %v765 = vmul.f32 %v436, %v700
      %v766 = vmul.f32 %v437, %v702
      %v767 = vmul.f32 %v438, %v704
      %v768 = vmul.f32 %v439, %v706
      %v769 = vmul.f32 %v440, %v708
      %v770 = vmul.f32 %v441, %v710
      %v771 = vmul.f32 %v442, %v712
      %v772 = vmul.f32 %v443, %v714
      %v773 = vmul.f32 %v444, %v716
      %v774 = vmul.f32 %v445, %v718
      %v775 = vmul.f32 %v446, %v720
      %v776 = vmul.f32 %v447, %v722
      %v777 = vmul.f32 %v448, %v724
      %v778 = vmul.f32 %v449, %v726
      %v779 = vmul.f32 %v450, %v728
      %v780 = vmul.f32 %v451, %v730
      %v781 = vmul.f32 %v452, %v732
      %v782 = vmul.f32 %v453, %v734
      %v783 = vmul.f32 %v454, %v736
      %v784 = vld [vmem:[%s3] sm:$0xff]
      %v785 = vld [vmem:[%s3 + $0x8] sm:$0xff]
      %v786 = vld [vmem:[%s3 + $0x10] sm:$0xff]
      %v787 = vld [vmem:[%s3 + $0x18] sm:$0xff]
      %v788 = vld [vmem:[%s3 + $0x20] sm:$0xff]
      %v789 = vld [vmem:[%s3 + $0x28] sm:$0xff]
      %v790 = vld [vmem:[%s3 + $0x30] sm:$0xff]
      %v791 = vld [vmem:[%s3 + $0x38] sm:$0xff]
      %v792 = vld [vmem:[%s3 + $0x40] sm:$0xff]
      %v793 = vld [vmem:[%s3 + $0x48] sm:$0xff]
      %v794 = vld [vmem:[%s3 + $0x50] sm:$0xff]
      %v795 = vld [vmem:[%s3 + $0x58] sm:$0xff]
      %v796 = vld [vmem:[%s3 + $0x60] sm:$0xff]
      %v797 = vld [vmem:[%s3 + $0x68] sm:$0xff]
      %v798 = vld [vmem:[%s3 + $0x70] sm:$0xff]
      %v799 = vld [vmem:[%s3 + $0x78] sm:$0xff]
      %v800 = vld [vmem:[%s3 + $0x80] sm:$0xff]
      %v801 = vld [vmem:[%s3 + $0x88] sm:$0xff]
      %v802 = vld [vmem:[%s3 + $0x90] sm:$0xff]
      %v803 = vld [vmem:[%s3 + $0x98] sm:$0xff]
      %v804 = vld [vmem:[%s3 + $0xa0] sm:$0xff]
      %v805 = vld [vmem:[%s3 + $0xa8] sm:$0xff]
      %v806 = vld [vmem:[%s3 + $0xb0] sm:$0xff]
      %v807 = vld [vmem:[%s3 + $0xb8] sm:$0xff]
      %v808 = vld [vmem:[%s3 + $0xc0] sm:$0xff]
      %v809 = vld [vmem:[%s3 + $0xc8] sm:$0xff]
      %v810 = vld [vmem:[%s3 + $0xd0] sm:$0xff]
      %v811 = vld [vmem:[%s3 + $0xd8] sm:$0xff]
      %v812 = vld [vmem:[%s3 + $0xe0] sm:$0xff]
      %v813 = vld [vmem:[%s3 + $0xe8] sm:$0xff]
      %v814 = vld [vmem:[%s3 + $0xf0] sm:$0xff]
      %v815 = vld [vmem:[%s3 + $0xf8] sm:$0xff]
      %v816 = vld [vmem:[%s3 + $0x100] sm:$0xff]
      %v817 = vld [vmem:[%s3 + $0x108] sm:$0xff]
      %v818 = vld [vmem:[%s3 + $0x110] sm:$0xff]
      %v819 = vld [vmem:[%s3 + $0x118] sm:$0xff]
      %v820 = vld [vmem:[%s3 + $0x120] sm:$0xff]
      %v821 = vld [vmem:[%s3 + $0x128] sm:$0xff]
      %v822 = vld [vmem:[%s3 + $0x130] sm:$0xff]
      %v823 = vld [vmem:[%s3 + $0x138] sm:$0xff]
      %v824 = vld [vmem:[%s3 + $0x140] sm:$0xff]
      %v825 = vld [vmem:[%s3 + $0x148] sm:$0xff]
      %v826 = vld [vmem:[%s3 + $0x150] sm:$0xff]
      %v827 = vld [vmem:[%s3 + $0x158] sm:$0xff]
      %v828 = vld [vmem:[%s3 + $0x160] sm:$0xff]
      %v829 = vld [vmem:[%s3 + $0x168] sm:$0xff]
      %v830 = vld [vmem:[%s3 + $0x170] sm:$0xff]
      %832 = vset.pattern.permute.xlu0 0
      %833 = vperm.xlu0 %832, %v784
      %v834 = vpop.permute.xlu0 %833
      %837 = vset.pattern.permute.xlu0 0
      %838 = vperm.xlu0 %837, %v785
      %v839 = vpop.permute.xlu0 %838
      %842 = vset.pattern.permute.xlu0 0
      %843 = vperm.xlu0 %842, %v786
      %v844 = vpop.permute.xlu0 %843
      %847 = vset.pattern.permute.xlu0 0
      %848 = vperm.xlu0 %847, %v787
      %v849 = vpop.permute.xlu0 %848
      %852 = vset.pattern.permute.xlu0 0
      %853 = vperm.xlu0 %852, %v788
      %v854 = vpop.permute.xlu0 %853
      %857 = vset.pattern.permute.xlu0 0
      %858 = vperm.xlu0 %857, %v789
      %v859 = vpop.permute.xlu0 %858
      %862 = vset.pattern.permute.xlu0 0
      %863 = vperm.xlu0 %862, %v790
      %v864 = vpop.permute.xlu0 %863
      %867 = vset.pattern.permute.xlu0 0
      %868 = vperm.xlu0 %867, %v791
      %v869 = vpop.permute.xlu0 %868
      %872 = vset.pattern.permute.xlu0 0
      %873 = vperm.xlu0 %872, %v792
      %v874 = vpop.permute.xlu0 %873
      %877 = vset.pattern.permute.xlu0 0
      %878 = vperm.xlu0 %877, %v793
      %v879 = vpop.permute.xlu0 %878
      %882 = vset.pattern.permute.xlu0 0
      %883 = vperm.xlu0 %882, %v794
      %v884 = vpop.permute.xlu0 %883
      %887 = vset.pattern.permute.xlu0 0
      %888 = vperm.xlu0 %887, %v795
      %v889 = vpop.permute.xlu0 %888
      %892 = vset.pattern.permute.xlu0 0
      %893 = vperm.xlu0 %892, %v796
      %v894 = vpop.permute.xlu0 %893
      %897 = vset.pattern.permute.xlu0 0
      %898 = vperm.xlu0 %897, %v797
      %v899 = vpop.permute.xlu0 %898
      %902 = vset.pattern.permute.xlu0 0
      %903 = vperm.xlu0 %902, %v798
      %v904 = vpop.permute.xlu0 %903
      %907 = vset.pattern.permute.xlu0 0
      %908 = vperm.xlu0 %907, %v799
      %v909 = vpop.permute.xlu0 %908
      %912 = vset.pattern.permute.xlu0 0
      %913 = vperm.xlu0 %912, %v800
      %v914 = vpop.permute.xlu0 %913
      %917 = vset.pattern.permute.xlu0 0
      %918 = vperm.xlu0 %917, %v801
      %v919 = vpop.permute.xlu0 %918
      %922 = vset.pattern.permute.xlu0 0
      %923 = vperm.xlu0 %922, %v802
      %v924 = vpop.permute.xlu0 %923
      %927 = vset.pattern.permute.xlu0 0
      %928 = vperm.xlu0 %927, %v803
      %v929 = vpop.permute.xlu0 %928
      %932 = vset.pattern.permute.xlu0 0
      %933 = vperm.xlu0 %932, %v804
      %v934 = vpop.permute.xlu0 %933
      %937 = vset.pattern.permute.xlu0 0
      %938 = vperm.xlu0 %937, %v805
      %v939 = vpop.permute.xlu0 %938
      %942 = vset.pattern.permute.xlu0 0
      %943 = vperm.xlu0 %942, %v806
      %v944 = vpop.permute.xlu0 %943
      %947 = vset.pattern.permute.xlu0 0
      %948 = vperm.xlu0 %947, %v807
      %v949 = vpop.permute.xlu0 %948
      %952 = vset.pattern.permute.xlu0 0
      %953 = vperm.xlu0 %952, %v808
      %v954 = vpop.permute.xlu0 %953
      %957 = vset.pattern.permute.xlu0 0
      %958 = vperm.xlu0 %957, %v809
      %v959 = vpop.permute.xlu0 %958
      %962 = vset.pattern.permute.xlu0 0
      %963 = vperm.xlu0 %962, %v810
      %v964 = vpop.permute.xlu0 %963
      %967 = vset.pattern.permute.xlu0 0
      %968 = vperm.xlu0 %967, %v811
      %v969 = vpop.permute.xlu0 %968
      %972 = vset.pattern.permute.xlu0 0
      %973 = vperm.xlu0 %972, %v812
      %v974 = vpop.permute.xlu0 %973
      %977 = vset.pattern.permute.xlu0 0
      %978 = vperm.xlu0 %977, %v813
      %v979 = vpop.permute.xlu0 %978
      %982 = vset.pattern.permute.xlu0 0
      %983 = vperm.xlu0 %982, %v814
      %v984 = vpop.permute.xlu0 %983
      %987 = vset.pattern.permute.xlu0 0
      %988 = vperm.xlu0 %987, %v815
      %v989 = vpop.permute.xlu0 %988
      %992 = vset.pattern.permute.xlu0 0
      %993 = vperm.xlu0 %992, %v816
      %v994 = vpop.permute.xlu0 %993
      %997 = vset.pattern.permute.xlu0 0
      %998 = vperm.xlu0 %997, %v817
      %v999 = vpop.permute.xlu0 %998
      %1002 = vset.pattern.permute.xlu0 0
      %1003 = vperm.xlu0 %1002, %v818
      %v1004 = vpop.permute.xlu0 %1003
      %1007 = vset.pattern.permute.xlu0 0
      %1008 = vperm.xlu0 %1007, %v819
      %v1009 = vpop.permute.xlu0 %1008
      %1012 = vset.pattern.permute.xlu0 0
      %1013 = vperm.xlu0 %1012, %v820
      %v1014 = vpop.permute.xlu0 %1013
      %1017 = vset.pattern.permute.xlu0 0
      %1018 = vperm.xlu0 %1017, %v821
      %v1019 = vpop.permute.xlu0 %1018
      %1022 = vset.pattern.permute.xlu0 0
      %1023 = vperm.xlu0 %1022, %v822
      %v1024 = vpop.permute.xlu0 %1023
      %1027 = vset.pattern.permute.xlu0 0
      %1028 = vperm.xlu0 %1027, %v823
      %v1029 = vpop.permute.xlu0 %1028
      %1032 = vset.pattern.permute.xlu0 0
      %1033 = vperm.xlu0 %1032, %v824
      %v1034 = vpop.permute.xlu0 %1033
      %1037 = vset.pattern.permute.xlu0 0
      %1038 = vperm.xlu0 %1037, %v825
      %v1039 = vpop.permute.xlu0 %1038
      %1042 = vset.pattern.permute.xlu0 0
      %1043 = vperm.xlu0 %1042, %v826
      %v1044 = vpop.permute.xlu0 %1043
      %1047 = vset.pattern.permute.xlu0 0
      %1048 = vperm.xlu0 %1047, %v827
      %v1049 = vpop.permute.xlu0 %1048
      %1052 = vset.pattern.permute.xlu0 0
      %1053 = vperm.xlu0 %1052, %v828
      %v1054 = vpop.permute.xlu0 %1053
      %1057 = vset.pattern.permute.xlu0 0
      %1058 = vperm.xlu0 %1057, %v829
      %v1059 = vpop.permute.xlu0 %1058
      %1062 = vset.pattern.permute.xlu0 0
      %1063 = vperm.xlu0 %1062, %v830
      %v1064 = vpop.permute.xlu0 %1063
      %v1066 = vmul.f32 %v737, %v834
      %v1067 = vmul.f32 %v738, %v839
      %v1068 = vmul.f32 %v739, %v844
      %v1069 = vmul.f32 %v740, %v849
      %v1070 = vmul.f32 %v741, %v854
      %v1071 = vmul.f32 %v742, %v859
      %v1072 = vmul.f32 %v743, %v864
      %v1073 = vmul.f32 %v744, %v869
      %v1074 = vmul.f32 %v745, %v874
      %v1075 = vmul.f32 %v746, %v879
      %v1076 = vmul.f32 %v747, %v884
      %v1077 = vmul.f32 %v748, %v889
      %v1078 = vmul.f32 %v749, %v894
      %v1079 = vmul.f32 %v750, %v899
      %v1080 = vmul.f32 %v751, %v904
      %v1081 = vmul.f32 %v752, %v909
      %v1082 = vmul.f32 %v753, %v914
      %v1083 = vmul.f32 %v754, %v919
      %v1084 = vmul.f32 %v755, %v924
      %v1085 = vmul.f32 %v756, %v929
      %v1086 = vmul.f32 %v757, %v934
      %v1087 = vmul.f32 %v758, %v939
      %v1088 = vmul.f32 %v759, %v944
      %v1089 = vmul.f32 %v760, %v949
      %v1090 = vmul.f32 %v761, %v954
      %v1091 = vmul.f32 %v762, %v959
      %v1092 = vmul.f32 %v763, %v964
      %v1093 = vmul.f32 %v764, %v969
      %v1094 = vmul.f32 %v765, %v974
      %v1095 = vmul.f32 %v766, %v979
      %v1096 = vmul.f32 %v767, %v984
      %v1097 = vmul.f32 %v768, %v989
      %v1098 = vmul.f32 %v769, %v994
      %v1099 = vmul.f32 %v770, %v999
      %v1100 = vmul.f32 %v771, %v1004
      %v1101 = vmul.f32 %v772, %v1009
      %v1102 = vmul.f32 %v773, %v1014
      %v1103 = vmul.f32 %v774, %v1019
      %v1104 = vmul.f32 %v775, %v1024
      %v1105 = vmul.f32 %v776, %v1029
      %v1106 = vmul.f32 %v777, %v1034
      %v1107 = vmul.f32 %v778, %v1039
      %v1108 = vmul.f32 %v779, %v1044
      %v1109 = vmul.f32 %v780, %v1049
      %v1110 = vmul.f32 %v781, %v1054
      %v1111 = vmul.f32 %v782, %v1059
      %v1112 = vmul.f32 %v783, %v1064
      %v1113 = vpack.c.bf16 %v1067, %v1066
      %v1114 = vpack.c.bf16 %v1069, %v1068
      %v1115 = vpack.c.bf16 %v1071, %v1070
      %v1116 = vpack.c.bf16 %v1073, %v1072
      %v1117 = vpack.c.bf16 %v1075, %v1074
      %v1118 = vpack.c.bf16 %v1077, %v1076
      %v1119 = vpack.c.bf16 %v1079, %v1078
      %v1120 = vpack.c.bf16 %v1081, %v1080
      %v1121 = vpack.c.bf16 %v1083, %v1082
      %v1122 = vpack.c.bf16 %v1085, %v1084
      %v1123 = vpack.c.bf16 %v1087, %v1086
      %v1124 = vpack.c.bf16 %v1089, %v1088
      %v1125 = vpack.c.bf16 %v1091, %v1090
      %v1126 = vpack.c.bf16 %v1093, %v1092
      %v1127 = vpack.c.bf16 %v1095, %v1094
      %v1128 = vpack.c.bf16 %v1097, %v1096
      %v1129 = vpack.c.bf16 %v1099, %v1098
      %v1130 = vpack.c.bf16 %v1101, %v1100
      %v1131 = vpack.c.bf16 %v1103, %v1102
      %v1132 = vpack.c.bf16 %v1105, %v1104
      %v1133 = vpack.c.bf16 %v1107, %v1106
      %v1134 = vpack.c.bf16 %v1109, %v1108
      %v1135 = vpack.c.bf16 %v1111, %v1110
      %v1136 = vpack.c.bf16 %v1112, %v1112
      %v1161 = vunpack.c.l.b16 %v1113
      %v1162 = vunpack.c.h.b16 %v1113
      %v1163 = vunpack.c.l.b16 %v1114
      %v1164 = vunpack.c.h.b16 %v1114
      %v1165 = vunpack.c.l.b16 %v1115
      %v1166 = vunpack.c.h.b16 %v1115
      %v1167 = vunpack.c.l.b16 %v1116
      %v1168 = vunpack.c.h.b16 %v1116
      %v1169 = vunpack.c.l.b16 %v1117
      %v1170 = vunpack.c.h.b16 %v1117
      %v1171 = vunpack.c.l.b16 %v1118
      %v1172 = vunpack.c.h.b16 %v1118
      %v1173 = vunpack.c.l.b16 %v1119
      %v1174 = vunpack.c.h.b16 %v1119
      %v1175 = vunpack.c.l.b16 %v1120
      %v1176 = vunpack.c.h.b16 %v1120
      %v1177 = vunpack.c.l.b16 %v1121
      %v1178 = vunpack.c.h.b16 %v1121
      %v1179 = vunpack.c.l.b16 %v1122
      %v1180 = vunpack.c.h.b16 %v1122
      %v1181 = vunpack.c.l.b16 %v1123
      %v1182 = vunpack.c.h.b16 %v1123
      %v1183 = vunpack.c.l.b16 %v1124
      %v1184 = vunpack.c.h.b16 %v1124
      %v1185 = vunpack.c.l.b16 %v1125
      %v1186 = vunpack.c.h.b16 %v1125
      %v1187 = vunpack.c.l.b16 %v1126
      %v1188 = vunpack.c.h.b16 %v1126
      %v1189 = vunpack.c.l.b16 %v1127
      %v1190 = vunpack.c.h.b16 %v1127
      %v1191 = vunpack.c.l.b16 %v1128
      %v1192 = vunpack.c.h.b16 %v1128
      %v1193 = vunpack.c.l.b16 %v1129
      %v1194 = vunpack.c.h.b16 %v1129
      %v1195 = vunpack.c.l.b16 %v1130
      %v1196 = vunpack.c.h.b16 %v1130
      %v1197 = vunpack.c.l.b16 %v1131
      %v1198 = vunpack.c.h.b16 %v1131
      %v1199 = vunpack.c.l.b16 %v1132
      %v1200 = vunpack.c.h.b16 %v1132
      %v1201 = vunpack.c.l.b16 %v1133
      %v1202 = vunpack.c.h.b16 %v1133
      %v1203 = vunpack.c.l.b16 %v1134
      %v1204 = vunpack.c.h.b16 %v1134
      %v1205 = vunpack.c.l.b16 %v1135
      %v1206 = vunpack.c.h.b16 %v1135
      %v1207 = vunpack.c.l.b16 %v1136
      %v1208 = vpack.c.b16 %v1161, %v1161
      %v1209 = vpack.c.b16 %v1162, %v1162
      %v1210 = vpack.c.b16 %v1163, %v1163
      %v1211 = vpack.c.b16 %v1164, %v1164
      %v1212 = vpack.c.b16 %v1165, %v1165
      %v1213 = vpack.c.b16 %v1166, %v1166
      %v1214 = vpack.c.b16 %v1167, %v1167
      %v1215 = vpack.c.b16 %v1168, %v1168
      %v1216 = vpack.c.b16 %v1169, %v1169
      %v1217 = vpack.c.b16 %v1170, %v1170
      %v1218 = vpack.c.b16 %v1171, %v1171
      %v1219 = vpack.c.b16 %v1172, %v1172
      %v1220 = vpack.c.b16 %v1173, %v1173
      %v1221 = vpack.c.b16 %v1174, %v1174
      %v1222 = vpack.c.b16 %v1175, %v1175
      %v1223 = vpack.c.b16 %v1176, %v1176
      %v1224 = vpack.c.b16 %v1177, %v1177
      %v1225 = vpack.c.b16 %v1178, %v1178
      %v1226 = vpack.c.b16 %v1179, %v1179
      %v1227 = vpack.c.b16 %v1180, %v1180
      %v1228 = vpack.c.b16 %v1181, %v1181
      %v1229 = vpack.c.b16 %v1182, %v1182
      %v1230 = vpack.c.b16 %v1183, %v1183
      %v1231 = vpack.c.b16 %v1184, %v1184
      %v1232 = vpack.c.b16 %v1185, %v1185
      %v1233 = vpack.c.b16 %v1186, %v1186
      %v1234 = vpack.c.b16 %v1187, %v1187
      %v1235 = vpack.c.b16 %v1188, %v1188
      %v1236 = vpack.c.b16 %v1189, %v1189
      %v1237 = vpack.c.b16 %v1190, %v1190
      %v1238 = vpack.c.b16 %v1191, %v1191
      %v1239 = vpack.c.b16 %v1192, %v1192
      %v1240 = vpack.c.b16 %v1193, %v1193
      %v1241 = vpack.c.b16 %v1194, %v1194
      %v1242 = vpack.c.b16 %v1195, %v1195
      %v1243 = vpack.c.b16 %v1196, %v1196
      %v1244 = vpack.c.b16 %v1197, %v1197
      %v1245 = vpack.c.b16 %v1198, %v1198
      %v1246 = vpack.c.b16 %v1199, %v1199
      %v1247 = vpack.c.b16 %v1200, %v1200
      %v1248 = vpack.c.b16 %v1201, %v1201
      %v1249 = vpack.c.b16 %v1202, %v1202
      %v1250 = vpack.c.b16 %v1203, %v1203
      %v1251 = vpack.c.b16 %v1204, %v1204
      %v1252 = vpack.c.b16 %v1205, %v1205
      %v1253 = vpack.c.b16 %v1206, %v1206
      %v1254 = vpack.c.b16 %v1207, %v1207
      %1302 = vst [vmem:[#allocation2] sm:$0xf] %v1208
      %1303 = vst [vmem:[#allocation2 + $0x4] sm:$0xf] %v1209
      %1304 = vst [vmem:[#allocation2 + $0x8] sm:$0xf] %v1210
      %1305 = vst [vmem:[#allocation2 + $0xc] sm:$0xf] %v1211
      %1306 = vst [vmem:[#allocation2 + $0x10] sm:$0xf] %v1212
      %1307 = vst [vmem:[#allocation2 + $0x14] sm:$0xf] %v1213
      %1308 = vst [vmem:[#allocation2 + $0x18] sm:$0xf] %v1214
      %1309 = vst [vmem:[#allocation2 + $0x1c] sm:$0xf] %v1215
      %1310 = vst [vmem:[#allocation2 + $0x20] sm:$0xf] %v1216
      %1311 = vst [vmem:[#allocation2 + $0x24] sm:$0xf] %v1217
      %1312 = vst [vmem:[#allocation2 + $0x28] sm:$0xf] %v1218
      %1313 = vst [vmem:[#allocation2 + $0x2c] sm:$0xf] %v1219
      %1314 = vst [vmem:[#allocation2 + $0x30] sm:$0xf] %v1220
      %1315 = vst [vmem:[#allocation2 + $0x34] sm:$0xf] %v1221
      %1316 = vst [vmem:[#allocation2 + $0x38] sm:$0xf] %v1222
      %1317 = vst [vmem:[#allocation2 + $0x3c] sm:$0xf] %v1223
      %1318 = vst [vmem:[#allocation2 + $0x40] sm:$0xf] %v1224
      %1319 = vst [vmem:[#allocation2 + $0x44] sm:$0xf] %v1225
      %1320 = vst [vmem:[#allocation2 + $0x48] sm:$0xf] %v1226
      %1321 = vst [vmem:[#allocation2 + $0x4c] sm:$0xf] %v1227
      %1322 = vst [vmem:[#allocation2 + $0x50] sm:$0xf] %v1228
      %1323 = vst [vmem:[#allocation2 + $0x54] sm:$0xf] %v1229
      %1324 = vst [vmem:[#allocation2 + $0x58] sm:$0xf] %v1230
      %1325 = vst [vmem:[#allocation2 + $0x5c] sm:$0xf] %v1231
      %1326 = vst [vmem:[#allocation2 + $0x60] sm:$0xf] %v1232
      %1327 = vst [vmem:[#allocation2 + $0x64] sm:$0xf] %v1233
      %1328 = vst [vmem:[#allocation2 + $0x68] sm:$0xf] %v1234
      %1329 = vst [vmem:[#allocation2 + $0x6c] sm:$0xf] %v1235
      %1330 = vst [vmem:[#allocation2 + $0x70] sm:$0xf] %v1236
      %1331 = vst [vmem:[#allocation2 + $0x74] sm:$0xf] %v1237
      %1332 = vst [vmem:[#allocation2 + $0x78] sm:$0xf] %v1238
      %1333 = vst [vmem:[#allocation2 + $0x7c] sm:$0xf] %v1239
      %1334 = vst [vmem:[#allocation2 + $0x80] sm:$0xf] %v1240
      %1335 = vst [vmem:[#allocation2 + $0x84] sm:$0xf] %v1241
      %1336 = vst [vmem:[#allocation2 + $0x88] sm:$0xf] %v1242
      %1337 = vst [vmem:[#allocation2 + $0x8c] sm:$0xf] %v1243
      %1338 = vst [vmem:[#allocation2 + $0x90] sm:$0xf] %v1244
      %1339 = vst [vmem:[#allocation2 + $0x94] sm:$0xf] %v1245
      %1340 = vst [vmem:[#allocation2 + $0x98] sm:$0xf] %v1246
      %1341 = vst [vmem:[#allocation2 + $0x9c] sm:$0xf] %v1247
      %1342 = vst [vmem:[#allocation2 + $0xa0] sm:$0xf] %v1248
      %1343 = vst [vmem:[#allocation2 + $0xa4] sm:$0xf] %v1249
      %1344 = vst [vmem:[#allocation2 + $0xa8] sm:$0xf] %v1250
      %1345 = vst [vmem:[#allocation2 + $0xac] sm:$0xf] %v1251
      %1346 = vst [vmem:[#allocation2 + $0xb0] sm:$0xf] %v1252
      %1347 = vst [vmem:[#allocation2 + $0xb4] sm:$0xf] %v1253
      %1348 = vst [vmem:[#allocation2 + $0xb8] sm:$0xf] %v1254
      %v1349 = vld [vmem:[#allocation2] sm:$0xc]
      %v1350 = vld [vmem:[#allocation2 + $0x4] sm:$0xf]
      %v1351 = vld [vmem:[#allocation2 + $0x8] sm:$0xf]
      %v1352 = vld [vmem:[#allocation2 + $0xc] sm:$0xf]
      %v1353 = vld [vmem:[#allocation2 + $0x10] sm:$0xf]
      %v1354 = vld [vmem:[#allocation2 + $0x14] sm:$0xf]
      %v1355 = vld [vmem:[#allocation2 + $0x18] sm:$0xf]
      %v1356 = vld [vmem:[#allocation2 + $0x1c] sm:$0xf]
      %v1357 = vld [vmem:[#allocation2 + $0x20] sm:$0xf]
      %v1358 = vld [vmem:[#allocation2 + $0x24] sm:$0xf]
      %v1359 = vld [vmem:[#allocation2 + $0x28] sm:$0xf]
      %v1360 = vld [vmem:[#allocation2 + $0x2c] sm:$0xf]
      %v1361 = vld [vmem:[#allocation2 + $0x30] sm:$0xf]
      %v1362 = vld [vmem:[#allocation2 + $0x34] sm:$0xf]
      %v1363 = vld [vmem:[#allocation2 + $0x38] sm:$0xf]
      %v1364 = vld [vmem:[#allocation2 + $0x3c] sm:$0xf]
      %v1365 = vld [vmem:[#allocation2 + $0x40] sm:$0xf]
      %v1366 = vld [vmem:[#allocation2 + $0x44] sm:$0xf]
      %v1367 = vld [vmem:[#allocation2 + $0x48] sm:$0xf]
      %v1368 = vld [vmem:[#allocation2 + $0x4c] sm:$0xf]
      %v1369 = vld [vmem:[#allocation2 + $0x50] sm:$0xf]
      %v1370 = vld [vmem:[#allocation2 + $0x54] sm:$0xf]
      %v1371 = vld [vmem:[#allocation2 + $0x58] sm:$0xf]
      %v1372 = vld [vmem:[#allocation2 + $0x5c] sm:$0xf]
      %v1373 = vld [vmem:[#allocation2 + $0x60] sm:$0xf]
      %v1374 = vld [vmem:[#allocation2 + $0x64] sm:$0xf]
      %v1375 = vld [vmem:[#allocation2 + $0x68] sm:$0xf]
      %v1376 = vld [vmem:[#allocation2 + $0x6c] sm:$0xf]
      %v1377 = vld [vmem:[#allocation2 + $0x70] sm:$0xf]
      %v1378 = vld [vmem:[#allocation2 + $0x74] sm:$0xf]
      %v1379 = vld [vmem:[#allocation2 + $0x78] sm:$0xf]
      %v1380 = vld [vmem:[#allocation2 + $0x7c] sm:$0xf]
      %v1381 = vld [vmem:[#allocation2 + $0x80] sm:$0xf]
      %v1382 = vld [vmem:[#allocation2 + $0x84] sm:$0xf]
      %v1383 = vld [vmem:[#allocation2 + $0x88] sm:$0xf]
      %v1384 = vld [vmem:[#allocation2 + $0x8c] sm:$0xf]
      %v1385 = vld [vmem:[#allocation2 + $0x90] sm:$0xf]
      %v1386 = vld [vmem:[#allocation2 + $0x94] sm:$0xf]
      %v1387 = vld [vmem:[#allocation2 + $0x98] sm:$0xf]
      %v1388 = vld [vmem:[#allocation2 + $0x9c] sm:$0xf]
      %v1389 = vld [vmem:[#allocation2 + $0xa0] sm:$0xf]
      %v1390 = vld [vmem:[#allocation2 + $0xa4] sm:$0x7]
      %v1391 = vld [vmem:[%s4] sm:$0xf]
      %v1392 = vld [vmem:[%s4 + $0x4] sm:$0xf]
      %v1393 = vld [vmem:[%s4 + $0x8] sm:$0xf]
      %v1394 = vld [vmem:[%s4 + $0xc] sm:$0xf]
      %v1395 = vld [vmem:[%s4 + $0x10] sm:$0xf]
      %v1396 = vld [vmem:[%s4 + $0x14] sm:$0xf]
      %v1397 = vld [vmem:[%s4 + $0x18] sm:$0xf]
      %v1398 = vld [vmem:[%s4 + $0x1c] sm:$0xf]
      %v1399 = vld [vmem:[%s4 + $0x20] sm:$0xf]
      %v1400 = vld [vmem:[%s4 + $0x24] sm:$0xf]
      %v1401 = vld [vmem:[%s4 + $0x28] sm:$0xf]
      %v1402 = vld [vmem:[%s4 + $0x2c] sm:$0xf]
      %v1403 = vld [vmem:[%s4 + $0x30] sm:$0xf]
      %v1404 = vld [vmem:[%s4 + $0x34] sm:$0xf]
      %v1405 = vld [vmem:[%s4 + $0x38] sm:$0xf]
      %v1406 = vld [vmem:[%s4 + $0x3c] sm:$0xf]
      %v1407 = vld [vmem:[#allocation2] sm:$0x8]
      %v1408 = vld [vmem:[%s4 + $0x40] sm:$0xf]
      %v1409 = vld [vmem:[%s4 + $0x44] sm:$0xf]
      %v1410 = vld [vmem:[%s4 + $0x48] sm:$0xf]
      %v1411 = vld [vmem:[%s4 + $0x4c] sm:$0xf]
      %v1412 = vld [vmem:[%s4 + $0x50] sm:$0xf]
      %v1413 = vld [vmem:[%s4 + $0x54] sm:$0xf]
      %v1414 = vld [vmem:[%s4 + $0x58] sm:$0xf]
      %v1415 = vld [vmem:[%s4 + $0x5c] sm:$0xf]
      %v1416 = vld [vmem:[%s4 + $0x60] sm:$0xf]
      %v1417 = vld [vmem:[%s4 + $0x64] sm:$0xf]
      %v1418 = vld [vmem:[%s4 + $0x68] sm:$0xf]
      %v1419 = vld [vmem:[%s4 + $0x6c] sm:$0xf]
      %v1420 = vld [vmem:[%s4 + $0x70] sm:$0xf]
      %v1421 = vld [vmem:[%s4 + $0x74] sm:$0xf]
      %v1422 = vld [vmem:[%s4 + $0x78] sm:$0xf]
      %v1423 = vld [vmem:[%s4 + $0x7c] sm:$0xf]
      %v1466 = vunpack.c.l.b16 %v1407
      %v1467 = vunpack.c.l.b16 %v1350
      %v1468 = vunpack.c.l.b16 %v1351
      %v1469 = vunpack.c.l.b16 %v1352
      %v1470 = vunpack.c.l.b16 %v1353
      %v1471 = vunpack.c.l.b16 %v1354
      %v1472 = vunpack.c.l.b16 %v1355
      %v1473 = vunpack.c.l.b16 %v1356
      %v1474 = vunpack.c.l.b16 %v1357
      %v1475 = vunpack.c.l.b16 %v1358
      %v1476 = vunpack.c.l.b16 %v1359
      %v1477 = vunpack.c.l.b16 %v1360
      %v1478 = vunpack.c.l.b16 %v1361
      %v1479 = vunpack.c.l.b16 %v1362
      %v1480 = vunpack.c.l.b16 %v1363
      %v1481 = vunpack.c.l.b16 %v1364
      %v1482 = vunpack.c.l.b16 %v1365
      %v1483 = vunpack.c.l.b16 %v1366
      %v1484 = vunpack.c.l.b16 %v1367
      %v1485 = vunpack.c.l.b16 %v1368
      %v1486 = vunpack.c.l.b16 %v1369
      %v1487 = vunpack.c.l.b16 %v1370
      %v1488 = vunpack.c.l.b16 %v1371
      %v1489 = vunpack.c.l.b16 %v1372
      %v1490 = vunpack.c.l.b16 %v1373
      %v1491 = vunpack.c.l.b16 %v1374
      %v1492 = vunpack.c.l.b16 %v1375
      %v1493 = vunpack.c.l.b16 %v1376
      %v1494 = vunpack.c.l.b16 %v1377
      %v1495 = vunpack.c.l.b16 %v1378
      %v1496 = vunpack.c.l.b16 %v1379
      %v1497 = vunpack.c.l.b16 %v1380
      %v1498 = vunpack.c.l.b16 %v1381
      %v1499 = vunpack.c.l.b16 %v1382
      %v1500 = vunpack.c.l.b16 %v1383
      %v1501 = vunpack.c.l.b16 %v1384
      %v1502 = vunpack.c.l.b16 %v1385
      %v1503 = vunpack.c.l.b16 %v1386
      %v1504 = vunpack.c.l.b16 %v1387
      %v1505 = vunpack.c.l.b16 %v1388
      %v1506 = vunpack.c.l.b16 %v1389
      %v1507 = vunpack.c.l.b16 %v1390
      %v1508 = vpack.c.b16 %v1467, %v1466
      %v1509 = vpack.c.b16 %v1469, %v1468
      %v1510 = vpack.c.b16 %v1471, %v1470
      %v1511 = vpack.c.b16 %v1473, %v1472
      %v1512 = vpack.c.b16 %v1475, %v1474
      %v1513 = vpack.c.b16 %v1477, %v1476
      %v1514 = vpack.c.b16 %v1479, %v1478
      %v1515 = vpack.c.b16 %v1481, %v1480
      %v1516 = vpack.c.b16 %v1483, %v1482
      %v1517 = vpack.c.b16 %v1485, %v1484
      %v1518 = vpack.c.b16 %v1487, %v1486
      %v1519 = vpack.c.b16 %v1489, %v1488
      %v1520 = vpack.c.b16 %v1491, %v1490
      %v1521 = vpack.c.b16 %v1493, %v1492
      %v1522 = vpack.c.b16 %v1495, %v1494
      %v1523 = vpack.c.b16 %v1497, %v1496
      %v1524 = vpack.c.b16 %v1499, %v1498
      %v1525 = vpack.c.b16 %v1501, %v1500
      %v1526 = vpack.c.b16 %v1503, %v1502
      %v1527 = vpack.c.b16 %v1505, %v1504
      %v1528 = vpack.c.b16 %v1507, %v1506
      %vm1529 = vcmask 1044480
      %v1530 = vrot.slane %v1508, 3
      %v1531 = vrot.slane %v1509, 3
      %v1532 = vsel %vm1529, %v1530, %v1531
      %v1533 = vrot.slane %v1510, 3
      %v1534 = vsel %vm1529, %v1531, %v1533
      %v1535 = vrot.slane %v1511, 3
      %v1536 = vsel %vm1529, %v1533, %v1535
      %v1537 = vrot.slane %v1512, 3
      %v1538 = vsel %vm1529, %v1535, %v1537
      %v1539 = vrot.slane %v1513, 3
      %v1540 = vsel %vm1529, %v1537, %v1539
      %v1541 = vrot.slane %v1514, 3
      %v1542 = vsel %vm1529, %v1539, %v1541
      %v1543 = vrot.slane %v1515, 3
      %v1544 = vsel %vm1529, %v1541, %v1543
      %v1545 = vrot.slane %v1516, 3
      %v1546 = vsel %vm1529, %v1543, %v1545
      %v1547 = vrot.slane %v1517, 3
      %v1548 = vsel %vm1529, %v1545, %v1547
      %v1549 = vrot.slane %v1518, 3
      %v1550 = vsel %vm1529, %v1547, %v1549
      %v1551 = vrot.slane %v1519, 3
      %v1552 = vsel %vm1529, %v1549, %v1551
      %v1553 = vrot.slane %v1520, 3
      %v1554 = vsel %vm1529, %v1551, %v1553
      %v1555 = vrot.slane %v1521, 3
      %v1556 = vsel %vm1529, %v1553, %v1555
      %v1557 = vrot.slane %v1522, 3
      %v1558 = vsel %vm1529, %v1555, %v1557
      %v1559 = vrot.slane %v1523, 3
      %v1560 = vsel %vm1529, %v1557, %v1559
      %v1561 = vrot.slane %v1524, 3
      %v1562 = vsel %vm1529, %v1559, %v1561
      %v1563 = vrot.slane %v1525, 3
      %v1564 = vsel %vm1529, %v1561, %v1563
      %v1565 = vrot.slane %v1526, 3
      %v1566 = vsel %vm1529, %v1563, %v1565
      %v1567 = vrot.slane %v1527, 3
      %v1568 = vsel %vm1529, %v1565, %v1567
      %v1569 = vrot.slane %v1528, 3
      %v1570 = vsel %vm1529, %v1567, %v1569
      %v1608 = vunpack.c.l.b16 %v1408
      %v1609 = vunpack.c.l.b16 %v1409
      %v1610 = vunpack.c.l.b16 %v1410
      %v1611 = vunpack.c.l.b16 %v1411
      %v1612 = vunpack.c.l.b16 %v1412
      %v1613 = vunpack.c.l.b16 %v1413
      %v1614 = vunpack.c.l.b16 %v1414
      %v1615 = vunpack.c.l.b16 %v1415
      %v1616 = vunpack.c.l.b16 %v1416
      %v1617 = vunpack.c.l.b16 %v1417
      %v1618 = vunpack.c.l.b16 %v1418
      %v1619 = vunpack.c.l.b16 %v1419
      %v1620 = vunpack.c.l.b16 %v1420
      %v1621 = vunpack.c.l.b16 %v1421
      %v1622 = vunpack.c.l.b16 %v1422
      %v1623 = vunpack.c.l.b16 %v1423
      %v1624 = vpack.c.b16 %v1609, %v1608
      %v1625 = vpack.c.b16 %v1611, %v1610
      %v1626 = vpack.c.b16 %v1613, %v1612
      %v1627 = vpack.c.b16 %v1615, %v1614
      %v1628 = vpack.c.b16 %v1617, %v1616
      %v1629 = vpack.c.b16 %v1619, %v1618
      %v1630 = vpack.c.b16 %v1621, %v1620
      %v1631 = vpack.c.b16 %v1623, %v1622
      %1640 = vmatprep.subr.bf16.mxu0 0
      %1641 = vmatpush1.bf16.msra.mxu0 %v1631
      %1642 = vmatprep.subr.bf16.mxu0 0
      %1643 = vmatpush1.bf16.msra.mxu0 %v1630
      %1644 = vmatprep.subr.bf16.mxu0 0
      %1645 = vmatpush1.bf16.msra.mxu0 %v1629
      %1646 = vmatprep.subr.bf16.mxu0 0
      %1647 = vmatpush1.bf16.msra.mxu0 %v1628
      %1648 = vmatprep.subr.bf16.mxu0 0
      %1649 = vmatpush1.bf16.msra.mxu0 %v1627
      %1650 = vmatprep.subr.bf16.mxu0 0
      %1651 = vmatpush1.bf16.msra.mxu0 %v1626
      %1652 = vmatprep.subr.bf16.mxu0 0
      %1653 = vmatpush1.bf16.msra.mxu0 %v1625
      %1654 = vmatprep.subr.bf16.mxu0 0
      %1655 = vmatpush1.bf16.msra.mxu0 %v1624
      %1656 = vmatprep.subr.bf16.mxu0 0
      %1657 = vmatpush2.bf16.msra.mxu0 0
      %1658 = vmatprep.subr.bf16.mxu0 0
      %1659 = vmatpush2.bf16.msra.mxu0 0
      %1660 = vmatprep.subr.bf16.mxu0 0
      %1661 = vmatpush2.bf16.msra.mxu0 0
      %1662 = vmatprep.subr.bf16.mxu0 0
      %1663 = vmatpush2.bf16.msra.mxu0 0
      %1664 = vmatprep.subr.bf16.mxu0 0
      %1665 = vmatpush2.bf16.msra.mxu0 0
      %1666 = vmatprep.subr.bf16.mxu0 0
      %1667 = vmatpush2.bf16.msra.mxu0 0
      %1668 = vmatprep.subr.bf16.mxu0 0
      %1669 = vmatpush2.bf16.msra.mxu0 0
      %1670 = vmatprep.subr.bf16.mxu0 0
      %1671 = vmatpush2.bf16.msra.mxu0 0
      %1672 = vmatprep.mubr.bf16.mxu0 0
      %1673 = vmatmul.mubr.bf16.gmra.mxu0 %v1532
      %v1674 = vpop.f32.mrf.mxu0
      %v1675 = vadd.f32 0.0, %v1674
      %v1676 = vpop.f32.mrf.mxu0
      %v1677 = vpop.f32.mrf.mxu0
      %v1678 = vadd.f32 0.0, %v1677
      %v1679 = vpop.f32.mrf.mxu0
      %1680 = vmatprep.mubr.bf16.mxu0 0
      %1681 = vmatmul.mubr.bf16.gmra.mxu0 %v1534
      %v1682 = vpop.f32.mrf.mxu0
      %v1683 = vadd.f32 0.0, %v1682
      %v1684 = vpop.f32.mrf.mxu0
      %v1685 = vpop.f32.mrf.mxu0
      %v1686 = vadd.f32 0.0, %v1685
      %v1687 = vpop.f32.mrf.mxu0
      %1688 = vmatprep.mubr.bf16.mxu0 0
      %1689 = vmatmul.mubr.bf16.gmra.mxu0 %v1536
      %v1690 = vpop.f32.mrf.mxu0
      %v1691 = vadd.f32 0.0, %v1690
      %v1692 = vpop.f32.mrf.mxu0
      %v1693 = vpop.f32.mrf.mxu0
      %v1694 = vadd.f32 0.0, %v1693
      %v1695 = vpop.f32.mrf.mxu0
      %1696 = vmatprep.mubr.bf16.mxu0 0
      %1697 = vmatmul.mubr.bf16.gmra.mxu0 %v1538
      %v1698 = vpop.f32.mrf.mxu0
      %v1699 = vadd.f32 0.0, %v1698
      %v1700 = vpop.f32.mrf.mxu0
      %v1701 = vpop.f32.mrf.mxu0
      %v1702 = vadd.f32 0.0, %v1701
      %v1703 = vpop.f32.mrf.mxu0
      %1704 = vmatprep.mubr.bf16.mxu0 0
      %1705 = vmatmul.mubr.bf16.gmra.mxu0 %v1540
      %v1706 = vpop.f32.mrf.mxu0
      %v1707 = vadd.f32 0.0, %v1706
      %v1708 = vpop.f32.mrf.mxu0
      %v1709 = vpop.f32.mrf.mxu0
      %v1710 = vadd.f32 0.0, %v1709
      %v1711 = vpop.f32.mrf.mxu0
      %1712 = vmatprep.mubr.bf16.mxu0 0
      %1713 = vmatmul.mubr.bf16.gmra.mxu0 %v1542
      %v1714 = vpop.f32.mrf.mxu0
      %v1715 = vadd.f32 0.0, %v1714
      %v1716 = vpop.f32.mrf.mxu0
      %v1717 = vpop.f32.mrf.mxu0
      %v1718 = vadd.f32 0.0, %v1717
      %v1719 = vpop.f32.mrf.mxu0
      %1720 = vmatprep.mubr.bf16.mxu0 0
      %1721 = vmatmul.mubr.bf16.gmra.mxu0 %v1544
      %v1722 = vpop.f32.mrf.mxu0
      %v1723 = vadd.f32 0.0, %v1722
      %v1724 = vpop.f32.mrf.mxu0
      %v1725 = vpop.f32.mrf.mxu0
      %v1726 = vadd.f32 0.0, %v1725
      %v1727 = vpop.f32.mrf.mxu0
      %1728 = vmatprep.mubr.bf16.mxu0 0
      %1729 = vmatmul.mubr.bf16.gmra.mxu0 %v1546
      %v1730 = vpop.f32.mrf.mxu0
      %v1731 = vadd.f32 0.0, %v1730
      %v1732 = vpop.f32.mrf.mxu0
      %v1733 = vpop.f32.mrf.mxu0
      %v1734 = vadd.f32 0.0, %v1733
      %v1735 = vpop.f32.mrf.mxu0
      %1736 = vmatprep.mubr.bf16.mxu0 0
      %1737 = vmatmul.mubr.bf16.gmra.mxu0 %v1548
      %v1738 = vpop.f32.mrf.mxu0
      %v1739 = vadd.f32 0.0, %v1738
      %v1740 = vpop.f32.mrf.mxu0
      %v1741 = vpop.f32.mrf.mxu0
      %v1742 = vadd.f32 0.0, %v1741
      %v1743 = vpop.f32.mrf.mxu0
      %1744 = vmatprep.mubr.bf16.mxu0 0
      %1745 = vmatmul.mubr.bf16.gmra.mxu0 %v1550
      %v1746 = vpop.f32.mrf.mxu0
      %v1747 = vadd.f32 0.0, %v1746
      %v1748 = vpop.f32.mrf.mxu0
      %v1749 = vpop.f32.mrf.mxu0
      %v1750 = vadd.f32 0.0, %v1749
      %v1751 = vpop.f32.mrf.mxu0
      %1752 = vmatprep.mubr.bf16.mxu0 0
      %1753 = vmatmul.mubr.bf16.gmra.mxu0 %v1552
      %v1754 = vpop.f32.mrf.mxu0
      %v1755 = vadd.f32 0.0, %v1754
      %v1756 = vpop.f32.mrf.mxu0
      %v1757 = vpop.f32.mrf.mxu0
      %v1758 = vadd.f32 0.0, %v1757
      %v1759 = vpop.f32.mrf.mxu0
      %1760 = vmatprep.mubr.bf16.mxu0 0
      %1761 = vmatmul.mubr.bf16.gmra.mxu0 %v1554
      %v1762 = vpop.f32.mrf.mxu0
      %v1763 = vadd.f32 0.0, %v1762
      %v1764 = vpop.f32.mrf.mxu0
      %v1765 = vpop.f32.mrf.mxu0
      %v1766 = vadd.f32 0.0, %v1765
      %v1767 = vpop.f32.mrf.mxu0
      %1768 = vmatprep.mubr.bf16.mxu0 0
      %1769 = vmatmul.mubr.bf16.gmra.mxu0 %v1556
      %v1770 = vpop.f32.mrf.mxu0
      %v1771 = vadd.f32 0.0, %v1770
      %v1772 = vpop.f32.mrf.mxu0
      %v1773 = vpop.f32.mrf.mxu0
      %v1774 = vadd.f32 0.0, %v1773
      %v1775 = vpop.f32.mrf.mxu0
      %1776 = vmatprep.mubr.bf16.mxu0 0
      %1777 = vmatmul.mubr.bf16.gmra.mxu0 %v1558
      %v1778 = vpop.f32.mrf.mxu0
      %v1779 = vadd.f32 0.0, %v1778
      %v1780 = vpop.f32.mrf.mxu0
      %v1781 = vpop.f32.mrf.mxu0
      %v1782 = vadd.f32 0.0, %v1781
      %v1783 = vpop.f32.mrf.mxu0
      %1784 = vmatprep.mubr.bf16.mxu0 0
      %1785 = vmatmul.mubr.bf16.gmra.mxu0 %v1560
      %v1786 = vpop.f32.mrf.mxu0
      %v1787 = vadd.f32 0.0, %v1786
      %v1788 = vpop.f32.mrf.mxu0
      %v1789 = vpop.f32.mrf.mxu0
      %v1790 = vadd.f32 0.0, %v1789
      %v1791 = vpop.f32.mrf.mxu0
      %1792 = vmatprep.mubr.bf16.mxu0 0
      %1793 = vmatmul.mubr.bf16.gmra.mxu0 %v1562
      %v1794 = vpop.f32.mrf.mxu0
      %v1795 = vadd.f32 0.0, %v1794
      %v1796 = vpop.f32.mrf.mxu0
      %v1797 = vpop.f32.mrf.mxu0
      %v1798 = vadd.f32 0.0, %v1797
      %v1799 = vpop.f32.mrf.mxu0
      %1800 = vmatprep.mubr.bf16.mxu0 0
      %1801 = vmatmul.mubr.bf16.gmra.mxu0 %v1564
      %v1802 = vpop.f32.mrf.mxu0
      %v1803 = vadd.f32 0.0, %v1802
      %v1804 = vpop.f32.mrf.mxu0
      %v1805 = vpop.f32.mrf.mxu0
      %v1806 = vadd.f32 0.0, %v1805
      %v1807 = vpop.f32.mrf.mxu0
      %1808 = vmatprep.mubr.bf16.mxu0 0
      %1809 = vmatmul.mubr.bf16.gmra.mxu0 %v1566
      %v1810 = vpop.f32.mrf.mxu0
      %v1811 = vadd.f32 0.0, %v1810
      %v1812 = vpop.f32.mrf.mxu0
      %v1813 = vpop.f32.mrf.mxu0
      %v1814 = vadd.f32 0.0, %v1813
      %v1815 = vpop.f32.mrf.mxu0
      %1816 = vmatprep.mubr.bf16.mxu0 0
      %1817 = vmatmul.mubr.bf16.gmra.mxu0 %v1568
      %v1818 = vpop.f32.mrf.mxu0
      %v1819 = vadd.f32 0.0, %v1818
      %v1820 = vpop.f32.mrf.mxu0
      %v1821 = vpop.f32.mrf.mxu0
      %v1822 = vadd.f32 0.0, %v1821
      %v1823 = vpop.f32.mrf.mxu0
      %1824 = vmatprep.mubr.bf16.mxu0 0
      %1825 = vmatmul.mubr.bf16.gmra.mxu0 %v1570
      %v1826 = vpop.f32.mrf.mxu0
      %v1827 = vadd.f32 0.0, %v1826
      %v1828 = vpop.f32.mrf.mxu0
      %v1829 = vpop.f32.mrf.mxu0
      %v1830 = vadd.f32 0.0, %v1829
      %v1831 = vpop.f32.mrf.mxu0
      %1832 = vmatprep.mubr.bf16.mxu0 0
      %1833 = vmatmul.mubr.bf16.gmra.mxu0 %v1569
      %v1834 = vpop.f32.mrf.mxu0
      %v1835 = vadd.f32 0.0, %v1834
      %v1836 = vpop.f32.mrf.mxu0
      %v1837 = vpop.f32.mrf.mxu0
      %v1838 = vpop.f32.mrf.mxu0
      %1839 = vdwg.mxu0
      %v1841 = vunpack.c.l.b16 %v1349
      %v1842 = vpack.c.b16 %v1467, %v1841
      %vm1843 = vsmask.f32 5376
      %v1845 = vshrl.u32 %v1842, 16
      %v1847 = vrot.slane %v1845, 2
      %v1848 = vshll.u32 %v1842, 16
      %v1850 = vrot.slane %v1848, 3
      %v1851 = vor.u32 %v1847, %v1850
      %v1853 = vshrl.u32 %v1509, 16
      %v1855 = vrot.slane %v1853, 2
      %v1856 = vshll.u32 %v1509, 16
      %v1858 = vrot.slane %v1856, 3
      %v1859 = vor.u32 %v1855, %v1858
      %v1860 = vsel %vm1843, %v1851, %v1859
      %v1862 = vshrl.u32 %v1510, 16
      %v1864 = vrot.slane %v1862, 2
      %v1865 = vshll.u32 %v1510, 16
      %v1867 = vrot.slane %v1865, 3
      %v1868 = vor.u32 %v1864, %v1867
      %v1869 = vsel %vm1843, %v1859, %v1868
      %v1871 = vshrl.u32 %v1511, 16
      %v1873 = vrot.slane %v1871, 2
      %v1874 = vshll.u32 %v1511, 16
      %v1876 = vrot.slane %v1874, 3
      %v1877 = vor.u32 %v1873, %v1876
      %v1878 = vsel %vm1843, %v1868, %v1877
      %v1880 = vshrl.u32 %v1512, 16
      %v1882 = vrot.slane %v1880, 2
      %v1883 = vshll.u32 %v1512, 16
      %v1885 = vrot.slane %v1883, 3
      %v1886 = vor.u32 %v1882, %v1885
      %v1887 = vsel %vm1843, %v1877, %v1886
      %v1889 = vshrl.u32 %v1513, 16
      %v1891 = vrot.slane %v1889, 2
      %v1892 = vshll.u32 %v1513, 16
      %v1894 = vrot.slane %v1892, 3
      %v1895 = vor.u32 %v1891, %v1894
      %v1896 = vsel %vm1843, %v1886, %v1895
      %v1898 = vshrl.u32 %v1514, 16
      %v1900 = vrot.slane %v1898, 2
      %v1901 = vshll.u32 %v1514, 16
      %v1903 = vrot.slane %v1901, 3
      %v1904 = vor.u32 %v1900, %v1903
      %v1905 = vsel %vm1843, %v1895, %v1904
      %v1907 = vshrl.u32 %v1515, 16
      %v1909 = vrot.slane %v1907, 2
      %v1910 = vshll.u32 %v1515, 16
      %v1912 = vrot.slane %v1910, 3
      %v1913 = vor.u32 %v1909, %v1912
      %v1914 = vsel %vm1843, %v1904, %v1913
      %v1916 = vshrl.u32 %v1516, 16
      %v1918 = vrot.slane %v1916, 2
      %v1919 = vshll.u32 %v1516, 16
      %v1921 = vrot.slane %v1919, 3
      %v1922 = vor.u32 %v1918, %v1921
      %v1923 = vsel %vm1843, %v1913, %v1922
      %v1925 = vshrl.u32 %v1517, 16
      %v1927 = vrot.slane %v1925, 2
      %v1928 = vshll.u32 %v1517, 16
      %v1930 = vrot.slane %v1928, 3
      %v1931 = vor.u32 %v1927, %v1930
      %v1932 = vsel %vm1843, %v1922, %v1931
      %v1934 = vshrl.u32 %v1518, 16
      %v1936 = vrot.slane %v1934, 2
      %v1937 = vshll.u32 %v1518, 16
      %v1939 = vrot.slane %v1937, 3
      %v1940 = vor.u32 %v1936, %v1939
      %v1941 = vsel %vm1843, %v1931, %v1940
      %v1943 = vshrl.u32 %v1519, 16
      %v1945 = vrot.slane %v1943, 2
      %v1946 = vshll.u32 %v1519, 16
      %v1948 = vrot.slane %v1946, 3
      %v1949 = vor.u32 %v1945, %v1948
      %v1950 = vsel %vm1843, %v1940, %v1949
      %v1952 = vshrl.u32 %v1520, 16
      %v1954 = vrot.slane %v1952, 2
      %v1955 = vshll.u32 %v1520, 16
      %v1957 = vrot.slane %v1955, 3
      %v1958 = vor.u32 %v1954, %v1957
      %v1959 = vsel %vm1843, %v1949, %v1958
      %v1961 = vshrl.u32 %v1521, 16
      %v1963 = vrot.slane %v1961, 2
      %v1964 = vshll.u32 %v1521, 16
      %v1966 = vrot.slane %v1964, 3
      %v1967 = vor.u32 %v1963, %v1966
      %v1968 = vsel %vm1843, %v1958, %v1967
      %v1970 = vshrl.u32 %v1522, 16
      %v1972 = vrot.slane %v1970, 2
      %v1973 = vshll.u32 %v1522, 16
      %v1975 = vrot.slane %v1973, 3
      %v1976 = vor.u32 %v1972, %v1975
      %v1977 = vsel %vm1843, %v1967, %v1976
      %v1979 = vshrl.u32 %v1523, 16
      %v1981 = vrot.slane %v1979, 2
      %v1982 = vshll.u32 %v1523, 16
      %v1984 = vrot.slane %v1982, 3
      %v1985 = vor.u32 %v1981, %v1984
      %v1986 = vsel %vm1843, %v1976, %v1985
      %v1988 = vshrl.u32 %v1524, 16
      %v1990 = vrot.slane %v1988, 2
      %v1991 = vshll.u32 %v1524, 16
      %v1993 = vrot.slane %v1991, 3
      %v1994 = vor.u32 %v1990, %v1993
      %v1995 = vsel %vm1843, %v1985, %v1994
      %v1997 = vshrl.u32 %v1525, 16
      %v1999 = vrot.slane %v1997, 2
      %v2000 = vshll.u32 %v1525, 16
      %v2002 = vrot.slane %v2000, 3
      %v2003 = vor.u32 %v1999, %v2002
      %v2004 = vsel %vm1843, %v1994, %v2003
      %v2006 = vshrl.u32 %v1526, 16
      %v2008 = vrot.slane %v2006, 2
      %v2009 = vshll.u32 %v1526, 16
      %v2011 = vrot.slane %v2009, 3
      %v2012 = vor.u32 %v2008, %v2011
      %v2013 = vsel %vm1843, %v2003, %v2012
      %v2015 = vshrl.u32 %v1527, 16
      %v2017 = vrot.slane %v2015, 2
      %v2018 = vshll.u32 %v1527, 16
      %v2020 = vrot.slane %v2018, 3
      %v2021 = vor.u32 %v2017, %v2020
      %v2022 = vsel %vm1843, %v2012, %v2021
      %v2024 = vshrl.u32 %v1528, 16
      %v2026 = vrot.slane %v2024, 2
      %v2027 = vshll.u32 %v1528, 16
      %v2029 = vrot.slane %v2027, 3
      %v2030 = vor.u32 %v2026, %v2029
      %v2031 = vsel %vm1843, %v2021, %v2030
      %v2069 = vunpack.c.l.b16 %v1391
      %v2070 = vunpack.c.l.b16 %v1392
      %v2071 = vunpack.c.l.b16 %v1393
      %v2072 = vunpack.c.l.b16 %v1394
      %v2073 = vunpack.c.l.b16 %v1395
      %v2074 = vunpack.c.l.b16 %v1396
      %v2075 = vunpack.c.l.b16 %v1397
      %v2076 = vunpack.c.l.b16 %v1398
      %v2077 = vunpack.c.l.b16 %v1399
      %v2078 = vunpack.c.l.b16 %v1400
      %v2079 = vunpack.c.l.b16 %v1401
      %v2080 = vunpack.c.l.b16 %v1402
      %v2081 = vunpack.c.l.b16 %v1403
      %v2082 = vunpack.c.l.b16 %v1404
      %v2083 = vunpack.c.l.b16 %v1405
      %v2084 = vunpack.c.l.b16 %v1406
      %v2085 = vpack.c.b16 %v2070, %v2069
      %v2086 = vpack.c.b16 %v2072, %v2071
      %v2087 = vpack.c.b16 %v2074, %v2073
      %v2088 = vpack.c.b16 %v2076, %v2075
      %v2089 = vpack.c.b16 %v2078, %v2077
      %v2090 = vpack.c.b16 %v2080, %v2079
      %v2091 = vpack.c.b16 %v2082, %v2081
      %v2092 = vpack.c.b16 %v2084, %v2083
      %2101 = vmatprep.subr.bf16.mxu0 0
      %2102 = vmatpush1.bf16.msra.mxu0 %v2092
      %2103 = vmatprep.subr.bf16.mxu0 0
      %2104 = vmatpush1.bf16.msra.mxu0 %v2091
      %2105 = vmatprep.subr.bf16.mxu0 0
      %2106 = vmatpush1.bf16.msra.mxu0 %v2090
      %2107 = vmatprep.subr.bf16.mxu0 0
      %2108 = vmatpush1.bf16.msra.mxu0 %v2089
      %2109 = vmatprep.subr.bf16.mxu0 0
      %2110 = vmatpush1.bf16.msra.mxu0 %v2088
      %2111 = vmatprep.subr.bf16.mxu0 0
      %2112 = vmatpush1.bf16.msra.mxu0 %v2087
      %2113 = vmatprep.subr.bf16.mxu0 0
      %2114 = vmatpush1.bf16.msra.mxu0 %v2086
      %2115 = vmatprep.subr.bf16.mxu0 0
      %2116 = vmatpush1.bf16.msra.mxu0 %v2085
      %2117 = vmatprep.subr.bf16.mxu0 0
      %2118 = vmatpush2.bf16.msra.mxu0 0
      %2119 = vmatprep.subr.bf16.mxu0 0
      %2120 = vmatpush2.bf16.msra.mxu0 0
      %2121 = vmatprep.subr.bf16.mxu0 0
      %2122 = vmatpush2.bf16.msra.mxu0 0
      %2123 = vmatprep.subr.bf16.mxu0 0
      %2124 = vmatpush2.bf16.msra.mxu0 0
      %2125 = vmatprep.subr.bf16.mxu0 0
      %2126 = vmatpush2.bf16.msra.mxu0 0
      %2127 = vmatprep.subr.bf16.mxu0 0
      %2128 = vmatpush2.bf16.msra.mxu0 0
      %2129 = vmatprep.subr.bf16.mxu0 0
      %2130 = vmatpush2.bf16.msra.mxu0 0
      %2131 = vmatprep.subr.bf16.mxu0 0
      %2132 = vmatpush2.bf16.msra.mxu0 0
      %2133 = vmatprep.mubr.bf16.mxu0 0
      %2134 = vmatmul.mubr.bf16.gmra.mxu0 %v1860
      %v2135 = vpop.f32.mrf.mxu0
      %v2136 = vadd.f32 %v1675, %v2135
      %v2137 = vpop.f32.mrf.mxu0
      %v2138 = vpop.f32.mrf.mxu0
      %v2139 = vadd.f32 %v1678, %v2138
      %v2140 = vpop.f32.mrf.mxu0
      %2141 = vmatprep.mubr.bf16.mxu0 0
      %2142 = vmatmul.mubr.bf16.gmra.mxu0 %v1869
      %v2143 = vpop.f32.mrf.mxu0
      %v2144 = vadd.f32 %v1683, %v2143
      %v2145 = vpop.f32.mrf.mxu0
      %v2146 = vpop.f32.mrf.mxu0
      %v2147 = vadd.f32 %v1686, %v2146
      %v2148 = vpop.f32.mrf.mxu0
      %2149 = vmatprep.mubr.bf16.mxu0 0
      %2150 = vmatmul.mubr.bf16.gmra.mxu0 %v1878
      %v2151 = vpop.f32.mrf.mxu0
      %v2152 = vadd.f32 %v1691, %v2151
      %v2153 = vpop.f32.mrf.mxu0
      %v2154 = vpop.f32.mrf.mxu0
      %v2155 = vadd.f32 %v1694, %v2154
      %v2156 = vpop.f32.mrf.mxu0
      %2157 = vmatprep.mubr.bf16.mxu0 0
      %2158 = vmatmul.mubr.bf16.gmra.mxu0 %v1887
      %v2159 = vpop.f32.mrf.mxu0
      %v2160 = vadd.f32 %v1699, %v2159
      %v2161 = vpop.f32.mrf.mxu0
      %v2162 = vpop.f32.mrf.mxu0
      %v2163 = vadd.f32 %v1702, %v2162
      %v2164 = vpop.f32.mrf.mxu0
      %2165 = vmatprep.mubr.bf16.mxu0 0
      %2166 = vmatmul.mubr.bf16.gmra.mxu0 %v1896
      %v2167 = vpop.f32.mrf.mxu0
      %v2168 = vadd.f32 %v1707, %v2167
      %v2169 = vpop.f32.mrf.mxu0
      %v2170 = vpop.f32.mrf.mxu0
      %v2171 = vadd.f32 %v1710, %v2170
      %v2172 = vpop.f32.mrf.mxu0
      %2173 = vmatprep.mubr.bf16.mxu0 0
      %2174 = vmatmul.mubr.bf16.gmra.mxu0 %v1905
      %v2175 = vpop.f32.mrf.mxu0
      %v2176 = vadd.f32 %v1715, %v2175
      %v2177 = vpop.f32.mrf.mxu0
      %v2178 = vpop.f32.mrf.mxu0
      %v2179 = vadd.f32 %v1718, %v2178
      %v2180 = vpop.f32.mrf.mxu0
      %2181 = vmatprep.mubr.bf16.mxu0 0
      %2182 = vmatmul.mubr.bf16.gmra.mxu0 %v1914
      %v2183 = vpop.f32.mrf.mxu0
      %v2184 = vadd.f32 %v1723, %v2183
      %v2185 = vpop.f32.mrf.mxu0
      %v2186 = vpop.f32.mrf.mxu0
      %v2187 = vadd.f32 %v1726, %v2186
      %v2188 = vpop.f32.mrf.mxu0
      %2189 = vmatprep.mubr.bf16.mxu0 0
      %2190 = vmatmul.mubr.bf16.gmra.mxu0 %v1923
      %v2191 = vpop.f32.mrf.mxu0
      %v2192 = vadd.f32 %v1731, %v2191
      %v2193 = vpop.f32.mrf.mxu0
      %v2194 = vpop.f32.mrf.mxu0
      %v2195 = vadd.f32 %v1734, %v2194
      %v2196 = vpop.f32.mrf.mxu0
      %2197 = vmatprep.mubr.bf16.mxu0 0
      %2198 = vmatmul.mubr.bf16.gmra.mxu0 %v1932
      %v2199 = vpop.f32.mrf.mxu0
      %v2200 = vadd.f32 %v1739, %v2199
      %v2201 = vpop.f32.mrf.mxu0
      %v2202 = vpop.f32.mrf.mxu0
      %v2203 = vadd.f32 %v1742, %v2202
      %v2204 = vpop.f32.mrf.mxu0
      %2205 = vmatprep.mubr.bf16.mxu0 0
      %2206 = vmatmul.mubr.bf16.gmra.mxu0 %v1941
      %v2207 = vpop.f32.mrf.mxu0
      %v2208 = vadd.f32 %v1747, %v2207
      %v2209 = vpop.f32.mrf.mxu0
      %v2210 = vpop.f32.mrf.mxu0
      %v2211 = vadd.f32 %v1750, %v2210
      %v2212 = vpop.f32.mrf.mxu0
      %2213 = vmatprep.mubr.bf16.mxu0 0
      %2214 = vmatmul.mubr.bf16.gmra.mxu0 %v1950
      %v2215 = vpop.f32.mrf.mxu0
      %v2216 = vadd.f32 %v1755, %v2215
      %v2217 = vpop.f32.mrf.mxu0
      %v2218 = vpop.f32.mrf.mxu0
      %v2219 = vadd.f32 %v1758, %v2218
      %v2220 = vpop.f32.mrf.mxu0
      %2221 = vmatprep.mubr.bf16.mxu0 0
      %2222 = vmatmul.mubr.bf16.gmra.mxu0 %v1959
      %v2223 = vpop.f32.mrf.mxu0
      %v2224 = vadd.f32 %v1763, %v2223
      %v2225 = vpop.f32.mrf.mxu0
      %v2226 = vpop.f32.mrf.mxu0
      %v2227 = vadd.f32 %v1766, %v2226
      %v2228 = vpop.f32.mrf.mxu0
      %2229 = vmatprep.mubr.bf16.mxu0 0
      %2230 = vmatmul.mubr.bf16.gmra.mxu0 %v1968
      %v2231 = vpop.f32.mrf.mxu0
      %v2232 = vadd.f32 %v1771, %v2231
      %v2233 = vpop.f32.mrf.mxu0
      %v2234 = vpop.f32.mrf.mxu0
      %v2235 = vadd.f32 %v1774, %v2234
      %v2236 = vpop.f32.mrf.mxu0
      %2237 = vmatprep.mubr.bf16.mxu0 0
      %2238 = vmatmul.mubr.bf16.gmra.mxu0 %v1977
      %v2239 = vpop.f32.mrf.mxu0
      %v2240 = vadd.f32 %v1779, %v2239
      %v2241 = vpop.f32.mrf.mxu0
      %v2242 = vpop.f32.mrf.mxu0
      %v2243 = vadd.f32 %v1782, %v2242
      %v2244 = vpop.f32.mrf.mxu0
      %2245 = vmatprep.mubr.bf16.mxu0 0
      %2246 = vmatmul.mubr.bf16.gmra.mxu0 %v1986
      %v2247 = vpop.f32.mrf.mxu0
      %v2248 = vadd.f32 %v1787, %v2247
      %v2249 = vpop.f32.mrf.mxu0
      %v2250 = vpop.f32.mrf.mxu0
      %v2251 = vadd.f32 %v1790, %v2250
      %v2252 = vpop.f32.mrf.mxu0
      %2253 = vmatprep.mubr.bf16.mxu0 0
      %2254 = vmatmul.mubr.bf16.gmra.mxu0 %v1995
      %v2255 = vpop.f32.mrf.mxu0
      %v2256 = vadd.f32 %v1795, %v2255
      %v2257 = vpop.f32.mrf.mxu0
      %v2258 = vpop.f32.mrf.mxu0
      %v2259 = vadd.f32 %v1798, %v2258
      %v2260 = vpop.f32.mrf.mxu0
      %2261 = vmatprep.mubr.bf16.mxu0 0
      %2262 = vmatmul.mubr.bf16.gmra.mxu0 %v2004
      %v2263 = vpop.f32.mrf.mxu0
      %v2264 = vadd.f32 %v1803, %v2263
      %v2265 = vpop.f32.mrf.mxu0
      %v2266 = vpop.f32.mrf.mxu0
      %v2267 = vadd.f32 %v1806, %v2266
      %v2268 = vpop.f32.mrf.mxu0
      %2269 = vmatprep.mubr.bf16.mxu0 0
      %2270 = vmatmul.mubr.bf16.gmra.mxu0 %v2013
      %v2271 = vpop.f32.mrf.mxu0
      %v2272 = vadd.f32 %v1811, %v2271
      %v2273 = vpop.f32.mrf.mxu0
      %v2274 = vpop.f32.mrf.mxu0
      %v2275 = vadd.f32 %v1814, %v2274
      %v2276 = vpop.f32.mrf.mxu0
      %2277 = vmatprep.mubr.bf16.mxu0 0
      %2278 = vmatmul.mubr.bf16.gmra.mxu0 %v2022
      %v2279 = vpop.f32.mrf.mxu0
      %v2280 = vadd.f32 %v1819, %v2279
      %v2281 = vpop.f32.mrf.mxu0
      %v2282 = vpop.f32.mrf.mxu0
      %v2283 = vadd.f32 %v1822, %v2282
      %v2284 = vpop.f32.mrf.mxu0
      %2285 = vmatprep.mubr.bf16.mxu0 0
      %2286 = vmatmul.mubr.bf16.gmra.mxu0 %v2031
      %v2287 = vpop.f32.mrf.mxu0
      %v2288 = vadd.f32 %v1827, %v2287
      %v2289 = vpop.f32.mrf.mxu0
      %v2290 = vpop.f32.mrf.mxu0
      %v2291 = vadd.f32 %v1830, %v2290
      %v2292 = vpop.f32.mrf.mxu0
      %2293 = vmatprep.mubr.bf16.mxu0 0
      %2294 = vmatmul.mubr.bf16.gmra.mxu0 %v2030
      %v2295 = vpop.f32.mrf.mxu0
      %v2296 = vadd.f32 %v1835, %v2295
      %v2297 = vpop.f32.mrf.mxu0
      %v2298 = vpop.f32.mrf.mxu0
      %v2299 = vpop.f32.mrf.mxu0
      %2300 = vdwg.mxu0
      %v2301 = vld [vmem:[#allocation2 + $0xa4] sm:$0xf]
      %v2302 = vld [vmem:[%s4 + $0x80] sm:$0xf]
      %v2303 = vld [vmem:[%s4 + $0x84] sm:$0xf]
      %v2304 = vld [vmem:[%s4 + $0x88] sm:$0xf]
      %v2305 = vld [vmem:[%s4 + $0x8c] sm:$0xf]
      %v2306 = vld [vmem:[%s4 + $0x90] sm:$0xf]
      %v2307 = vld [vmem:[%s4 + $0x94] sm:$0xf]
      %v2308 = vld [vmem:[%s4 + $0x98] sm:$0xf]
      %v2309 = vld [vmem:[%s4 + $0x9c] sm:$0xf]
      %v2310 = vld [vmem:[%s4 + $0xa0] sm:$0xf]
      %v2311 = vld [vmem:[%s4 + $0xa4] sm:$0xf]
      %v2312 = vld [vmem:[%s4 + $0xa8] sm:$0xf]
      %v2313 = vld [vmem:[%s4 + $0xac] sm:$0xf]
      %v2314 = vld [vmem:[%s4 + $0xb0] sm:$0xf]
      %v2315 = vld [vmem:[%s4 + $0xb4] sm:$0xf]
      %v2316 = vld [vmem:[%s4 + $0xb8] sm:$0xf]
      %v2317 = vld [vmem:[%s4 + $0xbc] sm:$0xf]
      %v2319 = vunpack.c.l.b16 %v2301
      %v2320 = vpack.c.b16 %v2319, %v1506
      %vm2321 = vsmask.f32 4352
      %v2323 = vshrl.u32 %v1508, 16
      %v2325 = vrot.slane %v2323, 3
      %v2326 = vshll.u32 %v1508, 16
      %v2328 = vrot.slane %v2326, 4
      %v2329 = vor.u32 %v2325, %v2328
      %v2330 = vrot.slane %v1853, 3
      %v2331 = vrot.slane %v1856, 4
      %v2332 = vor.u32 %v2330, %v2331
      %v2333 = vsel %vm2321, %v2329, %v2332
      %v2334 = vrot.slane %v1862, 3
      %v2335 = vrot.slane %v1865, 4
      %v2336 = vor.u32 %v2334, %v2335
      %v2337 = vsel %vm2321, %v2332, %v2336
      %v2338 = vrot.slane %v1871, 3
      %v2339 = vrot.slane %v1874, 4
      %v2340 = vor.u32 %v2338, %v2339
      %v2341 = vsel %vm2321, %v2336, %v2340
      %v2342 = vrot.slane %v1880, 3
      %v2343 = vrot.slane %v1883, 4
      %v2344 = vor.u32 %v2342, %v2343
      %v2345 = vsel %vm2321, %v2340, %v2344
      %v2346 = vrot.slane %v1889, 3
      %v2347 = vrot.slane %v1892, 4
      %v2348 = vor.u32 %v2346, %v2347
      %v2349 = vsel %vm2321, %v2344, %v2348
      %v2350 = vrot.slane %v1898, 3
      %v2351 = vrot.slane %v1901, 4
      %v2352 = vor.u32 %v2350, %v2351
      %v2353 = vsel %vm2321, %v2348, %v2352
      %v2354 = vrot.slane %v1907, 3
      %v2355 = vrot.slane %v1910, 4
      %v2356 = vor.u32 %v2354, %v2355
      %v2357 = vsel %vm2321, %v2352, %v2356
      %v2358 = vrot.slane %v1916, 3
      %v2359 = vrot.slane %v1919, 4
      %v2360 = vor.u32 %v2358, %v2359
      %v2361 = vsel %vm2321, %v2356, %v2360
      %v2362 = vrot.slane %v1925, 3
      %v2363 = vrot.slane %v1928, 4
      %v2364 = vor.u32 %v2362, %v2363
      %v2365 = vsel %vm2321, %v2360, %v2364
      %v2366 = vrot.slane %v1934, 3
      %v2367 = vrot.slane %v1937, 4
      %v2368 = vor.u32 %v2366, %v2367
      %v2369 = vsel %vm2321, %v2364, %v2368
      %v2370 = vrot.slane %v1943, 3
      %v2371 = vrot.slane %v1946, 4
      %v2372 = vor.u32 %v2370, %v2371
      %v2373 = vsel %vm2321, %v2368, %v2372
      %v2374 = vrot.slane %v1952, 3
      %v2375 = vrot.slane %v1955, 4
      %v2376 = vor.u32 %v2374, %v2375
      %v2377 = vsel %vm2321, %v2372, %v2376
      %v2378 = vrot.slane %v1961, 3
      %v2379 = vrot.slane %v1964, 4
      %v2380 = vor.u32 %v2378, %v2379
      %v2381 = vsel %vm2321, %v2376, %v2380
      %v2382 = vrot.slane %v1970, 3
      %v2383 = vrot.slane %v1973, 4
      %v2384 = vor.u32 %v2382, %v2383
      %v2385 = vsel %vm2321, %v2380, %v2384
      %v2386 = vrot.slane %v1979, 3
      %v2387 = vrot.slane %v1982, 4
      %v2388 = vor.u32 %v2386, %v2387
      %v2389 = vsel %vm2321, %v2384, %v2388
      %v2390 = vrot.slane %v1988, 3
      %v2391 = vrot.slane %v1991, 4
      %v2392 = vor.u32 %v2390, %v2391
      %v2393 = vsel %vm2321, %v2388, %v2392
      %v2394 = vrot.slane %v1997, 3
      %v2395 = vrot.slane %v2000, 4
      %v2396 = vor.u32 %v2394, %v2395
      %v2397 = vsel %vm2321, %v2392, %v2396
      %v2398 = vrot.slane %v2006, 3
      %v2399 = vrot.slane %v2009, 4
      %v2400 = vor.u32 %v2398, %v2399
      %v2401 = vsel %vm2321, %v2396, %v2400
      %v2402 = vrot.slane %v2015, 3
      %v2403 = vrot.slane %v2018, 4
      %v2404 = vor.u32 %v2402, %v2403
      %v2405 = vsel %vm2321, %v2400, %v2404
      %v2407 = vshrl.u32 %v2320, 16
      %v2409 = vrot.slane %v2407, 3
      %v2410 = vshll.u32 %v2320, 16
      %v2412 = vrot.slane %v2410, 4
      %v2413 = vor.u32 %v2409, %v2412
      %v2414 = vsel %vm2321, %v2404, %v2413
      %v2452 = vunpack.c.l.b16 %v2302
      %v2453 = vunpack.c.l.b16 %v2303
      %v2454 = vunpack.c.l.b16 %v2304
      %v2455 = vunpack.c.l.b16 %v2305
      %v2456 = vunpack.c.l.b16 %v2306
      %v2457 = vunpack.c.l.b16 %v2307
      %v2458 = vunpack.c.l.b16 %v2308
      %v2459 = vunpack.c.l.b16 %v2309
      %v2460 = vunpack.c.l.b16 %v2310
      %v2461 = vunpack.c.l.b16 %v2311
      %v2462 = vunpack.c.l.b16 %v2312
      %v2463 = vunpack.c.l.b16 %v2313
      %v2464 = vunpack.c.l.b16 %v2314
      %v2465 = vunpack.c.l.b16 %v2315
      %v2466 = vunpack.c.l.b16 %v2316
      %v2467 = vunpack.c.l.b16 %v2317
      %v2468 = vpack.c.b16 %v2453, %v2452
      %v2469 = vpack.c.b16 %v2455, %v2454
      %v2470 = vpack.c.b16 %v2457, %v2456
      %v2471 = vpack.c.b16 %v2459, %v2458
      %v2472 = vpack.c.b16 %v2461, %v2460
      %v2473 = vpack.c.b16 %v2463, %v2462
      %v2474 = vpack.c.b16 %v2465, %v2464
      %v2475 = vpack.c.b16 %v2467, %v2466
      %2484 = vmatprep.subr.bf16.mxu0 0
      %2485 = vmatpush1.bf16.msra.mxu0 %v2475
      %2486 = vmatprep.subr.bf16.mxu0 0
      %2487 = vmatpush1.bf16.msra.mxu0 %v2474
      %2488 = vmatprep.subr.bf16.mxu0 0
      %2489 = vmatpush1.bf16.msra.mxu0 %v2473
      %2490 = vmatprep.subr.bf16.mxu0 0
      %2491 = vmatpush1.bf16.msra.mxu0 %v2472
      %2492 = vmatprep.subr.bf16.mxu0 0
      %2493 = vmatpush1.bf16.msra.mxu0 %v2471
      %2494 = vmatprep.subr.bf16.mxu0 0
      %2495 = vmatpush1.bf16.msra.mxu0 %v2470
      %2496 = vmatprep.subr.bf16.mxu0 0
      %2497 = vmatpush1.bf16.msra.mxu0 %v2469
      %2498 = vmatprep.subr.bf16.mxu0 0
      %2499 = vmatpush1.bf16.msra.mxu0 %v2468
      %2500 = vmatprep.subr.bf16.mxu0 0
      %2501 = vmatpush2.bf16.msra.mxu0 0
      %2502 = vmatprep.subr.bf16.mxu0 0
      %2503 = vmatpush2.bf16.msra.mxu0 0
      %2504 = vmatprep.subr.bf16.mxu0 0
      %2505 = vmatpush2.bf16.msra.mxu0 0
      %2506 = vmatprep.subr.bf16.mxu0 0
      %2507 = vmatpush2.bf16.msra.mxu0 0
      %2508 = vmatprep.subr.bf16.mxu0 0
      %2509 = vmatpush2.bf16.msra.mxu0 0
      %2510 = vmatprep.subr.bf16.mxu0 0
      %2511 = vmatpush2.bf16.msra.mxu0 0
      %2512 = vmatprep.subr.bf16.mxu0 0
      %2513 = vmatpush2.bf16.msra.mxu0 0
      %2514 = vmatprep.subr.bf16.mxu0 0
      %2515 = vmatpush2.bf16.msra.mxu0 0
      %2516 = vmatprep.mubr.bf16.mxu0 0
      %2517 = vmatmul.mubr.bf16.gmra.mxu0 %v2333
      %v2518 = vpop.f32.mrf.mxu0
      %v2519 = vadd.f32 0.0, %v2518
      %v2520 = vpop.f32.mrf.mxu0
      %v2521 = vpop.f32.mrf.mxu0
      %v2522 = vadd.f32 0.0, %v2521
      %v2523 = vpop.f32.mrf.mxu0
      %2524 = vmatprep.mubr.bf16.mxu0 0
      %2525 = vmatmul.mubr.bf16.gmra.mxu0 %v2337
      %v2526 = vpop.f32.mrf.mxu0
      %v2527 = vadd.f32 0.0, %v2526
      %v2528 = vpop.f32.mrf.mxu0
      %v2529 = vpop.f32.mrf.mxu0
      %v2530 = vadd.f32 0.0, %v2529
      %v2531 = vpop.f32.mrf.mxu0
      %2532 = vmatprep.mubr.bf16.mxu0 0
      %2533 = vmatmul.mubr.bf16.gmra.mxu0 %v2341
      %v2534 = vpop.f32.mrf.mxu0
      %v2535 = vadd.f32 0.0, %v2534
      %v2536 = vpop.f32.mrf.mxu0
      %v2537 = vpop.f32.mrf.mxu0
      %v2538 = vadd.f32 0.0, %v2537
      %v2539 = vpop.f32.mrf.mxu0
      %2540 = vmatprep.mubr.bf16.mxu0 0
      %2541 = vmatmul.mubr.bf16.gmra.mxu0 %v2345
      %v2542 = vpop.f32.mrf.mxu0
      %v2543 = vadd.f32 0.0, %v2542
      %v2544 = vpop.f32.mrf.mxu0
      %v2545 = vpop.f32.mrf.mxu0
      %v2546 = vadd.f32 0.0, %v2545
      %v2547 = vpop.f32.mrf.mxu0
      %2548 = vmatprep.mubr.bf16.mxu0 0
      %2549 = vmatmul.mubr.bf16.gmra.mxu0 %v2349
      %v2550 = vpop.f32.mrf.mxu0
      %v2551 = vadd.f32 0.0, %v2550
      %v2552 = vpop.f32.mrf.mxu0
      %v2553 = vpop.f32.mrf.mxu0
      %v2554 = vadd.f32 0.0, %v2553
      %v2555 = vpop.f32.mrf.mxu0
      %2556 = vmatprep.mubr.bf16.mxu0 0
      %2557 = vmatmul.mubr.bf16.gmra.mxu0 %v2353
      %v2558 = vpop.f32.mrf.mxu0
      %v2559 = vadd.f32 0.0, %v2558
      %v2560 = vpop.f32.mrf.mxu0
      %v2561 = vpop.f32.mrf.mxu0
      %v2562 = vadd.f32 0.0, %v2561
      %v2563 = vpop.f32.mrf.mxu0
      %2564 = vmatprep.mubr.bf16.mxu0 0
      %2565 = vmatmul.mubr.bf16.gmra.mxu0 %v2357
      %v2566 = vpop.f32.mrf.mxu0
      %v2567 = vadd.f32 0.0, %v2566
      %v2568 = vpop.f32.mrf.mxu0
      %v2569 = vpop.f32.mrf.mxu0
      %v2570 = vadd.f32 0.0, %v2569
      %v2571 = vpop.f32.mrf.mxu0
      %2572 = vmatprep.mubr.bf16.mxu0 0
      %2573 = vmatmul.mubr.bf16.gmra.mxu0 %v2361
      %v2574 = vpop.f32.mrf.mxu0
      %v2575 = vadd.f32 0.0, %v2574
      %v2576 = vpop.f32.mrf.mxu0
      %v2577 = vpop.f32.mrf.mxu0
      %v2578 = vadd.f32 0.0, %v2577
      %v2579 = vpop.f32.mrf.mxu0
      %2580 = vmatprep.mubr.bf16.mxu0 0
      %2581 = vmatmul.mubr.bf16.gmra.mxu0 %v2365
      %v2582 = vpop.f32.mrf.mxu0
      %v2583 = vadd.f32 0.0, %v2582
      %v2584 = vpop.f32.mrf.mxu0
      %v2585 = vpop.f32.mrf.mxu0
      %v2586 = vadd.f32 0.0, %v2585
      %v2587 = vpop.f32.mrf.mxu0
      %2588 = vmatprep.mubr.bf16.mxu0 0
      %2589 = vmatmul.mubr.bf16.gmra.mxu0 %v2369
      %v2590 = vpop.f32.mrf.mxu0
      %v2591 = vadd.f32 0.0, %v2590
      %v2592 = vpop.f32.mrf.mxu0
      %v2593 = vpop.f32.mrf.mxu0
      %v2594 = vadd.f32 0.0, %v2593
      %v2595 = vpop.f32.mrf.mxu0
      %2596 = vmatprep.mubr.bf16.mxu0 0
      %2597 = vmatmul.mubr.bf16.gmra.mxu0 %v2373
      %v2598 = vpop.f32.mrf.mxu0
      %v2599 = vadd.f32 0.0, %v2598
      %v2600 = vpop.f32.mrf.mxu0
      %v2601 = vpop.f32.mrf.mxu0
      %v2602 = vadd.f32 0.0, %v2601
      %v2603 = vpop.f32.mrf.mxu0
      %2604 = vmatprep.mubr.bf16.mxu0 0
      %2605 = vmatmul.mubr.bf16.gmra.mxu0 %v2377
      %v2606 = vpop.f32.mrf.mxu0
      %v2607 = vadd.f32 0.0, %v2606
      %v2608 = vpop.f32.mrf.mxu0
      %v2609 = vpop.f32.mrf.mxu0
      %v2610 = vadd.f32 0.0, %v2609
      %v2611 = vpop.f32.mrf.mxu0
      %2612 = vmatprep.mubr.bf16.mxu0 0
      %2613 = vmatmul.mubr.bf16.gmra.mxu0 %v2381
      %v2614 = vpop.f32.mrf.mxu0
      %v2615 = vadd.f32 0.0, %v2614
      %v2616 = vpop.f32.mrf.mxu0
      %v2617 = vpop.f32.mrf.mxu0
      %v2618 = vadd.f32 0.0, %v2617
      %v2619 = vpop.f32.mrf.mxu0
      %2620 = vmatprep.mubr.bf16.mxu0 0
      %2621 = vmatmul.mubr.bf16.gmra.mxu0 %v2385
      %v2622 = vpop.f32.mrf.mxu0
      %v2623 = vadd.f32 0.0, %v2622
      %v2624 = vpop.f32.mrf.mxu0
      %v2625 = vpop.f32.mrf.mxu0
      %v2626 = vadd.f32 0.0, %v2625
      %v2627 = vpop.f32.mrf.mxu0
      %2628 = vmatprep.mubr.bf16.mxu0 0
      %2629 = vmatmul.mubr.bf16.gmra.mxu0 %v2389
      %v2630 = vpop.f32.mrf.mxu0
      %v2631 = vadd.f32 0.0, %v2630
      %v2632 = vpop.f32.mrf.mxu0
      %v2633 = vpop.f32.mrf.mxu0
      %v2634 = vadd.f32 0.0, %v2633
      %v2635 = vpop.f32.mrf.mxu0
      %2636 = vmatprep.mubr.bf16.mxu0 0
      %2637 = vmatmul.mubr.bf16.gmra.mxu0 %v2393
      %v2638 = vpop.f32.mrf.mxu0
      %v2639 = vadd.f32 0.0, %v2638
      %v2640 = vpop.f32.mrf.mxu0
      %v2641 = vpop.f32.mrf.mxu0
      %v2642 = vadd.f32 0.0, %v2641
      %v2643 = vpop.f32.mrf.mxu0
      %2644 = vmatprep.mubr.bf16.mxu0 0
      %2645 = vmatmul.mubr.bf16.gmra.mxu0 %v2397
      %v2646 = vpop.f32.mrf.mxu0
      %v2647 = vadd.f32 0.0, %v2646
      %v2648 = vpop.f32.mrf.mxu0
      %v2649 = vpop.f32.mrf.mxu0
      %v2650 = vadd.f32 0.0, %v2649
      %v2651 = vpop.f32.mrf.mxu0
      %2652 = vmatprep.mubr.bf16.mxu0 0
      %2653 = vmatmul.mubr.bf16.gmra.mxu0 %v2401
      %v2654 = vpop.f32.mrf.mxu0
      %v2655 = vadd.f32 0.0, %v2654
      %v2656 = vpop.f32.mrf.mxu0
      %v2657 = vpop.f32.mrf.mxu0
      %v2658 = vadd.f32 0.0, %v2657
      %v2659 = vpop.f32.mrf.mxu0
      %2660 = vmatprep.mubr.bf16.mxu0 0
      %2661 = vmatmul.mubr.bf16.gmra.mxu0 %v2405
      %v2662 = vpop.f32.mrf.mxu0
      %v2663 = vadd.f32 0.0, %v2662
      %v2664 = vpop.f32.mrf.mxu0
      %v2665 = vpop.f32.mrf.mxu0
      %v2666 = vadd.f32 0.0, %v2665
      %v2667 = vpop.f32.mrf.mxu0
      %2668 = vmatprep.mubr.bf16.mxu0 0
      %2669 = vmatmul.mubr.bf16.gmra.mxu0 %v2414
      %v2670 = vpop.f32.mrf.mxu0
      %v2671 = vadd.f32 0.0, %v2670
      %v2672 = vpop.f32.mrf.mxu0
      %v2673 = vpop.f32.mrf.mxu0
      %v2674 = vadd.f32 0.0, %v2673
      %v2675 = vpop.f32.mrf.mxu0
      %2676 = vmatprep.mubr.bf16.mxu0 0
      %2677 = vmatmul.mubr.bf16.gmra.mxu0 %v2413
      %v2678 = vpop.f32.mrf.mxu0
      %v2679 = vadd.f32 0.0, %v2678
      %v2680 = vpop.f32.mrf.mxu0
      %v2681 = vpop.f32.mrf.mxu0
      %v2682 = vpop.f32.mrf.mxu0
      %2683 = vdwg.mxu0
      %v2684 = vadd.f32 %v2136, %v2519
      %v2685 = vadd.f32 %v2139, %v2522
      %v2686 = vadd.f32 %v2144, %v2527
      %v2687 = vadd.f32 %v2147, %v2530
      %v2688 = vadd.f32 %v2152, %v2535
      %v2689 = vadd.f32 %v2155, %v2538
      %v2690 = vadd.f32 %v2160, %v2543
      %v2691 = vadd.f32 %v2163, %v2546
      %v2692 = vadd.f32 %v2168, %v2551
      %v2693 = vadd.f32 %v2171, %v2554
      %v2694 = vadd.f32 %v2176, %v2559
      %v2695 = vadd.f32 %v2179, %v2562
      %v2696 = vadd.f32 %v2184, %v2567
      %v2697 = vadd.f32 %v2187, %v2570
      %v2698 = vadd.f32 %v2192, %v2575
      %v2699 = vadd.f32 %v2195, %v2578
      %v2700 = vadd.f32 %v2200, %v2583
      %v2701 = vadd.f32 %v2203, %v2586
      %v2702 = vadd.f32 %v2208, %v2591
      %v2703 = vadd.f32 %v2211, %v2594
      %v2704 = vadd.f32 %v2216, %v2599
      %v2705 = vadd.f32 %v2219, %v2602
      %v2706 = vadd.f32 %v2224, %v2607
      %v2707 = vadd.f32 %v2227, %v2610
      %v2708 = vadd.f32 %v2232, %v2615
      %v2709 = vadd.f32 %v2235, %v2618
      %v2710 = vadd.f32 %v2240, %v2623
      %v2711 = vadd.f32 %v2243, %v2626
      %v2712 = vadd.f32 %v2248, %v2631
      %v2713 = vadd.f32 %v2251, %v2634
      %v2714 = vadd.f32 %v2256, %v2639
      %v2715 = vadd.f32 %v2259, %v2642
      %v2716 = vadd.f32 %v2264, %v2647
      %v2717 = vadd.f32 %v2267, %v2650
      %v2718 = vadd.f32 %v2272, %v2655
      %v2719 = vadd.f32 %v2275, %v2658
      %v2720 = vadd.f32 %v2280, %v2663
      %v2721 = vadd.f32 %v2283, %v2666
      %v2722 = vadd.f32 %v2288, %v2671
      %v2723 = vadd.f32 %v2291, %v2674
      %v2724 = vadd.f32 %v2296, %v2679
      %v2725 = vld [vmem:[#allocation2 + $0x8] sm:$0x8]
      %v2726 = vld [vmem:[#allocation2 + $0xc] sm:$0xf]
      %v2727 = vld [vmem:[#allocation2 + $0x10] sm:$0xf]
      %v2728 = vld [vmem:[#allocation2 + $0x14] sm:$0xf]
      %v2729 = vld [vmem:[#allocation2 + $0x18] sm:$0xf]
      %v2730 = vld [vmem:[#allocation2 + $0x1c] sm:$0xf]
      %v2731 = vld [vmem:[#allocation2 + $0x20] sm:$0xf]
      %v2732 = vld [vmem:[#allocation2 + $0x24] sm:$0xf]
      %v2733 = vld [vmem:[#allocation2 + $0x28] sm:$0xf]
      %v2734 = vld [vmem:[#allocation2 + $0x2c] sm:$0xf]
      %v2735 = vld [vmem:[#allocation2 + $0x30] sm:$0xf]
      %v2736 = vld [vmem:[#allocation2 + $0x34] sm:$0xf]
      %v2737 = vld [vmem:[#allocation2 + $0x38] sm:$0xf]
      %v2738 = vld [vmem:[#allocation2 + $0x3c] sm:$0xf]
      %v2739 = vld [vmem:[#allocation2 + $0x40] sm:$0xf]
      %v2740 = vld [vmem:[#allocation2 + $0x44] sm:$0xf]
      %v2741 = vld [vmem:[#allocation2 + $0x48] sm:$0xf]
      %v2742 = vld [vmem:[#allocation2 + $0x4c] sm:$0xf]
      %v2743 = vld [vmem:[#allocation2 + $0x50] sm:$0xf]
      %v2744 = vld [vmem:[#allocation2 + $0x54] sm:$0xf]
      %v2745 = vld [vmem:[#allocation2 + $0x58] sm:$0xf]
      %v2746 = vld [vmem:[#allocation2 + $0x5c] sm:$0xf]
      %v2747 = vld [vmem:[#allocation2 + $0x60] sm:$0xf]
      %v2748 = vld [vmem:[#allocation2 + $0x64] sm:$0xf]
      %v2749 = vld [vmem:[#allocation2 + $0x68] sm:$0xf]
      %v2750 = vld [vmem:[#allocation2 + $0x6c] sm:$0xf]
      %v2751 = vld [vmem:[#allocation2 + $0x70] sm:$0xf]
      %v2752 = vld [vmem:[#allocation2 + $0x74] sm:$0xf]
      %v2753 = vld [vmem:[#allocation2 + $0x78] sm:$0xf]
      %v2754 = vld [vmem:[#allocation2 + $0x7c] sm:$0xf]
      %v2755 = vld [vmem:[#allocation2 + $0x80] sm:$0xf]
      %v2756 = vld [vmem:[#allocation2 + $0x84] sm:$0xf]
      %v2757 = vld [vmem:[#allocation2 + $0x88] sm:$0xf]
      %v2758 = vld [vmem:[#allocation2 + $0x8c] sm:$0xf]
      %v2759 = vld [vmem:[#allocation2 + $0x90] sm:$0xf]
      %v2760 = vld [vmem:[#allocation2 + $0x94] sm:$0xf]
      %v2761 = vld [vmem:[#allocation2 + $0x98] sm:$0xf]
      %v2762 = vld [vmem:[#allocation2 + $0x9c] sm:$0xf]
      %v2763 = vld [vmem:[#allocation2 + $0xa0] sm:$0xf]
      %v2764 = vld [vmem:[#allocation2 + $0xa4] sm:$0xf]
      %v2765 = vld [vmem:[#allocation2 + $0xa8] sm:$0xf]
      %v2766 = vld [vmem:[#allocation2 + $0xac] sm:$0xf]
      %v2767 = vld [vmem:[%s4 + $0xc0] sm:$0xf]
      %v2768 = vld [vmem:[%s4 + $0xc4] sm:$0xf]
      %v2769 = vld [vmem:[%s4 + $0xc8] sm:$0xf]
      %v2770 = vld [vmem:[%s4 + $0xcc] sm:$0xf]
      %v2771 = vld [vmem:[%s4 + $0xd0] sm:$0xf]
      %v2772 = vld [vmem:[%s4 + $0xd4] sm:$0xf]
      %v2773 = vld [vmem:[%s4 + $0xd8] sm:$0xf]
      %v2774 = vld [vmem:[%s4 + $0xdc] sm:$0xf]
      %v2775 = vld [vmem:[%s4 + $0xe0] sm:$0xf]
      %v2776 = vld [vmem:[%s4 + $0xe4] sm:$0xf]
      %v2777 = vld [vmem:[%s4 + $0xe8] sm:$0xf]
      %v2778 = vld [vmem:[%s4 + $0xec] sm:$0xf]
      %v2779 = vld [vmem:[%s4 + $0xf0] sm:$0xf]
      %v2780 = vld [vmem:[%s4 + $0xf4] sm:$0xf]
      %v2781 = vld [vmem:[%s4 + $0xf8] sm:$0xf]
      %v2782 = vld [vmem:[%s4 + $0xfc] sm:$0xf]
      %v2825 = vunpack.c.l.b16 %v2725
      %v2826 = vunpack.c.l.b16 %v2726
      %v2827 = vunpack.c.l.b16 %v2727
      %v2828 = vunpack.c.l.b16 %v2728
      %v2829 = vunpack.c.l.b16 %v2729
      %v2830 = vunpack.c.l.b16 %v2730
      %v2831 = vunpack.c.l.b16 %v2731
      %v2832 = vunpack.c.l.b16 %v2732
      %v2833 = vunpack.c.l.b16 %v2733
      %v2834 = vunpack.c.l.b16 %v2734
      %v2835 = vunpack.c.l.b16 %v2735
      %v2836 = vunpack.c.l.b16 %v2736
      %v2837 = vunpack.c.l.b16 %v2737
      %v2838 = vunpack.c.l.b16 %v2738
      %v2839 = vunpack.c.l.b16 %v2739
      %v2840 = vunpack.c.l.b16 %v2740
      %v2841 = vunpack.c.l.b16 %v2741
      %v2842 = vunpack.c.l.b16 %v2742
      %v2843 = vunpack.c.l.b16 %v2743
      %v2844 = vunpack.c.l.b16 %v2744
      %v2845 = vunpack.c.l.b16 %v2745
      %v2846 = vunpack.c.l.b16 %v2746
      %v2847 = vunpack.c.l.b16 %v2747
      %v2848 = vunpack.c.l.b16 %v2748
      %v2849 = vunpack.c.l.b16 %v2749
      %v2850 = vunpack.c.l.b16 %v2750
      %v2851 = vunpack.c.l.b16 %v2751
      %v2852 = vunpack.c.l.b16 %v2752
      %v2853 = vunpack.c.l.b16 %v2753
      %v2854 = vunpack.c.l.b16 %v2754
      %v2855 = vunpack.c.l.b16 %v2755
      %v2856 = vunpack.c.l.b16 %v2756
      %v2857 = vunpack.c.l.b16 %v2757
      %v2858 = vunpack.c.l.b16 %v2758
      %v2859 = vunpack.c.l.b16 %v2759
      %v2860 = vunpack.c.l.b16 %v2760
      %v2861 = vunpack.c.l.b16 %v2761
      %v2862 = vunpack.c.l.b16 %v2762
      %v2863 = vunpack.c.l.b16 %v2763
      %v2864 = vunpack.c.l.b16 %v2764
      %v2865 = vunpack.c.l.b16 %v2765
      %v2866 = vunpack.c.l.b16 %v2766
      %v2867 = vpack.c.b16 %v2826, %v2825
      %v2868 = vpack.c.b16 %v2828, %v2827
      %v2869 = vpack.c.b16 %v2830, %v2829
      %v2870 = vpack.c.b16 %v2832, %v2831
      %v2871 = vpack.c.b16 %v2834, %v2833
      %v2872 = vpack.c.b16 %v2836, %v2835
      %v2873 = vpack.c.b16 %v2838, %v2837
      %v2874 = vpack.c.b16 %v2840, %v2839
      %v2875 = vpack.c.b16 %v2842, %v2841
      %v2876 = vpack.c.b16 %v2844, %v2843
      %v2877 = vpack.c.b16 %v2846, %v2845
      %v2878 = vpack.c.b16 %v2848, %v2847
      %v2879 = vpack.c.b16 %v2850, %v2849
      %v2880 = vpack.c.b16 %v2852, %v2851
      %v2881 = vpack.c.b16 %v2854, %v2853
      %v2882 = vpack.c.b16 %v2856, %v2855
      %v2883 = vpack.c.b16 %v2858, %v2857
      %v2884 = vpack.c.b16 %v2860, %v2859
      %v2885 = vpack.c.b16 %v2862, %v2861
      %v2886 = vpack.c.b16 %v2864, %v2863
      %v2887 = vpack.c.b16 %v2866, %v2865
      %v2889 = vshrl.u32 %v2867, 16
      %v2891 = vrot.slane %v2889, 3
      %v2892 = vshll.u32 %v2867, 16
      %v2894 = vrot.slane %v2892, 4
      %v2895 = vor.u32 %v2891, %v2894
      %v2897 = vshrl.u32 %v2868, 16
      %v2899 = vrot.slane %v2897, 3
      %v2900 = vshll.u32 %v2868, 16
      %v2902 = vrot.slane %v2900, 4
      %v2903 = vor.u32 %v2899, %v2902
      %v2904 = vsel %vm2321, %v2895, %v2903
      %v2906 = vshrl.u32 %v2869, 16
      %v2908 = vrot.slane %v2906, 3
      %v2909 = vshll.u32 %v2869, 16
      %v2911 = vrot.slane %v2909, 4
      %v2912 = vor.u32 %v2908, %v2911
      %v2913 = vsel %vm2321, %v2903, %v2912
      %v2915 = vshrl.u32 %v2870, 16
      %v2917 = vrot.slane %v2915, 3
      %v2918 = vshll.u32 %v2870, 16
      %v2920 = vrot.slane %v2918, 4
      %v2921 = vor.u32 %v2917, %v2920
      %v2922 = vsel %vm2321, %v2912, %v2921
      %v2924 = vshrl.u32 %v2871, 16
      %v2926 = vrot.slane %v2924, 3
      %v2927 = vshll.u32 %v2871, 16
      %v2929 = vrot.slane %v2927, 4
      %v2930 = vor.u32 %v2926, %v2929
      %v2931 = vsel %vm2321, %v2921, %v2930
      %v2933 = vshrl.u32 %v2872, 16
      %v2935 = vrot.slane %v2933, 3
      %v2936 = vshll.u32 %v2872, 16
      %v2938 = vrot.slane %v2936, 4
      %v2939 = vor.u32 %v2935, %v2938
      %v2940 = vsel %vm2321, %v2930, %v2939
      %v2942 = vshrl.u32 %v2873, 16
      %v2944 = vrot.slane %v2942, 3
      %v2945 = vshll.u32 %v2873, 16
      %v2947 = vrot.slane %v2945, 4
      %v2948 = vor.u32 %v2944, %v2947
      %v2949 = vsel %vm2321, %v2939, %v2948
      %v2951 = vshrl.u32 %v2874, 16
      %v2953 = vrot.slane %v2951, 3
      %v2954 = vshll.u32 %v2874, 16
      %v2956 = vrot.slane %v2954, 4
      %v2957 = vor.u32 %v2953, %v2956
      %v2958 = vsel %vm2321, %v2948, %v2957
      %v2960 = vshrl.u32 %v2875, 16
      %v2962 = vrot.slane %v2960, 3
      %v2963 = vshll.u32 %v2875, 16
      %v2965 = vrot.slane %v2963, 4
      %v2966 = vor.u32 %v2962, %v2965
      %v2967 = vsel %vm2321, %v2957, %v2966
      %v2969 = vshrl.u32 %v2876, 16
      %v2971 = vrot.slane %v2969, 3
      %v2972 = vshll.u32 %v2876, 16
      %v2974 = vrot.slane %v2972, 4
      %v2975 = vor.u32 %v2971, %v2974
      %v2976 = vsel %vm2321, %v2966, %v2975
      %v2978 = vshrl.u32 %v2877, 16
      %v2980 = vrot.slane %v2978, 3
      %v2981 = vshll.u32 %v2877, 16
      %v2983 = vrot.slane %v2981, 4
      %v2984 = vor.u32 %v2980, %v2983
      %v2985 = vsel %vm2321, %v2975, %v2984
      %v2987 = vshrl.u32 %v2878, 16
      %v2989 = vrot.slane %v2987, 3
      %v2990 = vshll.u32 %v2878, 16
      %v2992 = vrot.slane %v2990, 4
      %v2993 = vor.u32 %v2989, %v2992
      %v2994 = vsel %vm2321, %v2984, %v2993
      %v2996 = vshrl.u32 %v2879, 16
      %v2998 = vrot.slane %v2996, 3
      %v2999 = vshll.u32 %v2879, 16
      %v3001 = vrot.slane %v2999, 4
      %v3002 = vor.u32 %v2998, %v3001
      %v3003 = vsel %vm2321, %v2993, %v3002
      %v3005 = vshrl.u32 %v2880, 16
      %v3007 = vrot.slane %v3005, 3
      %v3008 = vshll.u32 %v2880, 16
      %v3010 = vrot.slane %v3008, 4
      %v3011 = vor.u32 %v3007, %v3010
      %v3012 = vsel %vm2321, %v3002, %v3011
      %v3014 = vshrl.u32 %v2881, 16
      %v3016 = vrot.slane %v3014, 3
      %v3017 = vshll.u32 %v2881, 16
      %v3019 = vrot.slane %v3017, 4
      %v3020 = vor.u32 %v3016, %v3019
      %v3021 = vsel %vm2321, %v3011, %v3020
      %v3023 = vshrl.u32 %v2882, 16
      %v3025 = vrot.slane %v3023, 3
      %v3026 = vshll.u32 %v2882, 16
      %v3028 = vrot.slane %v3026, 4
      %v3029 = vor.u32 %v3025, %v3028
      %v3030 = vsel %vm2321, %v3020, %v3029
      %v3032 = vshrl.u32 %v2883, 16
      %v3034 = vrot.slane %v3032, 3
      %v3035 = vshll.u32 %v2883, 16
      %v3037 = vrot.slane %v3035, 4
      %v3038 = vor.u32 %v3034, %v3037
      %v3039 = vsel %vm2321, %v3029, %v3038
      %v3041 = vshrl.u32 %v2884, 16
      %v3043 = vrot.slane %v3041, 3
      %v3044 = vshll.u32 %v2884, 16
      %v3046 = vrot.slane %v3044, 4
      %v3047 = vor.u32 %v3043, %v3046
      %v3048 = vsel %vm2321, %v3038, %v3047
      %v3050 = vshrl.u32 %v2885, 16
      %v3052 = vrot.slane %v3050, 3
      %v3053 = vshll.u32 %v2885, 16
      %v3055 = vrot.slane %v3053, 4
      %v3056 = vor.u32 %v3052, %v3055
      %v3057 = vsel %vm2321, %v3047, %v3056
      %v3059 = vshrl.u32 %v2886, 16
      %v3061 = vrot.slane %v3059, 3
      %v3062 = vshll.u32 %v2886, 16
      %v3064 = vrot.slane %v3062, 4
      %v3065 = vor.u32 %v3061, %v3064
      %v3066 = vsel %vm2321, %v3056, %v3065
      %v3068 = vshrl.u32 %v2887, 16
      %v3070 = vrot.slane %v3068, 3
      %v3071 = vshll.u32 %v2887, 16
      %v3073 = vrot.slane %v3071, 4
      %v3074 = vor.u32 %v3070, %v3073
      %v3075 = vsel %vm2321, %v3065, %v3074
      %v3113 = vunpack.c.l.b16 %v2767
      %v3114 = vunpack.c.l.b16 %v2768
      %v3115 = vunpack.c.l.b16 %v2769
      %v3116 = vunpack.c.l.b16 %v2770
      %v3117 = vunpack.c.l.b16 %v2771
      %v3118 = vunpack.c.l.b16 %v2772
      %v3119 = vunpack.c.l.b16 %v2773
      %v3120 = vunpack.c.l.b16 %v2774
      %v3121 = vunpack.c.l.b16 %v2775
      %v3122 = vunpack.c.l.b16 %v2776
      %v3123 = vunpack.c.l.b16 %v2777
      %v3124 = vunpack.c.l.b16 %v2778
      %v3125 = vunpack.c.l.b16 %v2779
      %v3126 = vunpack.c.l.b16 %v2780
      %v3127 = vunpack.c.l.b16 %v2781
      %v3128 = vunpack.c.l.b16 %v2782
      %v3129 = vpack.c.b16 %v3114, %v3113
      %v3130 = vpack.c.b16 %v3116, %v3115
      %v3131 = vpack.c.b16 %v3118, %v3117
      %v3132 = vpack.c.b16 %v3120, %v3119
      %v3133 = vpack.c.b16 %v3122, %v3121
      %v3134 = vpack.c.b16 %v3124, %v3123
      %v3135 = vpack.c.b16 %v3126, %v3125
      %v3136 = vpack.c.b16 %v3128, %v3127
      %3145 = vmatprep.subr.bf16.mxu0 0
      %3146 = vmatpush1.bf16.msra.mxu0 %v3136
      %3147 = vmatprep.subr.bf16.mxu0 0
      %3148 = vmatpush1.bf16.msra.mxu0 %v3135
      %3149 = vmatprep.subr.bf16.mxu0 0
      %3150 = vmatpush1.bf16.msra.mxu0 %v3134
      %3151 = vmatprep.subr.bf16.mxu0 0
      %3152 = vmatpush1.bf16.msra.mxu0 %v3133
      %3153 = vmatprep.subr.bf16.mxu0 0
      %3154 = vmatpush1.bf16.msra.mxu0 %v3132
      %3155 = vmatprep.subr.bf16.mxu0 0
      %3156 = vmatpush1.bf16.msra.mxu0 %v3131
      %3157 = vmatprep.subr.bf16.mxu0 0
      %3158 = vmatpush1.bf16.msra.mxu0 %v3130
      %3159 = vmatprep.subr.bf16.mxu0 0
      %3160 = vmatpush1.bf16.msra.mxu0 %v3129
      %3161 = vmatprep.subr.bf16.mxu0 0
      %3162 = vmatpush2.bf16.msra.mxu0 0
      %3163 = vmatprep.subr.bf16.mxu0 0
      %3164 = vmatpush2.bf16.msra.mxu0 0
      %3165 = vmatprep.subr.bf16.mxu0 0
      %3166 = vmatpush2.bf16.msra.mxu0 0
      %3167 = vmatprep.subr.bf16.mxu0 0
      %3168 = vmatpush2.bf16.msra.mxu0 0
      %3169 = vmatprep.subr.bf16.mxu0 0
      %3170 = vmatpush2.bf16.msra.mxu0 0
      %3171 = vmatprep.subr.bf16.mxu0 0
      %3172 = vmatpush2.bf16.msra.mxu0 0
      %3173 = vmatprep.subr.bf16.mxu0 0
      %3174 = vmatpush2.bf16.msra.mxu0 0
      %3175 = vmatprep.subr.bf16.mxu0 0
      %3176 = vmatpush2.bf16.msra.mxu0 0
      %3177 = vmatprep.mubr.bf16.mxu0 0
      %3178 = vmatmul.mubr.bf16.gmra.mxu0 %v2904
      %v3179 = vpop.f32.mrf.mxu0
      %v3180 = vadd.f32 0.0, %v3179
      %v3181 = vpop.f32.mrf.mxu0
      %v3182 = vpop.f32.mrf.mxu0
      %v3183 = vadd.f32 0.0, %v3182
      %v3184 = vpop.f32.mrf.mxu0
      %3185 = vmatprep.mubr.bf16.mxu0 0
      %3186 = vmatmul.mubr.bf16.gmra.mxu0 %v2913
      %v3187 = vpop.f32.mrf.mxu0
      %v3188 = vadd.f32 0.0, %v3187
      %v3189 = vpop.f32.mrf.mxu0
      %v3190 = vpop.f32.mrf.mxu0
      %v3191 = vadd.f32 0.0, %v3190
      %v3192 = vpop.f32.mrf.mxu0
      %3193 = vmatprep.mubr.bf16.mxu0 0
      %3194 = vmatmul.mubr.bf16.gmra.mxu0 %v2922
      %v3195 = vpop.f32.mrf.mxu0
      %v3196 = vadd.f32 0.0, %v3195
      %v3197 = vpop.f32.mrf.mxu0
      %v3198 = vpop.f32.mrf.mxu0
      %v3199 = vadd.f32 0.0, %v3198
      %v3200 = vpop.f32.mrf.mxu0
      %3201 = vmatprep.mubr.bf16.mxu0 0
      %3202 = vmatmul.mubr.bf16.gmra.mxu0 %v2931
      %v3203 = vpop.f32.mrf.mxu0
      %v3204 = vadd.f32 0.0, %v3203
      %v3205 = vpop.f32.mrf.mxu0
      %v3206 = vpop.f32.mrf.mxu0
      %v3207 = vadd.f32 0.0, %v3206
      %v3208 = vpop.f32.mrf.mxu0
      %3209 = vmatprep.mubr.bf16.mxu0 0
      %3210 = vmatmul.mubr.bf16.gmra.mxu0 %v2940
      %v3211 = vpop.f32.mrf.mxu0
      %v3212 = vadd.f32 0.0, %v3211
      %v3213 = vpop.f32.mrf.mxu0
      %v3214 = vpop.f32.mrf.mxu0
      %v3215 = vadd.f32 0.0, %v3214
      %v3216 = vpop.f32.mrf.mxu0
      %3217 = vmatprep.mubr.bf16.mxu0 0
      %3218 = vmatmul.mubr.bf16.gmra.mxu0 %v2949
      %v3219 = vpop.f32.mrf.mxu0
      %v3220 = vadd.f32 0.0, %v3219
      %v3221 = vpop.f32.mrf.mxu0
      %v3222 = vpop.f32.mrf.mxu0
      %v3223 = vadd.f32 0.0, %v3222
      %v3224 = vpop.f32.mrf.mxu0
      %3225 = vmatprep.mubr.bf16.mxu0 0
      %3226 = vmatmul.mubr.bf16.gmra.mxu0 %v2958
      %v3227 = vpop.f32.mrf.mxu0
      %v3228 = vadd.f32 0.0, %v3227
      %v3229 = vpop.f32.mrf.mxu0
      %v3230 = vpop.f32.mrf.mxu0
      %v3231 = vadd.f32 0.0, %v3230
      %v3232 = vpop.f32.mrf.mxu0
      %3233 = vmatprep.mubr.bf16.mxu0 0
      %3234 = vmatmul.mubr.bf16.gmra.mxu0 %v2967
      %v3235 = vpop.f32.mrf.mxu0
      %v3236 = vadd.f32 0.0, %v3235
      %v3237 = vpop.f32.mrf.mxu0
      %v3238 = vpop.f32.mrf.mxu0
      %v3239 = vadd.f32 0.0, %v3238
      %v3240 = vpop.f32.mrf.mxu0
      %3241 = vmatprep.mubr.bf16.mxu0 0
      %3242 = vmatmul.mubr.bf16.gmra.mxu0 %v2976
      %v3243 = vpop.f32.mrf.mxu0
      %v3244 = vadd.f32 0.0, %v3243
      %v3245 = vpop.f32.mrf.mxu0
      %v3246 = vpop.f32.mrf.mxu0
      %v3247 = vadd.f32 0.0, %v3246
      %v3248 = vpop.f32.mrf.mxu0
      %3249 = vmatprep.mubr.bf16.mxu0 0
      %3250 = vmatmul.mubr.bf16.gmra.mxu0 %v2985
      %v3251 = vpop.f32.mrf.mxu0
      %v3252 = vadd.f32 0.0, %v3251
      %v3253 = vpop.f32.mrf.mxu0
      %v3254 = vpop.f32.mrf.mxu0
      %v3255 = vadd.f32 0.0, %v3254
      %v3256 = vpop.f32.mrf.mxu0
      %3257 = vmatprep.mubr.bf16.mxu0 0
      %3258 = vmatmul.mubr.bf16.gmra.mxu0 %v2994
      %v3259 = vpop.f32.mrf.mxu0
      %v3260 = vadd.f32 0.0, %v3259
      %v3261 = vpop.f32.mrf.mxu0
      %v3262 = vpop.f32.mrf.mxu0
      %v3263 = vadd.f32 0.0, %v3262
      %v3264 = vpop.f32.mrf.mxu0
      %3265 = vmatprep.mubr.bf16.mxu0 0
      %3266 = vmatmul.mubr.bf16.gmra.mxu0 %v3003
      %v3267 = vpop.f32.mrf.mxu0
      %v3268 = vadd.f32 0.0, %v3267
      %v3269 = vpop.f32.mrf.mxu0
      %v3270 = vpop.f32.mrf.mxu0
      %v3271 = vadd.f32 0.0, %v3270
      %v3272 = vpop.f32.mrf.mxu0
      %3273 = vmatprep.mubr.bf16.mxu0 0
      %3274 = vmatmul.mubr.bf16.gmra.mxu0 %v3012
      %v3275 = vpop.f32.mrf.mxu0
      %v3276 = vadd.f32 0.0, %v3275
      %v3277 = vpop.f32.mrf.mxu0
      %v3278 = vpop.f32.mrf.mxu0
      %v3279 = vadd.f32 0.0, %v3278
      %v3280 = vpop.f32.mrf.mxu0
      %3281 = vmatprep.mubr.bf16.mxu0 0
      %3282 = vmatmul.mubr.bf16.gmra.mxu0 %v3021
      %v3283 = vpop.f32.mrf.mxu0
      %v3284 = vadd.f32 0.0, %v3283
      %v3285 = vpop.f32.mrf.mxu0
      %v3286 = vpop.f32.mrf.mxu0
      %v3287 = vadd.f32 0.0, %v3286
      %v3288 = vpop.f32.mrf.mxu0
      %3289 = vmatprep.mubr.bf16.mxu0 0
      %3290 = vmatmul.mubr.bf16.gmra.mxu0 %v3030
      %v3291 = vpop.f32.mrf.mxu0
      %v3292 = vadd.f32 0.0, %v3291
      %v3293 = vpop.f32.mrf.mxu0
      %v3294 = vpop.f32.mrf.mxu0
      %v3295 = vadd.f32 0.0, %v3294
      %v3296 = vpop.f32.mrf.mxu0
      %3297 = vmatprep.mubr.bf16.mxu0 0
      %3298 = vmatmul.mubr.bf16.gmra.mxu0 %v3039
      %v3299 = vpop.f32.mrf.mxu0
      %v3300 = vadd.f32 0.0, %v3299
      %v3301 = vpop.f32.mrf.mxu0
      %v3302 = vpop.f32.mrf.mxu0
      %v3303 = vadd.f32 0.0, %v3302
      %v3304 = vpop.f32.mrf.mxu0
      %3305 = vmatprep.mubr.bf16.mxu0 0
      %3306 = vmatmul.mubr.bf16.gmra.mxu0 %v3048
      %v3307 = vpop.f32.mrf.mxu0
      %v3308 = vadd.f32 0.0, %v3307
      %v3309 = vpop.f32.mrf.mxu0
      %v3310 = vpop.f32.mrf.mxu0
      %v3311 = vadd.f32 0.0, %v3310
      %v3312 = vpop.f32.mrf.mxu0
      %3313 = vmatprep.mubr.bf16.mxu0 0
      %3314 = vmatmul.mubr.bf16.gmra.mxu0 %v3057
      %v3315 = vpop.f32.mrf.mxu0
      %v3316 = vadd.f32 0.0, %v3315
      %v3317 = vpop.f32.mrf.mxu0
      %v3318 = vpop.f32.mrf.mxu0
      %v3319 = vadd.f32 0.0, %v3318
      %v3320 = vpop.f32.mrf.mxu0
      %3321 = vmatprep.mubr.bf16.mxu0 0
      %3322 = vmatmul.mubr.bf16.gmra.mxu0 %v3066
      %v3323 = vpop.f32.mrf.mxu0
      %v3324 = vadd.f32 0.0, %v3323
      %v3325 = vpop.f32.mrf.mxu0
      %v3326 = vpop.f32.mrf.mxu0
      %v3327 = vadd.f32 0.0, %v3326
      %v3328 = vpop.f32.mrf.mxu0
      %3329 = vmatprep.mubr.bf16.mxu0 0
      %3330 = vmatmul.mubr.bf16.gmra.mxu0 %v3075
      %v3331 = vpop.f32.mrf.mxu0
      %v3332 = vadd.f32 0.0, %v3331
      %v3333 = vpop.f32.mrf.mxu0
      %v3334 = vpop.f32.mrf.mxu0
      %v3335 = vadd.f32 0.0, %v3334
      %v3336 = vpop.f32.mrf.mxu0
      %3337 = vmatprep.mubr.bf16.mxu0 0
      %3338 = vmatmul.mubr.bf16.gmra.mxu0 %v3074
      %v3339 = vpop.f32.mrf.mxu0
      %v3340 = vadd.f32 0.0, %v3339
      %v3341 = vpop.f32.mrf.mxu0
      %v3342 = vpop.f32.mrf.mxu0
      %v3343 = vpop.f32.mrf.mxu0
      %3344 = vdwg.mxu0
      %v3345 = vadd.f32 %v2684, %v3180
      %v3346 = vadd.f32 %v2685, %v3183
      %v3347 = vadd.f32 %v2686, %v3188
      %v3348 = vadd.f32 %v2687, %v3191
      %v3349 = vadd.f32 %v2688, %v3196
      %v3350 = vadd.f32 %v2689, %v3199
      %v3351 = vadd.f32 %v2690, %v3204
      %v3352 = vadd.f32 %v2691, %v3207
      %v3353 = vadd.f32 %v2692, %v3212
      %v3354 = vadd.f32 %v2693, %v3215
      %v3355 = vadd.f32 %v2694, %v3220
      %v3356 = vadd.f32 %v2695, %v3223
      %v3357 = vadd.f32 %v2696, %v3228
      %v3358 = vadd.f32 %v2697, %v3231
      %v3359 = vadd.f32 %v2698, %v3236
      %v3360 = vadd.f32 %v2699, %v3239
      %v3361 = vadd.f32 %v2700, %v3244
      %v3362 = vadd.f32 %v2701, %v3247
      %v3363 = vadd.f32 %v2702, %v3252
      %v3364 = vadd.f32 %v2703, %v3255
      %v3365 = vadd.f32 %v2704, %v3260
      %v3366 = vadd.f32 %v2705, %v3263
      %v3367 = vadd.f32 %v2706, %v3268
      %v3368 = vadd.f32 %v2707, %v3271
      %v3369 = vadd.f32 %v2708, %v3276
      %v3370 = vadd.f32 %v2709, %v3279
      %v3371 = vadd.f32 %v2710, %v3284
      %v3372 = vadd.f32 %v2711, %v3287
      %v3373 = vadd.f32 %v2712, %v3292
      %v3374 = vadd.f32 %v2713, %v3295
      %v3375 = vadd.f32 %v2714, %v3300
      %v3376 = vadd.f32 %v2715, %v3303
      %v3377 = vadd.f32 %v2716, %v3308
      %v3378 = vadd.f32 %v2717, %v3311
      %v3379 = vadd.f32 %v2718, %v3316
      %v3380 = vadd.f32 %v2719, %v3319
      %v3381 = vadd.f32 %v2720, %v3324
      %v3382 = vadd.f32 %v2721, %v3327
      %v3383 = vadd.f32 %v2722, %v3332
      %v3384 = vadd.f32 %v2723, %v3335
      %v3385 = vadd.f32 %v2724, %v3340
      %v3386 = vld [vmem:[%s4 + $0x100] sm:$0xf]
      %v3387 = vld [vmem:[%s4 + $0x104] sm:$0xf]
      %v3388 = vld [vmem:[%s4 + $0x108] sm:$0xf]
      %v3389 = vld [vmem:[%s4 + $0x10c] sm:$0xf]
      %v3390 = vld [vmem:[%s4 + $0x110] sm:$0xf]
      %v3391 = vld [vmem:[%s4 + $0x114] sm:$0xf]
      %v3392 = vld [vmem:[%s4 + $0x118] sm:$0xf]
      %v3393 = vld [vmem:[%s4 + $0x11c] sm:$0xf]
      %v3394 = vld [vmem:[%s4 + $0x120] sm:$0xf]
      %v3395 = vld [vmem:[%s4 + $0x124] sm:$0xf]
      %v3396 = vld [vmem:[%s4 + $0x128] sm:$0xf]
      %v3397 = vld [vmem:[%s4 + $0x12c] sm:$0xf]
      %v3398 = vld [vmem:[%s4 + $0x130] sm:$0xf]
      %v3399 = vld [vmem:[%s4 + $0x134] sm:$0xf]
      %v3400 = vld [vmem:[%s4 + $0x138] sm:$0xf]
      %v3401 = vld [vmem:[%s4 + $0x13c] sm:$0xf]
      %v3402 = vpack.c.b16 %v2827, %v2826
      %v3403 = vpack.c.b16 %v2829, %v2828
      %v3404 = vpack.c.b16 %v2831, %v2830
      %v3405 = vpack.c.b16 %v2833, %v2832
      %v3406 = vpack.c.b16 %v2835, %v2834
      %v3407 = vpack.c.b16 %v2837, %v2836
      %v3408 = vpack.c.b16 %v2839, %v2838
      %v3409 = vpack.c.b16 %v2841, %v2840
      %v3410 = vpack.c.b16 %v2843, %v2842
      %v3411 = vpack.c.b16 %v2845, %v2844
      %v3412 = vpack.c.b16 %v2847, %v2846
      %v3413 = vpack.c.b16 %v2849, %v2848
      %v3414 = vpack.c.b16 %v2851, %v2850
      %v3415 = vpack.c.b16 %v2853, %v2852
      %v3416 = vpack.c.b16 %v2855, %v2854
      %v3417 = vpack.c.b16 %v2857, %v2856
      %v3418 = vpack.c.b16 %v2859, %v2858
      %v3419 = vpack.c.b16 %v2861, %v2860
      %v3420 = vpack.c.b16 %v2863, %v2862
      %v3421 = vpack.c.b16 %v2865, %v2864
      %v3422 = vpack.c.b16 %v2866, %v2866
      %v3460 = vunpack.c.l.b16 %v3386
      %v3461 = vunpack.c.l.b16 %v3387
      %v3462 = vunpack.c.l.b16 %v3388
      %v3463 = vunpack.c.l.b16 %v3389
      %v3464 = vunpack.c.l.b16 %v3390
      %v3465 = vunpack.c.l.b16 %v3391
      %v3466 = vunpack.c.l.b16 %v3392
      %v3467 = vunpack.c.l.b16 %v3393
      %v3468 = vunpack.c.l.b16 %v3394
      %v3469 = vunpack.c.l.b16 %v3395
      %v3470 = vunpack.c.l.b16 %v3396
      %v3471 = vunpack.c.l.b16 %v3397
      %v3472 = vunpack.c.l.b16 %v3398
      %v3473 = vunpack.c.l.b16 %v3399
      %v3474 = vunpack.c.l.b16 %v3400
      %v3475 = vunpack.c.l.b16 %v3401
      %v3476 = vpack.c.b16 %v3461, %v3460
      %v3477 = vpack.c.b16 %v3463, %v3462
      %v3478 = vpack.c.b16 %v3465, %v3464
      %v3479 = vpack.c.b16 %v3467, %v3466
      %v3480 = vpack.c.b16 %v3469, %v3468
      %v3481 = vpack.c.b16 %v3471, %v3470
      %v3482 = vpack.c.b16 %v3473, %v3472
      %v3483 = vpack.c.b16 %v3475, %v3474
      %3492 = vmatprep.subr.bf16.mxu0 0
      %3493 = vmatpush1.bf16.msra.mxu0 %v3483
      %3494 = vmatprep.subr.bf16.mxu0 0
      %3495 = vmatpush1.bf16.msra.mxu0 %v3482
      %3496 = vmatprep.subr.bf16.mxu0 0
      %3497 = vmatpush1.bf16.msra.mxu0 %v3481
      %3498 = vmatprep.subr.bf16.mxu0 0
      %3499 = vmatpush1.bf16.msra.mxu0 %v3480
      %3500 = vmatprep.subr.bf16.mxu0 0
      %3501 = vmatpush1.bf16.msra.mxu0 %v3479
      %3502 = vmatprep.subr.bf16.mxu0 0
      %3503 = vmatpush1.bf16.msra.mxu0 %v3478
      %3504 = vmatprep.subr.bf16.mxu0 0
      %3505 = vmatpush1.bf16.msra.mxu0 %v3477
      %3506 = vmatprep.subr.bf16.mxu0 0
      %3507 = vmatpush1.bf16.msra.mxu0 %v3476
      %3508 = vmatprep.subr.bf16.mxu0 0
      %3509 = vmatpush2.bf16.msra.mxu0 0
      %3510 = vmatprep.subr.bf16.mxu0 0
      %3511 = vmatpush2.bf16.msra.mxu0 0
      %3512 = vmatprep.subr.bf16.mxu0 0
      %3513 = vmatpush2.bf16.msra.mxu0 0
      %3514 = vmatprep.subr.bf16.mxu0 0
      %3515 = vmatpush2.bf16.msra.mxu0 0
      %3516 = vmatprep.subr.bf16.mxu0 0
      %3517 = vmatpush2.bf16.msra.mxu0 0
      %3518 = vmatprep.subr.bf16.mxu0 0
      %3519 = vmatpush2.bf16.msra.mxu0 0
      %3520 = vmatprep.subr.bf16.mxu0 0
      %3521 = vmatpush2.bf16.msra.mxu0 0
      %3522 = vmatprep.subr.bf16.mxu0 0
      %3523 = vmatpush2.bf16.msra.mxu0 0
      %3524 = vmatprep.mubr.bf16.mxu0 0
      %3525 = vmatmul.mubr.bf16.gmra.mxu0 %v3402
      %v3526 = vpop.f32.mrf.mxu0
      %v3527 = vadd.f32 0.0, %v3526
      %v3528 = vpop.f32.mrf.mxu0
      %v3529 = vpop.f32.mrf.mxu0
      %v3530 = vadd.f32 0.0, %v3529
      %v3531 = vpop.f32.mrf.mxu0
      %3532 = vmatprep.mubr.bf16.mxu0 0
      %3533 = vmatmul.mubr.bf16.gmra.mxu0 %v3403
      %v3534 = vpop.f32.mrf.mxu0
      %v3535 = vadd.f32 0.0, %v3534
      %v3536 = vpop.f32.mrf.mxu0
      %v3537 = vpop.f32.mrf.mxu0
      %v3538 = vadd.f32 0.0, %v3537
      %v3539 = vpop.f32.mrf.mxu0
      %3540 = vmatprep.mubr.bf16.mxu0 0
      %3541 = vmatmul.mubr.bf16.gmra.mxu0 %v3404
      %v3542 = vpop.f32.mrf.mxu0
      %v3543 = vadd.f32 0.0, %v3542
      %v3544 = vpop.f32.mrf.mxu0
      %v3545 = vpop.f32.mrf.mxu0
      %v3546 = vadd.f32 0.0, %v3545
      %v3547 = vpop.f32.mrf.mxu0
      %3548 = vmatprep.mubr.bf16.mxu0 0
      %3549 = vmatmul.mubr.bf16.gmra.mxu0 %v3405
      %v3550 = vpop.f32.mrf.mxu0
      %v3551 = vadd.f32 0.0, %v3550
      %v3552 = vpop.f32.mrf.mxu0
      %v3553 = vpop.f32.mrf.mxu0
      %v3554 = vadd.f32 0.0, %v3553
      %v3555 = vpop.f32.mrf.mxu0
      %3556 = vmatprep.mubr.bf16.mxu0 0
      %3557 = vmatmul.mubr.bf16.gmra.mxu0 %v3406
      %v3558 = vpop.f32.mrf.mxu0
      %v3559 = vadd.f32 0.0, %v3558
      %v3560 = vpop.f32.mrf.mxu0
      %v3561 = vpop.f32.mrf.mxu0
      %v3562 = vadd.f32 0.0, %v3561
      %v3563 = vpop.f32.mrf.mxu0
      %3564 = vmatprep.mubr.bf16.mxu0 0
      %3565 = vmatmul.mubr.bf16.gmra.mxu0 %v3407
      %v3566 = vpop.f32.mrf.mxu0
      %v3567 = vadd.f32 0.0, %v3566
      %v3568 = vpop.f32.mrf.mxu0
      %v3569 = vpop.f32.mrf.mxu0
      %v3570 = vadd.f32 0.0, %v3569
      %v3571 = vpop.f32.mrf.mxu0
      %3572 = vmatprep.mubr.bf16.mxu0 0
      %3573 = vmatmul.mubr.bf16.gmra.mxu0 %v3408
      %v3574 = vpop.f32.mrf.mxu0
      %v3575 = vadd.f32 0.0, %v3574
      %v3576 = vpop.f32.mrf.mxu0
      %v3577 = vpop.f32.mrf.mxu0
      %v3578 = vadd.f32 0.0, %v3577
      %v3579 = vpop.f32.mrf.mxu0
      %3580 = vmatprep.mubr.bf16.mxu0 0
      %3581 = vmatmul.mubr.bf16.gmra.mxu0 %v3409
      %v3582 = vpop.f32.mrf.mxu0
      %v3583 = vadd.f32 0.0, %v3582
      %v3584 = vpop.f32.mrf.mxu0
      %v3585 = vpop.f32.mrf.mxu0
      %v3586 = vadd.f32 0.0, %v3585
      %v3587 = vpop.f32.mrf.mxu0
      %3588 = vmatprep.mubr.bf16.mxu0 0
      %3589 = vmatmul.mubr.bf16.gmra.mxu0 %v3410
      %v3590 = vpop.f32.mrf.mxu0
      %v3591 = vadd.f32 0.0, %v3590
      %v3592 = vpop.f32.mrf.mxu0
      %v3593 = vpop.f32.mrf.mxu0
      %v3594 = vadd.f32 0.0, %v3593
      %v3595 = vpop.f32.mrf.mxu0
      %3596 = vmatprep.mubr.bf16.mxu0 0
      %3597 = vmatmul.mubr.bf16.gmra.mxu0 %v3411
      %v3598 = vpop.f32.mrf.mxu0
      %v3599 = vadd.f32 0.0, %v3598
      %v3600 = vpop.f32.mrf.mxu0
      %v3601 = vpop.f32.mrf.mxu0
      %v3602 = vadd.f32 0.0, %v3601
      %v3603 = vpop.f32.mrf.mxu0
      %3604 = vmatprep.mubr.bf16.mxu0 0
      %3605 = vmatmul.mubr.bf16.gmra.mxu0 %v3412
      %v3606 = vpop.f32.mrf.mxu0
      %v3607 = vadd.f32 0.0, %v3606
      %v3608 = vpop.f32.mrf.mxu0
      %v3609 = vpop.f32.mrf.mxu0
      %v3610 = vadd.f32 0.0, %v3609
      %v3611 = vpop.f32.mrf.mxu0
      %3612 = vmatprep.mubr.bf16.mxu0 0
      %3613 = vmatmul.mubr.bf16.gmra.mxu0 %v3413
      %v3614 = vpop.f32.mrf.mxu0
      %v3615 = vadd.f32 0.0, %v3614
      %v3616 = vpop.f32.mrf.mxu0
      %v3617 = vpop.f32.mrf.mxu0
      %v3618 = vadd.f32 0.0, %v3617
      %v3619 = vpop.f32.mrf.mxu0
      %3620 = vmatprep.mubr.bf16.mxu0 0
      %3621 = vmatmul.mubr.bf16.gmra.mxu0 %v3414
      %v3622 = vpop.f32.mrf.mxu0
      %v3623 = vadd.f32 0.0, %v3622
      %v3624 = vpop.f32.mrf.mxu0
      %v3625 = vpop.f32.mrf.mxu0
      %v3626 = vadd.f32 0.0, %v3625
      %v3627 = vpop.f32.mrf.mxu0
      %3628 = vmatprep.mubr.bf16.mxu0 0
      %3629 = vmatmul.mubr.bf16.gmra.mxu0 %v3415
      %v3630 = vpop.f32.mrf.mxu0
      %v3631 = vadd.f32 0.0, %v3630
      %v3632 = vpop.f32.mrf.mxu0
      %v3633 = vpop.f32.mrf.mxu0
      %v3634 = vadd.f32 0.0, %v3633
      %v3635 = vpop.f32.mrf.mxu0
      %3636 = vmatprep.mubr.bf16.mxu0 0
      %3637 = vmatmul.mubr.bf16.gmra.mxu0 %v3416
      %v3638 = vpop.f32.mrf.mxu0
      %v3639 = vadd.f32 0.0, %v3638
      %v3640 = vpop.f32.mrf.mxu0
      %v3641 = vpop.f32.mrf.mxu0
      %v3642 = vadd.f32 0.0, %v3641
      %v3643 = vpop.f32.mrf.mxu0
      %3644 = vmatprep.mubr.bf16.mxu0 0
      %3645 = vmatmul.mubr.bf16.gmra.mxu0 %v3417
      %v3646 = vpop.f32.mrf.mxu0
      %v3647 = vadd.f32 0.0, %v3646
      %v3648 = vpop.f32.mrf.mxu0
      %v3649 = vpop.f32.mrf.mxu0
      %v3650 = vadd.f32 0.0, %v3649
      %v3651 = vpop.f32.mrf.mxu0
      %3652 = vmatprep.mubr.bf16.mxu0 0
      %3653 = vmatmul.mubr.bf16.gmra.mxu0 %v3418
      %v3654 = vpop.f32.mrf.mxu0
      %v3655 = vadd.f32 0.0, %v3654
      %v3656 = vpop.f32.mrf.mxu0
      %v3657 = vpop.f32.mrf.mxu0
      %v3658 = vadd.f32 0.0, %v3657
      %v3659 = vpop.f32.mrf.mxu0
      %3660 = vmatprep.mubr.bf16.mxu0 0
      %3661 = vmatmul.mubr.bf16.gmra.mxu0 %v3419
      %v3662 = vpop.f32.mrf.mxu0
      %v3663 = vadd.f32 0.0, %v3662
      %v3664 = vpop.f32.mrf.mxu0
      %v3665 = vpop.f32.mrf.mxu0
      %v3666 = vadd.f32 0.0, %v3665
      %v3667 = vpop.f32.mrf.mxu0
      %3668 = vmatprep.mubr.bf16.mxu0 0
      %3669 = vmatmul.mubr.bf16.gmra.mxu0 %v3420
      %v3670 = vpop.f32.mrf.mxu0
      %v3671 = vadd.f32 0.0, %v3670
      %v3672 = vpop.f32.mrf.mxu0
      %v3673 = vpop.f32.mrf.mxu0
      %v3674 = vadd.f32 0.0, %v3673
      %v3675 = vpop.f32.mrf.mxu0
      %3676 = vmatprep.mubr.bf16.mxu0 0
      %3677 = vmatmul.mubr.bf16.gmra.mxu0 %v3421
      %v3678 = vpop.f32.mrf.mxu0
      %v3679 = vadd.f32 0.0, %v3678
      %v3680 = vpop.f32.mrf.mxu0
      %v3681 = vpop.f32.mrf.mxu0
      %v3682 = vadd.f32 0.0, %v3681
      %v3683 = vpop.f32.mrf.mxu0
      %3684 = vmatprep.mubr.bf16.mxu0 0
      %3685 = vmatmul.mubr.bf16.gmra.mxu0 %v3422
      %v3686 = vpop.f32.mrf.mxu0
      %v3687 = vadd.f32 0.0, %v3686
      %v3688 = vpop.f32.mrf.mxu0
      %v3689 = vpop.f32.mrf.mxu0
      %v3690 = vpop.f32.mrf.mxu0
      %3691 = vdwg.mxu0
      %v3692 = vadd.f32 %v3345, %v3527
      %v3693 = vadd.f32 %v3346, %v3530
      %v3694 = vadd.f32 %v3347, %v3535
      %v3695 = vadd.f32 %v3348, %v3538
      %v3696 = vadd.f32 %v3349, %v3543
      %v3697 = vadd.f32 %v3350, %v3546
      %v3698 = vadd.f32 %v3351, %v3551
      %v3699 = vadd.f32 %v3352, %v3554
      %v3700 = vadd.f32 %v3353, %v3559
      %v3701 = vadd.f32 %v3354, %v3562
      %v3702 = vadd.f32 %v3355, %v3567
      %v3703 = vadd.f32 %v3356, %v3570
      %v3704 = vadd.f32 %v3357, %v3575
      %v3705 = vadd.f32 %v3358, %v3578
      %v3706 = vadd.f32 %v3359, %v3583
      %v3707 = vadd.f32 %v3360, %v3586
      %v3708 = vadd.f32 %v3361, %v3591
      %v3709 = vadd.f32 %v3362, %v3594
      %v3710 = vadd.f32 %v3363, %v3599
      %v3711 = vadd.f32 %v3364, %v3602
      %v3712 = vadd.f32 %v3365, %v3607
      %v3713 = vadd.f32 %v3366, %v3610
      %v3714 = vadd.f32 %v3367, %v3615
      %v3715 = vadd.f32 %v3368, %v3618
      %v3716 = vadd.f32 %v3369, %v3623
      %v3717 = vadd.f32 %v3370, %v3626
      %v3718 = vadd.f32 %v3371, %v3631
      %v3719 = vadd.f32 %v3372, %v3634
      %v3720 = vadd.f32 %v3373, %v3639
      %v3721 = vadd.f32 %v3374, %v3642
      %v3722 = vadd.f32 %v3375, %v3647
      %v3723 = vadd.f32 %v3376, %v3650
      %v3724 = vadd.f32 %v3377, %v3655
      %v3725 = vadd.f32 %v3378, %v3658
      %v3726 = vadd.f32 %v3379, %v3663
      %v3727 = vadd.f32 %v3380, %v3666
      %v3728 = vadd.f32 %v3381, %v3671
      %v3729 = vadd.f32 %v3382, %v3674
      %v3730 = vadd.f32 %v3383, %v3679
      %v3731 = vadd.f32 %v3384, %v3682
      %v3732 = vadd.f32 %v3385, %v3687
      %v3733 = vld [vmem:[#allocation2 + $0xc] sm:$0xf]
      %v3734 = vld [vmem:[#allocation2 + $0x10] sm:$0xf]
      %v3735 = vld [vmem:[#allocation2 + $0x14] sm:$0xf]
      %v3736 = vld [vmem:[#allocation2 + $0x18] sm:$0xf]
      %v3737 = vld [vmem:[#allocation2 + $0x1c] sm:$0xf]
      %v3738 = vld [vmem:[#allocation2 + $0x20] sm:$0xf]
      %v3739 = vld [vmem:[#allocation2 + $0x24] sm:$0xf]
      %v3740 = vld [vmem:[#allocation2 + $0x28] sm:$0xf]
      %v3741 = vld [vmem:[#allocation2 + $0x2c] sm:$0xf]
      %v3742 = vld [vmem:[#allocation2 + $0x30] sm:$0xf]
      %v3743 = vld [vmem:[#allocation2 + $0x34] sm:$0xf]
      %v3744 = vld [vmem:[#allocation2 + $0x38] sm:$0xf]
      %v3745 = vld [vmem:[#allocation2 + $0x3c] sm:$0xf]
      %v3746 = vld [vmem:[#allocation2 + $0x40] sm:$0xf]
      %v3747 = vld [vmem:[#allocation2 + $0x44] sm:$0xf]
      %v3748 = vld [vmem:[#allocation2 + $0x48] sm:$0xf]
      %v3749 = vld [vmem:[#allocation2 + $0x4c] sm:$0xf]
      %v3750 = vld [vmem:[#allocation2 + $0x50] sm:$0xf]
      %v3751 = vld [vmem:[#allocation2 + $0x54] sm:$0xf]
      %v3752 = vld [vmem:[#allocation2 + $0x58] sm:$0xf]
      %v3753 = vld [vmem:[#allocation2 + $0x5c] sm:$0xf]
      %v3754 = vld [vmem:[#allocation2 + $0x60] sm:$0xf]
      %v3755 = vld [vmem:[#allocation2 + $0x64] sm:$0xf]
      %v3756 = vld [vmem:[#allocation2 + $0x68] sm:$0xf]
      %v3757 = vld [vmem:[#allocation2 + $0x6c] sm:$0xf]
      %v3758 = vld [vmem:[#allocation2 + $0x70] sm:$0xf]
      %v3759 = vld [vmem:[#allocation2 + $0x74] sm:$0xf]
      %v3760 = vld [vmem:[#allocation2 + $0x78] sm:$0xf]
      %v3761 = vld [vmem:[#allocation2 + $0x7c] sm:$0xf]
      %v3762 = vld [vmem:[#allocation2 + $0x80] sm:$0xf]
      %v3763 = vld [vmem:[#allocation2 + $0x84] sm:$0xf]
      %v3764 = vld [vmem:[#allocation2 + $0x88] sm:$0xf]
      %v3765 = vld [vmem:[#allocation2 + $0x8c] sm:$0xf]
      %v3766 = vld [vmem:[#allocation2 + $0x90] sm:$0xf]
      %v3767 = vld [vmem:[#allocation2 + $0x94] sm:$0xf]
      %v3768 = vld [vmem:[#allocation2 + $0x98] sm:$0xf]
      %v3769 = vld [vmem:[#allocation2 + $0x9c] sm:$0xf]
      %v3770 = vld [vmem:[#allocation2 + $0xa0] sm:$0xf]
      %v3771 = vld [vmem:[#allocation2 + $0xa4] sm:$0xf]
      %v3772 = vld [vmem:[#allocation2 + $0xa8] sm:$0xf]
      %v3773 = vld [vmem:[#allocation2 + $0xac] sm:$0xf]
      %v3774 = vld [vmem:[#allocation2 + $0xb0] sm:$0x1]
      %v3775 = vld [vmem:[%s4 + $0x140] sm:$0xf]
      %v3776 = vld [vmem:[%s4 + $0x144] sm:$0xf]
      %v3777 = vld [vmem:[%s4 + $0x148] sm:$0xf]
      %v3778 = vld [vmem:[%s4 + $0x14c] sm:$0xf]
      %v3779 = vld [vmem:[%s4 + $0x150] sm:$0xf]
      %v3780 = vld [vmem:[%s4 + $0x154] sm:$0xf]
      %v3781 = vld [vmem:[%s4 + $0x158] sm:$0xf]
      %v3782 = vld [vmem:[%s4 + $0x15c] sm:$0xf]
      %v3783 = vld [vmem:[%s4 + $0x160] sm:$0xf]
      %v3784 = vld [vmem:[%s4 + $0x164] sm:$0xf]
      %v3785 = vld [vmem:[%s4 + $0x168] sm:$0xf]
      %v3786 = vld [vmem:[%s4 + $0x16c] sm:$0xf]
      %v3787 = vld [vmem:[%s4 + $0x170] sm:$0xf]
      %v3788 = vld [vmem:[%s4 + $0x174] sm:$0xf]
      %v3789 = vld [vmem:[%s4 + $0x178] sm:$0xf]
      %v3790 = vld [vmem:[%s4 + $0x17c] sm:$0xf]
      %v3833 = vunpack.c.l.b16 %v3733
      %v3834 = vunpack.c.l.b16 %v3734
      %v3835 = vunpack.c.l.b16 %v3735
      %v3836 = vunpack.c.l.b16 %v3736
      %v3837 = vunpack.c.l.b16 %v3737
      %v3838 = vunpack.c.l.b16 %v3738
      %v3839 = vunpack.c.l.b16 %v3739
      %v3840 = vunpack.c.l.b16 %v3740
      %v3841 = vunpack.c.l.b16 %v3741
      %v3842 = vunpack.c.l.b16 %v3742
      %v3843 = vunpack.c.l.b16 %v3743
      %v3844 = vunpack.c.l.b16 %v3744
      %v3845 = vunpack.c.l.b16 %v3745
      %v3846 = vunpack.c.l.b16 %v3746
      %v3847 = vunpack.c.l.b16 %v3747
      %v3848 = vunpack.c.l.b16 %v3748
      %v3849 = vunpack.c.l.b16 %v3749
      %v3850 = vunpack.c.l.b16 %v3750
      %v3851 = vunpack.c.l.b16 %v3751
      %v3852 = vunpack.c.l.b16 %v3752
      %v3853 = vunpack.c.l.b16 %v3753
      %v3854 = vunpack.c.l.b16 %v3754
      %v3855 = vunpack.c.l.b16 %v3755
      %v3856 = vunpack.c.l.b16 %v3756
      %v3857 = vunpack.c.l.b16 %v3757
      %v3858 = vunpack.c.l.b16 %v3758
      %v3859 = vunpack.c.l.b16 %v3759
      %v3860 = vunpack.c.l.b16 %v3760
      %v3861 = vunpack.c.l.b16 %v3761
      %v3862 = vunpack.c.l.b16 %v3762
      %v3863 = vunpack.c.l.b16 %v3763
      %v3864 = vunpack.c.l.b16 %v3764
      %v3865 = vunpack.c.l.b16 %v3765
      %v3866 = vunpack.c.l.b16 %v3766
      %v3867 = vunpack.c.l.b16 %v3767
      %v3868 = vunpack.c.l.b16 %v3768
      %v3869 = vunpack.c.l.b16 %v3769
      %v3870 = vunpack.c.l.b16 %v3770
      %v3871 = vunpack.c.l.b16 %v3771
      %v3872 = vunpack.c.l.b16 %v3772
      %v3873 = vunpack.c.l.b16 %v3773
      %v3874 = vunpack.c.l.b16 %v3774
      %v3875 = vpack.c.b16 %v3834, %v3833
      %v3876 = vpack.c.b16 %v3836, %v3835
      %v3877 = vpack.c.b16 %v3838, %v3837
      %v3878 = vpack.c.b16 %v3840, %v3839
      %v3879 = vpack.c.b16 %v3842, %v3841
      %v3880 = vpack.c.b16 %v3844, %v3843
      %v3881 = vpack.c.b16 %v3846, %v3845
      %v3882 = vpack.c.b16 %v3848, %v3847
      %v3883 = vpack.c.b16 %v3850, %v3849
      %v3884 = vpack.c.b16 %v3852, %v3851
      %v3885 = vpack.c.b16 %v3854, %v3853
      %v3886 = vpack.c.b16 %v3856, %v3855
      %v3887 = vpack.c.b16 %v3858, %v3857
      %v3888 = vpack.c.b16 %v3860, %v3859
      %v3889 = vpack.c.b16 %v3862, %v3861
      %v3890 = vpack.c.b16 %v3864, %v3863
      %v3891 = vpack.c.b16 %v3866, %v3865
      %v3892 = vpack.c.b16 %v3868, %v3867
      %v3893 = vpack.c.b16 %v3870, %v3869
      %v3894 = vpack.c.b16 %v3872, %v3871
      %v3895 = vpack.c.b16 %v3874, %v3873
      %vm3896 = vsmask.f32 7424
      %v3898 = vshrl.u32 %v3875, 16
      %v3900 = vshll.u32 %v3875, 16
      %v3902 = vrot.slane %v3900, 1
      %v3903 = vor.u32 %v3898, %v3902
      %v3905 = vshll.u32 %v3876, 16
      %v3907 = vrot.slane %v3905, 1
      %v3908 = vsel %vm3896, %v3903, %v3907
      %v3909 = vshrl.u32 %v3876, 16
      %v3911 = vor.u32 %v3909, %v3907
      %v3913 = vshll.u32 %v3877, 16
      %v3915 = vrot.slane %v3913, 1
      %v3916 = vsel %vm3896, %v3911, %v3915
      %v3917 = vshrl.u32 %v3877, 16
      %v3919 = vor.u32 %v3917, %v3915
      %v3921 = vshll.u32 %v3878, 16
      %v3923 = vrot.slane %v3921, 1
      %v3924 = vsel %vm3896, %v3919, %v3923
      %v3925 = vshrl.u32 %v3878, 16
      %v3927 = vor.u32 %v3925, %v3923
      %v3929 = vshll.u32 %v3879, 16
      %v3931 = vrot.slane %v3929, 1
      %v3932 = vsel %vm3896, %v3927, %v3931
      %v3933 = vshrl.u32 %v3879, 16
      %v3935 = vor.u32 %v3933, %v3931
      %v3937 = vshll.u32 %v3880, 16
      %v3939 = vrot.slane %v3937, 1
      %v3940 = vsel %vm3896, %v3935, %v3939
      %v3941 = vshrl.u32 %v3880, 16
      %v3943 = vor.u32 %v3941, %v3939
      %v3945 = vshll.u32 %v3881, 16
      %v3947 = vrot.slane %v3945, 1
      %v3948 = vsel %vm3896, %v3943, %v3947
      %v3949 = vshrl.u32 %v3881, 16
      %v3951 = vor.u32 %v3949, %v3947
      %v3953 = vshll.u32 %v3882, 16
      %v3955 = vrot.slane %v3953, 1
      %v3956 = vsel %vm3896, %v3951, %v3955
      %v3957 = vshrl.u32 %v3882, 16
      %v3959 = vor.u32 %v3957, %v3955
      %v3961 = vshll.u32 %v3883, 16
      %v3963 = vrot.slane %v3961, 1
      %v3964 = vsel %vm3896, %v3959, %v3963
      %v3965 = vshrl.u32 %v3883, 16
      %v3967 = vor.u32 %v3965, %v3963
      %v3969 = vshll.u32 %v3884, 16
      %v3971 = vrot.slane %v3969, 1
      %v3972 = vsel %vm3896, %v3967, %v3971
      %v3973 = vshrl.u32 %v3884, 16
      %v3975 = vor.u32 %v3973, %v3971
      %v3977 = vshll.u32 %v3885, 16
      %v3979 = vrot.slane %v3977, 1
      %v3980 = vsel %vm3896, %v3975, %v3979
      %v3981 = vshrl.u32 %v3885, 16
      %v3983 = vor.u32 %v3981, %v3979
      %v3985 = vshll.u32 %v3886, 16
      %v3987 = vrot.slane %v3985, 1
      %v3988 = vsel %vm3896, %v3983, %v3987
      %v3989 = vshrl.u32 %v3886, 16
      %v3991 = vor.u32 %v3989, %v3987
      %v3993 = vshll.u32 %v3887, 16
      %v3995 = vrot.slane %v3993, 1
      %v3996 = vsel %vm3896, %v3991, %v3995
      %v3997 = vshrl.u32 %v3887, 16
      %v3999 = vor.u32 %v3997, %v3995
      %v4001 = vshll.u32 %v3888, 16
      %v4003 = vrot.slane %v4001, 1
      %v4004 = vsel %vm3896, %v3999, %v4003
      %v4005 = vshrl.u32 %v3888, 16
      %v4007 = vor.u32 %v4005, %v4003
      %v4009 = vshll.u32 %v3889, 16
      %v4011 = vrot.slane %v4009, 1
      %v4012 = vsel %vm3896, %v4007, %v4011
      %v4013 = vshrl.u32 %v3889, 16
      %v4015 = vor.u32 %v4013, %v4011
      %v4017 = vshll.u32 %v3890, 16
      %v4019 = vrot.slane %v4017, 1
      %v4020 = vsel %vm3896, %v4015, %v4019
      %v4021 = vshrl.u32 %v3890, 16
      %v4023 = vor.u32 %v4021, %v4019
      %v4025 = vshll.u32 %v3891, 16
      %v4027 = vrot.slane %v4025, 1
      %v4028 = vsel %vm3896, %v4023, %v4027
      %v4029 = vshrl.u32 %v3891, 16
      %v4031 = vor.u32 %v4029, %v4027
      %v4033 = vshll.u32 %v3892, 16
      %v4035 = vrot.slane %v4033, 1
      %v4036 = vsel %vm3896, %v4031, %v4035
      %v4037 = vshrl.u32 %v3892, 16
      %v4039 = vor.u32 %v4037, %v4035
      %v4041 = vshll.u32 %v3893, 16
      %v4043 = vrot.slane %v4041, 1
      %v4044 = vsel %vm3896, %v4039, %v4043
      %v4045 = vshrl.u32 %v3893, 16
      %v4047 = vor.u32 %v4045, %v4043
      %v4049 = vshll.u32 %v3894, 16
      %v4051 = vrot.slane %v4049, 1
      %v4052 = vsel %vm3896, %v4047, %v4051
      %v4053 = vshrl.u32 %v3894, 16
      %v4055 = vor.u32 %v4053, %v4051
      %v4057 = vshll.u32 %v3895, 16
      %v4059 = vrot.slane %v4057, 1
      %v4060 = vsel %vm3896, %v4055, %v4059
      %v4061 = vshrl.u32 %v3895, 16
      %v4063 = vor.u32 %v4061, %v4059
      %v4101 = vunpack.c.l.b16 %v3775
      %v4102 = vunpack.c.l.b16 %v3776
      %v4103 = vunpack.c.l.b16 %v3777
      %v4104 = vunpack.c.l.b16 %v3778
      %v4105 = vunpack.c.l.b16 %v3779
      %v4106 = vunpack.c.l.b16 %v3780
      %v4107 = vunpack.c.l.b16 %v3781
      %v4108 = vunpack.c.l.b16 %v3782
      %v4109 = vunpack.c.l.b16 %v3783
      %v4110 = vunpack.c.l.b16 %v3784
      %v4111 = vunpack.c.l.b16 %v3785
      %v4112 = vunpack.c.l.b16 %v3786
      %v4113 = vunpack.c.l.b16 %v3787
      %v4114 = vunpack.c.l.b16 %v3788
      %v4115 = vunpack.c.l.b16 %v3789
      %v4116 = vunpack.c.l.b16 %v3790
      %v4117 = vpack.c.b16 %v4102, %v4101
      %v4118 = vpack.c.b16 %v4104, %v4103
      %v4119 = vpack.c.b16 %v4106, %v4105
      %v4120 = vpack.c.b16 %v4108, %v4107
      %v4121 = vpack.c.b16 %v4110, %v4109
      %v4122 = vpack.c.b16 %v4112, %v4111
      %v4123 = vpack.c.b16 %v4114, %v4113
      %v4124 = vpack.c.b16 %v4116, %v4115
      %4133 = vmatprep.subr.bf16.mxu0 0
      %4134 = vmatpush1.bf16.msra.mxu0 %v4124
      %4135 = vmatprep.subr.bf16.mxu0 0
      %4136 = vmatpush1.bf16.msra.mxu0 %v4123
      %4137 = vmatprep.subr.bf16.mxu0 0
      %4138 = vmatpush1.bf16.msra.mxu0 %v4122
      %4139 = vmatprep.subr.bf16.mxu0 0
      %4140 = vmatpush1.bf16.msra.mxu0 %v4121
      %4141 = vmatprep.subr.bf16.mxu0 0
      %4142 = vmatpush1.bf16.msra.mxu0 %v4120
      %4143 = vmatprep.subr.bf16.mxu0 0
      %4144 = vmatpush1.bf16.msra.mxu0 %v4119
      %4145 = vmatprep.subr.bf16.mxu0 0
      %4146 = vmatpush1.bf16.msra.mxu0 %v4118
      %4147 = vmatprep.subr.bf16.mxu0 0
      %4148 = vmatpush1.bf16.msra.mxu0 %v4117
      %4149 = vmatprep.subr.bf16.mxu0 0
      %4150 = vmatpush2.bf16.msra.mxu0 0
      %4151 = vmatprep.subr.bf16.mxu0 0
      %4152 = vmatpush2.bf16.msra.mxu0 0
      %4153 = vmatprep.subr.bf16.mxu0 0
      %4154 = vmatpush2.bf16.msra.mxu0 0
      %4155 = vmatprep.subr.bf16.mxu0 0
      %4156 = vmatpush2.bf16.msra.mxu0 0
      %4157 = vmatprep.subr.bf16.mxu0 0
      %4158 = vmatpush2.bf16.msra.mxu0 0
      %4159 = vmatprep.subr.bf16.mxu0 0
      %4160 = vmatpush2.bf16.msra.mxu0 0
      %4161 = vmatprep.subr.bf16.mxu0 0
      %4162 = vmatpush2.bf16.msra.mxu0 0
      %4163 = vmatprep.subr.bf16.mxu0 0
      %4164 = vmatpush2.bf16.msra.mxu0 0
      %4165 = vmatprep.mubr.bf16.mxu0 0
      %4166 = vmatmul.mubr.bf16.gmra.mxu0 %v3908
      %v4167 = vpop.f32.mrf.mxu0
      %v4168 = vadd.f32 0.0, %v4167
      %v4169 = vpop.f32.mrf.mxu0
      %v4170 = vpop.f32.mrf.mxu0
      %v4171 = vadd.f32 0.0, %v4170
      %v4172 = vpop.f32.mrf.mxu0
      %4173 = vmatprep.mubr.bf16.mxu0 0
      %4174 = vmatmul.mubr.bf16.gmra.mxu0 %v3916
      %v4175 = vpop.f32.mrf.mxu0
      %v4176 = vadd.f32 0.0, %v4175
      %v4177 = vpop.f32.mrf.mxu0
      %v4178 = vpop.f32.mrf.mxu0
      %v4179 = vadd.f32 0.0, %v4178
      %v4180 = vpop.f32.mrf.mxu0
      %4181 = vmatprep.mubr.bf16.mxu0 0
      %4182 = vmatmul.mubr.bf16.gmra.mxu0 %v3924
      %v4183 = vpop.f32.mrf.mxu0
      %v4184 = vadd.f32 0.0, %v4183
      %v4185 = vpop.f32.mrf.mxu0
      %v4186 = vpop.f32.mrf.mxu0
      %v4187 = vadd.f32 0.0, %v4186
      %v4188 = vpop.f32.mrf.mxu0
      %4189 = vmatprep.mubr.bf16.mxu0 0
      %4190 = vmatmul.mubr.bf16.gmra.mxu0 %v3932
      %v4191 = vpop.f32.mrf.mxu0
      %v4192 = vadd.f32 0.0, %v4191
      %v4193 = vpop.f32.mrf.mxu0
      %v4194 = vpop.f32.mrf.mxu0
      %v4195 = vadd.f32 0.0, %v4194
      %v4196 = vpop.f32.mrf.mxu0
      %4197 = vmatprep.mubr.bf16.mxu0 0
      %4198 = vmatmul.mubr.bf16.gmra.mxu0 %v3940
      %v4199 = vpop.f32.mrf.mxu0
      %v4200 = vadd.f32 0.0, %v4199
      %v4201 = vpop.f32.mrf.mxu0
      %v4202 = vpop.f32.mrf.mxu0
      %v4203 = vadd.f32 0.0, %v4202
      %v4204 = vpop.f32.mrf.mxu0
      %4205 = vmatprep.mubr.bf16.mxu0 0
      %4206 = vmatmul.mubr.bf16.gmra.mxu0 %v3948
      %v4207 = vpop.f32.mrf.mxu0
      %v4208 = vadd.f32 0.0, %v4207
      %v4209 = vpop.f32.mrf.mxu0
      %v4210 = vpop.f32.mrf.mxu0
      %v4211 = vadd.f32 0.0, %v4210
      %v4212 = vpop.f32.mrf.mxu0
      %4213 = vmatprep.mubr.bf16.mxu0 0
      %4214 = vmatmul.mubr.bf16.gmra.mxu0 %v3956
      %v4215 = vpop.f32.mrf.mxu0
      %v4216 = vadd.f32 0.0, %v4215
      %v4217 = vpop.f32.mrf.mxu0
      %v4218 = vpop.f32.mrf.mxu0
      %v4219 = vadd.f32 0.0, %v4218
      %v4220 = vpop.f32.mrf.mxu0
      %4221 = vmatprep.mubr.bf16.mxu0 0
      %4222 = vmatmul.mubr.bf16.gmra.mxu0 %v3964
      %v4223 = vpop.f32.mrf.mxu0
      %v4224 = vadd.f32 0.0, %v4223
      %v4225 = vpop.f32.mrf.mxu0
      %v4226 = vpop.f32.mrf.mxu0
      %v4227 = vadd.f32 0.0, %v4226
      %v4228 = vpop.f32.mrf.mxu0
      %4229 = vmatprep.mubr.bf16.mxu0 0
      %4230 = vmatmul.mubr.bf16.gmra.mxu0 %v3972
      %v4231 = vpop.f32.mrf.mxu0
      %v4232 = vadd.f32 0.0, %v4231
      %v4233 = vpop.f32.mrf.mxu0
      %v4234 = vpop.f32.mrf.mxu0
      %v4235 = vadd.f32 0.0, %v4234
      %v4236 = vpop.f32.mrf.mxu0
      %4237 = vmatprep.mubr.bf16.mxu0 0
      %4238 = vmatmul.mubr.bf16.gmra.mxu0 %v3980
      %v4239 = vpop.f32.mrf.mxu0
      %v4240 = vadd.f32 0.0, %v4239
      %v4241 = vpop.f32.mrf.mxu0
      %v4242 = vpop.f32.mrf.mxu0
      %v4243 = vadd.f32 0.0, %v4242
      %v4244 = vpop.f32.mrf.mxu0
      %4245 = vmatprep.mubr.bf16.mxu0 0
      %4246 = vmatmul.mubr.bf16.gmra.mxu0 %v3988
      %v4247 = vpop.f32.mrf.mxu0
      %v4248 = vadd.f32 0.0, %v4247
      %v4249 = vpop.f32.mrf.mxu0
      %v4250 = vpop.f32.mrf.mxu0
      %v4251 = vadd.f32 0.0, %v4250
      %v4252 = vpop.f32.mrf.mxu0
      %4253 = vmatprep.mubr.bf16.mxu0 0
      %4254 = vmatmul.mubr.bf16.gmra.mxu0 %v3996
      %v4255 = vpop.f32.mrf.mxu0
      %v4256 = vadd.f32 0.0, %v4255
      %v4257 = vpop.f32.mrf.mxu0
      %v4258 = vpop.f32.mrf.mxu0
      %v4259 = vadd.f32 0.0, %v4258
      %v4260 = vpop.f32.mrf.mxu0
      %4261 = vmatprep.mubr.bf16.mxu0 0
      %4262 = vmatmul.mubr.bf16.gmra.mxu0 %v4004
      %v4263 = vpop.f32.mrf.mxu0
      %v4264 = vadd.f32 0.0, %v4263
      %v4265 = vpop.f32.mrf.mxu0
      %v4266 = vpop.f32.mrf.mxu0
      %v4267 = vadd.f32 0.0, %v4266
      %v4268 = vpop.f32.mrf.mxu0
      %4269 = vmatprep.mubr.bf16.mxu0 0
      %4270 = vmatmul.mubr.bf16.gmra.mxu0 %v4012
      %v4271 = vpop.f32.mrf.mxu0
      %v4272 = vadd.f32 0.0, %v4271
      %v4273 = vpop.f32.mrf.mxu0
      %v4274 = vpop.f32.mrf.mxu0
      %v4275 = vadd.f32 0.0, %v4274
      %v4276 = vpop.f32.mrf.mxu0
      %4277 = vmatprep.mubr.bf16.mxu0 0
      %4278 = vmatmul.mubr.bf16.gmra.mxu0 %v4020
      %v4279 = vpop.f32.mrf.mxu0
      %v4280 = vadd.f32 0.0, %v4279
      %v4281 = vpop.f32.mrf.mxu0
      %v4282 = vpop.f32.mrf.mxu0
      %v4283 = vadd.f32 0.0, %v4282
      %v4284 = vpop.f32.mrf.mxu0
      %4285 = vmatprep.mubr.bf16.mxu0 0
      %4286 = vmatmul.mubr.bf16.gmra.mxu0 %v4028
      %v4287 = vpop.f32.mrf.mxu0
      %v4288 = vadd.f32 0.0, %v4287
      %v4289 = vpop.f32.mrf.mxu0
      %v4290 = vpop.f32.mrf.mxu0
      %v4291 = vadd.f32 0.0, %v4290
      %v4292 = vpop.f32.mrf.mxu0
      %4293 = vmatprep.mubr.bf16.mxu0 0
      %4294 = vmatmul.mubr.bf16.gmra.mxu0 %v4036
      %v4295 = vpop.f32.mrf.mxu0
      %v4296 = vadd.f32 0.0, %v4295
      %v4297 = vpop.f32.mrf.mxu0
      %v4298 = vpop.f32.mrf.mxu0
      %v4299 = vadd.f32 0.0, %v4298
      %v4300 = vpop.f32.mrf.mxu0
      %4301 = vmatprep.mubr.bf16.mxu0 0
      %4302 = vmatmul.mubr.bf16.gmra.mxu0 %v4044
      %v4303 = vpop.f32.mrf.mxu0
      %v4304 = vadd.f32 0.0, %v4303
      %v4305 = vpop.f32.mrf.mxu0
      %v4306 = vpop.f32.mrf.mxu0
      %v4307 = vadd.f32 0.0, %v4306
      %v4308 = vpop.f32.mrf.mxu0
      %4309 = vmatprep.mubr.bf16.mxu0 0
      %4310 = vmatmul.mubr.bf16.gmra.mxu0 %v4052
      %v4311 = vpop.f32.mrf.mxu0
      %v4312 = vadd.f32 0.0, %v4311
      %v4313 = vpop.f32.mrf.mxu0
      %v4314 = vpop.f32.mrf.mxu0
      %v4315 = vadd.f32 0.0, %v4314
      %v4316 = vpop.f32.mrf.mxu0
      %4317 = vmatprep.mubr.bf16.mxu0 0
      %4318 = vmatmul.mubr.bf16.gmra.mxu0 %v4060
      %v4319 = vpop.f32.mrf.mxu0
      %v4320 = vadd.f32 0.0, %v4319
      %v4321 = vpop.f32.mrf.mxu0
      %v4322 = vpop.f32.mrf.mxu0
      %v4323 = vadd.f32 0.0, %v4322
      %v4324 = vpop.f32.mrf.mxu0
      %4325 = vmatprep.mubr.bf16.mxu0 0
      %4326 = vmatmul.mubr.bf16.gmra.mxu0 %v4063
      %v4327 = vpop.f32.mrf.mxu0
      %v4328 = vadd.f32 0.0, %v4327
      %v4329 = vpop.f32.mrf.mxu0
      %v4330 = vpop.f32.mrf.mxu0
      %v4331 = vpop.f32.mrf.mxu0
      %4332 = vdwg.mxu0
      %v4333 = vadd.f32 %v3692, %v4168
      %v4334 = vadd.f32 %v3693, %v4171
      %v4335 = vadd.f32 %v3694, %v4176
      %v4336 = vadd.f32 %v3695, %v4179
      %v4337 = vadd.f32 %v3696, %v4184
      %v4338 = vadd.f32 %v3697, %v4187
      %v4339 = vadd.f32 %v3698, %v4192
      %v4340 = vadd.f32 %v3699, %v4195
      %v4341 = vadd.f32 %v3700, %v4200
      %v4342 = vadd.f32 %v3701, %v4203
      %v4343 = vadd.f32 %v3702, %v4208
      %v4344 = vadd.f32 %v3703, %v4211
      %v4345 = vadd.f32 %v3704, %v4216
      %v4346 = vadd.f32 %v3705, %v4219
      %v4347 = vadd.f32 %v3706, %v4224
      %v4348 = vadd.f32 %v3707, %v4227
      %v4349 = vadd.f32 %v3708, %v4232
      %v4350 = vadd.f32 %v3709, %v4235
      %v4351 = vadd.f32 %v3710, %v4240
      %v4352 = vadd.f32 %v3711, %v4243
      %v4353 = vadd.f32 %v3712, %v4248
      %v4354 = vadd.f32 %v3713, %v4251
      %v4355 = vadd.f32 %v3714, %v4256
      %v4356 = vadd.f32 %v3715, %v4259
      %v4357 = vadd.f32 %v3716, %v4264
      %v4358 = vadd.f32 %v3717, %v4267
      %v4359 = vadd.f32 %v3718, %v4272
      %v4360 = vadd.f32 %v3719, %v4275
      %v4361 = vadd.f32 %v3720, %v4280
      %v4362 = vadd.f32 %v3721, %v4283
      %v4363 = vadd.f32 %v3722, %v4288
      %v4364 = vadd.f32 %v3723, %v4291
      %v4365 = vadd.f32 %v3724, %v4296
      %v4366 = vadd.f32 %v3725, %v4299
      %v4367 = vadd.f32 %v3726, %v4304
      %v4368 = vadd.f32 %v3727, %v4307
      %v4369 = vadd.f32 %v3728, %v4312
      %v4370 = vadd.f32 %v3729, %v4315
      %v4371 = vadd.f32 %v3730, %v4320
      %v4372 = vadd.f32 %v3731, %v4323
      %v4373 = vadd.f32 %v3732, %v4328
      %v4374 = vld [vmem:[#allocation2 + $0x14] sm:$0xf]
      %v4375 = vld [vmem:[#allocation2 + $0x18] sm:$0xf]
      %v4376 = vld [vmem:[#allocation2 + $0x1c] sm:$0xf]
      %v4377 = vld [vmem:[#allocation2 + $0x20] sm:$0xf]
      %v4378 = vld [vmem:[#allocation2 + $0x24] sm:$0xf]
      %v4379 = vld [vmem:[#allocation2 + $0x28] sm:$0xf]
      %v4380 = vld [vmem:[#allocation2 + $0x2c] sm:$0xf]
      %v4381 = vld [vmem:[#allocation2 + $0x30] sm:$0xf]
      %v4382 = vld [vmem:[#allocation2 + $0x34] sm:$0xf]
      %v4383 = vld [vmem:[#allocation2 + $0x38] sm:$0xf]
      %v4384 = vld [vmem:[#allocation2 + $0x3c] sm:$0xf]
      %v4385 = vld [vmem:[#allocation2 + $0x40] sm:$0xf]
      %v4386 = vld [vmem:[#allocation2 + $0x44] sm:$0xf]
      %v4387 = vld [vmem:[#allocation2 + $0x48] sm:$0xf]
      %v4388 = vld [vmem:[#allocation2 + $0x4c] sm:$0xf]
      %v4389 = vld [vmem:[#allocation2 + $0x50] sm:$0xf]
      %v4390 = vld [vmem:[#allocation2 + $0x54] sm:$0xf]
      %v4391 = vld [vmem:[#allocation2 + $0x58] sm:$0xf]
      %v4392 = vld [vmem:[#allocation2 + $0x5c] sm:$0xf]
      %v4393 = vld [vmem:[#allocation2 + $0x60] sm:$0xf]
      %v4394 = vld [vmem:[#allocation2 + $0x64] sm:$0xf]
      %v4395 = vld [vmem:[#allocation2 + $0x68] sm:$0xf]
      %v4396 = vld [vmem:[#allocation2 + $0x6c] sm:$0xf]
      %v4397 = vld [vmem:[#allocation2 + $0x70] sm:$0xf]
      %v4398 = vld [vmem:[#allocation2 + $0x74] sm:$0xf]
      %v4399 = vld [vmem:[#allocation2 + $0x78] sm:$0xf]
      %v4400 = vld [vmem:[#allocation2 + $0x7c] sm:$0xf]
      %v4401 = vld [vmem:[#allocation2 + $0x80] sm:$0xf]
      %v4402 = vld [vmem:[#allocation2 + $0x84] sm:$0xf]
      %v4403 = vld [vmem:[#allocation2 + $0x88] sm:$0xf]
      %v4404 = vld [vmem:[#allocation2 + $0x8c] sm:$0xf]
      %v4405 = vld [vmem:[#allocation2 + $0x90] sm:$0xf]
      %v4406 = vld [vmem:[#allocation2 + $0x94] sm:$0xf]
      %v4407 = vld [vmem:[#allocation2 + $0x98] sm:$0xf]
      %v4408 = vld [vmem:[#allocation2 + $0x9c] sm:$0xf]
      %v4409 = vld [vmem:[#allocation2 + $0xa0] sm:$0xf]
      %v4410 = vld [vmem:[#allocation2 + $0xa4] sm:$0xf]
      %v4411 = vld [vmem:[#allocation2 + $0xa8] sm:$0xf]
      %v4412 = vld [vmem:[#allocation2 + $0xac] sm:$0xf]
      %v4413 = vld [vmem:[#allocation2 + $0xb0] sm:$0xf]
      %v4414 = vld [vmem:[#allocation2 + $0xb4] sm:$0xf]
      %v4415 = vld [vmem:[#allocation2 + $0xb8] sm:$0x1]
      %v4416 = vld [vmem:[%s4 + $0x180] sm:$0xf]
      %v4417 = vld [vmem:[%s4 + $0x184] sm:$0xf]
      %v4418 = vld [vmem:[%s4 + $0x188] sm:$0xf]
      %v4419 = vld [vmem:[%s4 + $0x18c] sm:$0xf]
      %v4420 = vld [vmem:[%s4 + $0x190] sm:$0xf]
      %v4421 = vld [vmem:[%s4 + $0x194] sm:$0xf]
      %v4422 = vld [vmem:[%s4 + $0x198] sm:$0xf]
      %v4423 = vld [vmem:[%s4 + $0x19c] sm:$0xf]
      %v4424 = vld [vmem:[%s4 + $0x1a0] sm:$0xf]
      %v4425 = vld [vmem:[%s4 + $0x1a4] sm:$0xf]
      %v4426 = vld [vmem:[%s4 + $0x1a8] sm:$0xf]
      %v4427 = vld [vmem:[%s4 + $0x1ac] sm:$0xf]
      %v4428 = vld [vmem:[%s4 + $0x1b0] sm:$0xf]
      %v4429 = vld [vmem:[%s4 + $0x1b4] sm:$0xf]
      %v4430 = vld [vmem:[%s4 + $0x1b8] sm:$0xf]
      %v4431 = vld [vmem:[%s4 + $0x1bc] sm:$0xf]
      %v4474 = vunpack.c.l.b16 %v4374
      %v4475 = vunpack.c.l.b16 %v4375
      %v4476 = vunpack.c.l.b16 %v4376
      %v4477 = vunpack.c.l.b16 %v4377
      %v4478 = vunpack.c.l.b16 %v4378
      %v4479 = vunpack.c.l.b16 %v4379
      %v4480 = vunpack.c.l.b16 %v4380
      %v4481 = vunpack.c.l.b16 %v4381
      %v4482 = vunpack.c.l.b16 %v4382
      %v4483 = vunpack.c.l.b16 %v4383
      %v4484 = vunpack.c.l.b16 %v4384
      %v4485 = vunpack.c.l.b16 %v4385
      %v4486 = vunpack.c.l.b16 %v4386
      %v4487 = vunpack.c.l.b16 %v4387
      %v4488 = vunpack.c.l.b16 %v4388
      %v4489 = vunpack.c.l.b16 %v4389
      %v4490 = vunpack.c.l.b16 %v4390
      %v4491 = vunpack.c.l.b16 %v4391
      %v4492 = vunpack.c.l.b16 %v4392
      %v4493 = vunpack.c.l.b16 %v4393
      %v4494 = vunpack.c.l.b16 %v4394
      %v4495 = vunpack.c.l.b16 %v4395
      %v4496 = vunpack.c.l.b16 %v4396
      %v4497 = vunpack.c.l.b16 %v4397
      %v4498 = vunpack.c.l.b16 %v4398
      %v4499 = vunpack.c.l.b16 %v4399
      %v4500 = vunpack.c.l.b16 %v4400
      %v4501 = vunpack.c.l.b16 %v4401
      %v4502 = vunpack.c.l.b16 %v4402
      %v4503 = vunpack.c.l.b16 %v4403
      %v4504 = vunpack.c.l.b16 %v4404
      %v4505 = vunpack.c.l.b16 %v4405
      %v4506 = vunpack.c.l.b16 %v4406
      %v4507 = vunpack.c.l.b16 %v4407
      %v4508 = vunpack.c.l.b16 %v4408
      %v4509 = vunpack.c.l.b16 %v4409
      %v4510 = vunpack.c.l.b16 %v4410
      %v4511 = vunpack.c.l.b16 %v4411
      %v4512 = vunpack.c.l.b16 %v4412
      %v4513 = vunpack.c.l.b16 %v4413
      %v4514 = vunpack.c.l.b16 %v4414
      %v4515 = vunpack.c.l.b16 %v4415
      %v4516 = vpack.c.b16 %v4475, %v4474
      %v4517 = vpack.c.b16 %v4477, %v4476
      %v4518 = vpack.c.b16 %v4479, %v4478
      %v4519 = vpack.c.b16 %v4481, %v4480
      %v4520 = vpack.c.b16 %v4483, %v4482
      %v4521 = vpack.c.b16 %v4485, %v4484
      %v4522 = vpack.c.b16 %v4487, %v4486
      %v4523 = vpack.c.b16 %v4489, %v4488
      %v4524 = vpack.c.b16 %v4491, %v4490
      %v4525 = vpack.c.b16 %v4493, %v4492
      %v4526 = vpack.c.b16 %v4495, %v4494
      %v4527 = vpack.c.b16 %v4497, %v4496
      %v4528 = vpack.c.b16 %v4499, %v4498
      %v4529 = vpack.c.b16 %v4501, %v4500
      %v4530 = vpack.c.b16 %v4503, %v4502
      %v4531 = vpack.c.b16 %v4505, %v4504
      %v4532 = vpack.c.b16 %v4507, %v4506
      %v4533 = vpack.c.b16 %v4509, %v4508
      %v4534 = vpack.c.b16 %v4511, %v4510
      %v4535 = vpack.c.b16 %v4513, %v4512
      %v4536 = vpack.c.b16 %v4515, %v4514
      %v4538 = vshrl.u32 %v4516, 16
      %v4540 = vshll.u32 %v4516, 16
      %v4542 = vrot.slane %v4540, 1
      %v4543 = vor.u32 %v4538, %v4542
      %v4545 = vshll.u32 %v4517, 16
      %v4547 = vrot.slane %v4545, 1
      %v4548 = vsel %vm3896, %v4543, %v4547
      %v4549 = vshrl.u32 %v4517, 16
      %v4551 = vor.u32 %v4549, %v4547
      %v4553 = vshll.u32 %v4518, 16
      %v4555 = vrot.slane %v4553, 1
      %v4556 = vsel %vm3896, %v4551, %v4555
      %v4557 = vshrl.u32 %v4518, 16
      %v4559 = vor.u32 %v4557, %v4555
      %v4561 = vshll.u32 %v4519, 16
      %v4563 = vrot.slane %v4561, 1
      %v4564 = vsel %vm3896, %v4559, %v4563
      %v4565 = vshrl.u32 %v4519, 16
      %v4567 = vor.u32 %v4565, %v4563
      %v4569 = vshll.u32 %v4520, 16
      %v4571 = vrot.slane %v4569, 1
      %v4572 = vsel %vm3896, %v4567, %v4571
      %v4573 = vshrl.u32 %v4520, 16
      %v4575 = vor.u32 %v4573, %v4571
      %v4577 = vshll.u32 %v4521, 16
      %v4579 = vrot.slane %v4577, 1
      %v4580 = vsel %vm3896, %v4575, %v4579
      %v4581 = vshrl.u32 %v4521, 16
      %v4583 = vor.u32 %v4581, %v4579
      %v4585 = vshll.u32 %v4522, 16
      %v4587 = vrot.slane %v4585, 1
      %v4588 = vsel %vm3896, %v4583, %v4587
      %v4589 = vshrl.u32 %v4522, 16
      %v4591 = vor.u32 %v4589, %v4587
      %v4593 = vshll.u32 %v4523, 16
      %v4595 = vrot.slane %v4593, 1
      %v4596 = vsel %vm3896, %v4591, %v4595
      %v4597 = vshrl.u32 %v4523, 16
      %v4599 = vor.u32 %v4597, %v4595
      %v4601 = vshll.u32 %v4524, 16
      %v4603 = vrot.slane %v4601, 1
      %v4604 = vsel %vm3896, %v4599, %v4603
      %v4605 = vshrl.u32 %v4524, 16
      %v4607 = vor.u32 %v4605, %v4603
      %v4609 = vshll.u32 %v4525, 16
      %v4611 = vrot.slane %v4609, 1
      %v4612 = vsel %vm3896, %v4607, %v4611
      %v4613 = vshrl.u32 %v4525, 16
      %v4615 = vor.u32 %v4613, %v4611
      %v4617 = vshll.u32 %v4526, 16
      %v4619 = vrot.slane %v4617, 1
      %v4620 = vsel %vm3896, %v4615, %v4619
      %v4621 = vshrl.u32 %v4526, 16
      %v4623 = vor.u32 %v4621, %v4619
      %v4625 = vshll.u32 %v4527, 16
      %v4627 = vrot.slane %v4625, 1
      %v4628 = vsel %vm3896, %v4623, %v4627
      %v4629 = vshrl.u32 %v4527, 16
      %v4631 = vor.u32 %v4629, %v4627
      %v4633 = vshll.u32 %v4528, 16
      %v4635 = vrot.slane %v4633, 1
      %v4636 = vsel %vm3896, %v4631, %v4635
      %v4637 = vshrl.u32 %v4528, 16
      %v4639 = vor.u32 %v4637, %v4635
      %v4641 = vshll.u32 %v4529, 16
      %v4643 = vrot.slane %v4641, 1
      %v4644 = vsel %vm3896, %v4639, %v4643
      %v4645 = vshrl.u32 %v4529, 16
      %v4647 = vor.u32 %v4645, %v4643
      %v4649 = vshll.u32 %v4530, 16
      %v4651 = vrot.slane %v4649, 1
      %v4652 = vsel %vm3896, %v4647, %v4651
      %v4653 = vshrl.u32 %v4530, 16
      %v4655 = vor.u32 %v4653, %v4651
      %v4657 = vshll.u32 %v4531, 16
      %v4659 = vrot.slane %v4657, 1
      %v4660 = vsel %vm3896, %v4655, %v4659
      %v4661 = vshrl.u32 %v4531, 16
      %v4663 = vor.u32 %v4661, %v4659
      %v4665 = vshll.u32 %v4532, 16
      %v4667 = vrot.slane %v4665, 1
      %v4668 = vsel %vm3896, %v4663, %v4667
      %v4669 = vshrl.u32 %v4532, 16
      %v4671 = vor.u32 %v4669, %v4667
      %v4673 = vshll.u32 %v4533, 16
      %v4675 = vrot.slane %v4673, 1
      %v4676 = vsel %vm3896, %v4671, %v4675
      %v4677 = vshrl.u32 %v4533, 16
      %v4679 = vor.u32 %v4677, %v4675
      %v4681 = vshll.u32 %v4534, 16
      %v4683 = vrot.slane %v4681, 1
      %v4684 = vsel %vm3896, %v4679, %v4683
      %v4685 = vshrl.u32 %v4534, 16
      %v4687 = vor.u32 %v4685, %v4683
      %v4689 = vshll.u32 %v4535, 16
      %v4691 = vrot.slane %v4689, 1
      %v4692 = vsel %vm3896, %v4687, %v4691
      %v4693 = vshrl.u32 %v4535, 16
      %v4695 = vor.u32 %v4693, %v4691
      %v4697 = vshll.u32 %v4536, 16
      %v4699 = vrot.slane %v4697, 1
      %v4700 = vsel %vm3896, %v4695, %v4699
      %v4701 = vshrl.u32 %v4536, 16
      %v4703 = vor.u32 %v4701, %v4699
      %v4741 = vunpack.c.l.b16 %v4416
      %v4742 = vunpack.c.l.b16 %v4417
      %v4743 = vunpack.c.l.b16 %v4418
      %v4744 = vunpack.c.l.b16 %v4419
      %v4745 = vunpack.c.l.b16 %v4420
      %v4746 = vunpack.c.l.b16 %v4421
      %v4747 = vunpack.c.l.b16 %v4422
      %v4748 = vunpack.c.l.b16 %v4423
      %v4749 = vunpack.c.l.b16 %v4424
      %v4750 = vunpack.c.l.b16 %v4425
      %v4751 = vunpack.c.l.b16 %v4426
      %v4752 = vunpack.c.l.b16 %v4427
      %v4753 = vunpack.c.l.b16 %v4428
      %v4754 = vunpack.c.l.b16 %v4429
      %v4755 = vunpack.c.l.b16 %v4430
      %v4756 = vunpack.c.l.b16 %v4431
      %v4757 = vpack.c.b16 %v4742, %v4741
      %v4758 = vpack.c.b16 %v4744, %v4743
      %v4759 = vpack.c.b16 %v4746, %v4745
      %v4760 = vpack.c.b16 %v4748, %v4747
      %v4761 = vpack.c.b16 %v4750, %v4749
      %v4762 = vpack.c.b16 %v4752, %v4751
      %v4763 = vpack.c.b16 %v4754, %v4753
      %v4764 = vpack.c.b16 %v4756, %v4755
      %4773 = vmatprep.subr.bf16.mxu0 0
      %4774 = vmatpush1.bf16.msra.mxu0 %v4764
      %4775 = vmatprep.subr.bf16.mxu0 0
      %4776 = vmatpush1.bf16.msra.mxu0 %v4763
      %4777 = vmatprep.subr.bf16.mxu0 0
      %4778 = vmatpush1.bf16.msra.mxu0 %v4762
      %4779 = vmatprep.subr.bf16.mxu0 0
      %4780 = vmatpush1.bf16.msra.mxu0 %v4761
      %4781 = vmatprep.subr.bf16.mxu0 0
      %4782 = vmatpush1.bf16.msra.mxu0 %v4760
      %4783 = vmatprep.subr.bf16.mxu0 0
      %4784 = vmatpush1.bf16.msra.mxu0 %v4759
      %4785 = vmatprep.subr.bf16.mxu0 0
      %4786 = vmatpush1.bf16.msra.mxu0 %v4758
      %4787 = vmatprep.subr.bf16.mxu0 0
      %4788 = vmatpush1.bf16.msra.mxu0 %v4757
      %4789 = vmatprep.subr.bf16.mxu0 0
      %4790 = vmatpush2.bf16.msra.mxu0 0
      %4791 = vmatprep.subr.bf16.mxu0 0
      %4792 = vmatpush2.bf16.msra.mxu0 0
      %4793 = vmatprep.subr.bf16.mxu0 0
      %4794 = vmatpush2.bf16.msra.mxu0 0
      %4795 = vmatprep.subr.bf16.mxu0 0
      %4796 = vmatpush2.bf16.msra.mxu0 0
      %4797 = vmatprep.subr.bf16.mxu0 0
      %4798 = vmatpush2.bf16.msra.mxu0 0
      %4799 = vmatprep.subr.bf16.mxu0 0
      %4800 = vmatpush2.bf16.msra.mxu0 0
      %4801 = vmatprep.subr.bf16.mxu0 0
      %4802 = vmatpush2.bf16.msra.mxu0 0
      %4803 = vmatprep.subr.bf16.mxu0 0
      %4804 = vmatpush2.bf16.msra.mxu0 0
      %4805 = vmatprep.mubr.bf16.mxu0 0
      %4806 = vmatmul.mubr.bf16.gmra.mxu0 %v4548
      %v4807 = vpop.f32.mrf.mxu0
      %v4808 = vadd.f32 0.0, %v4807
      %v4809 = vpop.f32.mrf.mxu0
      %v4810 = vpop.f32.mrf.mxu0
      %v4811 = vadd.f32 0.0, %v4810
      %v4812 = vpop.f32.mrf.mxu0
      %4813 = vmatprep.mubr.bf16.mxu0 0
      %4814 = vmatmul.mubr.bf16.gmra.mxu0 %v4556
      %v4815 = vpop.f32.mrf.mxu0
      %v4816 = vadd.f32 0.0, %v4815
      %v4817 = vpop.f32.mrf.mxu0
      %v4818 = vpop.f32.mrf.mxu0
      %v4819 = vadd.f32 0.0, %v4818
      %v4820 = vpop.f32.mrf.mxu0
      %4821 = vmatprep.mubr.bf16.mxu0 0
      %4822 = vmatmul.mubr.bf16.gmra.mxu0 %v4564
      %v4823 = vpop.f32.mrf.mxu0
      %v4824 = vadd.f32 0.0, %v4823
      %v4825 = vpop.f32.mrf.mxu0
      %v4826 = vpop.f32.mrf.mxu0
      %v4827 = vadd.f32 0.0, %v4826
      %v4828 = vpop.f32.mrf.mxu0
      %4829 = vmatprep.mubr.bf16.mxu0 0
      %4830 = vmatmul.mubr.bf16.gmra.mxu0 %v4572
      %v4831 = vpop.f32.mrf.mxu0
      %v4832 = vadd.f32 0.0, %v4831
      %v4833 = vpop.f32.mrf.mxu0
      %v4834 = vpop.f32.mrf.mxu0
      %v4835 = vadd.f32 0.0, %v4834
      %v4836 = vpop.f32.mrf.mxu0
      %4837 = vmatprep.mubr.bf16.mxu0 0
      %4838 = vmatmul.mubr.bf16.gmra.mxu0 %v4580
      %v4839 = vpop.f32.mrf.mxu0
      %v4840 = vadd.f32 0.0, %v4839
      %v4841 = vpop.f32.mrf.mxu0
      %v4842 = vpop.f32.mrf.mxu0
      %v4843 = vadd.f32 0.0, %v4842
      %v4844 = vpop.f32.mrf.mxu0
      %4845 = vmatprep.mubr.bf16.mxu0 0
      %4846 = vmatmul.mubr.bf16.gmra.mxu0 %v4588
      %v4847 = vpop.f32.mrf.mxu0
      %v4848 = vadd.f32 0.0, %v4847
      %v4849 = vpop.f32.mrf.mxu0
      %v4850 = vpop.f32.mrf.mxu0
      %v4851 = vadd.f32 0.0, %v4850
      %v4852 = vpop.f32.mrf.mxu0
      %4853 = vmatprep.mubr.bf16.mxu0 0
      %4854 = vmatmul.mubr.bf16.gmra.mxu0 %v4596
      %v4855 = vpop.f32.mrf.mxu0
      %v4856 = vadd.f32 0.0, %v4855
      %v4857 = vpop.f32.mrf.mxu0
      %v4858 = vpop.f32.mrf.mxu0
      %v4859 = vadd.f32 0.0, %v4858
      %v4860 = vpop.f32.mrf.mxu0
      %4861 = vmatprep.mubr.bf16.mxu0 0
      %4862 = vmatmul.mubr.bf16.gmra.mxu0 %v4604
      %v4863 = vpop.f32.mrf.mxu0
      %v4864 = vadd.f32 0.0, %v4863
      %v4865 = vpop.f32.mrf.mxu0
      %v4866 = vpop.f32.mrf.mxu0
      %v4867 = vadd.f32 0.0, %v4866
      %v4868 = vpop.f32.mrf.mxu0
      %4869 = vmatprep.mubr.bf16.mxu0 0
      %4870 = vmatmul.mubr.bf16.gmra.mxu0 %v4612
      %v4871 = vpop.f32.mrf.mxu0
      %v4872 = vadd.f32 0.0, %v4871
      %v4873 = vpop.f32.mrf.mxu0
      %v4874 = vpop.f32.mrf.mxu0
      %v4875 = vadd.f32 0.0, %v4874
      %v4876 = vpop.f32.mrf.mxu0
      %4877 = vmatprep.mubr.bf16.mxu0 0
      %4878 = vmatmul.mubr.bf16.gmra.mxu0 %v4620
      %v4879 = vpop.f32.mrf.mxu0
      %v4880 = vadd.f32 0.0, %v4879
      %v4881 = vpop.f32.mrf.mxu0
      %v4882 = vpop.f32.mrf.mxu0
      %v4883 = vadd.f32 0.0, %v4882
      %v4884 = vpop.f32.mrf.mxu0
      %4885 = vmatprep.mubr.bf16.mxu0 0
      %4886 = vmatmul.mubr.bf16.gmra.mxu0 %v4628
      %v4887 = vpop.f32.mrf.mxu0
      %v4888 = vadd.f32 0.0, %v4887
      %v4889 = vpop.f32.mrf.mxu0
      %v4890 = vpop.f32.mrf.mxu0
      %v4891 = vadd.f32 0.0, %v4890
      %v4892 = vpop.f32.mrf.mxu0
      %4893 = vmatprep.mubr.bf16.mxu0 0
      %4894 = vmatmul.mubr.bf16.gmra.mxu0 %v4636
      %v4895 = vpop.f32.mrf.mxu0
      %v4896 = vadd.f32 0.0, %v4895
      %v4897 = vpop.f32.mrf.mxu0
      %v4898 = vpop.f32.mrf.mxu0
      %v4899 = vadd.f32 0.0, %v4898
      %v4900 = vpop.f32.mrf.mxu0
      %4901 = vmatprep.mubr.bf16.mxu0 0
      %4902 = vmatmul.mubr.bf16.gmra.mxu0 %v4644
      %v4903 = vpop.f32.mrf.mxu0
      %v4904 = vadd.f32 0.0, %v4903
      %v4905 = vpop.f32.mrf.mxu0
      %v4906 = vpop.f32.mrf.mxu0
      %v4907 = vadd.f32 0.0, %v4906
      %v4908 = vpop.f32.mrf.mxu0
      %4909 = vmatprep.mubr.bf16.mxu0 0
      %4910 = vmatmul.mubr.bf16.gmra.mxu0 %v4652
      %v4911 = vpop.f32.mrf.mxu0
      %v4912 = vadd.f32 0.0, %v4911
      %v4913 = vpop.f32.mrf.mxu0
      %v4914 = vpop.f32.mrf.mxu0
      %v4915 = vadd.f32 0.0, %v4914
      %v4916 = vpop.f32.mrf.mxu0
      %4917 = vmatprep.mubr.bf16.mxu0 0
      %4918 = vmatmul.mubr.bf16.gmra.mxu0 %v4660
      %v4919 = vpop.f32.mrf.mxu0
      %v4920 = vadd.f32 0.0, %v4919
      %v4921 = vpop.f32.mrf.mxu0
      %v4922 = vpop.f32.mrf.mxu0
      %v4923 = vadd.f32 0.0, %v4922
      %v4924 = vpop.f32.mrf.mxu0
      %4925 = vmatprep.mubr.bf16.mxu0 0
      %4926 = vmatmul.mubr.bf16.gmra.mxu0 %v4668
      %v4927 = vpop.f32.mrf.mxu0
      %v4928 = vadd.f32 0.0, %v4927
      %v4929 = vpop.f32.mrf.mxu0
      %v4930 = vpop.f32.mrf.mxu0
      %v4931 = vadd.f32 0.0, %v4930
      %v4932 = vpop.f32.mrf.mxu0
      %4933 = vmatprep.mubr.bf16.mxu0 0
      %4934 = vmatmul.mubr.bf16.gmra.mxu0 %v4676
      %v4935 = vpop.f32.mrf.mxu0
      %v4936 = vadd.f32 0.0, %v4935
      %v4937 = vpop.f32.mrf.mxu0
      %v4938 = vpop.f32.mrf.mxu0
      %v4939 = vadd.f32 0.0, %v4938
      %v4940 = vpop.f32.mrf.mxu0
      %4941 = vmatprep.mubr.bf16.mxu0 0
      %4942 = vmatmul.mubr.bf16.gmra.mxu0 %v4684
      %v4943 = vpop.f32.mrf.mxu0
      %v4944 = vadd.f32 0.0, %v4943
      %v4945 = vpop.f32.mrf.mxu0
      %v4946 = vpop.f32.mrf.mxu0
      %v4947 = vadd.f32 0.0, %v4946
      %v4948 = vpop.f32.mrf.mxu0
      %4949 = vmatprep.mubr.bf16.mxu0 0
      %4950 = vmatmul.mubr.bf16.gmra.mxu0 %v4692
      %v4951 = vpop.f32.mrf.mxu0
      %v4952 = vadd.f32 0.0, %v4951
      %v4953 = vpop.f32.mrf.mxu0
      %v4954 = vpop.f32.mrf.mxu0
      %v4955 = vadd.f32 0.0, %v4954
      %v4956 = vpop.f32.mrf.mxu0
      %4957 = vmatprep.mubr.bf16.mxu0 0
      %4958 = vmatmul.mubr.bf16.gmra.mxu0 %v4700
      %v4959 = vpop.f32.mrf.mxu0
      %v4960 = vadd.f32 0.0, %v4959
      %v4961 = vpop.f32.mrf.mxu0
      %v4962 = vpop.f32.mrf.mxu0
      %v4963 = vadd.f32 0.0, %v4962
      %v4964 = vpop.f32.mrf.mxu0
      %4965 = vmatprep.mubr.bf16.mxu0 0
      %4966 = vmatmul.mubr.bf16.gmra.mxu0 %v4703
      %v4967 = vpop.f32.mrf.mxu0
      %v4968 = vadd.f32 0.0, %v4967
      %v4969 = vpop.f32.mrf.mxu0
      %v4970 = vpop.f32.mrf.mxu0
      %v4971 = vpop.f32.mrf.mxu0
      %4972 = vdwg.mxu0
      %v4973 = vadd.f32 %v4333, %v4808
      %v4974 = vadd.f32 %v4334, %v4811
      %v4975 = vadd.f32 %v4335, %v4816
      %v4976 = vadd.f32 %v4336, %v4819
      %v4977 = vadd.f32 %v4337, %v4824
      %v4978 = vadd.f32 %v4338, %v4827
      %v4979 = vadd.f32 %v4339, %v4832
      %v4980 = vadd.f32 %v4340, %v4835
      %v4981 = vadd.f32 %v4341, %v4840
      %v4982 = vadd.f32 %v4342, %v4843
      %v4983 = vadd.f32 %v4343, %v4848
      %v4984 = vadd.f32 %v4344, %v4851
      %v4985 = vadd.f32 %v4345, %v4856
      %v4986 = vadd.f32 %v4346, %v4859
      %v4987 = vadd.f32 %v4347, %v4864
      %v4988 = vadd.f32 %v4348, %v4867
      %v4989 = vadd.f32 %v4349, %v4872
      %v4990 = vadd.f32 %v4350, %v4875
      %v4991 = vadd.f32 %v4351, %v4880
      %v4992 = vadd.f32 %v4352, %v4883
      %v4993 = vadd.f32 %v4353, %v4888
      %v4994 = vadd.f32 %v4354, %v4891
      %v4995 = vadd.f32 %v4355, %v4896
      %v4996 = vadd.f32 %v4356, %v4899
      %v4997 = vadd.f32 %v4357, %v4904
      %v4998 = vadd.f32 %v4358, %v4907
      %v4999 = vadd.f32 %v4359, %v4912
      %v5000 = vadd.f32 %v4360, %v4915
      %v5001 = vadd.f32 %v4361, %v4920
      %v5002 = vadd.f32 %v4362, %v4923
      %v5003 = vadd.f32 %v4363, %v4928
      %v5004 = vadd.f32 %v4364, %v4931
      %v5005 = vadd.f32 %v4365, %v4936
      %v5006 = vadd.f32 %v4366, %v4939
      %v5007 = vadd.f32 %v4367, %v4944
      %v5008 = vadd.f32 %v4368, %v4947
      %v5009 = vadd.f32 %v4369, %v4952
      %v5010 = vadd.f32 %v4370, %v4955
      %v5011 = vadd.f32 %v4371, %v4960
      %v5012 = vadd.f32 %v4372, %v4963
      %v5013 = vadd.f32 %v4373, %v4968
      %v5014 = vld [vmem:[#allocation2 + $0x14] sm:$0xe]
      %v5015 = vld [vmem:[%s4 + $0x1c0] sm:$0xf]
      %v5016 = vld [vmem:[%s4 + $0x1c4] sm:$0xf]
      %v5017 = vld [vmem:[%s4 + $0x1c8] sm:$0xf]
      %v5018 = vld [vmem:[%s4 + $0x1cc] sm:$0xf]
      %v5019 = vld [vmem:[%s4 + $0x1d0] sm:$0xf]
      %v5020 = vld [vmem:[%s4 + $0x1d4] sm:$0xf]
      %v5021 = vld [vmem:[%s4 + $0x1d8] sm:$0xf]
      %v5022 = vld [vmem:[%s4 + $0x1dc] sm:$0xf]
      %v5023 = vld [vmem:[%s4 + $0x1e0] sm:$0xf]
      %v5024 = vld [vmem:[%s4 + $0x1e4] sm:$0xf]
      %v5025 = vld [vmem:[%s4 + $0x1e8] sm:$0xf]
      %v5026 = vld [vmem:[%s4 + $0x1ec] sm:$0xf]
      %v5027 = vld [vmem:[%s4 + $0x1f0] sm:$0xf]
      %v5028 = vld [vmem:[%s4 + $0x1f4] sm:$0xf]
      %v5029 = vld [vmem:[%s4 + $0x1f8] sm:$0xf]
      %v5030 = vld [vmem:[%s4 + $0x1fc] sm:$0xf]
      %v5032 = vunpack.c.l.b16 %v5014
      %v5033 = vpack.c.b16 %v4475, %v5032
      %vm5034 = vcmask 1046528
      %v5035 = vrot.slane %v5033, 1
      %v5036 = vrot.slane %v4517, 1
      %v5037 = vsel %vm5034, %v5035, %v5036
      %v5038 = vrot.slane %v4518, 1
      %v5039 = vsel %vm5034, %v5036, %v5038
      %v5040 = vrot.slane %v4519, 1
      %v5041 = vsel %vm5034, %v5038, %v5040
      %v5042 = vrot.slane %v4520, 1
      %v5043 = vsel %vm5034, %v5040, %v5042
      %v5044 = vrot.slane %v4521, 1
      %v5045 = vsel %vm5034, %v5042, %v5044
      %v5046 = vrot.slane %v4522, 1
      %v5047 = vsel %vm5034, %v5044, %v5046
      %v5048 = vrot.slane %v4523, 1
      %v5049 = vsel %vm5034, %v5046, %v5048
      %v5050 = vrot.slane %v4524, 1
      %v5051 = vsel %vm5034, %v5048, %v5050
      %v5052 = vrot.slane %v4525, 1
      %v5053 = vsel %vm5034, %v5050, %v5052
      %v5054 = vrot.slane %v4526, 1
      %v5055 = vsel %vm5034, %v5052, %v5054
      %v5056 = vrot.slane %v4527, 1
      %v5057 = vsel %vm5034, %v5054, %v5056
      %v5058 = vrot.slane %v4528, 1
      %v5059 = vsel %vm5034, %v5056, %v5058
      %v5060 = vrot.slane %v4529, 1
      %v5061 = vsel %vm5034, %v5058, %v5060
      %v5062 = vrot.slane %v4530, 1
      %v5063 = vsel %vm5034, %v5060, %v5062
      %v5064 = vrot.slane %v4531, 1
      %v5065 = vsel %vm5034, %v5062, %v5064
      %v5066 = vrot.slane %v4532, 1
      %v5067 = vsel %vm5034, %v5064, %v5066
      %v5068 = vrot.slane %v4533, 1
      %v5069 = vsel %vm5034, %v5066, %v5068
      %v5070 = vrot.slane %v4534, 1
      %v5071 = vsel %vm5034, %v5068, %v5070
      %v5072 = vrot.slane %v4535, 1
      %v5073 = vsel %vm5034, %v5070, %v5072
      %v5074 = vrot.slane %v4536, 1
      %v5075 = vsel %vm5034, %v5072, %v5074
      %v5113 = vunpack.c.l.b16 %v5015
      %v5114 = vunpack.c.l.b16 %v5016
      %v5115 = vunpack.c.l.b16 %v5017
      %v5116 = vunpack.c.l.b16 %v5018
      %v5117 = vunpack.c.l.b16 %v5019
      %v5118 = vunpack.c.l.b16 %v5020
      %v5119 = vunpack.c.l.b16 %v5021
      %v5120 = vunpack.c.l.b16 %v5022
      %v5121 = vunpack.c.l.b16 %v5023
      %v5122 = vunpack.c.l.b16 %v5024
      %v5123 = vunpack.c.l.b16 %v5025
      %v5124 = vunpack.c.l.b16 %v5026
      %v5125 = vunpack.c.l.b16 %v5027
      %v5126 = vunpack.c.l.b16 %v5028
      %v5127 = vunpack.c.l.b16 %v5029
      %v5128 = vunpack.c.l.b16 %v5030
      %v5129 = vpack.c.b16 %v5114, %v5113
      %v5130 = vpack.c.b16 %v5116, %v5115
      %v5131 = vpack.c.b16 %v5118, %v5117
      %v5132 = vpack.c.b16 %v5120, %v5119
      %v5133 = vpack.c.b16 %v5122, %v5121
      %v5134 = vpack.c.b16 %v5124, %v5123
      %v5135 = vpack.c.b16 %v5126, %v5125
      %v5136 = vpack.c.b16 %v5128, %v5127
      %5145 = vmatprep.subr.bf16.mxu0 0
      %5146 = vmatpush1.bf16.msra.mxu0 %v5136
      %5147 = vmatprep.subr.bf16.mxu0 0
      %5148 = vmatpush1.bf16.msra.mxu0 %v5135
      %5149 = vmatprep.subr.bf16.mxu0 0
      %5150 = vmatpush1.bf16.msra.mxu0 %v5134
      %5151 = vmatprep.subr.bf16.mxu0 0
      %5152 = vmatpush1.bf16.msra.mxu0 %v5133
      %5153 = vmatprep.subr.bf16.mxu0 0
      %5154 = vmatpush1.bf16.msra.mxu0 %v5132
      %5155 = vmatprep.subr.bf16.mxu0 0
      %5156 = vmatpush1.bf16.msra.mxu0 %v5131
      %5157 = vmatprep.subr.bf16.mxu0 0
      %5158 = vmatpush1.bf16.msra.mxu0 %v5130
      %5159 = vmatprep.subr.bf16.mxu0 0
      %5160 = vmatpush1.bf16.msra.mxu0 %v5129
      %5161 = vmatprep.subr.bf16.mxu0 0
      %5162 = vmatpush2.bf16.msra.mxu0 0
      %5163 = vmatprep.subr.bf16.mxu0 0
      %5164 = vmatpush2.bf16.msra.mxu0 0
      %5165 = vmatprep.subr.bf16.mxu0 0
      %5166 = vmatpush2.bf16.msra.mxu0 0
      %5167 = vmatprep.subr.bf16.mxu0 0
      %5168 = vmatpush2.bf16.msra.mxu0 0
      %5169 = vmatprep.subr.bf16.mxu0 0
      %5170 = vmatpush2.bf16.msra.mxu0 0
      %5171 = vmatprep.subr.bf16.mxu0 0
      %5172 = vmatpush2.bf16.msra.mxu0 0
      %5173 = vmatprep.subr.bf16.mxu0 0
      %5174 = vmatpush2.bf16.msra.mxu0 0
      %5175 = vmatprep.subr.bf16.mxu0 0
      %5176 = vmatpush2.bf16.msra.mxu0 0
      %5177 = vmatprep.mubr.bf16.mxu0 0
      %5178 = vmatmul.mubr.bf16.gmra.mxu0 %v5037
      %v5179 = vpop.f32.mrf.mxu0
      %v5180 = vadd.f32 0.0, %v5179
      %v5181 = vpop.f32.mrf.mxu0
      %v5182 = vpop.f32.mrf.mxu0
      %v5183 = vadd.f32 0.0, %v5182
      %v5184 = vpop.f32.mrf.mxu0
      %5185 = vmatprep.mubr.bf16.mxu0 0
      %5186 = vmatmul.mubr.bf16.gmra.mxu0 %v5039
      %v5187 = vpop.f32.mrf.mxu0
      %v5188 = vadd.f32 0.0, %v5187
      %v5189 = vpop.f32.mrf.mxu0
      %v5190 = vpop.f32.mrf.mxu0
      %v5191 = vadd.f32 0.0, %v5190
      %v5192 = vpop.f32.mrf.mxu0
      %5193 = vmatprep.mubr.bf16.mxu0 0
      %5194 = vmatmul.mubr.bf16.gmra.mxu0 %v5041
      %v5195 = vpop.f32.mrf.mxu0
      %v5196 = vadd.f32 0.0, %v5195
      %v5197 = vpop.f32.mrf.mxu0
      %v5198 = vpop.f32.mrf.mxu0
      %v5199 = vadd.f32 0.0, %v5198
      %v5200 = vpop.f32.mrf.mxu0
      %5201 = vmatprep.mubr.bf16.mxu0 0
      %5202 = vmatmul.mubr.bf16.gmra.mxu0 %v5043
      %v5203 = vpop.f32.mrf.mxu0
      %v5204 = vadd.f32 0.0, %v5203
      %v5205 = vpop.f32.mrf.mxu0
      %v5206 = vpop.f32.mrf.mxu0
      %v5207 = vadd.f32 0.0, %v5206
      %v5208 = vpop.f32.mrf.mxu0
      %5209 = vmatprep.mubr.bf16.mxu0 0
      %5210 = vmatmul.mubr.bf16.gmra.mxu0 %v5045
      %v5211 = vpop.f32.mrf.mxu0
      %v5212 = vadd.f32 0.0, %v5211
      %v5213 = vpop.f32.mrf.mxu0
      %v5214 = vpop.f32.mrf.mxu0
      %v5215 = vadd.f32 0.0, %v5214
      %v5216 = vpop.f32.mrf.mxu0
      %5217 = vmatprep.mubr.bf16.mxu0 0
      %5218 = vmatmul.mubr.bf16.gmra.mxu0 %v5047
      %v5219 = vpop.f32.mrf.mxu0
      %v5220 = vadd.f32 0.0, %v5219
      %v5221 = vpop.f32.mrf.mxu0
      %v5222 = vpop.f32.mrf.mxu0
      %v5223 = vadd.f32 0.0, %v5222
      %v5224 = vpop.f32.mrf.mxu0
      %5225 = vmatprep.mubr.bf16.mxu0 0
      %5226 = vmatmul.mubr.bf16.gmra.mxu0 %v5049
      %v5227 = vpop.f32.mrf.mxu0
      %v5228 = vadd.f32 0.0, %v5227
      %v5229 = vpop.f32.mrf.mxu0
      %v5230 = vpop.f32.mrf.mxu0
      %v5231 = vadd.f32 0.0, %v5230
      %v5232 = vpop.f32.mrf.mxu0
      %5233 = vmatprep.mubr.bf16.mxu0 0
      %5234 = vmatmul.mubr.bf16.gmra.mxu0 %v5051
      %v5235 = vpop.f32.mrf.mxu0
      %v5236 = vadd.f32 0.0, %v5235
      %v5237 = vpop.f32.mrf.mxu0
      %v5238 = vpop.f32.mrf.mxu0
      %v5239 = vadd.f32 0.0, %v5238
      %v5240 = vpop.f32.mrf.mxu0
      %5241 = vmatprep.mubr.bf16.mxu0 0
      %5242 = vmatmul.mubr.bf16.gmra.mxu0 %v5053
      %v5243 = vpop.f32.mrf.mxu0
      %v5244 = vadd.f32 0.0, %v5243
      %v5245 = vpop.f32.mrf.mxu0
      %v5246 = vpop.f32.mrf.mxu0
      %v5247 = vadd.f32 0.0, %v5246
      %v5248 = vpop.f32.mrf.mxu0
      %5249 = vmatprep.mubr.bf16.mxu0 0
      %5250 = vmatmul.mubr.bf16.gmra.mxu0 %v5055
      %v5251 = vpop.f32.mrf.mxu0
      %v5252 = vadd.f32 0.0, %v5251
      %v5253 = vpop.f32.mrf.mxu0
      %v5254 = vpop.f32.mrf.mxu0
      %v5255 = vadd.f32 0.0, %v5254
      %v5256 = vpop.f32.mrf.mxu0
      %5257 = vmatprep.mubr.bf16.mxu0 0
      %5258 = vmatmul.mubr.bf16.gmra.mxu0 %v5057
      %v5259 = vpop.f32.mrf.mxu0
      %v5260 = vadd.f32 0.0, %v5259
      %v5261 = vpop.f32.mrf.mxu0
      %v5262 = vpop.f32.mrf.mxu0
      %v5263 = vadd.f32 0.0, %v5262
      %v5264 = vpop.f32.mrf.mxu0
      %5265 = vmatprep.mubr.bf16.mxu0 0
      %5266 = vmatmul.mubr.bf16.gmra.mxu0 %v5059
      %v5267 = vpop.f32.mrf.mxu0
      %v5268 = vadd.f32 0.0, %v5267
      %v5269 = vpop.f32.mrf.mxu0
      %v5270 = vpop.f32.mrf.mxu0
      %v5271 = vadd.f32 0.0, %v5270
      %v5272 = vpop.f32.mrf.mxu0
      %5273 = vmatprep.mubr.bf16.mxu0 0
      %5274 = vmatmul.mubr.bf16.gmra.mxu0 %v5061
      %v5275 = vpop.f32.mrf.mxu0
      %v5276 = vadd.f32 0.0, %v5275
      %v5277 = vpop.f32.mrf.mxu0
      %v5278 = vpop.f32.mrf.mxu0
      %v5279 = vadd.f32 0.0, %v5278
      %v5280 = vpop.f32.mrf.mxu0
      %5281 = vmatprep.mubr.bf16.mxu0 0
      %5282 = vmatmul.mubr.bf16.gmra.mxu0 %v5063
      %v5283 = vpop.f32.mrf.mxu0
      %v5284 = vadd.f32 0.0, %v5283
      %v5285 = vpop.f32.mrf.mxu0
      %v5286 = vpop.f32.mrf.mxu0
      %v5287 = vadd.f32 0.0, %v5286
      %v5288 = vpop.f32.mrf.mxu0
      %5289 = vmatprep.mubr.bf16.mxu0 0
      %5290 = vmatmul.mubr.bf16.gmra.mxu0 %v5065
      %v5291 = vpop.f32.mrf.mxu0
      %v5292 = vadd.f32 0.0, %v5291
      %v5293 = vpop.f32.mrf.mxu0
      %v5294 = vpop.f32.mrf.mxu0
      %v5295 = vadd.f32 0.0, %v5294
      %v5296 = vpop.f32.mrf.mxu0
      %5297 = vmatprep.mubr.bf16.mxu0 0
      %5298 = vmatmul.mubr.bf16.gmra.mxu0 %v5067
      %v5299 = vpop.f32.mrf.mxu0
      %v5300 = vadd.f32 0.0, %v5299
      %v5301 = vpop.f32.mrf.mxu0
      %v5302 = vpop.f32.mrf.mxu0
      %v5303 = vadd.f32 0.0, %v5302
      %v5304 = vpop.f32.mrf.mxu0
      %5305 = vmatprep.mubr.bf16.mxu0 0
      %5306 = vmatmul.mubr.bf16.gmra.mxu0 %v5069
      %v5307 = vpop.f32.mrf.mxu0
      %v5308 = vadd.f32 0.0, %v5307
      %v5309 = vpop.f32.mrf.mxu0
      %v5310 = vpop.f32.mrf.mxu0
      %v5311 = vadd.f32 0.0, %v5310
      %v5312 = vpop.f32.mrf.mxu0
      %5313 = vmatprep.mubr.bf16.mxu0 0
      %5314 = vmatmul.mubr.bf16.gmra.mxu0 %v5071
      %v5315 = vpop.f32.mrf.mxu0
      %v5316 = vadd.f32 0.0, %v5315
      %v5317 = vpop.f32.mrf.mxu0
      %v5318 = vpop.f32.mrf.mxu0
      %v5319 = vadd.f32 0.0, %v5318
      %v5320 = vpop.f32.mrf.mxu0
      %5321 = vmatprep.mubr.bf16.mxu0 0
      %5322 = vmatmul.mubr.bf16.gmra.mxu0 %v5073
      %v5323 = vpop.f32.mrf.mxu0
      %v5324 = vadd.f32 0.0, %v5323
      %v5325 = vpop.f32.mrf.mxu0
      %v5326 = vpop.f32.mrf.mxu0
      %v5327 = vadd.f32 0.0, %v5326
      %v5328 = vpop.f32.mrf.mxu0
      %5329 = vmatprep.mubr.bf16.mxu0 0
      %5330 = vmatmul.mubr.bf16.gmra.mxu0 %v5075
      %v5331 = vpop.f32.mrf.mxu0
      %v5332 = vadd.f32 0.0, %v5331
      %v5333 = vpop.f32.mrf.mxu0
      %v5334 = vpop.f32.mrf.mxu0
      %v5335 = vadd.f32 0.0, %v5334
      %v5336 = vpop.f32.mrf.mxu0
      %5337 = vmatprep.mubr.bf16.mxu0 0
      %5338 = vmatmul.mubr.bf16.gmra.mxu0 %v5074
      %v5339 = vpop.f32.mrf.mxu0
      %v5340 = vadd.f32 0.0, %v5339
      %v5341 = vpop.f32.mrf.mxu0
      %v5342 = vpop.f32.mrf.mxu0
      %v5343 = vpop.f32.mrf.mxu0
      %5344 = vdwg.mxu0
      %v5345 = vadd.f32 %v4973, %v5180
      %v5346 = vadd.f32 %v4974, %v5183
      %v5347 = vadd.f32 %v4975, %v5188
      %v5348 = vadd.f32 %v4976, %v5191
      %v5349 = vadd.f32 %v4977, %v5196
      %v5350 = vadd.f32 %v4978, %v5199
      %v5351 = vadd.f32 %v4979, %v5204
      %v5352 = vadd.f32 %v4980, %v5207
      %v5353 = vadd.f32 %v4981, %v5212
      %v5354 = vadd.f32 %v4982, %v5215
      %v5355 = vadd.f32 %v4983, %v5220
      %v5356 = vadd.f32 %v4984, %v5223
      %v5357 = vadd.f32 %v4985, %v5228
      %v5358 = vadd.f32 %v4986, %v5231
      %v5359 = vadd.f32 %v4987, %v5236
      %v5360 = vadd.f32 %v4988, %v5239
      %v5361 = vadd.f32 %v4989, %v5244
      %v5362 = vadd.f32 %v4990, %v5247
      %v5363 = vadd.f32 %v4991, %v5252
      %v5364 = vadd.f32 %v4992, %v5255
      %v5365 = vadd.f32 %v4993, %v5260
      %v5366 = vadd.f32 %v4994, %v5263
      %v5367 = vadd.f32 %v4995, %v5268
      %v5368 = vadd.f32 %v4996, %v5271
      %v5369 = vadd.f32 %v4997, %v5276
      %v5370 = vadd.f32 %v4998, %v5279
      %v5371 = vadd.f32 %v4999, %v5284
      %v5372 = vadd.f32 %v5000, %v5287
      %v5373 = vadd.f32 %v5001, %v5292
      %v5374 = vadd.f32 %v5002, %v5295
      %v5375 = vadd.f32 %v5003, %v5300
      %v5376 = vadd.f32 %v5004, %v5303
      %v5377 = vadd.f32 %v5005, %v5308
      %v5378 = vadd.f32 %v5006, %v5311
      %v5379 = vadd.f32 %v5007, %v5316
      %v5380 = vadd.f32 %v5008, %v5319
      %v5381 = vadd.f32 %v5009, %v5324
      %v5382 = vadd.f32 %v5010, %v5327
      %v5383 = vadd.f32 %v5011, %v5332
      %v5384 = vadd.f32 %v5012, %v5335
      %v5385 = vadd.f32 %v5013, %v5340
      %v5386 = vld [vmem:[#allocation2 + $0xb8] sm:$0x3]
      %v5387 = vld [vmem:[%s4 + $0x200] sm:$0xf]
      %v5388 = vld [vmem:[%s4 + $0x204] sm:$0xf]
      %v5389 = vld [vmem:[%s4 + $0x208] sm:$0xf]
      %v5390 = vld [vmem:[%s4 + $0x20c] sm:$0xf]
      %v5391 = vld [vmem:[%s4 + $0x210] sm:$0xf]
      %v5392 = vld [vmem:[%s4 + $0x214] sm:$0xf]
      %v5393 = vld [vmem:[%s4 + $0x218] sm:$0xf]
      %v5394 = vld [vmem:[%s4 + $0x21c] sm:$0xf]
      %v5395 = vld [vmem:[%s4 + $0x220] sm:$0xf]
      %v5396 = vld [vmem:[%s4 + $0x224] sm:$0xf]
      %v5397 = vld [vmem:[%s4 + $0x228] sm:$0xf]
      %v5398 = vld [vmem:[%s4 + $0x22c] sm:$0xf]
      %v5399 = vld [vmem:[%s4 + $0x230] sm:$0xf]
      %v5400 = vld [vmem:[%s4 + $0x234] sm:$0xf]
      %v5401 = vld [vmem:[%s4 + $0x238] sm:$0xf]
      %v5402 = vld [vmem:[%s4 + $0x23c] sm:$0xf]
      %v5404 = vunpack.c.l.b16 %v5386
      %v5405 = vpack.c.b16 %v5404, %v4514
      %vm5406 = vsmask.f32 6400
      %v5408 = vshrl.u32 %v5033, 16
      %v5410 = vrot.slane %v5408, 1
      %v5411 = vshll.u32 %v5033, 16
      %v5413 = vrot.slane %v5411, 2
      %v5414 = vor.u32 %v5410, %v5413
      %v5415 = vrot.slane %v4549, 1
      %v5416 = vrot.slane %v4545, 2
      %v5417 = vor.u32 %v5415, %v5416
      %v5418 = vsel %vm5406, %v5414, %v5417
      %v5419 = vrot.slane %v4557, 1
      %v5420 = vrot.slane %v4553, 2
      %v5421 = vor.u32 %v5419, %v5420
      %v5422 = vsel %vm5406, %v5417, %v5421
      %v5423 = vrot.slane %v4565, 1
      %v5424 = vrot.slane %v4561, 2
      %v5425 = vor.u32 %v5423, %v5424
      %v5426 = vsel %vm5406, %v5421, %v5425
      %v5427 = vrot.slane %v4573, 1
      %v5428 = vrot.slane %v4569, 2
      %v5429 = vor.u32 %v5427, %v5428
      %v5430 = vsel %vm5406, %v5425, %v5429
      %v5431 = vrot.slane %v4581, 1
      %v5432 = vrot.slane %v4577, 2
      %v5433 = vor.u32 %v5431, %v5432
      %v5434 = vsel %vm5406, %v5429, %v5433
      %v5435 = vrot.slane %v4589, 1
      %v5436 = vrot.slane %v4585, 2
      %v5437 = vor.u32 %v5435, %v5436
      %v5438 = vsel %vm5406, %v5433, %v5437
      %v5439 = vrot.slane %v4597, 1
      %v5440 = vrot.slane %v4593, 2
      %v5441 = vor.u32 %v5439, %v5440
      %v5442 = vsel %vm5406, %v5437, %v5441
      %v5443 = vrot.slane %v4605, 1
      %v5444 = vrot.slane %v4601, 2
      %v5445 = vor.u32 %v5443, %v5444
      %v5446 = vsel %vm5406, %v5441, %v5445
      %v5447 = vrot.slane %v4613, 1
      %v5448 = vrot.slane %v4609, 2
      %v5449 = vor.u32 %v5447, %v5448
      %v5450 = vsel %vm5406, %v5445, %v5449
      %v5451 = vrot.slane %v4621, 1
      %v5452 = vrot.slane %v4617, 2
      %v5453 = vor.u32 %v5451, %v5452
      %v5454 = vsel %vm5406, %v5449, %v5453
      %v5455 = vrot.slane %v4629, 1
      %v5456 = vrot.slane %v4625, 2
      %v5457 = vor.u32 %v5455, %v5456
      %v5458 = vsel %vm5406, %v5453, %v5457
      %v5459 = vrot.slane %v4637, 1
      %v5460 = vrot.slane %v4633, 2
      %v5461 = vor.u32 %v5459, %v5460
      %v5462 = vsel %vm5406, %v5457, %v5461
      %v5463 = vrot.slane %v4645, 1
      %v5464 = vrot.slane %v4641, 2
      %v5465 = vor.u32 %v5463, %v5464
      %v5466 = vsel %vm5406, %v5461, %v5465
      %v5467 = vrot.slane %v4653, 1
      %v5468 = vrot.slane %v4649, 2
      %v5469 = vor.u32 %v5467, %v5468
      %v5470 = vsel %vm5406, %v5465, %v5469
      %v5471 = vrot.slane %v4661, 1
      %v5472 = vrot.slane %v4657, 2
      %v5473 = vor.u32 %v5471, %v5472
      %v5474 = vsel %vm5406, %v5469, %v5473
      %v5475 = vrot.slane %v4669, 1
      %v5476 = vrot.slane %v4665, 2
      %v5477 = vor.u32 %v5475, %v5476
      %v5478 = vsel %vm5406, %v5473, %v5477
      %v5479 = vrot.slane %v4677, 1
      %v5480 = vrot.slane %v4673, 2
      %v5481 = vor.u32 %v5479, %v5480
      %v5482 = vsel %vm5406, %v5477, %v5481
      %v5483 = vrot.slane %v4685, 1
      %v5484 = vrot.slane %v4681, 2
      %v5485 = vor.u32 %v5483, %v5484
      %v5486 = vsel %vm5406, %v5481, %v5485
      %v5487 = vrot.slane %v4693, 1
      %v5488 = vrot.slane %v4689, 2
      %v5489 = vor.u32 %v5487, %v5488
      %v5490 = vsel %vm5406, %v5485, %v5489
      %v5492 = vshrl.u32 %v5405, 16
      %v5494 = vrot.slane %v5492, 1
      %v5495 = vshll.u32 %v5405, 16
      %v5497 = vrot.slane %v5495, 2
      %v5498 = vor.u32 %v5494, %v5497
      %v5499 = vsel %vm5406, %v5489, %v5498
      %v5537 = vunpack.c.l.b16 %v5387
      %v5538 = vunpack.c.l.b16 %v5388
      %v5539 = vunpack.c.l.b16 %v5389
      %v5540 = vunpack.c.l.b16 %v5390
      %v5541 = vunpack.c.l.b16 %v5391
      %v5542 = vunpack.c.l.b16 %v5392
      %v5543 = vunpack.c.l.b16 %v5393
      %v5544 = vunpack.c.l.b16 %v5394
      %v5545 = vunpack.c.l.b16 %v5395
      %v5546 = vunpack.c.l.b16 %v5396
      %v5547 = vunpack.c.l.b16 %v5397
      %v5548 = vunpack.c.l.b16 %v5398
      %v5549 = vunpack.c.l.b16 %v5399
      %v5550 = vunpack.c.l.b16 %v5400
      %v5551 = vunpack.c.l.b16 %v5401
      %v5552 = vunpack.c.l.b16 %v5402
      %v5553 = vpack.c.b16 %v5538, %v5537
      %v5554 = vpack.c.b16 %v5540, %v5539
      %v5555 = vpack.c.b16 %v5542, %v5541
      %v5556 = vpack.c.b16 %v5544, %v5543
      %v5557 = vpack.c.b16 %v5546, %v5545
      %v5558 = vpack.c.b16 %v5548, %v5547
      %v5559 = vpack.c.b16 %v5550, %v5549
      %v5560 = vpack.c.b16 %v5552, %v5551
      %5569 = vmatprep.subr.bf16.mxu0 0
      %5570 = vmatpush1.bf16.msra.mxu0 %v5560
      %5571 = vmatprep.subr.bf16.mxu0 0
      %5572 = vmatpush1.bf16.msra.mxu0 %v5559
      %5573 = vmatprep.subr.bf16.mxu0 0
      %5574 = vmatpush1.bf16.msra.mxu0 %v5558
      %5575 = vmatprep.subr.bf16.mxu0 0
      %5576 = vmatpush1.bf16.msra.mxu0 %v5557
      %5577 = vmatprep.subr.bf16.mxu0 0
      %5578 = vmatpush1.bf16.msra.mxu0 %v5556
      %5579 = vmatprep.subr.bf16.mxu0 0
      %5580 = vmatpush1.bf16.msra.mxu0 %v5555
      %5581 = vmatprep.subr.bf16.mxu0 0
      %5582 = vmatpush1.bf16.msra.mxu0 %v5554
      %5583 = vmatprep.subr.bf16.mxu0 0
      %5584 = vmatpush1.bf16.msra.mxu0 %v5553
      %5585 = vmatprep.subr.bf16.mxu0 0
      %5586 = vmatpush2.bf16.msra.mxu0 0
      %5587 = vmatprep.subr.bf16.mxu0 0
      %5588 = vmatpush2.bf16.msra.mxu0 0
      %5589 = vmatprep.subr.bf16.mxu0 0
      %5590 = vmatpush2.bf16.msra.mxu0 0
      %5591 = vmatprep.subr.bf16.mxu0 0
      %5592 = vmatpush2.bf16.msra.mxu0 0
      %5593 = vmatprep.subr.bf16.mxu0 0
      %5594 = vmatpush2.bf16.msra.mxu0 0
      %5595 = vmatprep.subr.bf16.mxu0 0
      %5596 = vmatpush2.bf16.msra.mxu0 0
      %5597 = vmatprep.subr.bf16.mxu0 0
      %5598 = vmatpush2.bf16.msra.mxu0 0
      %5599 = vmatprep.subr.bf16.mxu0 0
      %5600 = vmatpush2.bf16.msra.mxu0 0
      %5601 = vmatprep.mubr.bf16.mxu0 0
      %5602 = vmatmul.mubr.bf16.gmra.mxu0 %v5418
      %v5603 = vpop.f32.mrf.mxu0
      %v5604 = vadd.f32 0.0, %v5603
      %v5605 = vpop.f32.mrf.mxu0
      %v5606 = vpop.f32.mrf.mxu0
      %v5607 = vadd.f32 0.0, %v5606
      %v5608 = vpop.f32.mrf.mxu0
      %5609 = vmatprep.mubr.bf16.mxu0 0
      %5610 = vmatmul.mubr.bf16.gmra.mxu0 %v5422
      %v5611 = vpop.f32.mrf.mxu0
      %v5612 = vadd.f32 0.0, %v5611
      %v5613 = vpop.f32.mrf.mxu0
      %v5614 = vpop.f32.mrf.mxu0
      %v5615 = vadd.f32 0.0, %v5614
      %v5616 = vpop.f32.mrf.mxu0
      %5617 = vmatprep.mubr.bf16.mxu0 0
      %5618 = vmatmul.mubr.bf16.gmra.mxu0 %v5426
      %v5619 = vpop.f32.mrf.mxu0
      %v5620 = vadd.f32 0.0, %v5619
      %v5621 = vpop.f32.mrf.mxu0
      %v5622 = vpop.f32.mrf.mxu0
      %v5623 = vadd.f32 0.0, %v5622
      %v5624 = vpop.f32.mrf.mxu0
      %5625 = vmatprep.mubr.bf16.mxu0 0
      %5626 = vmatmul.mubr.bf16.gmra.mxu0 %v5430
      %v5627 = vpop.f32.mrf.mxu0
      %v5628 = vadd.f32 0.0, %v5627
      %v5629 = vpop.f32.mrf.mxu0
      %v5630 = vpop.f32.mrf.mxu0
      %v5631 = vadd.f32 0.0, %v5630
      %v5632 = vpop.f32.mrf.mxu0
      %5633 = vmatprep.mubr.bf16.mxu0 0
      %5634 = vmatmul.mubr.bf16.gmra.mxu0 %v5434
      %v5635 = vpop.f32.mrf.mxu0
      %v5636 = vadd.f32 0.0, %v5635
      %v5637 = vpop.f32.mrf.mxu0
      %v5638 = vpop.f32.mrf.mxu0
      %v5639 = vadd.f32 0.0, %v5638
      %v5640 = vpop.f32.mrf.mxu0
      %5641 = vmatprep.mubr.bf16.mxu0 0
      %5642 = vmatmul.mubr.bf16.gmra.mxu0 %v5438
      %v5643 = vpop.f32.mrf.mxu0
      %v5644 = vadd.f32 0.0, %v5643
      %v5645 = vpop.f32.mrf.mxu0
      %v5646 = vpop.f32.mrf.mxu0
      %v5647 = vadd.f32 0.0, %v5646
      %v5648 = vpop.f32.mrf.mxu0
      %5649 = vmatprep.mubr.bf16.mxu0 0
      %5650 = vmatmul.mubr.bf16.gmra.mxu0 %v5442
      %v5651 = vpop.f32.mrf.mxu0
      %v5652 = vadd.f32 0.0, %v5651
      %v5653 = vpop.f32.mrf.mxu0
      %v5654 = vpop.f32.mrf.mxu0
      %v5655 = vadd.f32 0.0, %v5654
      %v5656 = vpop.f32.mrf.mxu0
      %5657 = vmatprep.mubr.bf16.mxu0 0
      %5658 = vmatmul.mubr.bf16.gmra.mxu0 %v5446
      %v5659 = vpop.f32.mrf.mxu0
      %v5660 = vadd.f32 0.0, %v5659
      %v5661 = vpop.f32.mrf.mxu0
      %v5662 = vpop.f32.mrf.mxu0
      %v5663 = vadd.f32 0.0, %v5662
      %v5664 = vpop.f32.mrf.mxu0
      %5665 = vmatprep.mubr.bf16.mxu0 0
      %5666 = vmatmul.mubr.bf16.gmra.mxu0 %v5450
      %v5667 = vpop.f32.mrf.mxu0
      %v5668 = vadd.f32 0.0, %v5667
      %v5669 = vpop.f32.mrf.mxu0
      %v5670 = vpop.f32.mrf.mxu0
      %v5671 = vadd.f32 0.0, %v5670
      %v5672 = vpop.f32.mrf.mxu0
      %5673 = vmatprep.mubr.bf16.mxu0 0
      %5674 = vmatmul.mubr.bf16.gmra.mxu0 %v5454
      %v5675 = vpop.f32.mrf.mxu0
      %v5676 = vadd.f32 0.0, %v5675
      %v5677 = vpop.f32.mrf.mxu0
      %v5678 = vpop.f32.mrf.mxu0
      %v5679 = vadd.f32 0.0, %v5678
      %v5680 = vpop.f32.mrf.mxu0
      %5681 = vmatprep.mubr.bf16.mxu0 0
      %5682 = vmatmul.mubr.bf16.gmra.mxu0 %v5458
      %v5683 = vpop.f32.mrf.mxu0
      %v5684 = vadd.f32 0.0, %v5683
      %v5685 = vpop.f32.mrf.mxu0
      %v5686 = vpop.f32.mrf.mxu0
      %v5687 = vadd.f32 0.0, %v5686
      %v5688 = vpop.f32.mrf.mxu0
      %5689 = vmatprep.mubr.bf16.mxu0 0
      %5690 = vmatmul.mubr.bf16.gmra.mxu0 %v5462
      %v5691 = vpop.f32.mrf.mxu0
      %v5692 = vadd.f32 0.0, %v5691
      %v5693 = vpop.f32.mrf.mxu0
      %v5694 = vpop.f32.mrf.mxu0
      %v5695 = vadd.f32 0.0, %v5694
      %v5696 = vpop.f32.mrf.mxu0
      %5697 = vmatprep.mubr.bf16.mxu0 0
      %5698 = vmatmul.mubr.bf16.gmra.mxu0 %v5466
      %v5699 = vpop.f32.mrf.mxu0
      %v5700 = vadd.f32 0.0, %v5699
      %v5701 = vpop.f32.mrf.mxu0
      %v5702 = vpop.f32.mrf.mxu0
      %v5703 = vadd.f32 0.0, %v5702
      %v5704 = vpop.f32.mrf.mxu0
      %5705 = vmatprep.mubr.bf16.mxu0 0
      %5706 = vmatmul.mubr.bf16.gmra.mxu0 %v5470
      %v5707 = vpop.f32.mrf.mxu0
      %v5708 = vadd.f32 0.0, %v5707
      %v5709 = vpop.f32.mrf.mxu0
      %v5710 = vpop.f32.mrf.mxu0
      %v5711 = vadd.f32 0.0, %v5710
      %v5712 = vpop.f32.mrf.mxu0
      %5713 = vmatprep.mubr.bf16.mxu0 0
      %5714 = vmatmul.mubr.bf16.gmra.mxu0 %v5474
      %v5715 = vpop.f32.mrf.mxu0
      %v5716 = vadd.f32 0.0, %v5715
      %v5717 = vpop.f32.mrf.mxu0
      %v5718 = vpop.f32.mrf.mxu0
      %v5719 = vadd.f32 0.0, %v5718
      %v5720 = vpop.f32.mrf.mxu0
      %5721 = vmatprep.mubr.bf16.mxu0 0
      %5722 = vmatmul.mubr.bf16.gmra.mxu0 %v5478
      %v5723 = vpop.f32.mrf.mxu0
      %v5724 = vadd.f32 0.0, %v5723
      %v5725 = vpop.f32.mrf.mxu0
      %v5726 = vpop.f32.mrf.mxu0
      %v5727 = vadd.f32 0.0, %v5726
      %v5728 = vpop.f32.mrf.mxu0
      %5729 = vmatprep.mubr.bf16.mxu0 0
      %5730 = vmatmul.mubr.bf16.gmra.mxu0 %v5482
      %v5731 = vpop.f32.mrf.mxu0
      %v5732 = vadd.f32 0.0, %v5731
      %v5733 = vpop.f32.mrf.mxu0
      %v5734 = vpop.f32.mrf.mxu0
      %v5735 = vadd.f32 0.0, %v5734
      %v5736 = vpop.f32.mrf.mxu0
      %5737 = vmatprep.mubr.bf16.mxu0 0
      %5738 = vmatmul.mubr.bf16.gmra.mxu0 %v5486
      %v5739 = vpop.f32.mrf.mxu0
      %v5740 = vadd.f32 0.0, %v5739
      %v5741 = vpop.f32.mrf.mxu0
      %v5742 = vpop.f32.mrf.mxu0
      %v5743 = vadd.f32 0.0, %v5742
      %v5744 = vpop.f32.mrf.mxu0
      %5745 = vmatprep.mubr.bf16.mxu0 0
      %5746 = vmatmul.mubr.bf16.gmra.mxu0 %v5490
      %v5747 = vpop.f32.mrf.mxu0
      %v5748 = vadd.f32 0.0, %v5747
      %v5749 = vpop.f32.mrf.mxu0
      %v5750 = vpop.f32.mrf.mxu0
      %v5751 = vadd.f32 0.0, %v5750
      %v5752 = vpop.f32.mrf.mxu0
      %5753 = vmatprep.mubr.bf16.mxu0 0
      %5754 = vmatmul.mubr.bf16.gmra.mxu0 %v5499
      %v5755 = vpop.f32.mrf.mxu0
      %v5756 = vadd.f32 0.0, %v5755
      %v5757 = vpop.f32.mrf.mxu0
      %v5758 = vpop.f32.mrf.mxu0
      %v5759 = vadd.f32 0.0, %v5758
      %v5760 = vpop.f32.mrf.mxu0
      %5761 = vmatprep.mubr.bf16.mxu0 0
      %5762 = vmatmul.mubr.bf16.gmra.mxu0 %v5498
      %v5763 = vpop.f32.mrf.mxu0
      %v5764 = vadd.f32 0.0, %v5763
      %v5765 = vpop.f32.mrf.mxu0
      %v5766 = vpop.f32.mrf.mxu0
      %v5767 = vpop.f32.mrf.mxu0
      %5768 = vdwg.mxu0
      %v5769 = vadd.f32 %v5345, %v5604
      %v5770 = vadd.f32 %v5346, %v5607
      %v5771 = vadd.f32 %v5347, %v5612
      %v5772 = vadd.f32 %v5348, %v5615
      %v5773 = vadd.f32 %v5349, %v5620
      %v5774 = vadd.f32 %v5350, %v5623
      %v5775 = vadd.f32 %v5351, %v5628
      %v5776 = vadd.f32 %v5352, %v5631
      %v5777 = vadd.f32 %v5353, %v5636
      %v5778 = vadd.f32 %v5354, %v5639
      %v5779 = vadd.f32 %v5355, %v5644
      %v5780 = vadd.f32 %v5356, %v5647
      %v5781 = vadd.f32 %v5357, %v5652
      %v5782 = vadd.f32 %v5358, %v5655
      %v5783 = vadd.f32 %v5359, %v5660
      %v5784 = vadd.f32 %v5360, %v5663
      %v5785 = vadd.f32 %v5361, %v5668
      %v5786 = vadd.f32 %v5362, %v5671
      %v5787 = vadd.f32 %v5363, %v5676
      %v5788 = vadd.f32 %v5364, %v5679
      %v5789 = vadd.f32 %v5365, %v5684
      %v5790 = vadd.f32 %v5366, %v5687
      %v5791 = vadd.f32 %v5367, %v5692
      %v5792 = vadd.f32 %v5368, %v5695
      %v5793 = vadd.f32 %v5369, %v5700
      %v5794 = vadd.f32 %v5370, %v5703
      %v5795 = vadd.f32 %v5371, %v5708
      %v5796 = vadd.f32 %v5372, %v5711
      %v5797 = vadd.f32 %v5373, %v5716
      %v5798 = vadd.f32 %v5374, %v5719
      %v5799 = vadd.f32 %v5375, %v5724
      %v5800 = vadd.f32 %v5376, %v5727
      %v5801 = vadd.f32 %v5377, %v5732
      %v5802 = vadd.f32 %v5378, %v5735
      %v5803 = vadd.f32 %v5379, %v5740
      %v5804 = vadd.f32 %v5380, %v5743
      %v5805 = vadd.f32 %v5381, %v5748
      %v5806 = vadd.f32 %v5382, %v5751
      %v5807 = vadd.f32 %v5383, %v5756
      %v5808 = vadd.f32 %v5384, %v5759
      %v5809 = vadd.f32 %v5385, %v5764
      %v5810 = vld [vmem:[%s5] sm:$0x1]
      %v5812 = vlaneseq
      %v5813 = vshrl.u32 %v5812, 7
      %v5814 = vsub.s32 0, %v5813
      %v5815 = vrot.slane %v5810, %v5814
      %v5817 = vadd.f32 %v5769, %v5815
      %v5818 = vadd.f32 %v5770, %v5815
      %v5819 = vadd.f32 %v5771, %v5815
      %v5820 = vadd.f32 %v5772, %v5815
      %v5821 = vadd.f32 %v5773, %v5815
      %v5822 = vadd.f32 %v5774, %v5815
      %v5823 = vadd.f32 %v5775, %v5815
      %v5824 = vadd.f32 %v5776, %v5815
      %v5825 = vadd.f32 %v5777, %v5815
      %v5826 = vadd.f32 %v5778, %v5815
      %v5827 = vadd.f32 %v5779, %v5815
      %v5828 = vadd.f32 %v5780, %v5815
      %v5829 = vadd.f32 %v5781, %v5815
      %v5830 = vadd.f32 %v5782, %v5815
      %v5831 = vadd.f32 %v5783, %v5815
      %v5832 = vadd.f32 %v5784, %v5815
      %v5833 = vadd.f32 %v5785, %v5815
      %v5834 = vadd.f32 %v5786, %v5815
      %v5835 = vadd.f32 %v5787, %v5815
      %v5836 = vadd.f32 %v5788, %v5815
      %v5837 = vadd.f32 %v5789, %v5815
      %v5838 = vadd.f32 %v5790, %v5815
      %v5839 = vadd.f32 %v5791, %v5815
      %v5840 = vadd.f32 %v5792, %v5815
      %v5841 = vadd.f32 %v5793, %v5815
      %v5842 = vadd.f32 %v5794, %v5815
      %v5843 = vadd.f32 %v5795, %v5815
      %v5844 = vadd.f32 %v5796, %v5815
      %v5845 = vadd.f32 %v5797, %v5815
      %v5846 = vadd.f32 %v5798, %v5815
      %v5847 = vadd.f32 %v5799, %v5815
      %v5848 = vadd.f32 %v5800, %v5815
      %v5849 = vadd.f32 %v5801, %v5815
      %v5850 = vadd.f32 %v5802, %v5815
      %v5851 = vadd.f32 %v5803, %v5815
      %v5852 = vadd.f32 %v5804, %v5815
      %v5853 = vadd.f32 %v5805, %v5815
      %v5854 = vadd.f32 %v5806, %v5815
      %v5855 = vadd.f32 %v5807, %v5815
      %v5856 = vadd.f32 %v5808, %v5815
      %v5857 = vadd.f32 %v5809, %v5815
      %v5858 = vpack.c.bf16 %v5818, %v5817
      %v5859 = vpack.c.bf16 %v5820, %v5819
      %v5860 = vpack.c.bf16 %v5822, %v5821
      %v5861 = vpack.c.bf16 %v5824, %v5823
      %v5862 = vpack.c.bf16 %v5826, %v5825
      %v5863 = vpack.c.bf16 %v5828, %v5827
      %v5864 = vpack.c.bf16 %v5830, %v5829
      %v5865 = vpack.c.bf16 %v5832, %v5831
      %v5866 = vpack.c.bf16 %v5834, %v5833
      %v5867 = vpack.c.bf16 %v5836, %v5835
      %v5868 = vpack.c.bf16 %v5838, %v5837
      %v5869 = vpack.c.bf16 %v5840, %v5839
      %v5870 = vpack.c.bf16 %v5842, %v5841
      %v5871 = vpack.c.bf16 %v5844, %v5843
      %v5872 = vpack.c.bf16 %v5846, %v5845
      %v5873 = vpack.c.bf16 %v5848, %v5847
      %v5874 = vpack.c.bf16 %v5850, %v5849
      %v5875 = vpack.c.bf16 %v5852, %v5851
      %v5876 = vpack.c.bf16 %v5854, %v5853
      %v5877 = vpack.c.bf16 %v5856, %v5855
      %v5878 = vpack.c.bf16 %v5857, %v5857
      %v5900 = vunpack.c.l.b16 %v5858
      %v5901 = vunpack.c.h.b16 %v5858
      %v5902 = vunpack.c.l.b16 %v5859
      %v5903 = vunpack.c.h.b16 %v5859
      %v5904 = vunpack.c.l.b16 %v5860
      %v5905 = vunpack.c.h.b16 %v5860
      %v5906 = vunpack.c.l.b16 %v5861
      %v5907 = vunpack.c.h.b16 %v5861
      %v5908 = vunpack.c.l.b16 %v5862
      %v5909 = vunpack.c.h.b16 %v5862
      %v5910 = vunpack.c.l.b16 %v5863
      %v5911 = vunpack.c.h.b16 %v5863
      %v5912 = vunpack.c.l.b16 %v5864
      %v5913 = vunpack.c.h.b16 %v5864
      %v5914 = vunpack.c.l.b16 %v5865
      %v5915 = vunpack.c.h.b16 %v5865
      %v5916 = vunpack.c.l.b16 %v5866
      %v5917 = vunpack.c.h.b16 %v5866
      %v5918 = vunpack.c.l.b16 %v5867
      %v5919 = vunpack.c.h.b16 %v5867
      %v5920 = vunpack.c.l.b16 %v5868
      %v5921 = vunpack.c.h.b16 %v5868
      %v5922 = vunpack.c.l.b16 %v5869
      %v5923 = vunpack.c.h.b16 %v5869
      %v5924 = vunpack.c.l.b16 %v5870
      %v5925 = vunpack.c.h.b16 %v5870
      %v5926 = vunpack.c.l.b16 %v5871
      %v5927 = vunpack.c.h.b16 %v5871
      %v5928 = vunpack.c.l.b16 %v5872
      %v5929 = vunpack.c.h.b16 %v5872
      %v5930 = vunpack.c.l.b16 %v5873
      %v5931 = vunpack.c.h.b16 %v5873
      %v5932 = vunpack.c.l.b16 %v5874
      %v5933 = vunpack.c.h.b16 %v5874
      %v5934 = vunpack.c.l.b16 %v5875
      %v5935 = vunpack.c.h.b16 %v5875
      %v5936 = vunpack.c.l.b16 %v5876
      %v5937 = vunpack.c.h.b16 %v5876
      %v5938 = vunpack.c.l.b16 %v5877
      %v5939 = vunpack.c.h.b16 %v5877
      %v5940 = vunpack.c.l.b16 %v5878
      %v5941 = vpack.c.b16 %v5900, %v5900
      %v5942 = vpack.c.b16 %v5901, %v5901
      %v5943 = vpack.c.b16 %v5902, %v5902
      %v5944 = vpack.c.b16 %v5903, %v5903
      %v5945 = vpack.c.b16 %v5904, %v5904
      %v5946 = vpack.c.b16 %v5905, %v5905
      %v5947 = vpack.c.b16 %v5906, %v5906
      %v5948 = vpack.c.b16 %v5907, %v5907
      %v5949 = vpack.c.b16 %v5908, %v5908
      %v5950 = vpack.c.b16 %v5909, %v5909
      %v5951 = vpack.c.b16 %v5910, %v5910
      %v5952 = vpack.c.b16 %v5911, %v5911
      %v5953 = vpack.c.b16 %v5912, %v5912
      %v5954 = vpack.c.b16 %v5913, %v5913
      %v5955 = vpack.c.b16 %v5914, %v5914
      %v5956 = vpack.c.b16 %v5915, %v5915
      %v5957 = vpack.c.b16 %v5916, %v5916
      %v5958 = vpack.c.b16 %v5917, %v5917
      %v5959 = vpack.c.b16 %v5918, %v5918
      %v5960 = vpack.c.b16 %v5919, %v5919
      %v5961 = vpack.c.b16 %v5920, %v5920
      %v5962 = vpack.c.b16 %v5921, %v5921
      %v5963 = vpack.c.b16 %v5922, %v5922
      %v5964 = vpack.c.b16 %v5923, %v5923
      %v5965 = vpack.c.b16 %v5924, %v5924
      %v5966 = vpack.c.b16 %v5925, %v5925
      %v5967 = vpack.c.b16 %v5926, %v5926
      %v5968 = vpack.c.b16 %v5927, %v5927
      %v5969 = vpack.c.b16 %v5928, %v5928
      %v5970 = vpack.c.b16 %v5929, %v5929
      %v5971 = vpack.c.b16 %v5930, %v5930
      %v5972 = vpack.c.b16 %v5931, %v5931
      %v5973 = vpack.c.b16 %v5932, %v5932
      %v5974 = vpack.c.b16 %v5933, %v5933
      %v5975 = vpack.c.b16 %v5934, %v5934
      %v5976 = vpack.c.b16 %v5935, %v5935
      %v5977 = vpack.c.b16 %v5936, %v5936
      %v5978 = vpack.c.b16 %v5937, %v5937
      %v5979 = vpack.c.b16 %v5938, %v5938
      %v5980 = vpack.c.b16 %v5939, %v5939
      %v5981 = vpack.c.b16 %v5940, %v5940
      %6023 = vst [vmem:[%s251] sm:$0xf] %v5941
      %6024 = vst [vmem:[%s251 + $0x4] sm:$0xf] %v5942
      %6025 = vst [vmem:[%s251 + $0x8] sm:$0xf] %v5943
      %6026 = vst [vmem:[%s251 + $0xc] sm:$0xf] %v5944
      %6027 = vst [vmem:[%s251 + $0x10] sm:$0xf] %v5945
      %6028 = vst [vmem:[%s251 + $0x14] sm:$0xf] %v5946
      %6029 = vst [vmem:[%s251 + $0x18] sm:$0xf] %v5947
      %6030 = vst [vmem:[%s251 + $0x1c] sm:$0xf] %v5948
      %6031 = vst [vmem:[%s251 + $0x20] sm:$0xf] %v5949
      %6032 = vst [vmem:[%s251 + $0x24] sm:$0xf] %v5950
      %6033 = vst [vmem:[%s251 + $0x28] sm:$0xf] %v5951
      %6034 = vst [vmem:[%s251 + $0x2c] sm:$0xf] %v5952
      %6035 = vst [vmem:[%s251 + $0x30] sm:$0xf] %v5953
      %6036 = vst [vmem:[%s251 + $0x34] sm:$0xf] %v5954
      %6037 = vst [vmem:[%s251 + $0x38] sm:$0xf] %v5955
      %6038 = vst [vmem:[%s251 + $0x3c] sm:$0xf] %v5956
      %6039 = vst [vmem:[%s251 + $0x40] sm:$0xf] %v5957
      %6040 = vst [vmem:[%s251 + $0x44] sm:$0xf] %v5958
      %6041 = vst [vmem:[%s251 + $0x48] sm:$0xf] %v5959
      %6042 = vst [vmem:[%s251 + $0x4c] sm:$0xf] %v5960
      %6043 = vst [vmem:[%s251 + $0x50] sm:$0xf] %v5961
      %6044 = vst [vmem:[%s251 + $0x54] sm:$0xf] %v5962
      %6045 = vst [vmem:[%s251 + $0x58] sm:$0xf] %v5963
      %6046 = vst [vmem:[%s251 + $0x5c] sm:$0xf] %v5964
      %6047 = vst [vmem:[%s251 + $0x60] sm:$0xf] %v5965
      %6048 = vst [vmem:[%s251 + $0x64] sm:$0xf] %v5966
      %6049 = vst [vmem:[%s251 + $0x68] sm:$0xf] %v5967
      %6050 = vst [vmem:[%s251 + $0x6c] sm:$0xf] %v5968
      %6051 = vst [vmem:[%s251 + $0x70] sm:$0xf] %v5969
      %6052 = vst [vmem:[%s251 + $0x74] sm:$0xf] %v5970
      %6053 = vst [vmem:[%s251 + $0x78] sm:$0xf] %v5971
      %6054 = vst [vmem:[%s251 + $0x7c] sm:$0xf] %v5972
      %6055 = vst [vmem:[%s251 + $0x80] sm:$0xf] %v5973
      %6056 = vst [vmem:[%s251 + $0x84] sm:$0xf] %v5974
      %6057 = vst [vmem:[%s251 + $0x88] sm:$0xf] %v5975
      %6058 = vst [vmem:[%s251 + $0x8c] sm:$0xf] %v5976
      %6059 = vst [vmem:[%s251 + $0x90] sm:$0xf] %v5977
      %6060 = vst [vmem:[%s251 + $0x94] sm:$0xf] %v5978
      %6061 = vst [vmem:[%s251 + $0x98] sm:$0xf] %v5979
      %6062 = vst [vmem:[%s251 + $0x9c] sm:$0xf] %v5980
      %6063 = vst [vmem:[%s251 + $0xa0] sm:$0xf] %v5981
      %p6064 = scmp.lt.s32.totalorder %s17, 1
      %s6065 = scalar_select %p6064, %s17, 1
      %s6066 = smul.addr %s6065, 41
      %s6067 = smul.addr %s6066, 4
      %s6068 = scalar_lea.vmem %s6, %s6067
      // Predicated region
      $region45: #{unet_block_pallas.3} parent=43 // pred_check
        %p6069 = pneg %p166
      $region46: #{unet_block_pallas.3} parent=43 // pred_check_branch
        %6071 = sbr.rel (%p6069) target = $region48
      $region47: #{unet_block_pallas.3} parent=43 // pred_region
        _
      $region48: #{unet_block_pallas.3} parent=43 // pred_fallthru
        _
    $region44: #{unet_block_pallas.3} parent=5 // pred_fallthru
      _
    %p6072 = scmp.le.s32.totalorder 2, %s12
    // Predicated region
    $region49: #{unet_block_pallas.3} parent=5 // pred_check
      %p6073 = pneg %p6072
    $region50: #{unet_block_pallas.3} parent=5 // pred_check_branch
      %6075 = sbr.rel (%p6073) target = $region52
    $region51: #{unet_block_pallas.3} parent=5 // pred_region
      %s6076 = ssub.s32 %s12, 2
      // Predicated region
      $region53: #{unet_block_pallas.3} parent=51 // pred_check
        %p6077 = pneg %p172
      $region54: #{unet_block_pallas.3} parent=51 // pred_check_branch
        %6079 = sbr.rel (%p6077) target = $region56
      $region55: #{unet_block_pallas.3} parent=51 // pred_region
        %p6080 = scmp.lt.s32.totalorder %s18, 1
        %s6081 = scalar_select %p6080, %s18, 1
        %s6082 = smul.addr %s6081, 41
        %s6083 = smul.addr %s6082, 4
        %s6084 = scalar_lea.vmem %s6, %s6083
      $region56: #{unet_block_pallas.3} parent=51 // pred_fallthru
        _
    $region52: #{unet_block_pallas.3} parent=5 // pred_fallthru
      _
  $region6: #{unet_block_pallas.3} parent=0 // loop_footer
    %s16 = sadd.s32 1, %s12
  $region7: #{unet_block_pallas.3} parent=0 // loop_footer_branch
    %11 = sbr.rel target = $region3
  $region8: #{unet_block_pallas.3} parent=0 // loop_exit
    _

</llo_original>
